<compile_context>
chip_gen: v7x
topology: tpu7x:2x2x1
jax: 0.10.0
libtpu: 0.0.40
codegen_flags: <defaults>
</compile_context>

<pallas_src>
import functools

import jax
import jax.numpy as jnp
from jax.experimental import pallas as pl
from jax.experimental.pallas import tpu as pltpu

HIDDEN = 512
BN_EPS = 1e-5
LANE = 128


# --------------------------------------------------------------------------
# Kernel
# --------------------------------------------------------------------------
def _mlp_kernel(x_ref, w1_ref, w2_ref, w3_ref, w4_ref, vec_ref, o_ref, *,
                act_dtype, out_pad):
    # Packed per-feature vectors: rows of one small f32 block.
    b1 = vec_ref[0:1, :HIDDEN]     # encoder Linear bias (BN0 folded in)
    s1 = vec_ref[1:2, :HIDDEN]     # self.bat scale
    t1 = vec_ref[2:3, :HIDDEN]     # self.bat shift
    b2 = vec_ref[3:4, :HIDDEN]     # layer Linear #1 bias (BN2 folded in)
    b3 = vec_ref[4:5, :HIDDEN]     # layer Linear #2 bias (BN3 folded in)
    b4 = vec_ref[5:6, :out_pad]    # fc2 bias (lane-padded)

    def sigmoid_f32(z):
        # exp on the EUP in act_dtype (bf16 on v6e/v7x, f32 on v5e);
        # divide as approx reciprocal -> stays on the EUP slot, not VALU.
        return pl.reciprocal(1.0 + jnp.exp(-z).astype(jnp.float32), approx=True)

    def silu_to_bf16(h_f32):
        z = h_f32.astype(act_dtype)
        sig = sigmoid_f32(z)
        return (z * sig.astype(act_dtype)).astype(jnp.bfloat16)

    # encoder: BN0(folded) -> Linear -> ReLU
    x = x_ref[...].astype(jnp.bfloat16)
    h = jnp.dot(x, w1_ref[...], preferred_element_type=jnp.float32) + b1
    h = jnp.maximum(h, 0.0)

    # x = F.relu(self.bat(x)); dropout1 == identity (eval)
    h = jnp.maximum(h * s1 + t1, 0.0)

    # layer block 1: Linear -> BN2(folded) -> SiLU -> Dropout(identity)
    h = jnp.dot(h.astype(jnp.bfloat16), w2_ref[...],
                preferred_element_type=jnp.float32) + b2
    h = silu_to_bf16(h)

    # layer block 2: Linear -> BN3(folded) -> SiLU -> Dropout(identity)
    h = jnp.dot(h, w3_ref[...], preferred_element_type=jnp.float32) + b3
    h = silu_to_bf16(h)

    # fc2 -> Sigmoid (output columns lane-padded to 128; sliced off outside)
    h = jnp.dot(h, w4_ref[...], preferred_element_type=jnp.float32) + b4
    o_ref[...] = sigmoid_f32(h.astype(act_dtype))


# --------------------------------------------------------------------------
# Helpers
# --------------------------------------------------------------------------
def _round_up(n, m):
    return ((n + m - 1) // m) * m


def _fold_bn(gamma, beta, mean, var, eps=BN_EPS):
    """Eval-mode BatchNorm1d -> per-feature scale/shift."""
    scale = gamma / jnp.sqrt(var + eps)
    shift = beta - mean * scale
    return scale, shift


def _chip_info():
    """Trace-time chip detection; only used to pick static kernel config."""
    kind = ""
    try:
        kind = (getattr(jax.devices()[0], "device_kind", "") or "").lower()
    except Exception:
        pass
    # bf16 EUP/VPU exists from v6 on; v5e (and older) keep f32 activation math.
    bf16_act = ("v6" in kind) or ("v7" in kind)
    # Megacore parts (2 TensorCores behind one device): v7x / v4 / v5p.
    megacore = ("v7" in kind) or ("v4" in kind) or ("v5p" in kind)
    return kind, megacore, bf16_act


def _pick_batch_tile(B, megacore):
    """Single grid step up to 512 rows; above that ~512-row tiles (multiples of
    128/256 -> full MXU rows), with an even tile count on megacore parts."""
    B8 = _round_up(max(B, 8), 8)
    if B8 <= 512:
        return B8                                  # one grid step
    n = pl.cdiv(B8, 512)
    if megacore and n % 2:
        n += 1                                     # even split across the 2 TCs
    return _round_up(pl.cdiv(B8, n), 128)


# --------------------------------------------------------------------------
# One-time parameter preparation (hoisted out of the per-call path)
# --------------------------------------------------------------------------
def prepare_params(params):
    """Fold eval-mode BatchNorms into the neighbouring Linears, pad the input
    feature dim and the output dim to multiples of 128 lanes, cast matmul
    weights to bf16 and pack the small per-feature vectors into one block."""
    F = params["w1"].shape[0]
    out_size = params["w4"].shape[1]
    f_pad = _round_up(F, LANE)
    out_pad = _round_up(out_size, LANE)
    vw = max(HIDDEN, out_pad)

    s0, t0 = _fold_bn(*params["bn0"])   # pre-Linear1:  (x*s0+t0) @ W1 + b1
    s1, t1 = _fold_bn(*params["bn1"])   # standalone (between the two ReLUs)
    s2, t2 = _fold_bn(*params["bn2"])   # post-Linear2
    s3, t3 = _fold_bn(*params["bn3"])   # post-Linear3

    w1 = params["w1"] * s0[:, None]
    b1 = t0 @ params["w1"] + params["b1"]
    w2 = params["w2"] * s2[None, :]
    b2 = params["b2"] * s2 + t2
    w3 = params["w3"] * s3[None, :]
    b3 = params["b3"] * s3 + t3

    w1p = jnp.zeros((f_pad, HIDDEN), jnp.float32).at[:F, :].set(w1)
    w4p = jnp.zeros((HIDDEN, out_pad), jnp.float32).at[:, :out_size].set(params["w4"])
    b4p = jnp.zeros((out_pad,), jnp.float32).at[:out_size].set(params["b4"])

    def row(v):
        return jnp.zeros((vw,), jnp.float32).at[: v.shape[0]].set(v)

    vec = jnp.stack([row(b1), row(s1), row(t1), row(b2), row(b3), row(b4p)])

    return {
        "w1": w1p.astype(jnp.bfloat16),
        "w2": w2.astype(jnp.bfloat16),
        "w3": w3.astype(jnp.bfloat16),
        "w4": w4p.astype(jnp.bfloat16),
        "vec": vec,                      # (6, max(512, out_pad)) f32
        "out_size": out_size,
    }


# --------------------------------------------------------------------------
# Forward
# --------------------------------------------------------------------------
@functools.partial(jax.jit, static_argnames=("out_size", "batch_tile", "bf16_act"))
def _mlpnet_forward_impl(x, w1, w2, w3, w4, vec, *, out_size, batch_tile, bf16_act):
    B, F = x.shape
    f_pad = w1.shape[0]
    out_pad = w4.shape[1]
    act_dtype = jnp.bfloat16 if bf16_act else jnp.float32

    # Pad features to the prepared lane-aligned width and batch to a multiple
    # of the tile so the last grid step never touches out-of-range rows.
    b_pad = _round_up(B, batch_tile)
    if (b_pad != B) or (f_pad != F):
        x = jnp.pad(x, ((0, b_pad - B), (0, f_pad - F)))

    grid = (b_pad // batch_tile,)
    kernel = functools.partial(_mlp_kernel, act_dtype=act_dtype, out_pad=out_pad)

    weight_bytes = (f_pad * HIDDEN + 2 * HIDDEN * HIDDEN + HIDDEN * out_pad) * 2
    tile_bytes = (batch_tile * f_pad * 4 + batch_tile * out_pad * 4
                  + weight_bytes + vec.size * 4)
    # Explicit scoped-VMEM limit (double-buffered tiles + slack); the default
    # is only 16 MiB on v5e / 32 MiB on v6e+v7x.
    vmem_limit = int(min(max(2 * tile_bytes + (4 << 20), 32 << 20), 48 << 20))

    flops = 2 * b_pad * (f_pad * HIDDEN + 2 * HIDDEN * HIDDEN + HIDDEN * out_pad)
    transcendentals = b_pad * (2 * HIDDEN + out_pad)
    bytes_accessed = (b_pad * f_pad * 4 + b_pad * out_pad * 4
                      + weight_bytes + vec.size * 4)

    out = pl.pallas_call(
        kernel,
        out_shape=jax.ShapeDtypeStruct((b_pad, out_pad), jnp.float32),
        grid_spec=pltpu.PrefetchScalarGridSpec(
            num_scalar_prefetch=0,
            grid=grid,
            in_specs=[
                pl.BlockSpec((batch_tile, f_pad), lambda i: (i, 0)),   # x
                pl.BlockSpec((f_pad, HIDDEN), lambda i: (0, 0)),       # w1
                pl.BlockSpec((HIDDEN, HIDDEN), lambda i: (0, 0)),      # w2
                pl.BlockSpec((HIDDEN, HIDDEN), lambda i: (0, 0)),      # w3
                pl.BlockSpec((HIDDEN, out_pad), lambda i: (0, 0)),     # w4
                pl.BlockSpec(vec.shape, lambda i: (0, 0)),             # packed vecs
            ],
            out_specs=pl.BlockSpec((batch_tile, out_pad), lambda i: (i, 0)),
        ),
        compiler_params=pltpu.CompilerParams(
            dimension_semantics=("parallel",),
            vmem_limit_bytes=vmem_limit),
        cost_estimate=pl.CostEstimate(
            flops=flops,
            transcendentals=transcendentals,
            bytes_accessed=bytes_accessed),
    )(x, w1, w2, w3, w4, vec)
    return out[:B, :out_size]


def mlpnet_forward(x, prepared, *, batch_tile=None, bf16_act=None):
    """Eval-mode MLPNet forward.  `prepared` comes from prepare_params()."""
    if batch_tile is None or bf16_act is None:
        _, megacore, bf16_ok = _chip_info()
        if bf16_act is None:
            bf16_act = bf16_ok
        if batch_tile is None:
            batch_tile = _pick_batch_tile(x.shape[0], megacore)
    return _mlpnet_forward_impl(
        x, prepared["w1"], prepared["w2"], prepared["w3"], prepared["w4"],
        prepared["vec"],
        out_size=int(prepared["out_size"]),
        batch_tile=int(batch_tile),
        bf16_act=bool(bf16_act))


# --------------------------------------------------------------------------
# Pure-JAX reference + synthetic parameters (for the self-test)
# --------------------------------------------------------------------------
def mlpnet_reference(x, params):
    """Pure-JAX f32 reference of the same eval-mode forward."""
    def bn(h, p):
        g, b, m, v = p
        return (h - m) / jnp.sqrt(v + BN_EPS) * g + b

    h = bn(x, params["bn0"])
    h = jnp.maximum(h @ params["w1"] + params["b1"], 0.0)
    h = jnp.maximum(bn(h, params["bn1"]), 0.0)
    h = h @ params["w2"] + params["b2"]
    h = bn(h, params["bn2"]); h = h * jax.nn.sigmoid(h)
    h = h @ params["w3"] + params["b3"]
    h = bn(h, params["bn3"]); h = h * jax.nn.sigmoid(h)
    return jax.nn.sigmoid(h @ params["w4"] + params["b4"])


def init_params(key, input_size, output_size):
    """Deterministic synthetic parameters (PyTorch Linear weights transposed to [in, out])."""
    ks = jax.random.split(key, 24)

    def linear(kw, kb, fan_in, fan_out):
        bound = 1.0 / jnp.sqrt(fan_in)
        w = jax.random.uniform(kw, (fan_in, fan_out), jnp.float32, -bound, bound)
        b = jax.random.uniform(kb, (fan_out,), jnp.float32, -bound, bound)
        return w, b

    def bn(kg, kb, km, kv, dim):
        gamma = 1.0 + 0.1 * jax.random.normal(kg, (dim,), jnp.float32)
        beta = 0.1 * jax.random.normal(kb, (dim,), jnp.float32)
        mean = 0.1 * jax.random.normal(km, (dim,), jnp.float32)
        var = jnp.abs(1.0 + 0.1 * jax.random.normal(kv, (dim,), jnp.float32))
        return gamma, beta, mean, var

    w1, b1 = linear(ks[0], ks[1], input_size, HIDDEN)
    w2, b2 = linear(ks[2], ks[3], HIDDEN, HIDDEN)
    w3, b3 = linear(ks[4], ks[5], HIDDEN, HIDDEN)
    w4, b4 = linear(ks[6], ks[7], HIDDEN, output_size)
    return {
        "bn0": bn(ks[8], ks[9], ks[10], ks[11], input_size),
        "w1": w1, "b1": b1,
        "bn1": bn(ks[12], ks[13], ks[14], ks[15], HIDDEN),
        "w2": w2, "b2": b2,
        "bn2": bn(ks[16], ks[17], ks[18], ks[19], HIDDEN),
        "w3": w3, "b3": b3,
        "bn3": bn(ks[20], ks[21], ks[22], ks[23], HIDDEN),
        "w4": w4, "b4": b4,
    }


if __name__ == "__main__":
    key = jax.random.PRNGKey(0)
    k_x, k_p = jax.random.split(key)

    # Small-but-representative shapes; B=256 -> batch_tile=256, grid=(1,).
    B, INPUT_SIZE, OUTPUT_SIZE = 256, 128, 8
    x = jax.random.normal(k_x, (B, INPUT_SIZE), jnp.float32)
    params = init_params(k_p, INPUT_SIZE, OUTPUT_SIZE)

    prepared = prepare_params(params)          # one-time inference prep
    out = jax.block_until_ready(mlpnet_forward(x, prepared))

    ref = jax.block_until_ready(mlpnet_reference(x, params))
    assert out.shape == (B, OUTPUT_SIZE)

    # bf16 matmul operands everywhere; bf16 exp on v6e/v7x -> wider tolerance
    # there than on the f32-activation (v5e) path.
    _, _, _bf16_act = _chip_info()
    tol = 5e-2 if _bf16_act else 2.5e-2
    err = float(jnp.max(jnp.abs(out - ref)))
    assert err < tol, f"Pallas kernel mismatch vs JAX reference: max err {err}"

    print("KERNEL_OK")
</pallas_src>

<mosaic_0001>
module attributes {stable_mosaic.version = 11 : i64} {
  func.func @_mlp_kernel(%arg0: i32, %arg1: memref<256x128xf32, #tpu.memory_space<vmem>>, %arg2: memref<128x512xbf16, #tpu.memory_space<vmem>>, %arg3: memref<512x512xbf16, #tpu.memory_space<vmem>>, %arg4: memref<512x512xbf16, #tpu.memory_space<vmem>>, %arg5: memref<512x128xbf16, #tpu.memory_space<vmem>>, %arg6: memref<6x512xf32, #tpu.memory_space<vmem>>, %arg7: memref<256x128xf32, #tpu.memory_space<vmem>>) attributes {dimension_semantics = [#tpu.dimension_semantics<parallel>], iteration_bounds = array<i64: 1>, scalar_prefetch = 0 : i64, scratch_operands = 0 : i64, tpu.core_type = #tpu.core_type<tc>, window_params = [{transform_indices = @transform_0, window_bounds = array<i64: 256, 128>}, {pipeline_mode = #tpu.pipeline_mode<synchronous>, transform_indices = @transform_1, window_bounds = array<i64: 128, 512>}, {pipeline_mode = #tpu.pipeline_mode<synchronous>, transform_indices = @transform_2, window_bounds = array<i64: 512, 512>}, {pipeline_mode = #tpu.pipeline_mode<synchronous>, transform_indices = @transform_3, window_bounds = array<i64: 512, 512>}, {pipeline_mode = #tpu.pipeline_mode<synchronous>, transform_indices = @transform_4, window_bounds = array<i64: 512, 128>}, {pipeline_mode = #tpu.pipeline_mode<synchronous>, transform_indices = @transform_5, window_bounds = array<i64: 6, 512>}, {transform_indices = @transform_6, window_bounds = array<i64: 256, 128>}]} {
    %c0 = arith.constant 0 : index
    %c0_0 = arith.constant 0 : index
    %0 = vector.load %arg6[%c0, %c0_0] : memref<6x512xf32, #tpu.memory_space<vmem>>, vector<1x512xf32>
    %c1 = arith.constant 1 : index
    %c0_1 = arith.constant 0 : index
    %1 = vector.load %arg6[%c1, %c0_1] : memref<6x512xf32, #tpu.memory_space<vmem>>, vector<1x512xf32>
    %c2 = arith.constant 2 : index
    %c0_2 = arith.constant 0 : index
    %2 = vector.load %arg6[%c2, %c0_2] : memref<6x512xf32, #tpu.memory_space<vmem>>, vector<1x512xf32>
    %c3 = arith.constant 3 : index
    %c0_3 = arith.constant 0 : index
    %3 = vector.load %arg6[%c3, %c0_3] : memref<6x512xf32, #tpu.memory_space<vmem>>, vector<1x512xf32>
    %c4 = arith.constant 4 : index
    %c0_4 = arith.constant 0 : index
    %4 = vector.load %arg6[%c4, %c0_4] : memref<6x512xf32, #tpu.memory_space<vmem>>, vector<1x512xf32>
    %c5 = arith.constant 5 : index
    %c0_5 = arith.constant 0 : index
    %5 = vector.load %arg6[%c5, %c0_5] : memref<6x512xf32, #tpu.memory_space<vmem>>, vector<1x128xf32>
    %c0_6 = arith.constant 0 : index
    %c0_7 = arith.constant 0 : index
    %6 = vector.load %arg1[%c0_6, %c0_7] : memref<256x128xf32, #tpu.memory_space<vmem>>, vector<256x128xf32>
    %7 = arith.truncf %6 : vector<256x128xf32> to vector<256x128xbf16>
    %c0_8 = arith.constant 0 : index
    %c0_9 = arith.constant 0 : index
    %8 = vector.load %arg2[%c0_8, %c0_9] : memref<128x512xbf16, #tpu.memory_space<vmem>>, vector<128x512xbf16>
    %cst = arith.constant dense<0.000000e+00> : vector<256x512xf32>
    %9 = tpu.matmul %7, %8, %cst {dimension_numbers = #tpu.dot_dimension_numbers<[1], [0], [0], [1], [0, 0, 1, 1], [], []>} : vector<256x128xbf16>, vector<128x512xbf16>, vector<256x512xf32> -> vector<256x512xf32>
    %10 = vector.broadcast %0 : vector<1x512xf32> to vector<256x512xf32>
    %11 = arith.addf %9, %10 : vector<256x512xf32>
    %cst_10 = arith.constant 0.000000e+00 : f32
    %12 = vector.broadcast %cst_10 : f32 to vector<256x512xf32>
    %13 = arith.maximumf %11, %12 : vector<256x512xf32>
    %14 = vector.broadcast %1 : vector<1x512xf32> to vector<256x512xf32>
    %15 = arith.mulf %13, %14 : vector<256x512xf32>
    %16 = vector.broadcast %2 : vector<1x512xf32> to vector<256x512xf32>
    %17 = arith.addf %15, %16 : vector<256x512xf32>
    %cst_11 = arith.constant 0.000000e+00 : f32
    %18 = vector.broadcast %cst_11 : f32 to vector<256x512xf32>
    %19 = arith.maximumf %17, %18 : vector<256x512xf32>
    %20 = arith.truncf %19 : vector<256x512xf32> to vector<256x512xbf16>
    %c0_12 = arith.constant 0 : index
    %c0_13 = arith.constant 0 : index
    %21 = vector.load %arg3[%c0_12, %c0_13] : memref<512x512xbf16, #tpu.memory_space<vmem>>, vector<512x512xbf16>
    %cst_14 = arith.constant dense<0.000000e+00> : vector<256x512xf32>
    %22 = tpu.matmul %20, %21, %cst_14 {dimension_numbers = #tpu.dot_dimension_numbers<[1], [0], [0], [1], [0, 0, 1, 1], [], []>} : vector<256x512xbf16>, vector<512x512xbf16>, vector<256x512xf32> -> vector<256x512xf32>
    %23 = vector.broadcast %3 : vector<1x512xf32> to vector<256x512xf32>
    %24 = arith.addf %22, %23 : vector<256x512xf32>
    %cst_15 = arith.constant 0.000000e+00 : f32
    %25 = vector.broadcast %cst_15 : f32 to vector<256x512xf32>
    %26 = arith.subf %25, %24 : vector<256x512xf32>
    %27 = math.exp %26 : vector<256x512xf32>
    %cst_16 = arith.constant 1.000000e+00 : f32
    %28 = vector.broadcast %cst_16 : f32 to vector<256x512xf32>
    %29 = arith.addf %28, %27 : vector<256x512xf32>
    %30 = tpu.reciprocal %29 {approx = true} : vector<256x512xf32> -> vector<256x512xf32>
    %31 = arith.mulf %24, %30 : vector<256x512xf32>
    %32 = arith.truncf %31 : vector<256x512xf32> to vector<256x512xbf16>
    %c0_17 = arith.constant 0 : index
    %c0_18 = arith.constant 0 : index
    %33 = vector.load %arg4[%c0_17, %c0_18] : memref<512x512xbf16, #tpu.memory_space<vmem>>, vector<512x512xbf16>
    %cst_19 = arith.constant dense<0.000000e+00> : vector<256x512xf32>
    %34 = tpu.matmul %32, %33, %cst_19 {dimension_numbers = #tpu.dot_dimension_numbers<[1], [0], [0], [1], [0, 0, 1, 1], [], []>} : vector<256x512xbf16>, vector<512x512xbf16>, vector<256x512xf32> -> vector<256x512xf32>
    %35 = vector.broadcast %4 : vector<1x512xf32> to vector<256x512xf32>
    %36 = arith.addf %34, %35 : vector<256x512xf32>
    %cst_20 = arith.constant 0.000000e+00 : f32
    %37 = vector.broadcast %cst_20 : f32 to vector<256x512xf32>
    %38 = arith.subf %37, %36 : vector<256x512xf32>
    %39 = math.exp %38 : vector<256x512xf32>
    %cst_21 = arith.constant 1.000000e+00 : f32
    %40 = vector.broadcast %cst_21 : f32 to vector<256x512xf32>
    %41 = arith.addf %40, %39 : vector<256x512xf32>
    %42 = tpu.reciprocal %41 {approx = true} : vector<256x512xf32> -> vector<256x512xf32>
    %43 = arith.mulf %36, %42 : vector<256x512xf32>
    %44 = arith.truncf %43 : vector<256x512xf32> to vector<256x512xbf16>
    %c0_22 = arith.constant 0 : index
    %c0_23 = arith.constant 0 : index
    %45 = vector.load %arg5[%c0_22, %c0_23] : memref<512x128xbf16, #tpu.memory_space<vmem>>, vector<512x128xbf16>
    %cst_24 = arith.constant dense<0.000000e+00> : vector<256x128xf32>
    %46 = tpu.matmul %44, %45, %cst_24 {dimension_numbers = #tpu.dot_dimension_numbers<[1], [0], [0], [1], [0, 0, 1, 1], [], []>} : vector<256x512xbf16>, vector<512x128xbf16>, vector<256x128xf32> -> vector<256x128xf32>
    %47 = vector.broadcast %5 : vector<1x128xf32> to vector<256x128xf32>
    %48 = arith.addf %46, %47 : vector<256x128xf32>
    %cst_25 = arith.constant 0.000000e+00 : f32
    %49 = vector.broadcast %cst_25 : f32 to vector<256x128xf32>
    %50 = arith.subf %49, %48 : vector<256x128xf32>
    %51 = math.exp %50 : vector<256x128xf32>
    %cst_26 = arith.constant 1.000000e+00 : f32
    %52 = vector.broadcast %cst_26 : f32 to vector<256x128xf32>
    %53 = arith.addf %52, %51 : vector<256x128xf32>
    %54 = tpu.reciprocal %53 {approx = true} : vector<256x128xf32> -> vector<256x128xf32>
    %c0_27 = arith.constant 0 : index
    %c0_28 = arith.constant 0 : index
    %55 = vector.load %arg7[%c0_27, %c0_28] : memref<256x128xf32, #tpu.memory_space<vmem>>, vector<256x128xf32>
    tpu.vector_store %arg7[%c0_27, %c0_28], %54 {strides = array<i32>} : memref<256x128xf32, #tpu.memory_space<vmem>>, vector<256x128xf32>,
    return
  }
  func.func @transform_0(%arg0: i32) -> (i32, i32) {
    %c0_i32 = arith.constant 0 : i32
    %c0_i32_0 = arith.constant 0 : i32
    return %arg0, %c0_i32 : i32, i32
  }
  func.func @transform_1(%arg0: i32) -> (i32, i32) {
    %c0_i32 = arith.constant 0 : i32
    %c0_i32_0 = arith.constant 0 : i32
    %c0_i32_1 = arith.constant 0 : i32
    return %c0_i32, %c0_i32_0 : i32, i32
  }
  func.func @transform_2(%arg0: i32) -> (i32, i32) {
    %c0_i32 = arith.constant 0 : i32
    %c0_i32_0 = arith.constant 0 : i32
    %c0_i32_1 = arith.constant 0 : i32
    return %c0_i32, %c0_i32_0 : i32, i32
  }
  func.func @transform_3(%arg0: i32) -> (i32, i32) {
    %c0_i32 = arith.constant 0 : i32
    %c0_i32_0 = arith.constant 0 : i32
    %c0_i32_1 = arith.constant 0 : i32
    return %c0_i32, %c0_i32_0 : i32, i32
  }
  func.func @transform_4(%arg0: i32) -> (i32, i32) {
    %c0_i32 = arith.constant 0 : i32
    %c0_i32_0 = arith.constant 0 : i32
    %c0_i32_1 = arith.constant 0 : i32
    return %c0_i32, %c0_i32_0 : i32, i32
  }
  func.func @transform_5(%arg0: i32) -> (i32, i32) {
    %c0_i32 = arith.constant 0 : i32
    %c0_i32_0 = arith.constant 0 : i32
    %c0_i32_1 = arith.constant 0 : i32
    return %c0_i32, %c0_i32_0 : i32, i32
  }
  func.func @transform_6(%arg0: i32) -> (i32, i32) {
    %c0_i32 = arith.constant 0 : i32
    %c0_i32_0 = arith.constant 0 : i32
    return %arg0, %c0_i32 : i32, i32
  }
}

</mosaic_0001>

<llo_original>
// kernel: _mlpnet_forward_impl.1
$region0: #{_mlpnet_forward_impl.1}
  #allocation0 [shape = 'u32[]', space=smem, size = 0x4, offset = 0x4, fixed_abs, tag = 'smem constant byte address 0x4 - core index']
  #allocation1 [shape = 'u32[144,128]{1,0:T(1,128)}', space=vmem, size = 0x12000, scoped, tag = 'internal scratch']
  %s0 = inlined_call_operand.hbm [shape: f32[256,128], index: 0, kind: input, shape index: {}]
  %s1 = inlined_call_operand.hbm [shape: bf16[128,512], index: 1, kind: input, shape index: {}]
  %s2 = inlined_call_operand.hbm [shape: bf16[512,512], index: 2, kind: input, shape index: {}]
  %s3 = inlined_call_operand.hbm [shape: bf16[512,512], index: 3, kind: input, shape index: {}]
  %s4 = inlined_call_operand.hbm [shape: bf16[512,128], index: 4, kind: input, shape index: {}]
  %s5 = inlined_call_operand.hbm [shape: f32[6,512], index: 5, kind: input, shape index: {}]
  %s6 = inlined_call_operand.vmem [shape: f32[256,128], index: 6, kind: output, shape index: {}]
  %s7 = sld [smem:[#allocation0]]
  $region58: #{_mlpnet_forward_impl.1} parent=0
    _
  %s9 = ssub.s32 1, %s7
  %s10 = scalar_select 0, %s9, %s7
  $region1: #{_mlpnet_forward_impl.1} parent=0
    #allocation2 [shape = 'u8[131072]{0}', space=vmem, size = 0x20000, scoped, tag = 'input window, operand 0, single buffered']
    #allocation3 [shape = 's32[1]{0}', space=sflag, size = 0x4, scoped, tag = 'scoped memory for _mlpnet_forward_impl.1']
    #allocation4 [shape = 'u8[131072]{0}', space=vmem, size = 0x20000, scoped, tag = 'input window, operand 1, single buffered']
    #allocation5 [shape = 's32[1]{0}', space=sflag, size = 0x4, scoped, tag = 'scoped memory for _mlpnet_forward_impl.1']
    #allocation6 [shape = 'u8[524288]{0}', space=vmem, size = 0x80000, scoped, tag = 'input window, operand 2, single buffered']
    #allocation7 [shape = 'u8[524288]{0}', space=vmem, size = 0x80000, scoped, tag = 'input window, operand 3, single buffered']
    #allocation8 [shape = 's32[1]{0}', space=sflag, size = 0x4, scoped, tag = 'scoped memory for _mlpnet_forward_impl.1']
    #allocation9 [shape = 'u8[131072]{0}', space=vmem, size = 0x20000, scoped, tag = 'input window, operand 4, single buffered']
    #allocation10 [shape = 'u8[16384]{0}', space=vmem, size = 0x4000, scoped, tag = 'input window, operand 5, single buffered']
    #allocation11 [shape = 's32[1]{0}', space=sflag, size = 0x4, scoped, tag = 'scoped memory for _mlpnet_forward_impl.1']
    %11 = vsyncpa [#allocation3], 0
    %12 = vsyncpa [#allocation5], 0
    %13 = vsyncpa [#allocation8], 0
    %14 = vsyncpa [#allocation11], 0
    // Predicated region
    $region2: #{_mlpnet_forward_impl.1} parent=1 // pred_check
      _
    $region3: #{_mlpnet_forward_impl.1} parent=1 // pred_check_branch
      %16 = sbr.rel (0) target = $region5
    $region4: #{_mlpnet_forward_impl.1} parent=1 // pred_region
      %s18 = ssub.s32 4096, 4096
      %19 = vsyncadd [#allocation3], %s18
      %s20 = sshll.u32 [#allocation2], 4
      %s21 = int_to_ptr.vmem [resolvable:$true] %s20
      %26 = dma.hbm_to_vmem [thread:$0]  %s0, 4096, %s21, [#allocation3], 128, 128, 8
    $region5: #{_mlpnet_forward_impl.1} parent=1 // pred_fallthru
      _
    // Predicated region
    $region6: #{_mlpnet_forward_impl.1} parent=1 // pred_check
      _
    $region7: #{_mlpnet_forward_impl.1} parent=1 // pred_check_branch
      %28 = sbr.rel (0) target = $region9
    $region8: #{_mlpnet_forward_impl.1} parent=1 // pred_region
      %s30 = ssub.s32 4096, 4096
      %31 = vsyncadd [#allocation5], %s30
      %s32 = sshll.u32 [#allocation4], 4
      %s33 = int_to_ptr.vmem [resolvable:$true] %s32
      %38 = dma.hbm_to_vmem [thread:$0]  %s1, 4096, %s33, [#allocation5], 256, 256, 16
    $region9: #{_mlpnet_forward_impl.1} parent=1 // pred_fallthru
      _
    // Predicated region
    $region10: #{_mlpnet_forward_impl.1} parent=1 // pred_check
      _
    $region11: #{_mlpnet_forward_impl.1} parent=1 // pred_check_branch
      %40 = sbr.rel (0) target = $region13
    $region12: #{_mlpnet_forward_impl.1} parent=1 // pred_region
      %s42 = ssub.s32 16384, 16384
      %43 = vsyncadd [#allocation5], %s42
      %s44 = sshll.u32 [#allocation6], 4
      %s45 = int_to_ptr.vmem [resolvable:$true] %s44
      %50 = dma.hbm_to_vmem [thread:$0]  %s2, 16384, %s45, [#allocation5], 256, 256, 16
    $region13: #{_mlpnet_forward_impl.1} parent=1 // pred_fallthru
      _
    // Predicated region
    $region14: #{_mlpnet_forward_impl.1} parent=1 // pred_check
      _
    $region15: #{_mlpnet_forward_impl.1} parent=1 // pred_check_branch
      %52 = sbr.rel (0) target = $region17
    $region16: #{_mlpnet_forward_impl.1} parent=1 // pred_region
      %s54 = ssub.s32 16384, 16384
      %55 = vsyncadd [#allocation8], %s54
      %s56 = sshll.u32 [#allocation7], 4
      %s57 = int_to_ptr.vmem [resolvable:$true] %s56
      %62 = dma.hbm_to_vmem [thread:$0]  %s3, 16384, %s57, [#allocation8], 256, 256, 16
    $region17: #{_mlpnet_forward_impl.1} parent=1 // pred_fallthru
      _
    // Predicated region
    $region18: #{_mlpnet_forward_impl.1} parent=1 // pred_check
      _
    $region19: #{_mlpnet_forward_impl.1} parent=1 // pred_check_branch
      %64 = sbr.rel (0) target = $region21
    $region20: #{_mlpnet_forward_impl.1} parent=1 // pred_region
      %s66 = ssub.s32 4096, 4096
      %67 = vsyncadd [#allocation8], %s66
      %s68 = sshll.u32 [#allocation9], 4
      %s69 = int_to_ptr.vmem [resolvable:$true] %s68
      %74 = dma.hbm_to_vmem [thread:$0]  %s4, 4096, %s69, [#allocation8], 64, 64, 4
    $region21: #{_mlpnet_forward_impl.1} parent=1 // pred_fallthru
      _
    // Predicated region
    $region22: #{_mlpnet_forward_impl.1} parent=1 // pred_check
      _
    $region23: #{_mlpnet_forward_impl.1} parent=1 // pred_check_branch
      %76 = sbr.rel (0) target = $region25
    $region24: #{_mlpnet_forward_impl.1} parent=1 // pred_region
      %s78 = ssub.s32 512, 512
      %79 = vsyncadd [#allocation11], %s78
      %s81 = sshll.u32 [#allocation10], 4
      %s82 = int_to_ptr.vmem [resolvable:$true] %s81
      %84 = dma.hbm_to_vmem [thread:$0]  %s5, 512, %s82, [#allocation11]
    $region25: #{_mlpnet_forward_impl.1} parent=1 // pred_fallthru
      _
    // Predicated region
    $region26: #{_mlpnet_forward_impl.1} parent=1 // pred_check
      _
    $region27: #{_mlpnet_forward_impl.1} parent=1 // pred_check_branch
      %86 = sbr.rel (0) target = $region29
    $region28: #{_mlpnet_forward_impl.1} parent=1 // pred_region
      %87 = dma.done [#allocation3], 4096
    $region29: #{_mlpnet_forward_impl.1} parent=1 // pred_fallthru
      _
    // Predicated region
    $region30: #{_mlpnet_forward_impl.1} parent=1 // pred_check
      _
    $region31: #{_mlpnet_forward_impl.1} parent=1 // pred_check_branch
      %89 = sbr.rel (0) target = $region33
    $region32: #{_mlpnet_forward_impl.1} parent=1 // pred_region
      %90 = dma.done [#allocation5], 4096
    $region33: #{_mlpnet_forward_impl.1} parent=1 // pred_fallthru
      _
    // Predicated region
    $region34: #{_mlpnet_forward_impl.1} parent=1 // pred_check
      _
    $region35: #{_mlpnet_forward_impl.1} parent=1 // pred_check_branch
      %92 = sbr.rel (0) target = $region37
    $region36: #{_mlpnet_forward_impl.1} parent=1 // pred_region
      %93 = dma.done [#allocation5], 16384
    $region37: #{_mlpnet_forward_impl.1} parent=1 // pred_fallthru
      _
    // Predicated region
    $region38: #{_mlpnet_forward_impl.1} parent=1 // pred_check
      _
    $region39: #{_mlpnet_forward_impl.1} parent=1 // pred_check_branch
      %95 = sbr.rel (0) target = $region41
    $region40: #{_mlpnet_forward_impl.1} parent=1 // pred_region
      %96 = dma.done [#allocation8], 16384
    $region41: #{_mlpnet_forward_impl.1} parent=1 // pred_fallthru
      _
    // Predicated region
    $region42: #{_mlpnet_forward_impl.1} parent=1 // pred_check
      _
    $region43: #{_mlpnet_forward_impl.1} parent=1 // pred_check_branch
      %98 = sbr.rel (0) target = $region45
    $region44: #{_mlpnet_forward_impl.1} parent=1 // pred_region
      %99 = dma.done [#allocation8], 4096
    $region45: #{_mlpnet_forward_impl.1} parent=1 // pred_fallthru
      _
    // Predicated region
    $region46: #{_mlpnet_forward_impl.1} parent=1 // pred_check
      _
    $region47: #{_mlpnet_forward_impl.1} parent=1 // pred_check_branch
      %101 = sbr.rel (0) target = $region49
    $region48: #{_mlpnet_forward_impl.1} parent=1 // pred_region
      %102 = dma.done [#allocation11], 512
    $region49: #{_mlpnet_forward_impl.1} parent=1 // pred_fallthru
      _
    %v104 = vld [vmem:[#allocation10] ss:$8 sm:$0xf]
    %s105 = scalar_lea.vmem [#allocation10], 1
    %v106 = vld [vmem:[%s105] ss:$8 sm:$0xf]
    %s107 = scalar_lea.vmem [#allocation10], 2
    %v108 = vld [vmem:[%s107] ss:$8 sm:$0xf]
    %s109 = scalar_lea.vmem [#allocation10], 3
    %v110 = vld [vmem:[%s109] ss:$8 sm:$0xf]
    %s111 = scalar_lea.vmem [#allocation10], 4
    %v112 = vld [vmem:[%s111] ss:$8 sm:$0xf]
    %v113 = vld [vmem:[#allocation10 + $0x5] ss:$0 sm:$0xff]
    %v114 = vld [vmem:[#allocation2] sm:$0xff]
    %v115 = vld [vmem:[#allocation2 + $0x8] sm:$0xff]
    %v116 = vld [vmem:[#allocation2 + $0x10] sm:$0xff]
    %v117 = vld [vmem:[#allocation2 + $0x18] sm:$0xff]
    %v118 = vld [vmem:[#allocation2 + $0x20] sm:$0xff]
    %v119 = vld [vmem:[#allocation2 + $0x28] sm:$0xff]
    %v120 = vld [vmem:[#allocation2 + $0x30] sm:$0xff]
    %v121 = vld [vmem:[#allocation2 + $0x38] sm:$0xff]
    %v122 = vld [vmem:[#allocation2 + $0x40] sm:$0xff]
    %v123 = vld [vmem:[#allocation2 + $0x48] sm:$0xff]
    %v124 = vld [vmem:[#allocation2 + $0x50] sm:$0xff]
    %v125 = vld [vmem:[#allocation2 + $0x58] sm:$0xff]
    %v126 = vld [vmem:[#allocation2 + $0x60] sm:$0xff]
    %v127 = vld [vmem:[#allocation2 + $0x68] sm:$0xff]
    %v128 = vld [vmem:[#allocation2 + $0x70] sm:$0xff]
    %v129 = vld [vmem:[#allocation2 + $0x78] sm:$0xff]
    %v130 = vld [vmem:[#allocation2 + $0x80] sm:$0xff]
    %v131 = vld [vmem:[#allocation2 + $0x88] sm:$0xff]
    %v132 = vld [vmem:[#allocation2 + $0x90] sm:$0xff]
    %v133 = vld [vmem:[#allocation2 + $0x98] sm:$0xff]
    %v134 = vld [vmem:[#allocation2 + $0xa0] sm:$0xff]
    %v135 = vld [vmem:[#allocation2 + $0xa8] sm:$0xff]
    %v136 = vld [vmem:[#allocation2 + $0xb0] sm:$0xff]
    %v137 = vld [vmem:[#allocation2 + $0xb8] sm:$0xff]
    %v138 = vld [vmem:[#allocation2 + $0xc0] sm:$0xff]
    %v139 = vld [vmem:[#allocation2 + $0xc8] sm:$0xff]
    %v140 = vld [vmem:[#allocation2 + $0xd0] sm:$0xff]
    %v141 = vld [vmem:[#allocation2 + $0xd8] sm:$0xff]
    %v142 = vld [vmem:[#allocation2 + $0xe0] sm:$0xff]
    %v143 = vld [vmem:[#allocation2 + $0xe8] sm:$0xff]
    %v144 = vld [vmem:[#allocation2 + $0xf0] sm:$0xff]
    %v145 = vld [vmem:[#allocation2 + $0xf8] sm:$0xff]
    %v146 = vpack.c.bf16 %v115, %v114
    %v147 = vpack.c.bf16 %v117, %v116
    %v148 = vpack.c.bf16 %v119, %v118
    %v149 = vpack.c.bf16 %v121, %v120
    %v150 = vpack.c.bf16 %v123, %v122
    %v151 = vpack.c.bf16 %v125, %v124
    %v152 = vpack.c.bf16 %v127, %v126
    %v153 = vpack.c.bf16 %v129, %v128
    %v154 = vpack.c.bf16 %v131, %v130
    %v155 = vpack.c.bf16 %v133, %v132
    %v156 = vpack.c.bf16 %v135, %v134
    %v157 = vpack.c.bf16 %v137, %v136
    %v158 = vpack.c.bf16 %v139, %v138
    %v159 = vpack.c.bf16 %v141, %v140
    %v160 = vpack.c.bf16 %v143, %v142
    %v161 = vpack.c.bf16 %v145, %v144
    %v162 = vld [vmem:[#allocation4] sm:$0xff]
    %v163 = vld [vmem:[#allocation4 + $0x8] sm:$0xff]
    %v164 = vld [vmem:[#allocation4 + $0x10] sm:$0xff]
    %v165 = vld [vmem:[#allocation4 + $0x18] sm:$0xff]
    %v166 = vld [vmem:[#allocation4 + $0x20] sm:$0xff]
    %v167 = vld [vmem:[#allocation4 + $0x28] sm:$0xff]
    %v168 = vld [vmem:[#allocation4 + $0x30] sm:$0xff]
    %v169 = vld [vmem:[#allocation4 + $0x38] sm:$0xff]
    %v170 = vld [vmem:[#allocation4 + $0x40] sm:$0xff]
    %v171 = vld [vmem:[#allocation4 + $0x48] sm:$0xff]
    %v172 = vld [vmem:[#allocation4 + $0x50] sm:$0xff]
    %v173 = vld [vmem:[#allocation4 + $0x58] sm:$0xff]
    %v174 = vld [vmem:[#allocation4 + $0x60] sm:$0xff]
    %v175 = vld [vmem:[#allocation4 + $0x68] sm:$0xff]
    %v176 = vld [vmem:[#allocation4 + $0x70] sm:$0xff]
    %v177 = vld [vmem:[#allocation4 + $0x78] sm:$0xff]
    %v178 = vld [vmem:[#allocation4 + $0x80] sm:$0xff]
    %v179 = vld [vmem:[#allocation4 + $0x88] sm:$0xff]
    %v180 = vld [vmem:[#allocation4 + $0x90] sm:$0xff]
    %v181 = vld [vmem:[#allocation4 + $0x98] sm:$0xff]
    %v182 = vld [vmem:[#allocation4 + $0xa0] sm:$0xff]
    %v183 = vld [vmem:[#allocation4 + $0xa8] sm:$0xff]
    %v184 = vld [vmem:[#allocation4 + $0xb0] sm:$0xff]
    %v185 = vld [vmem:[#allocation4 + $0xb8] sm:$0xff]
    %v186 = vld [vmem:[#allocation4 + $0xc0] sm:$0xff]
    %v187 = vld [vmem:[#allocation4 + $0xc8] sm:$0xff]
    %v188 = vld [vmem:[#allocation4 + $0xd0] sm:$0xff]
    %v189 = vld [vmem:[#allocation4 + $0xd8] sm:$0xff]
    %v190 = vld [vmem:[#allocation4 + $0xe0] sm:$0xff]
    %v191 = vld [vmem:[#allocation4 + $0xe8] sm:$0xff]
    %v192 = vld [vmem:[#allocation4 + $0xf0] sm:$0xff]
    %v193 = vld [vmem:[#allocation4 + $0xf8] sm:$0xff]
    %v195 = vlaneseq
    %v196 = vshrl.u32 %v195, 7
    %v197 = vsub.s32 0, %v196
    %v198 = vrot.slane %v104, %v197
    %v199 = vlaneseq
    %v200 = vshrl.u32 %v199, 7
    %v201 = vsub.s32 1, %v200
    %v202 = vrot.slane %v104, %v201
    %v203 = vlaneseq
    %v204 = vshrl.u32 %v203, 7
    %v205 = vsub.s32 2, %v204
    %v206 = vrot.slane %v104, %v205
    %v207 = vlaneseq
    %v208 = vshrl.u32 %v207, 7
    %v209 = vsub.s32 3, %v208
    %v210 = vrot.slane %v104, %v209
    %v247 = vunpack.c.l.b16 %v162
    %v248 = vunpack.c.h.b16 %v162
    %v249 = vunpack.c.l.b16 %v163
    %v250 = vunpack.c.h.b16 %v163
    %v251 = vunpack.c.l.b16 %v164
    %v252 = vunpack.c.h.b16 %v164
    %v253 = vunpack.c.l.b16 %v165
    %v254 = vunpack.c.h.b16 %v165
    %v255 = vunpack.c.l.b16 %v166
    %v256 = vunpack.c.h.b16 %v166
    %v257 = vunpack.c.l.b16 %v167
    %v258 = vunpack.c.h.b16 %v167
    %v259 = vunpack.c.l.b16 %v168
    %v260 = vunpack.c.h.b16 %v168
    %v261 = vunpack.c.l.b16 %v169
    %v262 = vunpack.c.h.b16 %v169
    %v263 = vunpack.c.l.b16 %v170
    %v264 = vunpack.c.h.b16 %v170
    %v265 = vunpack.c.l.b16 %v171
    %v266 = vunpack.c.h.b16 %v171
    %v267 = vunpack.c.l.b16 %v172
    %v268 = vunpack.c.h.b16 %v172
    %v269 = vunpack.c.l.b16 %v173
    %v270 = vunpack.c.h.b16 %v173
    %v271 = vunpack.c.l.b16 %v174
    %v272 = vunpack.c.h.b16 %v174
    %v273 = vunpack.c.l.b16 %v175
    %v274 = vunpack.c.h.b16 %v175
    %v275 = vunpack.c.l.b16 %v176
    %v276 = vunpack.c.h.b16 %v176
    %v277 = vunpack.c.l.b16 %v177
    %v278 = vunpack.c.h.b16 %v177
    %v279 = vunpack.c.l.b16 %v178
    %v280 = vunpack.c.h.b16 %v178
    %v281 = vunpack.c.l.b16 %v179
    %v282 = vunpack.c.h.b16 %v179
    %v283 = vunpack.c.l.b16 %v180
    %v284 = vunpack.c.h.b16 %v180
    %v285 = vunpack.c.l.b16 %v181
    %v286 = vunpack.c.h.b16 %v181
    %v287 = vunpack.c.l.b16 %v182
    %v288 = vunpack.c.h.b16 %v182
    %v289 = vunpack.c.l.b16 %v183
    %v290 = vunpack.c.h.b16 %v183
    %v291 = vunpack.c.l.b16 %v184
    %v292 = vunpack.c.h.b16 %v184
    %v293 = vunpack.c.l.b16 %v185
    %v294 = vunpack.c.h.b16 %v185
    %v295 = vunpack.c.l.b16 %v186
    %v296 = vunpack.c.h.b16 %v186
    %v297 = vunpack.c.l.b16 %v187
    %v298 = vunpack.c.h.b16 %v187
    %v299 = vunpack.c.l.b16 %v188
    %v300 = vunpack.c.h.b16 %v188
    %v301 = vunpack.c.l.b16 %v189
    %v302 = vunpack.c.h.b16 %v189
    %v303 = vunpack.c.l.b16 %v190
    %v304 = vunpack.c.h.b16 %v190
    %v305 = vunpack.c.l.b16 %v191
    %v306 = vunpack.c.h.b16 %v191
    %v307 = vunpack.c.l.b16 %v192
    %v308 = vunpack.c.h.b16 %v192
    %v309 = vunpack.c.l.b16 %v193
    %v310 = vunpack.c.h.b16 %v193
    %v311 = vpack.c.b16 %v251, %v247
    %v312 = vpack.c.b16 %v252, %v248
    %v313 = vpack.c.b16 %v253, %v249
    %v314 = vpack.c.b16 %v254, %v250
    %v315 = vpack.c.b16 %v259, %v255
    %v316 = vpack.c.b16 %v260, %v256
    %v317 = vpack.c.b16 %v261, %v257
    %v318 = vpack.c.b16 %v262, %v258
    %v319 = vpack.c.b16 %v267, %v263
    %v320 = vpack.c.b16 %v268, %v264
    %v321 = vpack.c.b16 %v269, %v265
    %v322 = vpack.c.b16 %v270, %v266
    %v323 = vpack.c.b16 %v275, %v271
    %v324 = vpack.c.b16 %v276, %v272
    %v325 = vpack.c.b16 %v277, %v273
    %v326 = vpack.c.b16 %v278, %v274
    %v327 = vpack.c.b16 %v283, %v279
    %v328 = vpack.c.b16 %v284, %v280
    %v329 = vpack.c.b16 %v285, %v281
    %v330 = vpack.c.b16 %v286, %v282
    %v331 = vpack.c.b16 %v291, %v287
    %v332 = vpack.c.b16 %v292, %v288
    %v333 = vpack.c.b16 %v293, %v289
    %v334 = vpack.c.b16 %v294, %v290
    %v335 = vpack.c.b16 %v299, %v295
    %v336 = vpack.c.b16 %v300, %v296
    %v337 = vpack.c.b16 %v301, %v297
    %v338 = vpack.c.b16 %v302, %v298
    %v339 = vpack.c.b16 %v307, %v303
    %v340 = vpack.c.b16 %v308, %v304
    %v341 = vpack.c.b16 %v309, %v305
    %v342 = vpack.c.b16 %v310, %v306
    %375 = vmatprep.subr.bf16.mxu0 %v312
    %376 = vmatpush1.bf16.msra.mxu0 %v311
    %377 = vmatprep.subr.bf16.mxu0 %v316
    %378 = vmatpush1.bf16.msra.mxu0 %v315
    %379 = vmatprep.subr.bf16.mxu0 %v320
    %380 = vmatpush1.bf16.msra.mxu0 %v319
    %381 = vmatprep.subr.bf16.mxu0 %v324
    %382 = vmatpush1.bf16.msra.mxu0 %v323
    %383 = vmatprep.subr.bf16.mxu0 %v328
    %384 = vmatpush1.bf16.msra.mxu0 %v327
    %385 = vmatprep.subr.bf16.mxu0 %v332
    %386 = vmatpush1.bf16.msra.mxu0 %v331
    %387 = vmatprep.subr.bf16.mxu0 %v336
    %388 = vmatpush1.bf16.msra.mxu0 %v335
    %389 = vmatprep.subr.bf16.mxu0 %v340
    %390 = vmatpush1.bf16.msra.mxu0 %v339
    %391 = vmatprep.subr.bf16.mxu0 0
    %392 = vmatpush1.bf16.msra.mxu0 0
    %393 = vmatprep.subr.bf16.mxu0 0
    %394 = vmatpush1.bf16.msra.mxu0 0
    %395 = vmatprep.subr.bf16.mxu0 0
    %396 = vmatpush1.bf16.msra.mxu0 0
    %397 = vmatprep.subr.bf16.mxu0 0
    %398 = vmatpush1.bf16.msra.mxu0 0
    %399 = vmatprep.subr.bf16.mxu0 0
    %400 = vmatpush1.bf16.msra.mxu0 0
    %401 = vmatprep.subr.bf16.mxu0 0
    %402 = vmatpush1.bf16.msra.mxu0 0
    %403 = vmatprep.subr.bf16.mxu0 0
    %404 = vmatpush1.bf16.msra.mxu0 0
    %405 = vmatprep.subr.bf16.mxu0 0
    %406 = vmatpush1.bf16.msra.mxu0 0
    %407 = vmatprep.mubr.bf16.mxu0 0
    %408 = vmatmul.mubr.bf16.gmra.mrb[0].mxu0 %v146
    %v409 = vpop.f32.mrb[0].mxu0
    %v410 = vadd.f32 %v198, %v409
    %v411 = vpop.f32.mrb[0].mxu0
    %v412 = vadd.f32 %v202, %v411
    %v413 = vpop.f32.mrb[0].mxu0
    %v414 = vadd.f32 %v198, %v413
    %v415 = vpop.f32.mrb[0].mxu0
    %v416 = vadd.f32 %v202, %v415
    %417 = vmatprep.mubr.bf16.mxu0 0
    %418 = vmatmul.mubr.bf16.gmra.mrb[0].mxu0 %v147
    %v419 = vpop.f32.mrb[0].mxu0
    %v420 = vadd.f32 %v198, %v419
    %v421 = vpop.f32.mrb[0].mxu0
    %v422 = vadd.f32 %v202, %v421
    %v423 = vpop.f32.mrb[0].mxu0
    %v424 = vadd.f32 %v198, %v423
    %v425 = vpop.f32.mrb[0].mxu0
    %v426 = vadd.f32 %v202, %v425
    %427 = vmatprep.mubr.bf16.mxu0 0
    %428 = vmatmul.mubr.bf16.gmra.mrb[0].mxu0 %v148
    %v429 = vpop.f32.mrb[0].mxu0
    %v430 = vadd.f32 %v198, %v429
    %v431 = vpop.f32.mrb[0].mxu0
    %v432 = vadd.f32 %v202, %v431
    %v433 = vpop.f32.mrb[0].mxu0
    %v434 = vadd.f32 %v198, %v433
    %v435 = vpop.f32.mrb[0].mxu0
    %v436 = vadd.f32 %v202, %v435
    %437 = vmatprep.mubr.bf16.mxu0 0
    %438 = vmatmul.mubr.bf16.gmra.mrb[0].mxu0 %v149
    %v439 = vpop.f32.mrb[0].mxu0
    %v440 = vadd.f32 %v198, %v439
    %v441 = vpop.f32.mrb[0].mxu0
    %v442 = vadd.f32 %v202, %v441
    %v443 = vpop.f32.mrb[0].mxu0
    %v444 = vadd.f32 %v198, %v443
    %v445 = vpop.f32.mrb[0].mxu0
    %v446 = vadd.f32 %v202, %v445
    %447 = vmatprep.mubr.bf16.mxu0 0
    %448 = vmatmul.mubr.bf16.gmra.mrb[0].mxu0 %v150
    %v449 = vpop.f32.mrb[0].mxu0
    %v450 = vadd.f32 %v198, %v449
    %v451 = vpop.f32.mrb[0].mxu0
    %v452 = vadd.f32 %v202, %v451
    %v453 = vpop.f32.mrb[0].mxu0
    %v454 = vadd.f32 %v198, %v453
    %v455 = vpop.f32.mrb[0].mxu0
    %v456 = vadd.f32 %v202, %v455
    %457 = vmatprep.mubr.bf16.mxu0 0
    %458 = vmatmul.mubr.bf16.gmra.mrb[0].mxu0 %v151
    %v459 = vpop.f32.mrb[0].mxu0
    %v460 = vadd.f32 %v198, %v459
    %v461 = vpop.f32.mrb[0].mxu0
    %v462 = vadd.f32 %v202, %v461
    %v463 = vpop.f32.mrb[0].mxu0
    %v464 = vadd.f32 %v198, %v463
    %v465 = vpop.f32.mrb[0].mxu0
    %v466 = vadd.f32 %v202, %v465
    %467 = vmatprep.mubr.bf16.mxu0 0
    %468 = vmatmul.mubr.bf16.gmra.mrb[0].mxu0 %v152
    %v469 = vpop.f32.mrb[0].mxu0
    %v470 = vadd.f32 %v198, %v469
    %v471 = vpop.f32.mrb[0].mxu0
    %v472 = vadd.f32 %v202, %v471
    %v473 = vpop.f32.mrb[0].mxu0
    %v474 = vadd.f32 %v198, %v473
    %v475 = vpop.f32.mrb[0].mxu0
    %v476 = vadd.f32 %v202, %v475
    %477 = vmatprep.mubr.bf16.mxu0 0
    %478 = vmatmul.mubr.bf16.gmra.mrb[0].mxu0 %v153
    %v479 = vpop.f32.mrb[0].mxu0
    %v480 = vadd.f32 %v198, %v479
    %v481 = vpop.f32.mrb[0].mxu0
    %v482 = vadd.f32 %v202, %v481
    %v483 = vpop.f32.mrb[0].mxu0
    %v484 = vadd.f32 %v198, %v483
    %v485 = vpop.f32.mrb[0].mxu0
    %v486 = vadd.f32 %v202, %v485
    %487 = vmatprep.mubr.bf16.mxu0 0
    %488 = vmatmul.mubr.bf16.gmra.mrb[0].mxu0 %v154
    %v489 = vpop.f32.mrb[0].mxu0
    %v490 = vadd.f32 %v198, %v489
    %v491 = vpop.f32.mrb[0].mxu0
    %v492 = vadd.f32 %v202, %v491
    %v493 = vpop.f32.mrb[0].mxu0
    %v494 = vadd.f32 %v198, %v493
    %v495 = vpop.f32.mrb[0].mxu0
    %v496 = vadd.f32 %v202, %v495
    %497 = vmatprep.mubr.bf16.mxu0 0
    %498 = vmatmul.mubr.bf16.gmra.mrb[0].mxu0 %v155
    %v499 = vpop.f32.mrb[0].mxu0
    %v500 = vadd.f32 %v198, %v499
    %v501 = vpop.f32.mrb[0].mxu0
    %v502 = vadd.f32 %v202, %v501
    %v503 = vpop.f32.mrb[0].mxu0
    %v504 = vadd.f32 %v198, %v503
    %v505 = vpop.f32.mrb[0].mxu0
    %v506 = vadd.f32 %v202, %v505
    %507 = vmatprep.mubr.bf16.mxu0 0
    %508 = vmatmul.mubr.bf16.gmra.mrb[0].mxu0 %v156
    %v509 = vpop.f32.mrb[0].mxu0
    %v510 = vadd.f32 %v198, %v509
    %v511 = vpop.f32.mrb[0].mxu0
    %v512 = vadd.f32 %v202, %v511
    %v513 = vpop.f32.mrb[0].mxu0
    %v514 = vadd.f32 %v198, %v513
    %v515 = vpop.f32.mrb[0].mxu0
    %v516 = vadd.f32 %v202, %v515
    %517 = vmatprep.mubr.bf16.mxu0 0
    %518 = vmatmul.mubr.bf16.gmra.mrb[0].mxu0 %v157
    %v519 = vpop.f32.mrb[0].mxu0
    %v520 = vadd.f32 %v198, %v519
    %v521 = vpop.f32.mrb[0].mxu0
    %v522 = vadd.f32 %v202, %v521
    %v523 = vpop.f32.mrb[0].mxu0
    %v524 = vadd.f32 %v198, %v523
    %v525 = vpop.f32.mrb[0].mxu0
    %v526 = vadd.f32 %v202, %v525
    %527 = vmatprep.mubr.bf16.mxu0 0
    %528 = vmatmul.mubr.bf16.gmra.mrb[0].mxu0 %v158
    %v529 = vpop.f32.mrb[0].mxu0
    %v530 = vadd.f32 %v198, %v529
    %v531 = vpop.f32.mrb[0].mxu0
    %v532 = vadd.f32 %v202, %v531
    %v533 = vpop.f32.mrb[0].mxu0
    %v534 = vadd.f32 %v198, %v533
    %v535 = vpop.f32.mrb[0].mxu0
    %v536 = vadd.f32 %v202, %v535
    %537 = vmatprep.mubr.bf16.mxu0 0
    %538 = vmatmul.mubr.bf16.gmra.mrb[0].mxu0 %v159
    %v539 = vpop.f32.mrb[0].mxu0
    %v540 = vadd.f32 %v198, %v539
    %v541 = vpop.f32.mrb[0].mxu0
    %v542 = vadd.f32 %v202, %v541
    %v543 = vpop.f32.mrb[0].mxu0
    %v544 = vadd.f32 %v198, %v543
    %v545 = vpop.f32.mrb[0].mxu0
    %v546 = vadd.f32 %v202, %v545
    %547 = vmatprep.mubr.bf16.mxu0 0
    %548 = vmatmul.mubr.bf16.gmra.mrb[0].mxu0 %v160
    %v549 = vpop.f32.mrb[0].mxu0
    %v550 = vadd.f32 %v198, %v549
    %v551 = vpop.f32.mrb[0].mxu0
    %v552 = vadd.f32 %v202, %v551
    %v553 = vpop.f32.mrb[0].mxu0
    %v554 = vadd.f32 %v198, %v553
    %v555 = vpop.f32.mrb[0].mxu0
    %v556 = vadd.f32 %v202, %v555
    %557 = vmatprep.mubr.bf16.mxu0 0
    %558 = vmatmul.mubr.bf16.gmra.mrb[0].mxu0 %v161
    %v559 = vpop.f32.mrb[0].mxu0
    %v560 = vadd.f32 %v198, %v559
    %v561 = vpop.f32.mrb[0].mxu0
    %v562 = vadd.f32 %v202, %v561
    %v563 = vpop.f32.mrb[0].mxu0
    %v564 = vadd.f32 %v198, %v563
    %v565 = vpop.f32.mrb[0].mxu0
    %v566 = vadd.f32 %v202, %v565
    %567 = vdwg.mxu0
    %568 = vmatprep.subr.bf16.mxu0 %v314
    %569 = vmatpush1.bf16.msra.mxu0 %v313
    %570 = vmatprep.subr.bf16.mxu0 %v318
    %571 = vmatpush1.bf16.msra.mxu0 %v317
    %572 = vmatprep.subr.bf16.mxu0 %v322
    %573 = vmatpush1.bf16.msra.mxu0 %v321
    %574 = vmatprep.subr.bf16.mxu0 %v326
    %575 = vmatpush1.bf16.msra.mxu0 %v325
    %576 = vmatprep.subr.bf16.mxu0 %v330
    %577 = vmatpush1.bf16.msra.mxu0 %v329
    %578 = vmatprep.subr.bf16.mxu0 %v334
    %579 = vmatpush1.bf16.msra.mxu0 %v333
    %580 = vmatprep.subr.bf16.mxu0 %v338
    %581 = vmatpush1.bf16.msra.mxu0 %v337
    %582 = vmatprep.subr.bf16.mxu0 %v342
    %583 = vmatpush1.bf16.msra.mxu0 %v341
    %584 = vmatprep.subr.bf16.mxu0 0
    %585 = vmatpush1.bf16.msra.mxu0 0
    %586 = vmatprep.subr.bf16.mxu0 0
    %587 = vmatpush1.bf16.msra.mxu0 0
    %588 = vmatprep.subr.bf16.mxu0 0
    %589 = vmatpush1.bf16.msra.mxu0 0
    %590 = vmatprep.subr.bf16.mxu0 0
    %591 = vmatpush1.bf16.msra.mxu0 0
    %592 = vmatprep.subr.bf16.mxu0 0
    %593 = vmatpush1.bf16.msra.mxu0 0
    %594 = vmatprep.subr.bf16.mxu0 0
    %595 = vmatpush1.bf16.msra.mxu0 0
    %596 = vmatprep.subr.bf16.mxu0 0
    %597 = vmatpush1.bf16.msra.mxu0 0
    %598 = vmatprep.subr.bf16.mxu0 0
    %599 = vmatpush1.bf16.msra.mxu0 0
    %600 = vmatprep.mubr.bf16.mxu0 0
    %601 = vmatmul.mubr.bf16.gmra.mrb[0].mxu0 %v146
    %v602 = vpop.f32.mrb[0].mxu0
    %v603 = vadd.f32 %v206, %v602
    %v604 = vpop.f32.mrb[0].mxu0
    %v605 = vadd.f32 %v210, %v604
    %v606 = vpop.f32.mrb[0].mxu0
    %v607 = vadd.f32 %v206, %v606
    %v608 = vpop.f32.mrb[0].mxu0
    %v609 = vadd.f32 %v210, %v608
    %610 = vmatprep.mubr.bf16.mxu0 0
    %611 = vmatmul.mubr.bf16.gmra.mrb[0].mxu0 %v147
    %v612 = vpop.f32.mrb[0].mxu0
    %v613 = vadd.f32 %v206, %v612
    %v614 = vpop.f32.mrb[0].mxu0
    %v615 = vadd.f32 %v210, %v614
    %v616 = vpop.f32.mrb[0].mxu0
    %v617 = vadd.f32 %v206, %v616
    %v618 = vpop.f32.mrb[0].mxu0
    %v619 = vadd.f32 %v210, %v618
    %620 = vmatprep.mubr.bf16.mxu0 0
    %621 = vmatmul.mubr.bf16.gmra.mrb[0].mxu0 %v148
    %v622 = vpop.f32.mrb[0].mxu0
    %v623 = vadd.f32 %v206, %v622
    %v624 = vpop.f32.mrb[0].mxu0
    %v625 = vadd.f32 %v210, %v624
    %v626 = vpop.f32.mrb[0].mxu0
    %v627 = vadd.f32 %v206, %v626
    %v628 = vpop.f32.mrb[0].mxu0
    %v629 = vadd.f32 %v210, %v628
    %630 = vmatprep.mubr.bf16.mxu0 0
    %631 = vmatmul.mubr.bf16.gmra.mrb[0].mxu0 %v149
    %v632 = vpop.f32.mrb[0].mxu0
    %v633 = vadd.f32 %v206, %v632
    %v634 = vpop.f32.mrb[0].mxu0
    %v635 = vadd.f32 %v210, %v634
    %v636 = vpop.f32.mrb[0].mxu0
    %v637 = vadd.f32 %v206, %v636
    %v638 = vpop.f32.mrb[0].mxu0
    %v639 = vadd.f32 %v210, %v638
    %640 = vmatprep.mubr.bf16.mxu0 0
    %641 = vmatmul.mubr.bf16.gmra.mrb[0].mxu0 %v150
    %v642 = vpop.f32.mrb[0].mxu0
    %v643 = vadd.f32 %v206, %v642
    %v644 = vpop.f32.mrb[0].mxu0
    %v645 = vadd.f32 %v210, %v644
    %v646 = vpop.f32.mrb[0].mxu0
    %v647 = vadd.f32 %v206, %v646
    %v648 = vpop.f32.mrb[0].mxu0
    %v649 = vadd.f32 %v210, %v648
    %650 = vmatprep.mubr.bf16.mxu0 0
    %651 = vmatmul.mubr.bf16.gmra.mrb[0].mxu0 %v151
    %v652 = vpop.f32.mrb[0].mxu0
    %v653 = vadd.f32 %v206, %v652
    %v654 = vpop.f32.mrb[0].mxu0
    %v655 = vadd.f32 %v210, %v654
    %v656 = vpop.f32.mrb[0].mxu0
    %v657 = vadd.f32 %v206, %v656
    %v658 = vpop.f32.mrb[0].mxu0
    %v659 = vadd.f32 %v210, %v658
    %660 = vmatprep.mubr.bf16.mxu0 0
    %661 = vmatmul.mubr.bf16.gmra.mrb[0].mxu0 %v152
    %v662 = vpop.f32.mrb[0].mxu0
    %v663 = vadd.f32 %v206, %v662
    %v664 = vpop.f32.mrb[0].mxu0
    %v665 = vadd.f32 %v210, %v664
    %v666 = vpop.f32.mrb[0].mxu0
    %v667 = vadd.f32 %v206, %v666
    %v668 = vpop.f32.mrb[0].mxu0
    %v669 = vadd.f32 %v210, %v668
    %670 = vmatprep.mubr.bf16.mxu0 0
    %671 = vmatmul.mubr.bf16.gmra.mrb[0].mxu0 %v153
    %v672 = vpop.f32.mrb[0].mxu0
    %v673 = vadd.f32 %v206, %v672
    %v674 = vpop.f32.mrb[0].mxu0
    %v675 = vadd.f32 %v210, %v674
    %v676 = vpop.f32.mrb[0].mxu0
    %v677 = vadd.f32 %v206, %v676
    %v678 = vpop.f32.mrb[0].mxu0
    %v679 = vadd.f32 %v210, %v678
    %680 = vmatprep.mubr.bf16.mxu0 0
    %681 = vmatmul.mubr.bf16.gmra.mrb[0].mxu0 %v154
    %v682 = vpop.f32.mrb[0].mxu0
    %v683 = vadd.f32 %v206, %v682
    %v684 = vpop.f32.mrb[0].mxu0
    %v685 = vadd.f32 %v210, %v684
    %v686 = vpop.f32.mrb[0].mxu0
    %v687 = vadd.f32 %v206, %v686
    %v688 = vpop.f32.mrb[0].mxu0
    %v689 = vadd.f32 %v210, %v688
    %690 = vmatprep.mubr.bf16.mxu0 0
    %691 = vmatmul.mubr.bf16.gmra.mrb[0].mxu0 %v155
    %v692 = vpop.f32.mrb[0].mxu0
    %v693 = vadd.f32 %v206, %v692
    %v694 = vpop.f32.mrb[0].mxu0
    %v695 = vadd.f32 %v210, %v694
    %v696 = vpop.f32.mrb[0].mxu0
    %v697 = vadd.f32 %v206, %v696
    %v698 = vpop.f32.mrb[0].mxu0
    %v699 = vadd.f32 %v210, %v698
    %700 = vmatprep.mubr.bf16.mxu0 0
    %701 = vmatmul.mubr.bf16.gmra.mrb[0].mxu0 %v156
    %v702 = vpop.f32.mrb[0].mxu0
    %v703 = vadd.f32 %v206, %v702
    %v704 = vpop.f32.mrb[0].mxu0
    %v705 = vadd.f32 %v210, %v704
    %v706 = vpop.f32.mrb[0].mxu0
    %v707 = vadd.f32 %v206, %v706
    %v708 = vpop.f32.mrb[0].mxu0
    %v709 = vadd.f32 %v210, %v708
    %710 = vmatprep.mubr.bf16.mxu0 0
    %711 = vmatmul.mubr.bf16.gmra.mrb[0].mxu0 %v157
    %v712 = vpop.f32.mrb[0].mxu0
    %v713 = vadd.f32 %v206, %v712
    %v714 = vpop.f32.mrb[0].mxu0
    %v715 = vadd.f32 %v210, %v714
    %v716 = vpop.f32.mrb[0].mxu0
    %v717 = vadd.f32 %v206, %v716
    %v718 = vpop.f32.mrb[0].mxu0
    %v719 = vadd.f32 %v210, %v718
    %720 = vmatprep.mubr.bf16.mxu0 0
    %721 = vmatmul.mubr.bf16.gmra.mrb[0].mxu0 %v158
    %v722 = vpop.f32.mrb[0].mxu0
    %v723 = vadd.f32 %v206, %v722
    %v724 = vpop.f32.mrb[0].mxu0
    %v725 = vadd.f32 %v210, %v724
    %v726 = vpop.f32.mrb[0].mxu0
    %v727 = vadd.f32 %v206, %v726
    %v728 = vpop.f32.mrb[0].mxu0
    %v729 = vadd.f32 %v210, %v728
    %730 = vmatprep.mubr.bf16.mxu0 0
    %731 = vmatmul.mubr.bf16.gmra.mrb[0].mxu0 %v159
    %v732 = vpop.f32.mrb[0].mxu0
    %v733 = vadd.f32 %v206, %v732
    %v734 = vpop.f32.mrb[0].mxu0
    %v735 = vadd.f32 %v210, %v734
    %v736 = vpop.f32.mrb[0].mxu0
    %v737 = vadd.f32 %v206, %v736
    %v738 = vpop.f32.mrb[0].mxu0
    %v739 = vadd.f32 %v210, %v738
    %740 = vmatprep.mubr.bf16.mxu0 0
    %741 = vmatmul.mubr.bf16.gmra.mrb[0].mxu0 %v160
    %v742 = vpop.f32.mrb[0].mxu0
    %v743 = vadd.f32 %v206, %v742
    %v744 = vpop.f32.mrb[0].mxu0
    %v745 = vadd.f32 %v210, %v744
    %v746 = vpop.f32.mrb[0].mxu0
    %v747 = vadd.f32 %v206, %v746
    %v748 = vpop.f32.mrb[0].mxu0
    %v749 = vadd.f32 %v210, %v748
    %750 = vmatprep.mubr.bf16.mxu0 0
    %751 = vmatmul.mubr.bf16.gmra.mrb[0].mxu0 %v161
    %v752 = vpop.f32.mrb[0].mxu0
    %v753 = vadd.f32 %v206, %v752
    %v754 = vpop.f32.mrb[0].mxu0
    %v755 = vadd.f32 %v210, %v754
    %v756 = vpop.f32.mrb[0].mxu0
    %v757 = vadd.f32 %v206, %v756
    %v758 = vpop.f32.mrb[0].mxu0
    %v759 = vadd.f32 %v210, %v758
    %760 = vdwg.mxu0
    %v761 = vmax.f32 %v410, 0.0
    %v762 = vmax.f32 %v412, 0.0
    %v763 = vmax.f32 %v603, 0.0
    %v764 = vmax.f32 %v605, 0.0
    %v765 = vmax.f32 %v414, 0.0
    %v766 = vmax.f32 %v416, 0.0
    %v767 = vmax.f32 %v607, 0.0
    %v768 = vmax.f32 %v609, 0.0
    %v769 = vmax.f32 %v420, 0.0
    %v770 = vmax.f32 %v422, 0.0
    %v771 = vmax.f32 %v613, 0.0
    %v772 = vmax.f32 %v615, 0.0
    %v773 = vmax.f32 %v424, 0.0
    %v774 = vmax.f32 %v426, 0.0
    %v775 = vmax.f32 %v617, 0.0
    %v776 = vmax.f32 %v619, 0.0
    %v777 = vmax.f32 %v430, 0.0
    %v778 = vmax.f32 %v432, 0.0
    %v779 = vmax.f32 %v623, 0.0
    %v780 = vmax.f32 %v625, 0.0
    %v781 = vmax.f32 %v434, 0.0
    %v782 = vmax.f32 %v436, 0.0
    %v783 = vmax.f32 %v627, 0.0
    %v784 = vmax.f32 %v629, 0.0
    %v785 = vmax.f32 %v440, 0.0
    %v786 = vmax.f32 %v442, 0.0
    %v787 = vmax.f32 %v633, 0.0
    %v788 = vmax.f32 %v635, 0.0
    %v789 = vmax.f32 %v444, 0.0
    %v790 = vmax.f32 %v446, 0.0
    %v791 = vmax.f32 %v637, 0.0
    %v792 = vmax.f32 %v639, 0.0
    %v793 = vmax.f32 %v450, 0.0
    %v794 = vmax.f32 %v452, 0.0
    %v795 = vmax.f32 %v643, 0.0
    %v796 = vmax.f32 %v645, 0.0
    %v797 = vmax.f32 %v454, 0.0
    %v798 = vmax.f32 %v456, 0.0
    %v799 = vmax.f32 %v647, 0.0
    %v800 = vmax.f32 %v649, 0.0
    %v801 = vmax.f32 %v460, 0.0
    %v802 = vmax.f32 %v462, 0.0
    %v803 = vmax.f32 %v653, 0.0
    %v804 = vmax.f32 %v655, 0.0
    %v805 = vmax.f32 %v464, 0.0
    %v806 = vmax.f32 %v466, 0.0
    %v807 = vmax.f32 %v657, 0.0
    %v808 = vmax.f32 %v659, 0.0
    %v809 = vmax.f32 %v470, 0.0
    %v810 = vmax.f32 %v472, 0.0
    %v811 = vmax.f32 %v663, 0.0
    %v812 = vmax.f32 %v665, 0.0
    %v813 = vmax.f32 %v474, 0.0
    %v814 = vmax.f32 %v476, 0.0
    %v815 = vmax.f32 %v667, 0.0
    %v816 = vmax.f32 %v669, 0.0
    %v817 = vmax.f32 %v480, 0.0
    %v818 = vmax.f32 %v482, 0.0
    %v819 = vmax.f32 %v673, 0.0
    %v820 = vmax.f32 %v675, 0.0
    %v821 = vmax.f32 %v484, 0.0
    %v822 = vmax.f32 %v486, 0.0
    %v823 = vmax.f32 %v677, 0.0
    %v824 = vmax.f32 %v679, 0.0
    %v825 = vmax.f32 %v490, 0.0
    %v826 = vmax.f32 %v492, 0.0
    %v827 = vmax.f32 %v683, 0.0
    %v828 = vmax.f32 %v685, 0.0
    %v829 = vmax.f32 %v494, 0.0
    %v830 = vmax.f32 %v496, 0.0
    %v831 = vmax.f32 %v687, 0.0
    %v832 = vmax.f32 %v689, 0.0
    %v833 = vmax.f32 %v500, 0.0
    %v834 = vmax.f32 %v502, 0.0
    %v835 = vmax.f32 %v693, 0.0
    %v836 = vmax.f32 %v695, 0.0
    %v837 = vmax.f32 %v504, 0.0
    %v838 = vmax.f32 %v506, 0.0
    %v839 = vmax.f32 %v697, 0.0
    %v840 = vmax.f32 %v699, 0.0
    %v841 = vmax.f32 %v510, 0.0
    %v842 = vmax.f32 %v512, 0.0
    %v843 = vmax.f32 %v703, 0.0
    %v844 = vmax.f32 %v705, 0.0
    %v845 = vmax.f32 %v514, 0.0
    %v846 = vmax.f32 %v516, 0.0
    %v847 = vmax.f32 %v707, 0.0
    %v848 = vmax.f32 %v709, 0.0
    %v849 = vmax.f32 %v520, 0.0
    %v850 = vmax.f32 %v522, 0.0
    %v851 = vmax.f32 %v713, 0.0
    %v852 = vmax.f32 %v715, 0.0
    %v853 = vmax.f32 %v524, 0.0
    %v854 = vmax.f32 %v526, 0.0
    %v855 = vmax.f32 %v717, 0.0
    %v856 = vmax.f32 %v719, 0.0
    %v857 = vmax.f32 %v530, 0.0
    %v858 = vmax.f32 %v532, 0.0
    %v859 = vmax.f32 %v723, 0.0
    %v860 = vmax.f32 %v725, 0.0
    %v861 = vmax.f32 %v534, 0.0
    %v862 = vmax.f32 %v536, 0.0
    %v863 = vmax.f32 %v727, 0.0
    %v864 = vmax.f32 %v729, 0.0
    %v865 = vmax.f32 %v540, 0.0
    %v866 = vmax.f32 %v542, 0.0
    %v867 = vmax.f32 %v733, 0.0
    %v868 = vmax.f32 %v735, 0.0
    %v869 = vmax.f32 %v544, 0.0
    %v870 = vmax.f32 %v546, 0.0
    %v871 = vmax.f32 %v737, 0.0
    %v872 = vmax.f32 %v739, 0.0
    %v873 = vmax.f32 %v550, 0.0
    %v874 = vmax.f32 %v552, 0.0
    %v875 = vmax.f32 %v743, 0.0
    %v876 = vmax.f32 %v745, 0.0
    %v877 = vmax.f32 %v554, 0.0
    %v878 = vmax.f32 %v556, 0.0
    %v879 = vmax.f32 %v747, 0.0
    %v880 = vmax.f32 %v749, 0.0
    %v881 = vmax.f32 %v560, 0.0
    %v882 = vmax.f32 %v562, 0.0
    %v883 = vmax.f32 %v753, 0.0
    %v884 = vmax.f32 %v755, 0.0
    %v885 = vmax.f32 %v564, 0.0
    %v886 = vmax.f32 %v566, 0.0
    %v887 = vmax.f32 %v757, 0.0
    %v888 = vmax.f32 %v759, 0.0
    %v890 = vlaneseq
    %v891 = vshrl.u32 %v890, 7
    %v892 = vsub.s32 0, %v891
    %v893 = vrot.slane %v106, %v892
    %v894 = vlaneseq
    %v895 = vshrl.u32 %v894, 7
    %v896 = vsub.s32 1, %v895
    %v897 = vrot.slane %v106, %v896
    %v898 = vlaneseq
    %v899 = vshrl.u32 %v898, 7
    %v900 = vsub.s32 2, %v899
    %v901 = vrot.slane %v106, %v900
    %v902 = vlaneseq
    %v903 = vshrl.u32 %v902, 7
    %v904 = vsub.s32 3, %v903
    %v905 = vrot.slane %v106, %v904
    %v910 = vmul.f32 %v761, %v893
    %v911 = vmul.f32 %v762, %v897
    %v912 = vmul.f32 %v763, %v901
    %v913 = vmul.f32 %v764, %v905
    %v914 = vmul.f32 %v765, %v893
    %v915 = vmul.f32 %v766, %v897
    %v916 = vmul.f32 %v767, %v901
    %v917 = vmul.f32 %v768, %v905
    %v918 = vmul.f32 %v769, %v893
    %v919 = vmul.f32 %v770, %v897
    %v920 = vmul.f32 %v771, %v901
    %v921 = vmul.f32 %v772, %v905
    %v922 = vmul.f32 %v773, %v893
    %v923 = vmul.f32 %v774, %v897
    %v924 = vmul.f32 %v775, %v901
    %v925 = vmul.f32 %v776, %v905
    %v926 = vmul.f32 %v777, %v893
    %v927 = vmul.f32 %v778, %v897
    %v928 = vmul.f32 %v779, %v901
    %v929 = vmul.f32 %v780, %v905
    %v930 = vmul.f32 %v781, %v893
    %v931 = vmul.f32 %v782, %v897
    %v932 = vmul.f32 %v783, %v901
    %v933 = vmul.f32 %v784, %v905
    %v934 = vmul.f32 %v785, %v893
    %v935 = vmul.f32 %v786, %v897
    %v936 = vmul.f32 %v787, %v901
    %v937 = vmul.f32 %v788, %v905
    %v938 = vmul.f32 %v789, %v893
    %v939 = vmul.f32 %v790, %v897
    %v940 = vmul.f32 %v791, %v901
    %v941 = vmul.f32 %v792, %v905
    %v942 = vmul.f32 %v793, %v893
    %v943 = vmul.f32 %v794, %v897
    %v944 = vmul.f32 %v795, %v901
    %v945 = vmul.f32 %v796, %v905
    %v946 = vmul.f32 %v797, %v893
    %v947 = vmul.f32 %v798, %v897
    %v948 = vmul.f32 %v799, %v901
    %v949 = vmul.f32 %v800, %v905
    %v950 = vmul.f32 %v801, %v893
    %v951 = vmul.f32 %v802, %v897
    %v952 = vmul.f32 %v803, %v901
    %v953 = vmul.f32 %v804, %v905
    %v954 = vmul.f32 %v805, %v893
    %v955 = vmul.f32 %v806, %v897
    %v956 = vmul.f32 %v807, %v901
    %v957 = vmul.f32 %v808, %v905
    %v958 = vmul.f32 %v809, %v893
    %v959 = vmul.f32 %v810, %v897
    %v960 = vmul.f32 %v811, %v901
    %v961 = vmul.f32 %v812, %v905
    %v962 = vmul.f32 %v813, %v893
    %v963 = vmul.f32 %v814, %v897
    %v964 = vmul.f32 %v815, %v901
    %v965 = vmul.f32 %v816, %v905
    %v966 = vmul.f32 %v817, %v893
    %v967 = vmul.f32 %v818, %v897
    %v968 = vmul.f32 %v819, %v901
    %v969 = vmul.f32 %v820, %v905
    %v970 = vmul.f32 %v821, %v893
    %v971 = vmul.f32 %v822, %v897
    %v972 = vmul.f32 %v823, %v901
    %v973 = vmul.f32 %v824, %v905
    %v974 = vmul.f32 %v825, %v893
    %v975 = vmul.f32 %v826, %v897
    %v976 = vmul.f32 %v827, %v901
    %v977 = vmul.f32 %v828, %v905
    %v978 = vmul.f32 %v829, %v893
    %v979 = vmul.f32 %v830, %v897
    %v980 = vmul.f32 %v831, %v901
    %v981 = vmul.f32 %v832, %v905
    %v982 = vmul.f32 %v833, %v893
    %v983 = vmul.f32 %v834, %v897
    %v984 = vmul.f32 %v835, %v901
    %v985 = vmul.f32 %v836, %v905
    %v986 = vmul.f32 %v837, %v893
    %v987 = vmul.f32 %v838, %v897
    %v988 = vmul.f32 %v839, %v901
    %v989 = vmul.f32 %v840, %v905
    %v990 = vmul.f32 %v841, %v893
    %v991 = vmul.f32 %v842, %v897
    %v992 = vmul.f32 %v843, %v901
    %v993 = vmul.f32 %v844, %v905
    %v994 = vmul.f32 %v845, %v893
    %v995 = vmul.f32 %v846, %v897
    %v996 = vmul.f32 %v847, %v901
    %v997 = vmul.f32 %v848, %v905
    %v998 = vmul.f32 %v849, %v893
    %v999 = vmul.f32 %v850, %v897
    %v1000 = vmul.f32 %v851, %v901
    %v1001 = vmul.f32 %v852, %v905
    %v1002 = vmul.f32 %v853, %v893
    %v1003 = vmul.f32 %v854, %v897
    %v1004 = vmul.f32 %v855, %v901
    %v1005 = vmul.f32 %v856, %v905
    %v1006 = vmul.f32 %v857, %v893
    %v1007 = vmul.f32 %v858, %v897
    %v1008 = vmul.f32 %v859, %v901
    %v1009 = vmul.f32 %v860, %v905
    %v1010 = vmul.f32 %v861, %v893
    %v1011 = vmul.f32 %v862, %v897
    %v1012 = vmul.f32 %v863, %v901
    %v1013 = vmul.f32 %v864, %v905
    %v1014 = vmul.f32 %v865, %v893
    %v1015 = vmul.f32 %v866, %v897
    %v1016 = vmul.f32 %v867, %v901
    %v1017 = vmul.f32 %v868, %v905
    %v1018 = vmul.f32 %v869, %v893
    %v1019 = vmul.f32 %v870, %v897
    %v1020 = vmul.f32 %v871, %v901
    %v1021 = vmul.f32 %v872, %v905
    %v1022 = vmul.f32 %v873, %v893
    %v1023 = vmul.f32 %v874, %v897
    %v1024 = vmul.f32 %v875, %v901
    %v1025 = vmul.f32 %v876, %v905
    %v1026 = vmul.f32 %v877, %v893
    %v1027 = vmul.f32 %v878, %v897
    %v1028 = vmul.f32 %v879, %v901
    %v1029 = vmul.f32 %v880, %v905
    %v1030 = vmul.f32 %v881, %v893
    %v1031 = vmul.f32 %v882, %v897
    %v1032 = vmul.f32 %v883, %v901
    %v1033 = vmul.f32 %v884, %v905
    %v1034 = vmul.f32 %v885, %v893
    %v1035 = vmul.f32 %v886, %v897
    %v1036 = vmul.f32 %v887, %v901
    %v1037 = vmul.f32 %v888, %v905
    %v1039 = vlaneseq
    %v1040 = vshrl.u32 %v1039, 7
    %v1041 = vsub.s32 0, %v1040
    %v1042 = vrot.slane %v108, %v1041
    %v1043 = vlaneseq
    %v1044 = vshrl.u32 %v1043, 7
    %v1045 = vsub.s32 1, %v1044
    %v1046 = vrot.slane %v108, %v1045
    %v1047 = vlaneseq
    %v1048 = vshrl.u32 %v1047, 7
    %v1049 = vsub.s32 2, %v1048
    %v1050 = vrot.slane %v108, %v1049
    %v1051 = vlaneseq
    %v1052 = vshrl.u32 %v1051, 7
    %v1053 = vsub.s32 3, %v1052
    %v1054 = vrot.slane %v108, %v1053
    %v1059 = vadd.f32 %v910, %v1042
    %v1060 = vadd.f32 %v911, %v1046
    %v1061 = vadd.f32 %v912, %v1050
    %v1062 = vadd.f32 %v913, %v1054
    %v1063 = vadd.f32 %v914, %v1042
    %v1064 = vadd.f32 %v915, %v1046
    %v1065 = vadd.f32 %v916, %v1050
    %v1066 = vadd.f32 %v917, %v1054
    %v1067 = vadd.f32 %v918, %v1042
    %v1068 = vadd.f32 %v919, %v1046
    %v1069 = vadd.f32 %v920, %v1050
    %v1070 = vadd.f32 %v921, %v1054
    %v1071 = vadd.f32 %v922, %v1042
    %v1072 = vadd.f32 %v923, %v1046
    %v1073 = vadd.f32 %v924, %v1050
    %v1074 = vadd.f32 %v925, %v1054
    %v1075 = vadd.f32 %v926, %v1042
    %v1076 = vadd.f32 %v927, %v1046
    %v1077 = vadd.f32 %v928, %v1050
    %v1078 = vadd.f32 %v929, %v1054
    %v1079 = vadd.f32 %v930, %v1042
    %v1080 = vadd.f32 %v931, %v1046
    %v1081 = vadd.f32 %v932, %v1050
    %v1082 = vadd.f32 %v933, %v1054
    %v1083 = vadd.f32 %v934, %v1042
    %v1084 = vadd.f32 %v935, %v1046
    %v1085 = vadd.f32 %v936, %v1050
    %v1086 = vadd.f32 %v937, %v1054
    %v1087 = vadd.f32 %v938, %v1042
    %v1088 = vadd.f32 %v939, %v1046
    %v1089 = vadd.f32 %v940, %v1050
    %v1090 = vadd.f32 %v941, %v1054
    %v1091 = vadd.f32 %v942, %v1042
    %v1092 = vadd.f32 %v943, %v1046
    %v1093 = vadd.f32 %v944, %v1050
    %v1094 = vadd.f32 %v945, %v1054
    %v1095 = vadd.f32 %v946, %v1042
    %v1096 = vadd.f32 %v947, %v1046
    %v1097 = vadd.f32 %v948, %v1050
    %v1098 = vadd.f32 %v949, %v1054
    %v1099 = vadd.f32 %v950, %v1042
    %v1100 = vadd.f32 %v951, %v1046
    %v1101 = vadd.f32 %v952, %v1050
    %v1102 = vadd.f32 %v953, %v1054
    %v1103 = vadd.f32 %v954, %v1042
    %v1104 = vadd.f32 %v955, %v1046
    %v1105 = vadd.f32 %v956, %v1050
    %v1106 = vadd.f32 %v957, %v1054
    %v1107 = vadd.f32 %v958, %v1042
    %v1108 = vadd.f32 %v959, %v1046
    %v1109 = vadd.f32 %v960, %v1050
    %v1110 = vadd.f32 %v961, %v1054
    %v1111 = vadd.f32 %v962, %v1042
    %v1112 = vadd.f32 %v963, %v1046
    %v1113 = vadd.f32 %v964, %v1050
    %v1114 = vadd.f32 %v965, %v1054
    %v1115 = vadd.f32 %v966, %v1042
    %v1116 = vadd.f32 %v967, %v1046
    %v1117 = vadd.f32 %v968, %v1050
    %v1118 = vadd.f32 %v969, %v1054
    %v1119 = vadd.f32 %v970, %v1042
    %v1120 = vadd.f32 %v971, %v1046
    %v1121 = vadd.f32 %v972, %v1050
    %v1122 = vadd.f32 %v973, %v1054
    %v1123 = vadd.f32 %v974, %v1042
    %v1124 = vadd.f32 %v975, %v1046
    %v1125 = vadd.f32 %v976, %v1050
    %v1126 = vadd.f32 %v977, %v1054
    %v1127 = vadd.f32 %v978, %v1042
    %v1128 = vadd.f32 %v979, %v1046
    %v1129 = vadd.f32 %v980, %v1050
    %v1130 = vadd.f32 %v981, %v1054
    %v1131 = vadd.f32 %v982, %v1042
    %v1132 = vadd.f32 %v983, %v1046
    %v1133 = vadd.f32 %v984, %v1050
    %v1134 = vadd.f32 %v985, %v1054
    %v1135 = vadd.f32 %v986, %v1042
    %v1136 = vadd.f32 %v987, %v1046
    %v1137 = vadd.f32 %v988, %v1050
    %v1138 = vadd.f32 %v989, %v1054
    %v1139 = vadd.f32 %v990, %v1042
    %v1140 = vadd.f32 %v991, %v1046
    %v1141 = vadd.f32 %v992, %v1050
    %v1142 = vadd.f32 %v993, %v1054
    %v1143 = vadd.f32 %v994, %v1042
    %v1144 = vadd.f32 %v995, %v1046
    %v1145 = vadd.f32 %v996, %v1050
    %v1146 = vadd.f32 %v997, %v1054
    %v1147 = vadd.f32 %v998, %v1042
    %v1148 = vadd.f32 %v999, %v1046
    %v1149 = vadd.f32 %v1000, %v1050
    %v1150 = vadd.f32 %v1001, %v1054
    %v1151 = vadd.f32 %v1002, %v1042
    %v1152 = vadd.f32 %v1003, %v1046
    %v1153 = vadd.f32 %v1004, %v1050
    %v1154 = vadd.f32 %v1005, %v1054
    %v1155 = vadd.f32 %v1006, %v1042
    %v1156 = vadd.f32 %v1007, %v1046
    %v1157 = vadd.f32 %v1008, %v1050
    %v1158 = vadd.f32 %v1009, %v1054
    %v1159 = vadd.f32 %v1010, %v1042
    %v1160 = vadd.f32 %v1011, %v1046
    %v1161 = vadd.f32 %v1012, %v1050
    %v1162 = vadd.f32 %v1013, %v1054
    %v1163 = vadd.f32 %v1014, %v1042
    %v1164 = vadd.f32 %v1015, %v1046
    %v1165 = vadd.f32 %v1016, %v1050
    %v1166 = vadd.f32 %v1017, %v1054
    %v1167 = vadd.f32 %v1018, %v1042
    %v1168 = vadd.f32 %v1019, %v1046
    %v1169 = vadd.f32 %v1020, %v1050
    %v1170 = vadd.f32 %v1021, %v1054
    %v1171 = vadd.f32 %v1022, %v1042
    %v1172 = vadd.f32 %v1023, %v1046
    %v1173 = vadd.f32 %v1024, %v1050
    %v1174 = vadd.f32 %v1025, %v1054
    %v1175 = vadd.f32 %v1026, %v1042
    %v1176 = vadd.f32 %v1027, %v1046
    %v1177 = vadd.f32 %v1028, %v1050
    %v1178 = vadd.f32 %v1029, %v1054
    %v1179 = vadd.f32 %v1030, %v1042
    %v1180 = vadd.f32 %v1031, %v1046
    %v1181 = vadd.f32 %v1032, %v1050
    %v1182 = vadd.f32 %v1033, %v1054
    %v1183 = vadd.f32 %v1034, %v1042
    %v1184 = vadd.f32 %v1035, %v1046
    %v1185 = vadd.f32 %v1036, %v1050
    %v1186 = vadd.f32 %v1037, %v1054
    %v1187 = vmax.f32 %v1059, 0.0
    %v1188 = vmax.f32 %v1060, 0.0
    %v1189 = vmax.f32 %v1061, 0.0
    %v1190 = vmax.f32 %v1062, 0.0
    %v1191 = vmax.f32 %v1063, 0.0
    %v1192 = vmax.f32 %v1064, 0.0
    %v1193 = vmax.f32 %v1065, 0.0
    %v1194 = vmax.f32 %v1066, 0.0
    %v1195 = vmax.f32 %v1067, 0.0
    %v1196 = vmax.f32 %v1068, 0.0
    %v1197 = vmax.f32 %v1069, 0.0
    %v1198 = vmax.f32 %v1070, 0.0
    %v1199 = vmax.f32 %v1071, 0.0
    %v1200 = vmax.f32 %v1072, 0.0
    %v1201 = vmax.f32 %v1073, 0.0
    %v1202 = vmax.f32 %v1074, 0.0
    %v1203 = vmax.f32 %v1075, 0.0
    %v1204 = vmax.f32 %v1076, 0.0
    %v1205 = vmax.f32 %v1077, 0.0
    %v1206 = vmax.f32 %v1078, 0.0
    %v1207 = vmax.f32 %v1079, 0.0
    %v1208 = vmax.f32 %v1080, 0.0
    %v1209 = vmax.f32 %v1081, 0.0
    %v1210 = vmax.f32 %v1082, 0.0
    %v1211 = vmax.f32 %v1083, 0.0
    %v1212 = vmax.f32 %v1084, 0.0
    %v1213 = vmax.f32 %v1085, 0.0
    %v1214 = vmax.f32 %v1086, 0.0
    %v1215 = vmax.f32 %v1087, 0.0
    %v1216 = vmax.f32 %v1088, 0.0
    %v1217 = vmax.f32 %v1089, 0.0
    %v1218 = vmax.f32 %v1090, 0.0
    %v1219 = vmax.f32 %v1091, 0.0
    %v1220 = vmax.f32 %v1092, 0.0
    %v1221 = vmax.f32 %v1093, 0.0
    %v1222 = vmax.f32 %v1094, 0.0
    %v1223 = vmax.f32 %v1095, 0.0
    %v1224 = vmax.f32 %v1096, 0.0
    %v1225 = vmax.f32 %v1097, 0.0
    %v1226 = vmax.f32 %v1098, 0.0
    %v1227 = vmax.f32 %v1099, 0.0
    %v1228 = vmax.f32 %v1100, 0.0
    %v1229 = vmax.f32 %v1101, 0.0
    %v1230 = vmax.f32 %v1102, 0.0
    %v1231 = vmax.f32 %v1103, 0.0
    %v1232 = vmax.f32 %v1104, 0.0
    %v1233 = vmax.f32 %v1105, 0.0
    %v1234 = vmax.f32 %v1106, 0.0
    %v1235 = vmax.f32 %v1107, 0.0
    %v1236 = vmax.f32 %v1108, 0.0
    %v1237 = vmax.f32 %v1109, 0.0
    %v1238 = vmax.f32 %v1110, 0.0
    %v1239 = vmax.f32 %v1111, 0.0
    %v1240 = vmax.f32 %v1112, 0.0
    %v1241 = vmax.f32 %v1113, 0.0
    %v1242 = vmax.f32 %v1114, 0.0
    %v1243 = vmax.f32 %v1115, 0.0
    %v1244 = vmax.f32 %v1116, 0.0
    %v1245 = vmax.f32 %v1117, 0.0
    %v1246 = vmax.f32 %v1118, 0.0
    %v1247 = vmax.f32 %v1119, 0.0
    %v1248 = vmax.f32 %v1120, 0.0
    %v1249 = vmax.f32 %v1121, 0.0
    %v1250 = vmax.f32 %v1122, 0.0
    %v1251 = vmax.f32 %v1123, 0.0
    %v1252 = vmax.f32 %v1124, 0.0
    %v1253 = vmax.f32 %v1125, 0.0
    %v1254 = vmax.f32 %v1126, 0.0
    %v1255 = vmax.f32 %v1127, 0.0
    %v1256 = vmax.f32 %v1128, 0.0
    %v1257 = vmax.f32 %v1129, 0.0
    %v1258 = vmax.f32 %v1130, 0.0
    %v1259 = vmax.f32 %v1131, 0.0
    %v1260 = vmax.f32 %v1132, 0.0
    %v1261 = vmax.f32 %v1133, 0.0
    %v1262 = vmax.f32 %v1134, 0.0
    %v1263 = vmax.f32 %v1135, 0.0
    %v1264 = vmax.f32 %v1136, 0.0
    %v1265 = vmax.f32 %v1137, 0.0
    %v1266 = vmax.f32 %v1138, 0.0
    %v1267 = vmax.f32 %v1139, 0.0
    %v1268 = vmax.f32 %v1140, 0.0
    %v1269 = vmax.f32 %v1141, 0.0
    %v1270 = vmax.f32 %v1142, 0.0
    %v1271 = vmax.f32 %v1143, 0.0
    %v1272 = vmax.f32 %v1144, 0.0
    %v1273 = vmax.f32 %v1145, 0.0
    %v1274 = vmax.f32 %v1146, 0.0
    %v1275 = vmax.f32 %v1147, 0.0
    %v1276 = vmax.f32 %v1148, 0.0
    %v1277 = vmax.f32 %v1149, 0.0
    %v1278 = vmax.f32 %v1150, 0.0
    %v1279 = vmax.f32 %v1151, 0.0
    %v1280 = vmax.f32 %v1152, 0.0
    %v1281 = vmax.f32 %v1153, 0.0
    %v1282 = vmax.f32 %v1154, 0.0
    %v1283 = vmax.f32 %v1155, 0.0
    %v1284 = vmax.f32 %v1156, 0.0
    %v1285 = vmax.f32 %v1157, 0.0
    %v1286 = vmax.f32 %v1158, 0.0
    %v1287 = vmax.f32 %v1159, 0.0
    %v1288 = vmax.f32 %v1160, 0.0
    %v1289 = vmax.f32 %v1161, 0.0
    %v1290 = vmax.f32 %v1162, 0.0
    %v1291 = vmax.f32 %v1163, 0.0
    %v1292 = vmax.f32 %v1164, 0.0
    %v1293 = vmax.f32 %v1165, 0.0
    %v1294 = vmax.f32 %v1166, 0.0
    %v1295 = vmax.f32 %v1167, 0.0
    %v1296 = vmax.f32 %v1168, 0.0
    %v1297 = vmax.f32 %v1169, 0.0
    %v1298 = vmax.f32 %v1170, 0.0
    %v1299 = vmax.f32 %v1171, 0.0
    %v1300 = vmax.f32 %v1172, 0.0
    %v1301 = vmax.f32 %v1173, 0.0
    %v1302 = vmax.f32 %v1174, 0.0
    %v1303 = vmax.f32 %v1175, 0.0
    %v1304 = vmax.f32 %v1176, 0.0
    %v1305 = vmax.f32 %v1177, 0.0
    %v1306 = vmax.f32 %v1178, 0.0
    %v1307 = vmax.f32 %v1179, 0.0
    %v1308 = vmax.f32 %v1180, 0.0
    %v1309 = vmax.f32 %v1181, 0.0
    %v1310 = vmax.f32 %v1182, 0.0
    %v1311 = vmax.f32 %v1183, 0.0
    %v1312 = vmax.f32 %v1184, 0.0
    %v1313 = vmax.f32 %v1185, 0.0
    %v1314 = vmax.f32 %v1186, 0.0
    %v1315 = vpack.c.bf16 %v1191, %v1187
    %v1316 = vpack.c.bf16 %v1192, %v1188
    %v1317 = vpack.c.bf16 %v1193, %v1189
    %v1318 = vpack.c.bf16 %v1194, %v1190
    %v1319 = vpack.c.bf16 %v1199, %v1195
    %v1320 = vpack.c.bf16 %v1200, %v1196
    %v1321 = vpack.c.bf16 %v1201, %v1197
    %v1322 = vpack.c.bf16 %v1202, %v1198
    %v1323 = vpack.c.bf16 %v1207, %v1203
    %v1324 = vpack.c.bf16 %v1208, %v1204
    %v1325 = vpack.c.bf16 %v1209, %v1205
    %v1326 = vpack.c.bf16 %v1210, %v1206
    %v1327 = vpack.c.bf16 %v1215, %v1211
    %v1328 = vpack.c.bf16 %v1216, %v1212
    %v1329 = vpack.c.bf16 %v1217, %v1213
    %v1330 = vpack.c.bf16 %v1218, %v1214
    %v1331 = vpack.c.bf16 %v1223, %v1219
    %v1332 = vpack.c.bf16 %v1224, %v1220
    %v1333 = vpack.c.bf16 %v1225, %v1221
    %v1334 = vpack.c.bf16 %v1226, %v1222
    %v1335 = vpack.c.bf16 %v1231, %v1227
    %v1336 = vpack.c.bf16 %v1232, %v1228
    %v1337 = vpack.c.bf16 %v1233, %v1229
    %v1338 = vpack.c.bf16 %v1234, %v1230
    %v1339 = vpack.c.bf16 %v1239, %v1235
    %v1340 = vpack.c.bf16 %v1240, %v1236
    %v1341 = vpack.c.bf16 %v1241, %v1237
    %v1342 = vpack.c.bf16 %v1242, %v1238
    %v1343 = vpack.c.bf16 %v1247, %v1243
    %v1344 = vpack.c.bf16 %v1248, %v1244
    %v1345 = vpack.c.bf16 %v1249, %v1245
    %v1346 = vpack.c.bf16 %v1250, %v1246
    %v1347 = vpack.c.bf16 %v1255, %v1251
    %v1348 = vpack.c.bf16 %v1256, %v1252
    %v1349 = vpack.c.bf16 %v1257, %v1253
    %v1350 = vpack.c.bf16 %v1258, %v1254
    %v1351 = vpack.c.bf16 %v1263, %v1259
    %v1352 = vpack.c.bf16 %v1264, %v1260
    %v1353 = vpack.c.bf16 %v1265, %v1261
    %v1354 = vpack.c.bf16 %v1266, %v1262
    %v1355 = vpack.c.bf16 %v1271, %v1267
    %v1356 = vpack.c.bf16 %v1272, %v1268
    %v1357 = vpack.c.bf16 %v1273, %v1269
    %v1358 = vpack.c.bf16 %v1274, %v1270
    %v1359 = vpack.c.bf16 %v1279, %v1275
    %v1360 = vpack.c.bf16 %v1280, %v1276
    %v1361 = vpack.c.bf16 %v1281, %v1277
    %v1362 = vpack.c.bf16 %v1282, %v1278
    %v1363 = vpack.c.bf16 %v1287, %v1283
    %v1364 = vpack.c.bf16 %v1288, %v1284
    %v1365 = vpack.c.bf16 %v1289, %v1285
    %v1366 = vpack.c.bf16 %v1290, %v1286
    %v1367 = vpack.c.bf16 %v1295, %v1291
    %v1368 = vpack.c.bf16 %v1296, %v1292
    %v1369 = vpack.c.bf16 %v1297, %v1293
    %v1370 = vpack.c.bf16 %v1298, %v1294
    %v1371 = vpack.c.bf16 %v1303, %v1299
    %v1372 = vpack.c.bf16 %v1304, %v1300
    %v1373 = vpack.c.bf16 %v1305, %v1301
    %v1374 = vpack.c.bf16 %v1306, %v1302
    %v1375 = vpack.c.bf16 %v1311, %v1307
    %v1376 = vpack.c.bf16 %v1312, %v1308
    %v1377 = vpack.c.bf16 %v1313, %v1309
    %v1378 = vpack.c.bf16 %v1314, %v1310
    %v1379 = vld [vmem:[#allocation6] sm:$0xff]
    %v1380 = vld [vmem:[#allocation6 + $0x8] sm:$0xff]
    %v1381 = vld [vmem:[#allocation6 + $0x10] sm:$0xff]
    %v1382 = vld [vmem:[#allocation6 + $0x18] sm:$0xff]
    %v1383 = vld [vmem:[#allocation6 + $0x20] sm:$0xff]
    %v1384 = vld [vmem:[#allocation6 + $0x28] sm:$0xff]
    %v1385 = vld [vmem:[#allocation6 + $0x30] sm:$0xff]
    %v1386 = vld [vmem:[#allocation6 + $0x38] sm:$0xff]
    %v1387 = vld [vmem:[#allocation6 + $0x40] sm:$0xff]
    %v1388 = vld [vmem:[#allocation6 + $0x48] sm:$0xff]
    %v1389 = vld [vmem:[#allocation6 + $0x50] sm:$0xff]
    %v1390 = vld [vmem:[#allocation6 + $0x58] sm:$0xff]
    %v1391 = vld [vmem:[#allocation6 + $0x60] sm:$0xff]
    %v1392 = vld [vmem:[#allocation6 + $0x68] sm:$0xff]
    %v1393 = vld [vmem:[#allocation6 + $0x70] sm:$0xff]
    %v1394 = vld [vmem:[#allocation6 + $0x78] sm:$0xff]
    %v1395 = vld [vmem:[#allocation6 + $0x80] sm:$0xff]
    %v1396 = vld [vmem:[#allocation6 + $0x88] sm:$0xff]
    %v1397 = vld [vmem:[#allocation6 + $0x90] sm:$0xff]
    %v1398 = vld [vmem:[#allocation6 + $0x98] sm:$0xff]
    %v1399 = vld [vmem:[#allocation6 + $0xa0] sm:$0xff]
    %v1400 = vld [vmem:[#allocation6 + $0xa8] sm:$0xff]
    %v1401 = vld [vmem:[#allocation6 + $0xb0] sm:$0xff]
    %v1402 = vld [vmem:[#allocation6 + $0xb8] sm:$0xff]
    %v1403 = vld [vmem:[#allocation6 + $0xc0] sm:$0xff]
    %v1404 = vld [vmem:[#allocation6 + $0xc8] sm:$0xff]
    %v1405 = vld [vmem:[#allocation6 + $0xd0] sm:$0xff]
    %v1406 = vld [vmem:[#allocation6 + $0xd8] sm:$0xff]
    %v1407 = vld [vmem:[#allocation6 + $0xe0] sm:$0xff]
    %v1408 = vld [vmem:[#allocation6 + $0xe8] sm:$0xff]
    %v1409 = vld [vmem:[#allocation6 + $0xf0] sm:$0xff]
    %v1410 = vld [vmem:[#allocation6 + $0xf8] sm:$0xff]
    %v1411 = vld [vmem:[#allocation6 + $0x100] sm:$0xff]
    %v1412 = vld [vmem:[#allocation6 + $0x108] sm:$0xff]
    %v1413 = vld [vmem:[#allocation6 + $0x110] sm:$0xff]
    %v1414 = vld [vmem:[#allocation6 + $0x118] sm:$0xff]
    %v1415 = vld [vmem:[#allocation6 + $0x120] sm:$0xff]
    %v1416 = vld [vmem:[#allocation6 + $0x128] sm:$0xff]
    %v1417 = vld [vmem:[#allocation6 + $0x130] sm:$0xff]
    %v1418 = vld [vmem:[#allocation6 + $0x138] sm:$0xff]
    %v1419 = vld [vmem:[#allocation6 + $0x140] sm:$0xff]
    %v1420 = vld [vmem:[#allocation6 + $0x148] sm:$0xff]
    %v1421 = vld [vmem:[#allocation6 + $0x150] sm:$0xff]
    %v1422 = vld [vmem:[#allocation6 + $0x158] sm:$0xff]
    %v1423 = vld [vmem:[#allocation6 + $0x160] sm:$0xff]
    %v1424 = vld [vmem:[#allocation6 + $0x168] sm:$0xff]
    %v1425 = vld [vmem:[#allocation6 + $0x170] sm:$0xff]
    %v1426 = vld [vmem:[#allocation6 + $0x178] sm:$0xff]
    %v1427 = vld [vmem:[#allocation6 + $0x180] sm:$0xff]
    %v1428 = vld [vmem:[#allocation6 + $0x188] sm:$0xff]
    %v1429 = vld [vmem:[#allocation6 + $0x190] sm:$0xff]
    %v1430 = vld [vmem:[#allocation6 + $0x198] sm:$0xff]
    %v1431 = vld [vmem:[#allocation6 + $0x1a0] sm:$0xff]
    %v1432 = vld [vmem:[#allocation6 + $0x1a8] sm:$0xff]
    %v1433 = vld [vmem:[#allocation6 + $0x1b0] sm:$0xff]
    %v1434 = vld [vmem:[#allocation6 + $0x1b8] sm:$0xff]
    %v1435 = vld [vmem:[#allocation6 + $0x1c0] sm:$0xff]
    %v1436 = vld [vmem:[#allocation6 + $0x1c8] sm:$0xff]
    %v1437 = vld [vmem:[#allocation6 + $0x1d0] sm:$0xff]
    %v1438 = vld [vmem:[#allocation6 + $0x1d8] sm:$0xff]
    %v1439 = vld [vmem:[#allocation6 + $0x1e0] sm:$0xff]
    %v1440 = vld [vmem:[#allocation6 + $0x1e8] sm:$0xff]
    %v1441 = vld [vmem:[#allocation6 + $0x1f0] sm:$0xff]
    %v1442 = vld [vmem:[#allocation6 + $0x1f8] sm:$0xff]
    %v1443 = vld [vmem:[#allocation6 + $0x200] sm:$0xff]
    %v1444 = vld [vmem:[#allocation6 + $0x208] sm:$0xff]
    %v1445 = vld [vmem:[#allocation6 + $0x210] sm:$0xff]
    %v1446 = vld [vmem:[#allocation6 + $0x218] sm:$0xff]
    %v1447 = vld [vmem:[#allocation6 + $0x220] sm:$0xff]
    %v1448 = vld [vmem:[#allocation6 + $0x228] sm:$0xff]
    %v1449 = vld [vmem:[#allocation6 + $0x230] sm:$0xff]
    %v1450 = vld [vmem:[#allocation6 + $0x238] sm:$0xff]
    %v1451 = vld [vmem:[#allocation6 + $0x240] sm:$0xff]
    %v1452 = vld [vmem:[#allocation6 + $0x248] sm:$0xff]
    %v1453 = vld [vmem:[#allocation6 + $0x250] sm:$0xff]
    %v1454 = vld [vmem:[#allocation6 + $0x258] sm:$0xff]
    %v1455 = vld [vmem:[#allocation6 + $0x260] sm:$0xff]
    %v1456 = vld [vmem:[#allocation6 + $0x268] sm:$0xff]
    %v1457 = vld [vmem:[#allocation6 + $0x270] sm:$0xff]
    %v1458 = vld [vmem:[#allocation6 + $0x278] sm:$0xff]
    %v1459 = vld [vmem:[#allocation6 + $0x280] sm:$0xff]
    %v1460 = vld [vmem:[#allocation6 + $0x288] sm:$0xff]
    %v1461 = vld [vmem:[#allocation6 + $0x290] sm:$0xff]
    %v1462 = vld [vmem:[#allocation6 + $0x298] sm:$0xff]
    %v1463 = vld [vmem:[#allocation6 + $0x2a0] sm:$0xff]
    %v1464 = vld [vmem:[#allocation6 + $0x2a8] sm:$0xff]
    %v1465 = vld [vmem:[#allocation6 + $0x2b0] sm:$0xff]
    %v1466 = vld [vmem:[#allocation6 + $0x2b8] sm:$0xff]
    %v1467 = vld [vmem:[#allocation6 + $0x2c0] sm:$0xff]
    %v1468 = vld [vmem:[#allocation6 + $0x2c8] sm:$0xff]
    %v1469 = vld [vmem:[#allocation6 + $0x2d0] sm:$0xff]
    %v1470 = vld [vmem:[#allocation6 + $0x2d8] sm:$0xff]
    %v1471 = vld [vmem:[#allocation6 + $0x2e0] sm:$0xff]
    %v1472 = vld [vmem:[#allocation6 + $0x2e8] sm:$0xff]
    %v1473 = vld [vmem:[#allocation6 + $0x2f0] sm:$0xff]
    %v1474 = vld [vmem:[#allocation6 + $0x2f8] sm:$0xff]
    %v1475 = vld [vmem:[#allocation6 + $0x300] sm:$0xff]
    %v1476 = vld [vmem:[#allocation6 + $0x308] sm:$0xff]
    %v1477 = vld [vmem:[#allocation6 + $0x310] sm:$0xff]
    %v1478 = vld [vmem:[#allocation6 + $0x318] sm:$0xff]
    %v1479 = vld [vmem:[#allocation6 + $0x320] sm:$0xff]
    %v1480 = vld [vmem:[#allocation6 + $0x328] sm:$0xff]
    %v1481 = vld [vmem:[#allocation6 + $0x330] sm:$0xff]
    %v1482 = vld [vmem:[#allocation6 + $0x338] sm:$0xff]
    %v1483 = vld [vmem:[#allocation6 + $0x340] sm:$0xff]
    %v1484 = vld [vmem:[#allocation6 + $0x348] sm:$0xff]
    %v1485 = vld [vmem:[#allocation6 + $0x350] sm:$0xff]
    %v1486 = vld [vmem:[#allocation6 + $0x358] sm:$0xff]
    %v1487 = vld [vmem:[#allocation6 + $0x360] sm:$0xff]
    %v1488 = vld [vmem:[#allocation6 + $0x368] sm:$0xff]
    %v1489 = vld [vmem:[#allocation6 + $0x370] sm:$0xff]
    %v1490 = vld [vmem:[#allocation6 + $0x378] sm:$0xff]
    %v1491 = vld [vmem:[#allocation6 + $0x380] sm:$0xff]
    %v1492 = vld [vmem:[#allocation6 + $0x388] sm:$0xff]
    %v1493 = vld [vmem:[#allocation6 + $0x390] sm:$0xff]
    %v1494 = vld [vmem:[#allocation6 + $0x398] sm:$0xff]
    %v1495 = vld [vmem:[#allocation6 + $0x3a0] sm:$0xff]
    %v1496 = vld [vmem:[#allocation6 + $0x3a8] sm:$0xff]
    %v1497 = vld [vmem:[#allocation6 + $0x3b0] sm:$0xff]
    %v1498 = vld [vmem:[#allocation6 + $0x3b8] sm:$0xff]
    %v1499 = vld [vmem:[#allocation6 + $0x3c0] sm:$0xff]
    %v1500 = vld [vmem:[#allocation6 + $0x3c8] sm:$0xff]
    %v1501 = vld [vmem:[#allocation6 + $0x3d0] sm:$0xff]
    %v1502 = vld [vmem:[#allocation6 + $0x3d8] sm:$0xff]
    %v1503 = vld [vmem:[#allocation6 + $0x3e0] sm:$0xff]
    %v1504 = vld [vmem:[#allocation6 + $0x3e8] sm:$0xff]
    %v1505 = vld [vmem:[#allocation6 + $0x3f0] sm:$0xff]
    %v1506 = vld [vmem:[#allocation6 + $0x3f8] sm:$0xff]
    %v1508 = vlaneseq
    %v1509 = vshrl.u32 %v1508, 7
    %v1510 = vsub.s32 0, %v1509
    %v1511 = vrot.slane %v110, %v1510
    %v1512 = vlaneseq
    %v1513 = vshrl.u32 %v1512, 7
    %v1514 = vsub.s32 1, %v1513
    %v1515 = vrot.slane %v110, %v1514
    %v1516 = vlaneseq
    %v1517 = vshrl.u32 %v1516, 7
    %v1518 = vsub.s32 2, %v1517
    %v1519 = vrot.slane %v110, %v1518
    %v1520 = vlaneseq
    %v1521 = vshrl.u32 %v1520, 7
    %v1522 = vsub.s32 3, %v1521
    %v1523 = vrot.slane %v110, %v1522
    %v1656 = vunpack.c.l.b16 %v1379
    %v1657 = vunpack.c.h.b16 %v1379
    %v1658 = vunpack.c.l.b16 %v1380
    %v1659 = vunpack.c.h.b16 %v1380
    %v1660 = vunpack.c.l.b16 %v1381
    %v1661 = vunpack.c.h.b16 %v1381
    %v1662 = vunpack.c.l.b16 %v1382
    %v1663 = vunpack.c.h.b16 %v1382
    %v1664 = vunpack.c.l.b16 %v1383
    %v1665 = vunpack.c.h.b16 %v1383
    %v1666 = vunpack.c.l.b16 %v1384
    %v1667 = vunpack.c.h.b16 %v1384
    %v1668 = vunpack.c.l.b16 %v1385
    %v1669 = vunpack.c.h.b16 %v1385
    %v1670 = vunpack.c.l.b16 %v1386
    %v1671 = vunpack.c.h.b16 %v1386
    %v1672 = vunpack.c.l.b16 %v1387
    %v1673 = vunpack.c.h.b16 %v1387
    %v1674 = vunpack.c.l.b16 %v1388
    %v1675 = vunpack.c.h.b16 %v1388
    %v1676 = vunpack.c.l.b16 %v1389
    %v1677 = vunpack.c.h.b16 %v1389
    %v1678 = vunpack.c.l.b16 %v1390
    %v1679 = vunpack.c.h.b16 %v1390
    %v1680 = vunpack.c.l.b16 %v1391
    %v1681 = vunpack.c.h.b16 %v1391
    %v1682 = vunpack.c.l.b16 %v1392
    %v1683 = vunpack.c.h.b16 %v1392
    %v1684 = vunpack.c.l.b16 %v1393
    %v1685 = vunpack.c.h.b16 %v1393
    %v1686 = vunpack.c.l.b16 %v1394
    %v1687 = vunpack.c.h.b16 %v1394
    %v1688 = vunpack.c.l.b16 %v1395
    %v1689 = vunpack.c.h.b16 %v1395
    %v1690 = vunpack.c.l.b16 %v1396
    %v1691 = vunpack.c.h.b16 %v1396
    %v1692 = vunpack.c.l.b16 %v1397
    %v1693 = vunpack.c.h.b16 %v1397
    %v1694 = vunpack.c.l.b16 %v1398
    %v1695 = vunpack.c.h.b16 %v1398
    %v1696 = vunpack.c.l.b16 %v1399
    %v1697 = vunpack.c.h.b16 %v1399
    %v1698 = vunpack.c.l.b16 %v1400
    %v1699 = vunpack.c.h.b16 %v1400
    %v1700 = vunpack.c.l.b16 %v1401
    %v1701 = vunpack.c.h.b16 %v1401
    %v1702 = vunpack.c.l.b16 %v1402
    %v1703 = vunpack.c.h.b16 %v1402
    %v1704 = vunpack.c.l.b16 %v1403
    %v1705 = vunpack.c.h.b16 %v1403
    %v1706 = vunpack.c.l.b16 %v1404
    %v1707 = vunpack.c.h.b16 %v1404
    %v1708 = vunpack.c.l.b16 %v1405
    %v1709 = vunpack.c.h.b16 %v1405
    %v1710 = vunpack.c.l.b16 %v1406
    %v1711 = vunpack.c.h.b16 %v1406
    %v1712 = vunpack.c.l.b16 %v1407
    %v1713 = vunpack.c.h.b16 %v1407
    %v1714 = vunpack.c.l.b16 %v1408
    %v1715 = vunpack.c.h.b16 %v1408
    %v1716 = vunpack.c.l.b16 %v1409
    %v1717 = vunpack.c.h.b16 %v1409
    %v1718 = vunpack.c.l.b16 %v1410
    %v1719 = vunpack.c.h.b16 %v1410
    %v1720 = vunpack.c.l.b16 %v1411
    %v1721 = vunpack.c.h.b16 %v1411
    %v1722 = vunpack.c.l.b16 %v1412
    %v1723 = vunpack.c.h.b16 %v1412
    %v1724 = vunpack.c.l.b16 %v1413
    %v1725 = vunpack.c.h.b16 %v1413
    %v1726 = vunpack.c.l.b16 %v1414
    %v1727 = vunpack.c.h.b16 %v1414
    %v1728 = vunpack.c.l.b16 %v1415
    %v1729 = vunpack.c.h.b16 %v1415
    %v1730 = vunpack.c.l.b16 %v1416
    %v1731 = vunpack.c.h.b16 %v1416
    %v1732 = vunpack.c.l.b16 %v1417
    %v1733 = vunpack.c.h.b16 %v1417
    %v1734 = vunpack.c.l.b16 %v1418
    %v1735 = vunpack.c.h.b16 %v1418
    %v1736 = vunpack.c.l.b16 %v1419
    %v1737 = vunpack.c.h.b16 %v1419
    %v1738 = vunpack.c.l.b16 %v1420
    %v1739 = vunpack.c.h.b16 %v1420
    %v1740 = vunpack.c.l.b16 %v1421
    %v1741 = vunpack.c.h.b16 %v1421
    %v1742 = vunpack.c.l.b16 %v1422
    %v1743 = vunpack.c.h.b16 %v1422
    %v1744 = vunpack.c.l.b16 %v1423
    %v1745 = vunpack.c.h.b16 %v1423
    %v1746 = vunpack.c.l.b16 %v1424
    %v1747 = vunpack.c.h.b16 %v1424
    %v1748 = vunpack.c.l.b16 %v1425
    %v1749 = vunpack.c.h.b16 %v1425
    %v1750 = vunpack.c.l.b16 %v1426
    %v1751 = vunpack.c.h.b16 %v1426
    %v1752 = vunpack.c.l.b16 %v1427
    %v1753 = vunpack.c.h.b16 %v1427
    %v1754 = vunpack.c.l.b16 %v1428
    %v1755 = vunpack.c.h.b16 %v1428
    %v1756 = vunpack.c.l.b16 %v1429
    %v1757 = vunpack.c.h.b16 %v1429
    %v1758 = vunpack.c.l.b16 %v1430
    %v1759 = vunpack.c.h.b16 %v1430
    %v1760 = vunpack.c.l.b16 %v1431
    %v1761 = vunpack.c.h.b16 %v1431
    %v1762 = vunpack.c.l.b16 %v1432
    %v1763 = vunpack.c.h.b16 %v1432
    %v1764 = vunpack.c.l.b16 %v1433
    %v1765 = vunpack.c.h.b16 %v1433
    %v1766 = vunpack.c.l.b16 %v1434
    %v1767 = vunpack.c.h.b16 %v1434
    %v1768 = vunpack.c.l.b16 %v1435
    %v1769 = vunpack.c.h.b16 %v1435
    %v1770 = vunpack.c.l.b16 %v1436
    %v1771 = vunpack.c.h.b16 %v1436
    %v1772 = vunpack.c.l.b16 %v1437
    %v1773 = vunpack.c.h.b16 %v1437
    %v1774 = vunpack.c.l.b16 %v1438
    %v1775 = vunpack.c.h.b16 %v1438
    %v1776 = vunpack.c.l.b16 %v1439
    %v1777 = vunpack.c.h.b16 %v1439
    %v1778 = vunpack.c.l.b16 %v1440
    %v1779 = vunpack.c.h.b16 %v1440
    %v1780 = vunpack.c.l.b16 %v1441
    %v1781 = vunpack.c.h.b16 %v1441
    %v1782 = vunpack.c.l.b16 %v1442
    %v1783 = vunpack.c.h.b16 %v1442
    %v1784 = vunpack.c.l.b16 %v1443
    %v1785 = vunpack.c.h.b16 %v1443
    %v1786 = vunpack.c.l.b16 %v1444
    %v1787 = vunpack.c.h.b16 %v1444
    %v1788 = vunpack.c.l.b16 %v1445
    %v1789 = vunpack.c.h.b16 %v1445
    %v1790 = vunpack.c.l.b16 %v1446
    %v1791 = vunpack.c.h.b16 %v1446
    %v1792 = vunpack.c.l.b16 %v1447
    %v1793 = vunpack.c.h.b16 %v1447
    %v1794 = vunpack.c.l.b16 %v1448
    %v1795 = vunpack.c.h.b16 %v1448
    %v1796 = vunpack.c.l.b16 %v1449
    %v1797 = vunpack.c.h.b16 %v1449
    %v1798 = vunpack.c.l.b16 %v1450
    %v1799 = vunpack.c.h.b16 %v1450
    %v1800 = vunpack.c.l.b16 %v1451
    %v1801 = vunpack.c.h.b16 %v1451
    %v1802 = vunpack.c.l.b16 %v1452
    %v1803 = vunpack.c.h.b16 %v1452
    %v1804 = vunpack.c.l.b16 %v1453
    %v1805 = vunpack.c.h.b16 %v1453
    %v1806 = vunpack.c.l.b16 %v1454
    %v1807 = vunpack.c.h.b16 %v1454
    %v1808 = vunpack.c.l.b16 %v1455
    %v1809 = vunpack.c.h.b16 %v1455
    %v1810 = vunpack.c.l.b16 %v1456
    %v1811 = vunpack.c.h.b16 %v1456
    %v1812 = vunpack.c.l.b16 %v1457
    %v1813 = vunpack.c.h.b16 %v1457
    %v1814 = vunpack.c.l.b16 %v1458
    %v1815 = vunpack.c.h.b16 %v1458
    %v1816 = vunpack.c.l.b16 %v1459
    %v1817 = vunpack.c.h.b16 %v1459
    %v1818 = vunpack.c.l.b16 %v1460
    %v1819 = vunpack.c.h.b16 %v1460
    %v1820 = vunpack.c.l.b16 %v1461
    %v1821 = vunpack.c.h.b16 %v1461
    %v1822 = vunpack.c.l.b16 %v1462
    %v1823 = vunpack.c.h.b16 %v1462
    %v1824 = vunpack.c.l.b16 %v1463
    %v1825 = vunpack.c.h.b16 %v1463
    %v1826 = vunpack.c.l.b16 %v1464
    %v1827 = vunpack.c.h.b16 %v1464
    %v1828 = vunpack.c.l.b16 %v1465
    %v1829 = vunpack.c.h.b16 %v1465
    %v1830 = vunpack.c.l.b16 %v1466
    %v1831 = vunpack.c.h.b16 %v1466
    %v1832 = vunpack.c.l.b16 %v1467
    %v1833 = vunpack.c.h.b16 %v1467
    %v1834 = vunpack.c.l.b16 %v1468
    %v1835 = vunpack.c.h.b16 %v1468
    %v1836 = vunpack.c.l.b16 %v1469
    %v1837 = vunpack.c.h.b16 %v1469
    %v1838 = vunpack.c.l.b16 %v1470
    %v1839 = vunpack.c.h.b16 %v1470
    %v1840 = vunpack.c.l.b16 %v1471
    %v1841 = vunpack.c.h.b16 %v1471
    %v1842 = vunpack.c.l.b16 %v1472
    %v1843 = vunpack.c.h.b16 %v1472
    %v1844 = vunpack.c.l.b16 %v1473
    %v1845 = vunpack.c.h.b16 %v1473
    %v1846 = vunpack.c.l.b16 %v1474
    %v1847 = vunpack.c.h.b16 %v1474
    %v1848 = vunpack.c.l.b16 %v1475
    %v1849 = vunpack.c.h.b16 %v1475
    %v1850 = vunpack.c.l.b16 %v1476
    %v1851 = vunpack.c.h.b16 %v1476
    %v1852 = vunpack.c.l.b16 %v1477
    %v1853 = vunpack.c.h.b16 %v1477
    %v1854 = vunpack.c.l.b16 %v1478
    %v1855 = vunpack.c.h.b16 %v1478
    %v1856 = vunpack.c.l.b16 %v1479
    %v1857 = vunpack.c.h.b16 %v1479
    %v1858 = vunpack.c.l.b16 %v1480
    %v1859 = vunpack.c.h.b16 %v1480
    %v1860 = vunpack.c.l.b16 %v1481
    %v1861 = vunpack.c.h.b16 %v1481
    %v1862 = vunpack.c.l.b16 %v1482
    %v1863 = vunpack.c.h.b16 %v1482
    %v1864 = vunpack.c.l.b16 %v1483
    %v1865 = vunpack.c.h.b16 %v1483
    %v1866 = vunpack.c.l.b16 %v1484
    %v1867 = vunpack.c.h.b16 %v1484
    %v1868 = vunpack.c.l.b16 %v1485
    %v1869 = vunpack.c.h.b16 %v1485
    %v1870 = vunpack.c.l.b16 %v1486
    %v1871 = vunpack.c.h.b16 %v1486
    %v1872 = vunpack.c.l.b16 %v1487
    %v1873 = vunpack.c.h.b16 %v1487
    %v1874 = vunpack.c.l.b16 %v1488
    %v1875 = vunpack.c.h.b16 %v1488
    %v1876 = vunpack.c.l.b16 %v1489
    %v1877 = vunpack.c.h.b16 %v1489
    %v1878 = vunpack.c.l.b16 %v1490
    %v1879 = vunpack.c.h.b16 %v1490
    %v1880 = vunpack.c.l.b16 %v1491
    %v1881 = vunpack.c.h.b16 %v1491
    %v1882 = vunpack.c.l.b16 %v1492
    %v1883 = vunpack.c.h.b16 %v1492
    %v1884 = vunpack.c.l.b16 %v1493
    %v1885 = vunpack.c.h.b16 %v1493
    %v1886 = vunpack.c.l.b16 %v1494
    %v1887 = vunpack.c.h.b16 %v1494
    %v1888 = vunpack.c.l.b16 %v1495
    %v1889 = vunpack.c.h.b16 %v1495
    %v1890 = vunpack.c.l.b16 %v1496
    %v1891 = vunpack.c.h.b16 %v1496
    %v1892 = vunpack.c.l.b16 %v1497
    %v1893 = vunpack.c.h.b16 %v1497
    %v1894 = vunpack.c.l.b16 %v1498
    %v1895 = vunpack.c.h.b16 %v1498
    %v1896 = vunpack.c.l.b16 %v1499
    %v1897 = vunpack.c.h.b16 %v1499
    %v1898 = vunpack.c.l.b16 %v1500
    %v1899 = vunpack.c.h.b16 %v1500
    %v1900 = vunpack.c.l.b16 %v1501
    %v1901 = vunpack.c.h.b16 %v1501
    %v1902 = vunpack.c.l.b16 %v1502
    %v1903 = vunpack.c.h.b16 %v1502
    %v1904 = vunpack.c.l.b16 %v1503
    %v1905 = vunpack.c.h.b16 %v1503
    %v1906 = vunpack.c.l.b16 %v1504
    %v1907 = vunpack.c.h.b16 %v1504
    %v1908 = vunpack.c.l.b16 %v1505
    %v1909 = vunpack.c.h.b16 %v1505
    %v1910 = vunpack.c.l.b16 %v1506
    %v1911 = vunpack.c.h.b16 %v1506
    %v1912 = vpack.c.b16 %v1660, %v1656
    %v1913 = vpack.c.b16 %v1661, %v1657
    %v1914 = vpack.c.b16 %v1662, %v1658
    %v1915 = vpack.c.b16 %v1663, %v1659
    %v1916 = vpack.c.b16 %v1668, %v1664
    %v1917 = vpack.c.b16 %v1669, %v1665
    %v1918 = vpack.c.b16 %v1670, %v1666
    %v1919 = vpack.c.b16 %v1671, %v1667
    %v1920 = vpack.c.b16 %v1676, %v1672
    %v1921 = vpack.c.b16 %v1677, %v1673
    %v1922 = vpack.c.b16 %v1678, %v1674
    %v1923 = vpack.c.b16 %v1679, %v1675
    %v1924 = vpack.c.b16 %v1684, %v1680
    %v1925 = vpack.c.b16 %v1685, %v1681
    %v1926 = vpack.c.b16 %v1686, %v1682
    %v1927 = vpack.c.b16 %v1687, %v1683
    %v1928 = vpack.c.b16 %v1692, %v1688
    %v1929 = vpack.c.b16 %v1693, %v1689
    %v1930 = vpack.c.b16 %v1694, %v1690
    %v1931 = vpack.c.b16 %v1695, %v1691
    %v1932 = vpack.c.b16 %v1700, %v1696
    %v1933 = vpack.c.b16 %v1701, %v1697
    %v1934 = vpack.c.b16 %v1702, %v1698
    %v1935 = vpack.c.b16 %v1703, %v1699
    %v1936 = vpack.c.b16 %v1708, %v1704
    %v1937 = vpack.c.b16 %v1709, %v1705
    %v1938 = vpack.c.b16 %v1710, %v1706
    %v1939 = vpack.c.b16 %v1711, %v1707
    %v1940 = vpack.c.b16 %v1716, %v1712
    %v1941 = vpack.c.b16 %v1717, %v1713
    %v1942 = vpack.c.b16 %v1718, %v1714
    %v1943 = vpack.c.b16 %v1719, %v1715
    %v1944 = vpack.c.b16 %v1724, %v1720
    %v1945 = vpack.c.b16 %v1725, %v1721
    %v1946 = vpack.c.b16 %v1726, %v1722
    %v1947 = vpack.c.b16 %v1727, %v1723
    %v1948 = vpack.c.b16 %v1732, %v1728
    %v1949 = vpack.c.b16 %v1733, %v1729
    %v1950 = vpack.c.b16 %v1734, %v1730
    %v1951 = vpack.c.b16 %v1735, %v1731
    %v1952 = vpack.c.b16 %v1740, %v1736
    %v1953 = vpack.c.b16 %v1741, %v1737
    %v1954 = vpack.c.b16 %v1742, %v1738
    %v1955 = vpack.c.b16 %v1743, %v1739
    %v1956 = vpack.c.b16 %v1748, %v1744
    %v1957 = vpack.c.b16 %v1749, %v1745
    %v1958 = vpack.c.b16 %v1750, %v1746
    %v1959 = vpack.c.b16 %v1751, %v1747
    %v1960 = vpack.c.b16 %v1756, %v1752
    %v1961 = vpack.c.b16 %v1757, %v1753
    %v1962 = vpack.c.b16 %v1758, %v1754
    %v1963 = vpack.c.b16 %v1759, %v1755
    %v1964 = vpack.c.b16 %v1764, %v1760
    %v1965 = vpack.c.b16 %v1765, %v1761
    %v1966 = vpack.c.b16 %v1766, %v1762
    %v1967 = vpack.c.b16 %v1767, %v1763
    %v1968 = vpack.c.b16 %v1772, %v1768
    %v1969 = vpack.c.b16 %v1773, %v1769
    %v1970 = vpack.c.b16 %v1774, %v1770
    %v1971 = vpack.c.b16 %v1775, %v1771
    %v1972 = vpack.c.b16 %v1780, %v1776
    %v1973 = vpack.c.b16 %v1781, %v1777
    %v1974 = vpack.c.b16 %v1782, %v1778
    %v1975 = vpack.c.b16 %v1783, %v1779
    %v1976 = vpack.c.b16 %v1788, %v1784
    %v1977 = vpack.c.b16 %v1789, %v1785
    %v1978 = vpack.c.b16 %v1790, %v1786
    %v1979 = vpack.c.b16 %v1791, %v1787
    %v1980 = vpack.c.b16 %v1796, %v1792
    %v1981 = vpack.c.b16 %v1797, %v1793
    %v1982 = vpack.c.b16 %v1798, %v1794
    %v1983 = vpack.c.b16 %v1799, %v1795
    %v1984 = vpack.c.b16 %v1804, %v1800
    %v1985 = vpack.c.b16 %v1805, %v1801
    %v1986 = vpack.c.b16 %v1806, %v1802
    %v1987 = vpack.c.b16 %v1807, %v1803
    %v1988 = vpack.c.b16 %v1812, %v1808
    %v1989 = vpack.c.b16 %v1813, %v1809
    %v1990 = vpack.c.b16 %v1814, %v1810
    %v1991 = vpack.c.b16 %v1815, %v1811
    %v1992 = vpack.c.b16 %v1820, %v1816
    %v1993 = vpack.c.b16 %v1821, %v1817
    %v1994 = vpack.c.b16 %v1822, %v1818
    %v1995 = vpack.c.b16 %v1823, %v1819
    %v1996 = vpack.c.b16 %v1828, %v1824
    %v1997 = vpack.c.b16 %v1829, %v1825
    %v1998 = vpack.c.b16 %v1830, %v1826
    %v1999 = vpack.c.b16 %v1831, %v1827
    %v2000 = vpack.c.b16 %v1836, %v1832
    %v2001 = vpack.c.b16 %v1837, %v1833
    %v2002 = vpack.c.b16 %v1838, %v1834
    %v2003 = vpack.c.b16 %v1839, %v1835
    %v2004 = vpack.c.b16 %v1844, %v1840
    %v2005 = vpack.c.b16 %v1845, %v1841
    %v2006 = vpack.c.b16 %v1846, %v1842
    %v2007 = vpack.c.b16 %v1847, %v1843
    %v2008 = vpack.c.b16 %v1852, %v1848
    %v2009 = vpack.c.b16 %v1853, %v1849
    %v2010 = vpack.c.b16 %v1854, %v1850
    %v2011 = vpack.c.b16 %v1855, %v1851
    %v2012 = vpack.c.b16 %v1860, %v1856
    %v2013 = vpack.c.b16 %v1861, %v1857
    %v2014 = vpack.c.b16 %v1862, %v1858
    %v2015 = vpack.c.b16 %v1863, %v1859
    %v2016 = vpack.c.b16 %v1868, %v1864
    %v2017 = vpack.c.b16 %v1869, %v1865
    %v2018 = vpack.c.b16 %v1870, %v1866
    %v2019 = vpack.c.b16 %v1871, %v1867
    %v2020 = vpack.c.b16 %v1876, %v1872
    %v2021 = vpack.c.b16 %v1877, %v1873
    %v2022 = vpack.c.b16 %v1878, %v1874
    %v2023 = vpack.c.b16 %v1879, %v1875
    %v2024 = vpack.c.b16 %v1884, %v1880
    %v2025 = vpack.c.b16 %v1885, %v1881
    %v2026 = vpack.c.b16 %v1886, %v1882
    %v2027 = vpack.c.b16 %v1887, %v1883
    %v2028 = vpack.c.b16 %v1892, %v1888
    %v2029 = vpack.c.b16 %v1893, %v1889
    %v2030 = vpack.c.b16 %v1894, %v1890
    %v2031 = vpack.c.b16 %v1895, %v1891
    %v2032 = vpack.c.b16 %v1900, %v1896
    %v2033 = vpack.c.b16 %v1901, %v1897
    %v2034 = vpack.c.b16 %v1902, %v1898
    %v2035 = vpack.c.b16 %v1903, %v1899
    %v2036 = vpack.c.b16 %v1908, %v1904
    %v2037 = vpack.c.b16 %v1909, %v1905
    %v2038 = vpack.c.b16 %v1910, %v1906
    %v2039 = vpack.c.b16 %v1911, %v1907
    %2168 = vmatprep.subr.bf16.mxu0 %v1913
    %2169 = vmatpush1.bf16.msra.mxu0 %v1912
    %2170 = vmatprep.subr.bf16.mxu0 %v1917
    %2171 = vmatpush1.bf16.msra.mxu0 %v1916
    %2172 = vmatprep.subr.bf16.mxu0 %v1921
    %2173 = vmatpush1.bf16.msra.mxu0 %v1920
    %2174 = vmatprep.subr.bf16.mxu0 %v1925
    %2175 = vmatpush1.bf16.msra.mxu0 %v1924
    %2176 = vmatprep.subr.bf16.mxu0 %v1929
    %2177 = vmatpush1.bf16.msra.mxu0 %v1928
    %2178 = vmatprep.subr.bf16.mxu0 %v1933
    %2179 = vmatpush1.bf16.msra.mxu0 %v1932
    %2180 = vmatprep.subr.bf16.mxu0 %v1937
    %2181 = vmatpush1.bf16.msra.mxu0 %v1936
    %2182 = vmatprep.subr.bf16.mxu0 %v1941
    %2183 = vmatpush1.bf16.msra.mxu0 %v1940
    %2184 = vmatprep.subr.bf16.mxu0 %v1945
    %2185 = vmatpush1.bf16.msra.mxu0 %v1944
    %2186 = vmatprep.subr.bf16.mxu0 %v1949
    %2187 = vmatpush1.bf16.msra.mxu0 %v1948
    %2188 = vmatprep.subr.bf16.mxu0 %v1953
    %2189 = vmatpush1.bf16.msra.mxu0 %v1952
    %2190 = vmatprep.subr.bf16.mxu0 %v1957
    %2191 = vmatpush1.bf16.msra.mxu0 %v1956
    %2192 = vmatprep.subr.bf16.mxu0 %v1961
    %2193 = vmatpush1.bf16.msra.mxu0 %v1960
    %2194 = vmatprep.subr.bf16.mxu0 %v1965
    %2195 = vmatpush1.bf16.msra.mxu0 %v1964
    %2196 = vmatprep.subr.bf16.mxu0 %v1969
    %2197 = vmatpush1.bf16.msra.mxu0 %v1968
    %2198 = vmatprep.subr.bf16.mxu0 %v1973
    %2199 = vmatpush1.bf16.msra.mxu0 %v1972
    %2200 = vmatprep.mubr.bf16.mxu0 %v1316
    %2201 = vmatmul.mubr.bf16.gmra.mrb[0].mxu0 %v1315
    %v2202 = vpop.f32.mrb[0].mxu0
    %v2203 = vadd.f32 %v1511, %v2202
    %v2204 = vpop.f32.mrb[0].mxu0
    %v2205 = vadd.f32 %v1515, %v2204
    %v2206 = vpop.f32.mrb[0].mxu0
    %v2207 = vadd.f32 %v1511, %v2206
    %v2208 = vpop.f32.mrb[0].mxu0
    %v2209 = vadd.f32 %v1515, %v2208
    %2210 = vmatprep.mubr.bf16.mxu0 %v1320
    %2211 = vmatmul.mubr.bf16.gmra.mrb[0].mxu0 %v1319
    %v2212 = vpop.f32.mrb[0].mxu0
    %v2213 = vadd.f32 %v1511, %v2212
    %v2214 = vpop.f32.mrb[0].mxu0
    %v2215 = vadd.f32 %v1515, %v2214
    %v2216 = vpop.f32.mrb[0].mxu0
    %v2217 = vadd.f32 %v1511, %v2216
    %v2218 = vpop.f32.mrb[0].mxu0
    %v2219 = vadd.f32 %v1515, %v2218
    %2220 = vmatprep.mubr.bf16.mxu0 %v1324
    %2221 = vmatmul.mubr.bf16.gmra.mrb[0].mxu0 %v1323
    %v2222 = vpop.f32.mrb[0].mxu0
    %v2223 = vadd.f32 %v1511, %v2222
    %v2224 = vpop.f32.mrb[0].mxu0
    %v2225 = vadd.f32 %v1515, %v2224
    %v2226 = vpop.f32.mrb[0].mxu0
    %v2227 = vadd.f32 %v1511, %v2226
    %v2228 = vpop.f32.mrb[0].mxu0
    %v2229 = vadd.f32 %v1515, %v2228
    %2230 = vmatprep.mubr.bf16.mxu0 %v1328
    %2231 = vmatmul.mubr.bf16.gmra.mrb[0].mxu0 %v1327
    %v2232 = vpop.f32.mrb[0].mxu0
    %v2233 = vadd.f32 %v1511, %v2232
    %v2234 = vpop.f32.mrb[0].mxu0
    %v2235 = vadd.f32 %v1515, %v2234
    %v2236 = vpop.f32.mrb[0].mxu0
    %v2237 = vadd.f32 %v1511, %v2236
    %v2238 = vpop.f32.mrb[0].mxu0
    %v2239 = vadd.f32 %v1515, %v2238
    %2240 = vmatprep.mubr.bf16.mxu0 %v1332
    %2241 = vmatmul.mubr.bf16.gmra.mrb[0].mxu0 %v1331
    %v2242 = vpop.f32.mrb[0].mxu0
    %v2243 = vadd.f32 %v1511, %v2242
    %v2244 = vpop.f32.mrb[0].mxu0
    %v2245 = vadd.f32 %v1515, %v2244
    %v2246 = vpop.f32.mrb[0].mxu0
    %v2247 = vadd.f32 %v1511, %v2246
    %v2248 = vpop.f32.mrb[0].mxu0
    %v2249 = vadd.f32 %v1515, %v2248
    %2250 = vmatprep.mubr.bf16.mxu0 %v1336
    %2251 = vmatmul.mubr.bf16.gmra.mrb[0].mxu0 %v1335
    %v2252 = vpop.f32.mrb[0].mxu0
    %v2253 = vadd.f32 %v1511, %v2252
    %v2254 = vpop.f32.mrb[0].mxu0
    %v2255 = vadd.f32 %v1515, %v2254
    %v2256 = vpop.f32.mrb[0].mxu0
    %v2257 = vadd.f32 %v1511, %v2256
    %v2258 = vpop.f32.mrb[0].mxu0
    %v2259 = vadd.f32 %v1515, %v2258
    %2260 = vmatprep.mubr.bf16.mxu0 %v1340
    %2261 = vmatmul.mubr.bf16.gmra.mrb[0].mxu0 %v1339
    %v2262 = vpop.f32.mrb[0].mxu0
    %v2263 = vadd.f32 %v1511, %v2262
    %v2264 = vpop.f32.mrb[0].mxu0
    %v2265 = vadd.f32 %v1515, %v2264
    %v2266 = vpop.f32.mrb[0].mxu0
    %v2267 = vadd.f32 %v1511, %v2266
    %v2268 = vpop.f32.mrb[0].mxu0
    %v2269 = vadd.f32 %v1515, %v2268
    %2270 = vmatprep.mubr.bf16.mxu0 %v1344
    %2271 = vmatmul.mubr.bf16.gmra.mrb[0].mxu0 %v1343
    %v2272 = vpop.f32.mrb[0].mxu0
    %v2273 = vadd.f32 %v1511, %v2272
    %v2274 = vpop.f32.mrb[0].mxu0
    %v2275 = vadd.f32 %v1515, %v2274
    %v2276 = vpop.f32.mrb[0].mxu0
    %v2277 = vadd.f32 %v1511, %v2276
    %v2278 = vpop.f32.mrb[0].mxu0
    %v2279 = vadd.f32 %v1515, %v2278
    %2280 = vmatprep.mubr.bf16.mxu0 %v1348
    %2281 = vmatmul.mubr.bf16.gmra.mrb[0].mxu0 %v1347
    %v2282 = vpop.f32.mrb[0].mxu0
    %v2283 = vadd.f32 %v1511, %v2282
    %v2284 = vpop.f32.mrb[0].mxu0
    %v2285 = vadd.f32 %v1515, %v2284
    %v2286 = vpop.f32.mrb[0].mxu0
    %v2287 = vadd.f32 %v1511, %v2286
    %v2288 = vpop.f32.mrb[0].mxu0
    %v2289 = vadd.f32 %v1515, %v2288
    %2290 = vmatprep.mubr.bf16.mxu0 %v1352
    %2291 = vmatmul.mubr.bf16.gmra.mrb[0].mxu0 %v1351
    %v2292 = vpop.f32.mrb[0].mxu0
    %v2293 = vadd.f32 %v1511, %v2292
    %v2294 = vpop.f32.mrb[0].mxu0
    %v2295 = vadd.f32 %v1515, %v2294
    %v2296 = vpop.f32.mrb[0].mxu0
    %v2297 = vadd.f32 %v1511, %v2296
    %v2298 = vpop.f32.mrb[0].mxu0
    %v2299 = vadd.f32 %v1515, %v2298
    %2300 = vmatprep.mubr.bf16.mxu0 %v1356
    %2301 = vmatmul.mubr.bf16.gmra.mrb[0].mxu0 %v1355
    %v2302 = vpop.f32.mrb[0].mxu0
    %v2303 = vadd.f32 %v1511, %v2302
    %v2304 = vpop.f32.mrb[0].mxu0
    %v2305 = vadd.f32 %v1515, %v2304
    %v2306 = vpop.f32.mrb[0].mxu0
    %v2307 = vadd.f32 %v1511, %v2306
    %v2308 = vpop.f32.mrb[0].mxu0
    %v2309 = vadd.f32 %v1515, %v2308
    %2310 = vmatprep.mubr.bf16.mxu0 %v1360
    %2311 = vmatmul.mubr.bf16.gmra.mrb[0].mxu0 %v1359
    %v2312 = vpop.f32.mrb[0].mxu0
    %v2313 = vadd.f32 %v1511, %v2312
    %v2314 = vpop.f32.mrb[0].mxu0
    %v2315 = vadd.f32 %v1515, %v2314
    %v2316 = vpop.f32.mrb[0].mxu0
    %v2317 = vadd.f32 %v1511, %v2316
    %v2318 = vpop.f32.mrb[0].mxu0
    %v2319 = vadd.f32 %v1515, %v2318
    %2320 = vmatprep.mubr.bf16.mxu0 %v1364
    %2321 = vmatmul.mubr.bf16.gmra.mrb[0].mxu0 %v1363
    %v2322 = vpop.f32.mrb[0].mxu0
    %v2323 = vadd.f32 %v1511, %v2322
    %v2324 = vpop.f32.mrb[0].mxu0
    %v2325 = vadd.f32 %v1515, %v2324
    %v2326 = vpop.f32.mrb[0].mxu0
    %v2327 = vadd.f32 %v1511, %v2326
    %v2328 = vpop.f32.mrb[0].mxu0
    %v2329 = vadd.f32 %v1515, %v2328
    %2330 = vmatprep.mubr.bf16.mxu0 %v1368
    %2331 = vmatmul.mubr.bf16.gmra.mrb[0].mxu0 %v1367
    %v2332 = vpop.f32.mrb[0].mxu0
    %v2333 = vadd.f32 %v1511, %v2332
    %v2334 = vpop.f32.mrb[0].mxu0
    %v2335 = vadd.f32 %v1515, %v2334
    %v2336 = vpop.f32.mrb[0].mxu0
    %v2337 = vadd.f32 %v1511, %v2336
    %v2338 = vpop.f32.mrb[0].mxu0
    %v2339 = vadd.f32 %v1515, %v2338
    %2340 = vmatprep.mubr.bf16.mxu0 %v1372
    %2341 = vmatmul.mubr.bf16.gmra.mrb[0].mxu0 %v1371
    %v2342 = vpop.f32.mrb[0].mxu0
    %v2343 = vadd.f32 %v1511, %v2342
    %v2344 = vpop.f32.mrb[0].mxu0
    %v2345 = vadd.f32 %v1515, %v2344
    %v2346 = vpop.f32.mrb[0].mxu0
    %v2347 = vadd.f32 %v1511, %v2346
    %v2348 = vpop.f32.mrb[0].mxu0
    %v2349 = vadd.f32 %v1515, %v2348
    %2350 = vmatprep.mubr.bf16.mxu0 %v1376
    %2351 = vmatmul.mubr.bf16.gmra.mrb[0].mxu0 %v1375
    %v2352 = vpop.f32.mrb[0].mxu0
    %v2353 = vadd.f32 %v1511, %v2352
    %v2354 = vpop.f32.mrb[0].mxu0
    %v2355 = vadd.f32 %v1515, %v2354
    %v2356 = vpop.f32.mrb[0].mxu0
    %v2357 = vadd.f32 %v1511, %v2356
    %v2358 = vpop.f32.mrb[0].mxu0
    %v2359 = vadd.f32 %v1515, %v2358
    %2360 = vdwg.mxu0
    %2361 = vmatprep.subr.bf16.mxu0 %v1977
    %2362 = vmatpush1.bf16.msra.mxu0 %v1976
    %2363 = vmatprep.subr.bf16.mxu0 %v1981
    %2364 = vmatpush1.bf16.msra.mxu0 %v1980
    %2365 = vmatprep.subr.bf16.mxu0 %v1985
    %2366 = vmatpush1.bf16.msra.mxu0 %v1984
    %2367 = vmatprep.subr.bf16.mxu0 %v1989
    %2368 = vmatpush1.bf16.msra.mxu0 %v1988
    %2369 = vmatprep.subr.bf16.mxu0 %v1993
    %2370 = vmatpush1.bf16.msra.mxu0 %v1992
    %2371 = vmatprep.subr.bf16.mxu0 %v1997
    %2372 = vmatpush1.bf16.msra.mxu0 %v1996
    %2373 = vmatprep.subr.bf16.mxu0 %v2001
    %2374 = vmatpush1.bf16.msra.mxu0 %v2000
    %2375 = vmatprep.subr.bf16.mxu0 %v2005
    %2376 = vmatpush1.bf16.msra.mxu0 %v2004
    %2377 = vmatprep.subr.bf16.mxu0 %v2009
    %2378 = vmatpush1.bf16.msra.mxu0 %v2008
    %2379 = vmatprep.subr.bf16.mxu0 %v2013
    %2380 = vmatpush1.bf16.msra.mxu0 %v2012
    %2381 = vmatprep.subr.bf16.mxu0 %v2017
    %2382 = vmatpush1.bf16.msra.mxu0 %v2016
    %2383 = vmatprep.subr.bf16.mxu0 %v2021
    %2384 = vmatpush1.bf16.msra.mxu0 %v2020
    %2385 = vmatprep.subr.bf16.mxu0 %v2025
    %2386 = vmatpush1.bf16.msra.mxu0 %v2024
    %2387 = vmatprep.subr.bf16.mxu0 %v2029
    %2388 = vmatpush1.bf16.msra.mxu0 %v2028
    %2389 = vmatprep.subr.bf16.mxu0 %v2033
    %2390 = vmatpush1.bf16.msra.mxu0 %v2032
    %2391 = vmatprep.subr.bf16.mxu0 %v2037
    %2392 = vmatpush1.bf16.msra.mxu0 %v2036
    %2393 = vmatprep.mubr.bf16.mxu0 %v1318
    %2394 = vmatmul.mubr.bf16.gmra.mrb[0].mxu0 %v1317
    %v2395 = vpop.f32.mrb[0].mxu0
    %v2396 = vadd.f32 %v2203, %v2395
    %v2397 = vpop.f32.mrb[0].mxu0
    %v2398 = vadd.f32 %v2205, %v2397
    %v2399 = vpop.f32.mrb[0].mxu0
    %v2400 = vadd.f32 %v2207, %v2399
    %v2401 = vpop.f32.mrb[0].mxu0
    %v2402 = vadd.f32 %v2209, %v2401
    %2403 = vmatprep.mubr.bf16.mxu0 %v1322
    %2404 = vmatmul.mubr.bf16.gmra.mrb[0].mxu0 %v1321
    %v2405 = vpop.f32.mrb[0].mxu0
    %v2406 = vadd.f32 %v2213, %v2405
    %v2407 = vpop.f32.mrb[0].mxu0
    %v2408 = vadd.f32 %v2215, %v2407
    %v2409 = vpop.f32.mrb[0].mxu0
    %v2410 = vadd.f32 %v2217, %v2409
    %v2411 = vpop.f32.mrb[0].mxu0
    %v2412 = vadd.f32 %v2219, %v2411
    %2413 = vmatprep.mubr.bf16.mxu0 %v1326
    %2414 = vmatmul.mubr.bf16.gmra.mrb[0].mxu0 %v1325
    %v2415 = vpop.f32.mrb[0].mxu0
    %v2416 = vadd.f32 %v2223, %v2415
    %v2417 = vpop.f32.mrb[0].mxu0
    %v2418 = vadd.f32 %v2225, %v2417
    %v2419 = vpop.f32.mrb[0].mxu0
    %v2420 = vadd.f32 %v2227, %v2419
    %v2421 = vpop.f32.mrb[0].mxu0
    %v2422 = vadd.f32 %v2229, %v2421
    %2423 = vmatprep.mubr.bf16.mxu0 %v1330
    %2424 = vmatmul.mubr.bf16.gmra.mrb[0].mxu0 %v1329
    %v2425 = vpop.f32.mrb[0].mxu0
    %v2426 = vadd.f32 %v2233, %v2425
    %v2427 = vpop.f32.mrb[0].mxu0
    %v2428 = vadd.f32 %v2235, %v2427
    %v2429 = vpop.f32.mrb[0].mxu0
    %v2430 = vadd.f32 %v2237, %v2429
    %v2431 = vpop.f32.mrb[0].mxu0
    %v2432 = vadd.f32 %v2239, %v2431
    %2433 = vmatprep.mubr.bf16.mxu0 %v1334
    %2434 = vmatmul.mubr.bf16.gmra.mrb[0].mxu0 %v1333
    %v2435 = vpop.f32.mrb[0].mxu0
    %v2436 = vadd.f32 %v2243, %v2435
    %v2437 = vpop.f32.mrb[0].mxu0
    %v2438 = vadd.f32 %v2245, %v2437
    %v2439 = vpop.f32.mrb[0].mxu0
    %v2440 = vadd.f32 %v2247, %v2439
    %v2441 = vpop.f32.mrb[0].mxu0
    %v2442 = vadd.f32 %v2249, %v2441
    %2443 = vmatprep.mubr.bf16.mxu0 %v1338
    %2444 = vmatmul.mubr.bf16.gmra.mrb[0].mxu0 %v1337
    %v2445 = vpop.f32.mrb[0].mxu0
    %v2446 = vadd.f32 %v2253, %v2445
    %v2447 = vpop.f32.mrb[0].mxu0
    %v2448 = vadd.f32 %v2255, %v2447
    %v2449 = vpop.f32.mrb[0].mxu0
    %v2450 = vadd.f32 %v2257, %v2449
    %v2451 = vpop.f32.mrb[0].mxu0
    %v2452 = vadd.f32 %v2259, %v2451
    %2453 = vmatprep.mubr.bf16.mxu0 %v1342
    %2454 = vmatmul.mubr.bf16.gmra.mrb[0].mxu0 %v1341
    %v2455 = vpop.f32.mrb[0].mxu0
    %v2456 = vadd.f32 %v2263, %v2455
    %v2457 = vpop.f32.mrb[0].mxu0
    %v2458 = vadd.f32 %v2265, %v2457
    %v2459 = vpop.f32.mrb[0].mxu0
    %v2460 = vadd.f32 %v2267, %v2459
    %v2461 = vpop.f32.mrb[0].mxu0
    %v2462 = vadd.f32 %v2269, %v2461
    %2463 = vmatprep.mubr.bf16.mxu0 %v1346
    %2464 = vmatmul.mubr.bf16.gmra.mrb[0].mxu0 %v1345
    %v2465 = vpop.f32.mrb[0].mxu0
    %v2466 = vadd.f32 %v2273, %v2465
    %v2467 = vpop.f32.mrb[0].mxu0
    %v2468 = vadd.f32 %v2275, %v2467
    %v2469 = vpop.f32.mrb[0].mxu0
    %v2470 = vadd.f32 %v2277, %v2469
    %v2471 = vpop.f32.mrb[0].mxu0
    %v2472 = vadd.f32 %v2279, %v2471
    %2473 = vmatprep.mubr.bf16.mxu0 %v1350
    %2474 = vmatmul.mubr.bf16.gmra.mrb[0].mxu0 %v1349
    %v2475 = vpop.f32.mrb[0].mxu0
    %v2476 = vadd.f32 %v2283, %v2475
    %v2477 = vpop.f32.mrb[0].mxu0
    %v2478 = vadd.f32 %v2285, %v2477
    %v2479 = vpop.f32.mrb[0].mxu0
    %v2480 = vadd.f32 %v2287, %v2479
    %v2481 = vpop.f32.mrb[0].mxu0
    %v2482 = vadd.f32 %v2289, %v2481
    %2483 = vmatprep.mubr.bf16.mxu0 %v1354
    %2484 = vmatmul.mubr.bf16.gmra.mrb[0].mxu0 %v1353
    %v2485 = vpop.f32.mrb[0].mxu0
    %v2486 = vadd.f32 %v2293, %v2485
    %v2487 = vpop.f32.mrb[0].mxu0
    %v2488 = vadd.f32 %v2295, %v2487
    %v2489 = vpop.f32.mrb[0].mxu0
    %v2490 = vadd.f32 %v2297, %v2489
    %v2491 = vpop.f32.mrb[0].mxu0
    %v2492 = vadd.f32 %v2299, %v2491
    %2493 = vmatprep.mubr.bf16.mxu0 %v1358
    %2494 = vmatmul.mubr.bf16.gmra.mrb[0].mxu0 %v1357
    %v2495 = vpop.f32.mrb[0].mxu0
    %v2496 = vadd.f32 %v2303, %v2495
    %v2497 = vpop.f32.mrb[0].mxu0
    %v2498 = vadd.f32 %v2305, %v2497
    %v2499 = vpop.f32.mrb[0].mxu0
    %v2500 = vadd.f32 %v2307, %v2499
    %v2501 = vpop.f32.mrb[0].mxu0
    %v2502 = vadd.f32 %v2309, %v2501
    %2503 = vmatprep.mubr.bf16.mxu0 %v1362
    %2504 = vmatmul.mubr.bf16.gmra.mrb[0].mxu0 %v1361
    %v2505 = vpop.f32.mrb[0].mxu0
    %v2506 = vadd.f32 %v2313, %v2505
    %v2507 = vpop.f32.mrb[0].mxu0
    %v2508 = vadd.f32 %v2315, %v2507
    %v2509 = vpop.f32.mrb[0].mxu0
    %v2510 = vadd.f32 %v2317, %v2509
    %v2511 = vpop.f32.mrb[0].mxu0
    %v2512 = vadd.f32 %v2319, %v2511
    %2513 = vmatprep.mubr.bf16.mxu0 %v1366
    %2514 = vmatmul.mubr.bf16.gmra.mrb[0].mxu0 %v1365
    %v2515 = vpop.f32.mrb[0].mxu0
    %v2516 = vadd.f32 %v2323, %v2515
    %v2517 = vpop.f32.mrb[0].mxu0
    %v2518 = vadd.f32 %v2325, %v2517
    %v2519 = vpop.f32.mrb[0].mxu0
    %v2520 = vadd.f32 %v2327, %v2519
    %v2521 = vpop.f32.mrb[0].mxu0
    %v2522 = vadd.f32 %v2329, %v2521
    %2523 = vmatprep.mubr.bf16.mxu0 %v1370
    %2524 = vmatmul.mubr.bf16.gmra.mrb[0].mxu0 %v1369
    %v2525 = vpop.f32.mrb[0].mxu0
    %v2526 = vadd.f32 %v2333, %v2525
    %v2527 = vpop.f32.mrb[0].mxu0
    %v2528 = vadd.f32 %v2335, %v2527
    %v2529 = vpop.f32.mrb[0].mxu0
    %v2530 = vadd.f32 %v2337, %v2529
    %v2531 = vpop.f32.mrb[0].mxu0
    %v2532 = vadd.f32 %v2339, %v2531
    %2533 = vmatprep.mubr.bf16.mxu0 %v1374
    %2534 = vmatmul.mubr.bf16.gmra.mrb[0].mxu0 %v1373
    %v2535 = vpop.f32.mrb[0].mxu0
    %v2536 = vadd.f32 %v2343, %v2535
    %v2537 = vpop.f32.mrb[0].mxu0
    %v2538 = vadd.f32 %v2345, %v2537
    %v2539 = vpop.f32.mrb[0].mxu0
    %v2540 = vadd.f32 %v2347, %v2539
    %v2541 = vpop.f32.mrb[0].mxu0
    %v2542 = vadd.f32 %v2349, %v2541
    %2543 = vmatprep.mubr.bf16.mxu0 %v1378
    %2544 = vmatmul.mubr.bf16.gmra.mrb[0].mxu0 %v1377
    %v2545 = vpop.f32.mrb[0].mxu0
    %v2546 = vadd.f32 %v2353, %v2545
    %v2547 = vpop.f32.mrb[0].mxu0
    %v2548 = vadd.f32 %v2355, %v2547
    %v2549 = vpop.f32.mrb[0].mxu0
    %v2550 = vadd.f32 %v2357, %v2549
    %v2551 = vpop.f32.mrb[0].mxu0
    %v2552 = vadd.f32 %v2359, %v2551
    %2553 = vdwg.mxu0
    %2554 = vmatprep.subr.bf16.mxu0 %v1915
    %2555 = vmatpush1.bf16.msra.mxu0 %v1914
    %2556 = vmatprep.subr.bf16.mxu0 %v1919
    %2557 = vmatpush1.bf16.msra.mxu0 %v1918
    %2558 = vmatprep.subr.bf16.mxu0 %v1923
    %2559 = vmatpush1.bf16.msra.mxu0 %v1922
    %2560 = vmatprep.subr.bf16.mxu0 %v1927
    %2561 = vmatpush1.bf16.msra.mxu0 %v1926
    %2562 = vmatprep.subr.bf16.mxu0 %v1931
    %2563 = vmatpush1.bf16.msra.mxu0 %v1930
    %2564 = vmatprep.subr.bf16.mxu0 %v1935
    %2565 = vmatpush1.bf16.msra.mxu0 %v1934
    %2566 = vmatprep.subr.bf16.mxu0 %v1939
    %2567 = vmatpush1.bf16.msra.mxu0 %v1938
    %2568 = vmatprep.subr.bf16.mxu0 %v1943
    %2569 = vmatpush1.bf16.msra.mxu0 %v1942
    %2570 = vmatprep.subr.bf16.mxu0 %v1947
    %2571 = vmatpush1.bf16.msra.mxu0 %v1946
    %2572 = vmatprep.subr.bf16.mxu0 %v1951
    %2573 = vmatpush1.bf16.msra.mxu0 %v1950
    %2574 = vmatprep.subr.bf16.mxu0 %v1955
    %2575 = vmatpush1.bf16.msra.mxu0 %v1954
    %2576 = vmatprep.subr.bf16.mxu0 %v1959
    %2577 = vmatpush1.bf16.msra.mxu0 %v1958
    %2578 = vmatprep.subr.bf16.mxu0 %v1963
    %2579 = vmatpush1.bf16.msra.mxu0 %v1962
    %2580 = vmatprep.subr.bf16.mxu0 %v1967
    %2581 = vmatpush1.bf16.msra.mxu0 %v1966
    %2582 = vmatprep.subr.bf16.mxu0 %v1971
    %2583 = vmatpush1.bf16.msra.mxu0 %v1970
    %2584 = vmatprep.subr.bf16.mxu0 %v1975
    %2585 = vmatpush1.bf16.msra.mxu0 %v1974
    %2586 = vmatprep.mubr.bf16.mxu0 %v1316
    %2587 = vmatmul.mubr.bf16.gmra.mrb[0].mxu0 %v1315
    %v2588 = vpop.f32.mrb[0].mxu0
    %v2589 = vadd.f32 %v1519, %v2588
    %v2590 = vpop.f32.mrb[0].mxu0
    %v2591 = vadd.f32 %v1523, %v2590
    %v2592 = vpop.f32.mrb[0].mxu0
    %v2593 = vadd.f32 %v1519, %v2592
    %v2594 = vpop.f32.mrb[0].mxu0
    %v2595 = vadd.f32 %v1523, %v2594
    %2596 = vmatprep.mubr.bf16.mxu0 %v1320
    %2597 = vmatmul.mubr.bf16.gmra.mrb[0].mxu0 %v1319
    %v2598 = vpop.f32.mrb[0].mxu0
    %v2599 = vadd.f32 %v1519, %v2598
    %v2600 = vpop.f32.mrb[0].mxu0
    %v2601 = vadd.f32 %v1523, %v2600
    %v2602 = vpop.f32.mrb[0].mxu0
    %v2603 = vadd.f32 %v1519, %v2602
    %v2604 = vpop.f32.mrb[0].mxu0
    %v2605 = vadd.f32 %v1523, %v2604
    %2606 = vmatprep.mubr.bf16.mxu0 %v1324
    %2607 = vmatmul.mubr.bf16.gmra.mrb[0].mxu0 %v1323
    %v2608 = vpop.f32.mrb[0].mxu0
    %v2609 = vadd.f32 %v1519, %v2608
    %v2610 = vpop.f32.mrb[0].mxu0
    %v2611 = vadd.f32 %v1523, %v2610
    %v2612 = vpop.f32.mrb[0].mxu0
    %v2613 = vadd.f32 %v1519, %v2612
    %v2614 = vpop.f32.mrb[0].mxu0
    %v2615 = vadd.f32 %v1523, %v2614
    %2616 = vmatprep.mubr.bf16.mxu0 %v1328
    %2617 = vmatmul.mubr.bf16.gmra.mrb[0].mxu0 %v1327
    %v2618 = vpop.f32.mrb[0].mxu0
    %v2619 = vadd.f32 %v1519, %v2618
    %v2620 = vpop.f32.mrb[0].mxu0
    %v2621 = vadd.f32 %v1523, %v2620
    %v2622 = vpop.f32.mrb[0].mxu0
    %v2623 = vadd.f32 %v1519, %v2622
    %v2624 = vpop.f32.mrb[0].mxu0
    %v2625 = vadd.f32 %v1523, %v2624
    %2626 = vmatprep.mubr.bf16.mxu0 %v1332
    %2627 = vmatmul.mubr.bf16.gmra.mrb[0].mxu0 %v1331
    %v2628 = vpop.f32.mrb[0].mxu0
    %v2629 = vadd.f32 %v1519, %v2628
    %v2630 = vpop.f32.mrb[0].mxu0
    %v2631 = vadd.f32 %v1523, %v2630
    %v2632 = vpop.f32.mrb[0].mxu0
    %v2633 = vadd.f32 %v1519, %v2632
    %v2634 = vpop.f32.mrb[0].mxu0
    %v2635 = vadd.f32 %v1523, %v2634
    %2636 = vmatprep.mubr.bf16.mxu0 %v1336
    %2637 = vmatmul.mubr.bf16.gmra.mrb[0].mxu0 %v1335
    %v2638 = vpop.f32.mrb[0].mxu0
    %v2639 = vadd.f32 %v1519, %v2638
    %v2640 = vpop.f32.mrb[0].mxu0
    %v2641 = vadd.f32 %v1523, %v2640
    %v2642 = vpop.f32.mrb[0].mxu0
    %v2643 = vadd.f32 %v1519, %v2642
    %v2644 = vpop.f32.mrb[0].mxu0
    %v2645 = vadd.f32 %v1523, %v2644
    %2646 = vmatprep.mubr.bf16.mxu0 %v1340
    %2647 = vmatmul.mubr.bf16.gmra.mrb[0].mxu0 %v1339
    %v2648 = vpop.f32.mrb[0].mxu0
    %v2649 = vadd.f32 %v1519, %v2648
    %v2650 = vpop.f32.mrb[0].mxu0
    %v2651 = vadd.f32 %v1523, %v2650
    %v2652 = vpop.f32.mrb[0].mxu0
    %v2653 = vadd.f32 %v1519, %v2652
    %v2654 = vpop.f32.mrb[0].mxu0
    %v2655 = vadd.f32 %v1523, %v2654
    %2656 = vmatprep.mubr.bf16.mxu0 %v1344
    %2657 = vmatmul.mubr.bf16.gmra.mrb[0].mxu0 %v1343
    %v2658 = vpop.f32.mrb[0].mxu0
    %v2659 = vadd.f32 %v1519, %v2658
    %v2660 = vpop.f32.mrb[0].mxu0
    %v2661 = vadd.f32 %v1523, %v2660
    %v2662 = vpop.f32.mrb[0].mxu0
    %v2663 = vadd.f32 %v1519, %v2662
    %v2664 = vpop.f32.mrb[0].mxu0
    %v2665 = vadd.f32 %v1523, %v2664
    %2666 = vmatprep.mubr.bf16.mxu0 %v1348
    %2667 = vmatmul.mubr.bf16.gmra.mrb[0].mxu0 %v1347
    %v2668 = vpop.f32.mrb[0].mxu0
    %v2669 = vadd.f32 %v1519, %v2668
    %v2670 = vpop.f32.mrb[0].mxu0
    %v2671 = vadd.f32 %v1523, %v2670
    %v2672 = vpop.f32.mrb[0].mxu0
    %v2673 = vadd.f32 %v1519, %v2672
    %v2674 = vpop.f32.mrb[0].mxu0
    %v2675 = vadd.f32 %v1523, %v2674
    %2676 = vmatprep.mubr.bf16.mxu0 %v1352
    %2677 = vmatmul.mubr.bf16.gmra.mrb[0].mxu0 %v1351
    %v2678 = vpop.f32.mrb[0].mxu0
    %v2679 = vadd.f32 %v1519, %v2678
    %v2680 = vpop.f32.mrb[0].mxu0
    %v2681 = vadd.f32 %v1523, %v2680
    %v2682 = vpop.f32.mrb[0].mxu0
    %v2683 = vadd.f32 %v1519, %v2682
    %v2684 = vpop.f32.mrb[0].mxu0
    %v2685 = vadd.f32 %v1523, %v2684
    %2686 = vmatprep.mubr.bf16.mxu0 %v1356
    %2687 = vmatmul.mubr.bf16.gmra.mrb[0].mxu0 %v1355
    %v2688 = vpop.f32.mrb[0].mxu0
    %v2689 = vadd.f32 %v1519, %v2688
    %v2690 = vpop.f32.mrb[0].mxu0
    %v2691 = vadd.f32 %v1523, %v2690
    %v2692 = vpop.f32.mrb[0].mxu0
    %v2693 = vadd.f32 %v1519, %v2692
    %v2694 = vpop.f32.mrb[0].mxu0
    %v2695 = vadd.f32 %v1523, %v2694
    %2696 = vmatprep.mubr.bf16.mxu0 %v1360
    %2697 = vmatmul.mubr.bf16.gmra.mrb[0].mxu0 %v1359
    %v2698 = vpop.f32.mrb[0].mxu0
    %v2699 = vadd.f32 %v1519, %v2698
    %v2700 = vpop.f32.mrb[0].mxu0
    %v2701 = vadd.f32 %v1523, %v2700
    %v2702 = vpop.f32.mrb[0].mxu0
    %v2703 = vadd.f32 %v1519, %v2702
    %v2704 = vpop.f32.mrb[0].mxu0
    %v2705 = vadd.f32 %v1523, %v2704
    %2706 = vmatprep.mubr.bf16.mxu0 %v1364
    %2707 = vmatmul.mubr.bf16.gmra.mrb[0].mxu0 %v1363
    %v2708 = vpop.f32.mrb[0].mxu0
    %v2709 = vadd.f32 %v1519, %v2708
    %v2710 = vpop.f32.mrb[0].mxu0
    %v2711 = vadd.f32 %v1523, %v2710
    %v2712 = vpop.f32.mrb[0].mxu0
    %v2713 = vadd.f32 %v1519, %v2712
    %v2714 = vpop.f32.mrb[0].mxu0
    %v2715 = vadd.f32 %v1523, %v2714
    %2716 = vmatprep.mubr.bf16.mxu0 %v1368
    %2717 = vmatmul.mubr.bf16.gmra.mrb[0].mxu0 %v1367
    %v2718 = vpop.f32.mrb[0].mxu0
    %v2719 = vadd.f32 %v1519, %v2718
    %v2720 = vpop.f32.mrb[0].mxu0
    %v2721 = vadd.f32 %v1523, %v2720
    %v2722 = vpop.f32.mrb[0].mxu0
    %v2723 = vadd.f32 %v1519, %v2722
    %v2724 = vpop.f32.mrb[0].mxu0
    %v2725 = vadd.f32 %v1523, %v2724
    %2726 = vmatprep.mubr.bf16.mxu0 %v1372
    %2727 = vmatmul.mubr.bf16.gmra.mrb[0].mxu0 %v1371
    %v2728 = vpop.f32.mrb[0].mxu0
    %v2729 = vadd.f32 %v1519, %v2728
    %v2730 = vpop.f32.mrb[0].mxu0
    %v2731 = vadd.f32 %v1523, %v2730
    %v2732 = vpop.f32.mrb[0].mxu0
    %v2733 = vadd.f32 %v1519, %v2732
    %v2734 = vpop.f32.mrb[0].mxu0
    %v2735 = vadd.f32 %v1523, %v2734
    %2736 = vmatprep.mubr.bf16.mxu0 %v1376
    %2737 = vmatmul.mubr.bf16.gmra.mrb[0].mxu0 %v1375
    %v2738 = vpop.f32.mrb[0].mxu0
    %v2739 = vadd.f32 %v1519, %v2738
    %v2740 = vpop.f32.mrb[0].mxu0
    %v2741 = vadd.f32 %v1523, %v2740
    %v2742 = vpop.f32.mrb[0].mxu0
    %v2743 = vadd.f32 %v1519, %v2742
    %v2744 = vpop.f32.mrb[0].mxu0
    %v2745 = vadd.f32 %v1523, %v2744
    %2746 = vdwg.mxu0
    %2747 = vmatprep.subr.bf16.mxu0 %v1979
    %2748 = vmatpush1.bf16.msra.mxu0 %v1978
    %2749 = vmatprep.subr.bf16.mxu0 %v1983
    %2750 = vmatpush1.bf16.msra.mxu0 %v1982
    %2751 = vmatprep.subr.bf16.mxu0 %v1987
    %2752 = vmatpush1.bf16.msra.mxu0 %v1986
    %2753 = vmatprep.subr.bf16.mxu0 %v1991
    %2754 = vmatpush1.bf16.msra.mxu0 %v1990
    %2755 = vmatprep.subr.bf16.mxu0 %v1995
    %2756 = vmatpush1.bf16.msra.mxu0 %v1994
    %2757 = vmatprep.subr.bf16.mxu0 %v1999
    %2758 = vmatpush1.bf16.msra.mxu0 %v1998
    %2759 = vmatprep.subr.bf16.mxu0 %v2003
    %2760 = vmatpush1.bf16.msra.mxu0 %v2002
    %2761 = vmatprep.subr.bf16.mxu0 %v2007
    %2762 = vmatpush1.bf16.msra.mxu0 %v2006
    %2763 = vmatprep.subr.bf16.mxu0 %v2011
    %2764 = vmatpush1.bf16.msra.mxu0 %v2010
    %2765 = vmatprep.subr.bf16.mxu0 %v2015
    %2766 = vmatpush1.bf16.msra.mxu0 %v2014
    %2767 = vmatprep.subr.bf16.mxu0 %v2019
    %2768 = vmatpush1.bf16.msra.mxu0 %v2018
    %2769 = vmatprep.subr.bf16.mxu0 %v2023
    %2770 = vmatpush1.bf16.msra.mxu0 %v2022
    %2771 = vmatprep.subr.bf16.mxu0 %v2027
    %2772 = vmatpush1.bf16.msra.mxu0 %v2026
    %2773 = vmatprep.subr.bf16.mxu0 %v2031
    %2774 = vmatpush1.bf16.msra.mxu0 %v2030
    %2775 = vmatprep.subr.bf16.mxu0 %v2035
    %2776 = vmatpush1.bf16.msra.mxu0 %v2034
    %2777 = vmatprep.subr.bf16.mxu0 %v2039
    %2778 = vmatpush1.bf16.msra.mxu0 %v2038
    %2779 = vmatprep.mubr.bf16.mxu0 %v1318
    %2780 = vmatmul.mubr.bf16.gmra.mrb[0].mxu0 %v1317
    %v2781 = vpop.f32.mrb[0].mxu0
    %v2782 = vadd.f32 %v2589, %v2781
    %v2783 = vpop.f32.mrb[0].mxu0
    %v2784 = vadd.f32 %v2591, %v2783
    %v2785 = vpop.f32.mrb[0].mxu0
    %v2786 = vadd.f32 %v2593, %v2785
    %v2787 = vpop.f32.mrb[0].mxu0
    %v2788 = vadd.f32 %v2595, %v2787
    %2789 = vmatprep.mubr.bf16.mxu0 %v1322
    %2790 = vmatmul.mubr.bf16.gmra.mrb[0].mxu0 %v1321
    %v2791 = vpop.f32.mrb[0].mxu0
    %v2792 = vadd.f32 %v2599, %v2791
    %v2793 = vpop.f32.mrb[0].mxu0
    %v2794 = vadd.f32 %v2601, %v2793
    %v2795 = vpop.f32.mrb[0].mxu0
    %v2796 = vadd.f32 %v2603, %v2795
    %v2797 = vpop.f32.mrb[0].mxu0
    %v2798 = vadd.f32 %v2605, %v2797
    %2799 = vmatprep.mubr.bf16.mxu0 %v1326
    %2800 = vmatmul.mubr.bf16.gmra.mrb[0].mxu0 %v1325
    %v2801 = vpop.f32.mrb[0].mxu0
    %v2802 = vadd.f32 %v2609, %v2801
    %v2803 = vpop.f32.mrb[0].mxu0
    %v2804 = vadd.f32 %v2611, %v2803
    %v2805 = vpop.f32.mrb[0].mxu0
    %v2806 = vadd.f32 %v2613, %v2805
    %v2807 = vpop.f32.mrb[0].mxu0
    %v2808 = vadd.f32 %v2615, %v2807
    %2809 = vmatprep.mubr.bf16.mxu0 %v1330
    %2810 = vmatmul.mubr.bf16.gmra.mrb[0].mxu0 %v1329
    %v2811 = vpop.f32.mrb[0].mxu0
    %v2812 = vadd.f32 %v2619, %v2811
    %v2813 = vpop.f32.mrb[0].mxu0
    %v2814 = vadd.f32 %v2621, %v2813
    %v2815 = vpop.f32.mrb[0].mxu0
    %v2816 = vadd.f32 %v2623, %v2815
    %v2817 = vpop.f32.mrb[0].mxu0
    %v2818 = vadd.f32 %v2625, %v2817
    %2819 = vmatprep.mubr.bf16.mxu0 %v1334
    %2820 = vmatmul.mubr.bf16.gmra.mrb[0].mxu0 %v1333
    %v2821 = vpop.f32.mrb[0].mxu0
    %v2822 = vadd.f32 %v2629, %v2821
    %v2823 = vpop.f32.mrb[0].mxu0
    %v2824 = vadd.f32 %v2631, %v2823
    %v2825 = vpop.f32.mrb[0].mxu0
    %v2826 = vadd.f32 %v2633, %v2825
    %v2827 = vpop.f32.mrb[0].mxu0
    %v2828 = vadd.f32 %v2635, %v2827
    %2829 = vmatprep.mubr.bf16.mxu0 %v1338
    %2830 = vmatmul.mubr.bf16.gmra.mrb[0].mxu0 %v1337
    %v2831 = vpop.f32.mrb[0].mxu0
    %v2832 = vadd.f32 %v2639, %v2831
    %v2833 = vpop.f32.mrb[0].mxu0
    %v2834 = vadd.f32 %v2641, %v2833
    %v2835 = vpop.f32.mrb[0].mxu0
    %v2836 = vadd.f32 %v2643, %v2835
    %v2837 = vpop.f32.mrb[0].mxu0
    %v2838 = vadd.f32 %v2645, %v2837
    %2839 = vmatprep.mubr.bf16.mxu0 %v1342
    %2840 = vmatmul.mubr.bf16.gmra.mrb[0].mxu0 %v1341
    %v2841 = vpop.f32.mrb[0].mxu0
    %v2842 = vadd.f32 %v2649, %v2841
    %v2843 = vpop.f32.mrb[0].mxu0
    %v2844 = vadd.f32 %v2651, %v2843
    %v2845 = vpop.f32.mrb[0].mxu0
    %v2846 = vadd.f32 %v2653, %v2845
    %v2847 = vpop.f32.mrb[0].mxu0
    %v2848 = vadd.f32 %v2655, %v2847
    %2849 = vmatprep.mubr.bf16.mxu0 %v1346
    %2850 = vmatmul.mubr.bf16.gmra.mrb[0].mxu0 %v1345
    %v2851 = vpop.f32.mrb[0].mxu0
    %v2852 = vadd.f32 %v2659, %v2851
    %v2853 = vpop.f32.mrb[0].mxu0
    %v2854 = vadd.f32 %v2661, %v2853
    %v2855 = vpop.f32.mrb[0].mxu0
    %v2856 = vadd.f32 %v2663, %v2855
    %v2857 = vpop.f32.mrb[0].mxu0
    %v2858 = vadd.f32 %v2665, %v2857
    %2859 = vmatprep.mubr.bf16.mxu0 %v1350
    %2860 = vmatmul.mubr.bf16.gmra.mrb[0].mxu0 %v1349
    %v2861 = vpop.f32.mrb[0].mxu0
    %v2862 = vadd.f32 %v2669, %v2861
    %v2863 = vpop.f32.mrb[0].mxu0
    %v2864 = vadd.f32 %v2671, %v2863
    %v2865 = vpop.f32.mrb[0].mxu0
    %v2866 = vadd.f32 %v2673, %v2865
    %v2867 = vpop.f32.mrb[0].mxu0
    %v2868 = vadd.f32 %v2675, %v2867
    %2869 = vmatprep.mubr.bf16.mxu0 %v1354
    %2870 = vmatmul.mubr.bf16.gmra.mrb[0].mxu0 %v1353
    %v2871 = vpop.f32.mrb[0].mxu0
    %v2872 = vadd.f32 %v2679, %v2871
    %v2873 = vpop.f32.mrb[0].mxu0
    %v2874 = vadd.f32 %v2681, %v2873
    %v2875 = vpop.f32.mrb[0].mxu0
    %v2876 = vadd.f32 %v2683, %v2875
    %v2877 = vpop.f32.mrb[0].mxu0
    %v2878 = vadd.f32 %v2685, %v2877
    %2879 = vmatprep.mubr.bf16.mxu0 %v1358
    %2880 = vmatmul.mubr.bf16.gmra.mrb[0].mxu0 %v1357
    %v2881 = vpop.f32.mrb[0].mxu0
    %v2882 = vadd.f32 %v2689, %v2881
    %v2883 = vpop.f32.mrb[0].mxu0
    %v2884 = vadd.f32 %v2691, %v2883
    %v2885 = vpop.f32.mrb[0].mxu0
    %v2886 = vadd.f32 %v2693, %v2885
    %v2887 = vpop.f32.mrb[0].mxu0
    %v2888 = vadd.f32 %v2695, %v2887
    %2889 = vmatprep.mubr.bf16.mxu0 %v1362
    %2890 = vmatmul.mubr.bf16.gmra.mrb[0].mxu0 %v1361
    %v2891 = vpop.f32.mrb[0].mxu0
    %v2892 = vadd.f32 %v2699, %v2891
    %v2893 = vpop.f32.mrb[0].mxu0
    %v2894 = vadd.f32 %v2701, %v2893
    %v2895 = vpop.f32.mrb[0].mxu0
    %v2896 = vadd.f32 %v2703, %v2895
    %v2897 = vpop.f32.mrb[0].mxu0
    %v2898 = vadd.f32 %v2705, %v2897
    %2899 = vmatprep.mubr.bf16.mxu0 %v1366
    %2900 = vmatmul.mubr.bf16.gmra.mrb[0].mxu0 %v1365
    %v2901 = vpop.f32.mrb[0].mxu0
    %v2902 = vadd.f32 %v2709, %v2901
    %v2903 = vpop.f32.mrb[0].mxu0
    %v2904 = vadd.f32 %v2711, %v2903
    %v2905 = vpop.f32.mrb[0].mxu0
    %v2906 = vadd.f32 %v2713, %v2905
    %v2907 = vpop.f32.mrb[0].mxu0
    %v2908 = vadd.f32 %v2715, %v2907
    %2909 = vmatprep.mubr.bf16.mxu0 %v1370
    %2910 = vmatmul.mubr.bf16.gmra.mrb[0].mxu0 %v1369
    %v2911 = vpop.f32.mrb[0].mxu0
    %v2912 = vadd.f32 %v2719, %v2911
    %v2913 = vpop.f32.mrb[0].mxu0
    %v2914 = vadd.f32 %v2721, %v2913
    %v2915 = vpop.f32.mrb[0].mxu0
    %v2916 = vadd.f32 %v2723, %v2915
    %v2917 = vpop.f32.mrb[0].mxu0
    %v2918 = vadd.f32 %v2725, %v2917
    %2919 = vmatprep.mubr.bf16.mxu0 %v1374
    %2920 = vmatmul.mubr.bf16.gmra.mrb[0].mxu0 %v1373
    %v2921 = vpop.f32.mrb[0].mxu0
    %v2922 = vadd.f32 %v2729, %v2921
    %v2923 = vpop.f32.mrb[0].mxu0
    %v2924 = vadd.f32 %v2731, %v2923
    %v2925 = vpop.f32.mrb[0].mxu0
    %v2926 = vadd.f32 %v2733, %v2925
    %v2927 = vpop.f32.mrb[0].mxu0
    %v2928 = vadd.f32 %v2735, %v2927
    %2929 = vmatprep.mubr.bf16.mxu0 %v1378
    %2930 = vmatmul.mubr.bf16.gmra.mrb[0].mxu0 %v1377
    %v2931 = vpop.f32.mrb[0].mxu0
    %v2932 = vadd.f32 %v2739, %v2931
    %v2933 = vpop.f32.mrb[0].mxu0
    %v2934 = vadd.f32 %v2741, %v2933
    %v2935 = vpop.f32.mrb[0].mxu0
    %v2936 = vadd.f32 %v2743, %v2935
    %v2937 = vpop.f32.mrb[0].mxu0
    %v2938 = vadd.f32 %v2745, %v2937
    %2939 = vdwg.mxu0
    %v2940 = vsub.f32 0.0, %v2396
    %v2941 = vsub.f32 0.0, %v2398
    %v2942 = vsub.f32 0.0, %v2782
    %v2943 = vsub.f32 0.0, %v2784
    %v2944 = vsub.f32 0.0, %v2400
    %v2945 = vsub.f32 0.0, %v2402
    %v2946 = vsub.f32 0.0, %v2786
    %v2947 = vsub.f32 0.0, %v2788
    %v2948 = vsub.f32 0.0, %v2406
    %v2949 = vsub.f32 0.0, %v2408
    %v2950 = vsub.f32 0.0, %v2792
    %v2951 = vsub.f32 0.0, %v2794
    %v2952 = vsub.f32 0.0, %v2410
    %v2953 = vsub.f32 0.0, %v2412
    %v2954 = vsub.f32 0.0, %v2796
    %v2955 = vsub.f32 0.0, %v2798
    %v2956 = vsub.f32 0.0, %v2416
    %v2957 = vsub.f32 0.0, %v2418
    %v2958 = vsub.f32 0.0, %v2802
    %v2959 = vsub.f32 0.0, %v2804
    %v2960 = vsub.f32 0.0, %v2420
    %v2961 = vsub.f32 0.0, %v2422
    %v2962 = vsub.f32 0.0, %v2806
    %v2963 = vsub.f32 0.0, %v2808
    %v2964 = vsub.f32 0.0, %v2426
    %v2965 = vsub.f32 0.0, %v2428
    %v2966 = vsub.f32 0.0, %v2812
    %v2967 = vsub.f32 0.0, %v2814
    %v2968 = vsub.f32 0.0, %v2430
    %v2969 = vsub.f32 0.0, %v2432
    %v2970 = vsub.f32 0.0, %v2816
    %v2971 = vsub.f32 0.0, %v2818
    %v2972 = vsub.f32 0.0, %v2436
    %v2973 = vsub.f32 0.0, %v2438
    %v2974 = vsub.f32 0.0, %v2822
    %v2975 = vsub.f32 0.0, %v2824
    %v2976 = vsub.f32 0.0, %v2440
    %v2977 = vsub.f32 0.0, %v2442
    %v2978 = vsub.f32 0.0, %v2826
    %v2979 = vsub.f32 0.0, %v2828
    %v2980 = vsub.f32 0.0, %v2446
    %v2981 = vsub.f32 0.0, %v2448
    %v2982 = vsub.f32 0.0, %v2832
    %v2983 = vsub.f32 0.0, %v2834
    %v2984 = vsub.f32 0.0, %v2450
    %v2985 = vsub.f32 0.0, %v2452
    %v2986 = vsub.f32 0.0, %v2836
    %v2987 = vsub.f32 0.0, %v2838
    %v2988 = vsub.f32 0.0, %v2456
    %v2989 = vsub.f32 0.0, %v2458
    %v2990 = vsub.f32 0.0, %v2842
    %v2991 = vsub.f32 0.0, %v2844
    %v2992 = vsub.f32 0.0, %v2460
    %v2993 = vsub.f32 0.0, %v2462
    %v2994 = vsub.f32 0.0, %v2846
    %v2995 = vsub.f32 0.0, %v2848
    %v2996 = vsub.f32 0.0, %v2466
    %v2997 = vsub.f32 0.0, %v2468
    %v2998 = vsub.f32 0.0, %v2852
    %v2999 = vsub.f32 0.0, %v2854
    %v3000 = vsub.f32 0.0, %v2470
    %v3001 = vsub.f32 0.0, %v2472
    %v3002 = vsub.f32 0.0, %v2856
    %v3003 = vsub.f32 0.0, %v2858
    %v3004 = vsub.f32 0.0, %v2476
    %v3005 = vsub.f32 0.0, %v2478
    %v3006 = vsub.f32 0.0, %v2862
    %v3007 = vsub.f32 0.0, %v2864
    %v3008 = vsub.f32 0.0, %v2480
    %v3009 = vsub.f32 0.0, %v2482
    %v3010 = vsub.f32 0.0, %v2866
    %v3011 = vsub.f32 0.0, %v2868
    %v3012 = vsub.f32 0.0, %v2486
    %v3013 = vsub.f32 0.0, %v2488
    %v3014 = vsub.f32 0.0, %v2872
    %v3015 = vsub.f32 0.0, %v2874
    %v3016 = vsub.f32 0.0, %v2490
    %v3017 = vsub.f32 0.0, %v2492
    %v3018 = vsub.f32 0.0, %v2876
    %v3019 = vsub.f32 0.0, %v2878
    %v3020 = vsub.f32 0.0, %v2496
    %v3021 = vsub.f32 0.0, %v2498
    %v3022 = vsub.f32 0.0, %v2882
    %v3023 = vsub.f32 0.0, %v2884
    %v3024 = vsub.f32 0.0, %v2500
    %v3025 = vsub.f32 0.0, %v2502
    %v3026 = vsub.f32 0.0, %v2886
    %v3027 = vsub.f32 0.0, %v2888
    %v3028 = vsub.f32 0.0, %v2506
    %v3029 = vsub.f32 0.0, %v2508
    %v3030 = vsub.f32 0.0, %v2892
    %v3031 = vsub.f32 0.0, %v2894
    %v3032 = vsub.f32 0.0, %v2510
    %v3033 = vsub.f32 0.0, %v2512
    %v3034 = vsub.f32 0.0, %v2896
    %v3035 = vsub.f32 0.0, %v2898
    %v3036 = vsub.f32 0.0, %v2516
    %v3037 = vsub.f32 0.0, %v2518
    %v3038 = vsub.f32 0.0, %v2902
    %v3039 = vsub.f32 0.0, %v2904
    %v3040 = vsub.f32 0.0, %v2520
    %v3041 = vsub.f32 0.0, %v2522
    %v3042 = vsub.f32 0.0, %v2906
    %v3043 = vsub.f32 0.0, %v2908
    %v3044 = vsub.f32 0.0, %v2526
    %v3045 = vsub.f32 0.0, %v2528
    %v3046 = vsub.f32 0.0, %v2912
    %v3047 = vsub.f32 0.0, %v2914
    %v3048 = vsub.f32 0.0, %v2530
    %v3049 = vsub.f32 0.0, %v2532
    %v3050 = vsub.f32 0.0, %v2916
    %v3051 = vsub.f32 0.0, %v2918
    %v3052 = vsub.f32 0.0, %v2536
    %v3053 = vsub.f32 0.0, %v2538
    %v3054 = vsub.f32 0.0, %v2922
    %v3055 = vsub.f32 0.0, %v2924
    %v3056 = vsub.f32 0.0, %v2540
    %v3057 = vsub.f32 0.0, %v2542
    %v3058 = vsub.f32 0.0, %v2926
    %v3059 = vsub.f32 0.0, %v2928
    %v3060 = vsub.f32 0.0, %v2546
    %v3061 = vsub.f32 0.0, %v2548
    %v3062 = vsub.f32 0.0, %v2932
    %v3063 = vsub.f32 0.0, %v2934
    %v3064 = vsub.f32 0.0, %v2550
    %v3065 = vsub.f32 0.0, %v2552
    %v3066 = vsub.f32 0.0, %v2936
    %v3067 = vsub.f32 0.0, %v2938
    %v3068 = vmul.f32 %v2940, 1.442695
    %v3069 = vpow.pop %v3068
    %v3070 = vmul.f32 %v2941, 1.442695
    %v3071 = vpow.pop %v3070
    %v3072 = vmul.f32 %v2942, 1.442695
    %v3073 = vpow.pop %v3072
    %v3074 = vmul.f32 %v2943, 1.442695
    %v3075 = vpow.pop %v3074
    %v3076 = vmul.f32 %v2944, 1.442695
    %v3077 = vpow.pop %v3076
    %v3078 = vmul.f32 %v2945, 1.442695
    %v3079 = vpow.pop %v3078
    %v3080 = vmul.f32 %v2946, 1.442695
    %v3081 = vpow.pop %v3080
    %v3082 = vmul.f32 %v2947, 1.442695
    %v3083 = vpow.pop %v3082
    %v3084 = vmul.f32 %v2948, 1.442695
    %v3085 = vpow.pop %v3084
    %v3086 = vmul.f32 %v2949, 1.442695
    %v3087 = vpow.pop %v3086
    %v3088 = vmul.f32 %v2950, 1.442695
    %v3089 = vpow.pop %v3088
    %v3090 = vmul.f32 %v2951, 1.442695
    %v3091 = vpow.pop %v3090
    %v3092 = vmul.f32 %v2952, 1.442695
    %v3093 = vpow.pop %v3092
    %v3094 = vmul.f32 %v2953, 1.442695
    %v3095 = vpow.pop %v3094
    %v3096 = vmul.f32 %v2954, 1.442695
    %v3097 = vpow.pop %v3096
    %v3098 = vmul.f32 %v2955, 1.442695
    %v3099 = vpow.pop %v3098
    %v3100 = vmul.f32 %v2956, 1.442695
    %v3101 = vpow.pop %v3100
    %v3102 = vmul.f32 %v2957, 1.442695
    %v3103 = vpow.pop %v3102
    %v3104 = vmul.f32 %v2958, 1.442695
    %v3105 = vpow.pop %v3104
    %v3106 = vmul.f32 %v2959, 1.442695
    %v3107 = vpow.pop %v3106
    %v3108 = vmul.f32 %v2960, 1.442695
    %v3109 = vpow.pop %v3108
    %v3110 = vmul.f32 %v2961, 1.442695
    %v3111 = vpow.pop %v3110
    %v3112 = vmul.f32 %v2962, 1.442695
    %v3113 = vpow.pop %v3112
    %v3114 = vmul.f32 %v2963, 1.442695
    %v3115 = vpow.pop %v3114
    %v3116 = vmul.f32 %v2964, 1.442695
    %v3117 = vpow.pop %v3116
    %v3118 = vmul.f32 %v2965, 1.442695
    %v3119 = vpow.pop %v3118
    %v3120 = vmul.f32 %v2966, 1.442695
    %v3121 = vpow.pop %v3120
    %v3122 = vmul.f32 %v2967, 1.442695
    %v3123 = vpow.pop %v3122
    %v3124 = vmul.f32 %v2968, 1.442695
    %v3125 = vpow.pop %v3124
    %v3126 = vmul.f32 %v2969, 1.442695
    %v3127 = vpow.pop %v3126
    %v3128 = vmul.f32 %v2970, 1.442695
    %v3129 = vpow.pop %v3128
    %v3130 = vmul.f32 %v2971, 1.442695
    %v3131 = vpow.pop %v3130
    %v3132 = vmul.f32 %v2972, 1.442695
    %v3133 = vpow.pop %v3132
    %v3134 = vmul.f32 %v2973, 1.442695
    %v3135 = vpow.pop %v3134
    %v3136 = vmul.f32 %v2974, 1.442695
    %v3137 = vpow.pop %v3136
    %v3138 = vmul.f32 %v2975, 1.442695
    %v3139 = vpow.pop %v3138
    %v3140 = vmul.f32 %v2976, 1.442695
    %v3141 = vpow.pop %v3140
    %v3142 = vmul.f32 %v2977, 1.442695
    %v3143 = vpow.pop %v3142
    %v3144 = vmul.f32 %v2978, 1.442695
    %v3145 = vpow.pop %v3144
    %v3146 = vmul.f32 %v2979, 1.442695
    %v3147 = vpow.pop %v3146
    %v3148 = vmul.f32 %v2980, 1.442695
    %v3149 = vpow.pop %v3148
    %v3150 = vmul.f32 %v2981, 1.442695
    %v3151 = vpow.pop %v3150
    %v3152 = vmul.f32 %v2982, 1.442695
    %v3153 = vpow.pop %v3152
    %v3154 = vmul.f32 %v2983, 1.442695
    %v3155 = vpow.pop %v3154
    %v3156 = vmul.f32 %v2984, 1.442695
    %v3157 = vpow.pop %v3156
    %v3158 = vmul.f32 %v2985, 1.442695
    %v3159 = vpow.pop %v3158
    %v3160 = vmul.f32 %v2986, 1.442695
    %v3161 = vpow.pop %v3160
    %v3162 = vmul.f32 %v2987, 1.442695
    %v3163 = vpow.pop %v3162
    %v3164 = vmul.f32 %v2988, 1.442695
    %v3165 = vpow.pop %v3164
    %v3166 = vmul.f32 %v2989, 1.442695
    %v3167 = vpow.pop %v3166
    %v3168 = vmul.f32 %v2990, 1.442695
    %v3169 = vpow.pop %v3168
    %v3170 = vmul.f32 %v2991, 1.442695
    %v3171 = vpow.pop %v3170
    %v3172 = vmul.f32 %v2992, 1.442695
    %v3173 = vpow.pop %v3172
    %v3174 = vmul.f32 %v2993, 1.442695
    %v3175 = vpow.pop %v3174
    %v3176 = vmul.f32 %v2994, 1.442695
    %v3177 = vpow.pop %v3176
    %v3178 = vmul.f32 %v2995, 1.442695
    %v3179 = vpow.pop %v3178
    %v3180 = vmul.f32 %v2996, 1.442695
    %v3181 = vpow.pop %v3180
    %v3182 = vmul.f32 %v2997, 1.442695
    %v3183 = vpow.pop %v3182
    %v3184 = vmul.f32 %v2998, 1.442695
    %v3185 = vpow.pop %v3184
    %v3186 = vmul.f32 %v2999, 1.442695
    %v3187 = vpow.pop %v3186
    %v3188 = vmul.f32 %v3000, 1.442695
    %v3189 = vpow.pop %v3188
    %v3190 = vmul.f32 %v3001, 1.442695
    %v3191 = vpow.pop %v3190
    %v3192 = vmul.f32 %v3002, 1.442695
    %v3193 = vpow.pop %v3192
    %v3194 = vmul.f32 %v3003, 1.442695
    %v3195 = vpow.pop %v3194
    %v3196 = vmul.f32 %v3004, 1.442695
    %v3197 = vpow.pop %v3196
    %v3198 = vmul.f32 %v3005, 1.442695
    %v3199 = vpow.pop %v3198
    %v3200 = vmul.f32 %v3006, 1.442695
    %v3201 = vpow.pop %v3200
    %v3202 = vmul.f32 %v3007, 1.442695
    %v3203 = vpow.pop %v3202
    %v3204 = vmul.f32 %v3008, 1.442695
    %v3205 = vpow.pop %v3204
    %v3206 = vmul.f32 %v3009, 1.442695
    %v3207 = vpow.pop %v3206
    %v3208 = vmul.f32 %v3010, 1.442695
    %v3209 = vpow.pop %v3208
    %v3210 = vmul.f32 %v3011, 1.442695
    %v3211 = vpow.pop %v3210
    %v3212 = vmul.f32 %v3012, 1.442695
    %v3213 = vpow.pop %v3212
    %v3214 = vmul.f32 %v3013, 1.442695
    %v3215 = vpow.pop %v3214
    %v3216 = vmul.f32 %v3014, 1.442695
    %v3217 = vpow.pop %v3216
    %v3218 = vmul.f32 %v3015, 1.442695
    %v3219 = vpow.pop %v3218
    %v3220 = vmul.f32 %v3016, 1.442695
    %v3221 = vpow.pop %v3220
    %v3222 = vmul.f32 %v3017, 1.442695
    %v3223 = vpow.pop %v3222
    %v3224 = vmul.f32 %v3018, 1.442695
    %v3225 = vpow.pop %v3224
    %v3226 = vmul.f32 %v3019, 1.442695
    %v3227 = vpow.pop %v3226
    %v3228 = vmul.f32 %v3020, 1.442695
    %v3229 = vpow.pop %v3228
    %v3230 = vmul.f32 %v3021, 1.442695
    %v3231 = vpow.pop %v3230
    %v3232 = vmul.f32 %v3022, 1.442695
    %v3233 = vpow.pop %v3232
    %v3234 = vmul.f32 %v3023, 1.442695
    %v3235 = vpow.pop %v3234
    %v3236 = vmul.f32 %v3024, 1.442695
    %v3237 = vpow.pop %v3236
    %v3238 = vmul.f32 %v3025, 1.442695
    %v3239 = vpow.pop %v3238
    %v3240 = vmul.f32 %v3026, 1.442695
    %v3241 = vpow.pop %v3240
    %v3242 = vmul.f32 %v3027, 1.442695
    %v3243 = vpow.pop %v3242
    %v3244 = vmul.f32 %v3028, 1.442695
    %v3245 = vpow.pop %v3244
    %v3246 = vmul.f32 %v3029, 1.442695
    %v3247 = vpow.pop %v3246
    %v3248 = vmul.f32 %v3030, 1.442695
    %v3249 = vpow.pop %v3248
    %v3250 = vmul.f32 %v3031, 1.442695
    %v3251 = vpow.pop %v3250
    %v3252 = vmul.f32 %v3032, 1.442695
    %v3253 = vpow.pop %v3252
    %v3254 = vmul.f32 %v3033, 1.442695
    %v3255 = vpow.pop %v3254
    %v3256 = vmul.f32 %v3034, 1.442695
    %v3257 = vpow.pop %v3256
    %v3258 = vmul.f32 %v3035, 1.442695
    %v3259 = vpow.pop %v3258
    %v3260 = vmul.f32 %v3036, 1.442695
    %v3261 = vpow.pop %v3260
    %v3262 = vmul.f32 %v3037, 1.442695
    %v3263 = vpow.pop %v3262
    %v3264 = vmul.f32 %v3038, 1.442695
    %v3265 = vpow.pop %v3264
    %v3266 = vmul.f32 %v3039, 1.442695
    %v3267 = vpow.pop %v3266
    %v3268 = vmul.f32 %v3040, 1.442695
    %v3269 = vpow.pop %v3268
    %v3270 = vmul.f32 %v3041, 1.442695
    %v3271 = vpow.pop %v3270
    %v3272 = vmul.f32 %v3042, 1.442695
    %v3273 = vpow.pop %v3272
    %v3274 = vmul.f32 %v3043, 1.442695
    %v3275 = vpow.pop %v3274
    %v3276 = vmul.f32 %v3044, 1.442695
    %v3277 = vpow.pop %v3276
    %v3278 = vmul.f32 %v3045, 1.442695
    %v3279 = vpow.pop %v3278
    %v3280 = vmul.f32 %v3046, 1.442695
    %v3281 = vpow.pop %v3280
    %v3282 = vmul.f32 %v3047, 1.442695
    %v3283 = vpow.pop %v3282
    %v3284 = vmul.f32 %v3048, 1.442695
    %v3285 = vpow.pop %v3284
    %v3286 = vmul.f32 %v3049, 1.442695
    %v3287 = vpow.pop %v3286
    %v3288 = vmul.f32 %v3050, 1.442695
    %v3289 = vpow.pop %v3288
    %v3290 = vmul.f32 %v3051, 1.442695
    %v3291 = vpow.pop %v3290
    %v3292 = vmul.f32 %v3052, 1.442695
    %v3293 = vpow.pop %v3292
    %v3294 = vmul.f32 %v3053, 1.442695
    %v3295 = vpow.pop %v3294
    %v3296 = vmul.f32 %v3054, 1.442695
    %v3297 = vpow.pop %v3296
    %v3298 = vmul.f32 %v3055, 1.442695
    %v3299 = vpow.pop %v3298
    %v3300 = vmul.f32 %v3056, 1.442695
    %v3301 = vpow.pop %v3300
    %v3302 = vmul.f32 %v3057, 1.442695
    %v3303 = vpow.pop %v3302
    %v3304 = vmul.f32 %v3058, 1.442695
    %v3305 = vpow.pop %v3304
    %v3306 = vmul.f32 %v3059, 1.442695
    %v3307 = vpow.pop %v3306
    %v3308 = vmul.f32 %v3060, 1.442695
    %v3309 = vpow.pop %v3308
    %v3310 = vmul.f32 %v3061, 1.442695
    %v3311 = vpow.pop %v3310
    %v3312 = vmul.f32 %v3062, 1.442695
    %v3313 = vpow.pop %v3312
    %v3314 = vmul.f32 %v3063, 1.442695
    %v3315 = vpow.pop %v3314
    %v3316 = vmul.f32 %v3064, 1.442695
    %v3317 = vpow.pop %v3316
    %v3318 = vmul.f32 %v3065, 1.442695
    %v3319 = vpow.pop %v3318
    %v3320 = vmul.f32 %v3066, 1.442695
    %v3321 = vpow.pop %v3320
    %v3322 = vmul.f32 %v3067, 1.442695
    %v3323 = vpow.pop %v3322
    %v3324 = vadd.f32 %v3069, 1.0
    %v3325 = vadd.f32 %v3071, 1.0
    %v3326 = vadd.f32 %v3073, 1.0
    %v3327 = vadd.f32 %v3075, 1.0
    %v3328 = vadd.f32 %v3077, 1.0
    %v3329 = vadd.f32 %v3079, 1.0
    %v3330 = vadd.f32 %v3081, 1.0
    %v3331 = vadd.f32 %v3083, 1.0
    %v3332 = vadd.f32 %v3085, 1.0
    %v3333 = vadd.f32 %v3087, 1.0
    %v3334 = vadd.f32 %v3089, 1.0
    %v3335 = vadd.f32 %v3091, 1.0
    %v3336 = vadd.f32 %v3093, 1.0
    %v3337 = vadd.f32 %v3095, 1.0
    %v3338 = vadd.f32 %v3097, 1.0
    %v3339 = vadd.f32 %v3099, 1.0
    %v3340 = vadd.f32 %v3101, 1.0
    %v3341 = vadd.f32 %v3103, 1.0
    %v3342 = vadd.f32 %v3105, 1.0
    %v3343 = vadd.f32 %v3107, 1.0
    %v3344 = vadd.f32 %v3109, 1.0
    %v3345 = vadd.f32 %v3111, 1.0
    %v3346 = vadd.f32 %v3113, 1.0
    %v3347 = vadd.f32 %v3115, 1.0
    %v3348 = vadd.f32 %v3117, 1.0
    %v3349 = vadd.f32 %v3119, 1.0
    %v3350 = vadd.f32 %v3121, 1.0
    %v3351 = vadd.f32 %v3123, 1.0
    %v3352 = vadd.f32 %v3125, 1.0
    %v3353 = vadd.f32 %v3127, 1.0
    %v3354 = vadd.f32 %v3129, 1.0
    %v3355 = vadd.f32 %v3131, 1.0
    %v3356 = vadd.f32 %v3133, 1.0
    %v3357 = vadd.f32 %v3135, 1.0
    %v3358 = vadd.f32 %v3137, 1.0
    %v3359 = vadd.f32 %v3139, 1.0
    %v3360 = vadd.f32 %v3141, 1.0
    %v3361 = vadd.f32 %v3143, 1.0
    %v3362 = vadd.f32 %v3145, 1.0
    %v3363 = vadd.f32 %v3147, 1.0
    %v3364 = vadd.f32 %v3149, 1.0
    %v3365 = vadd.f32 %v3151, 1.0
    %v3366 = vadd.f32 %v3153, 1.0
    %v3367 = vadd.f32 %v3155, 1.0
    %v3368 = vadd.f32 %v3157, 1.0
    %v3369 = vadd.f32 %v3159, 1.0
    %v3370 = vadd.f32 %v3161, 1.0
    %v3371 = vadd.f32 %v3163, 1.0
    %v3372 = vadd.f32 %v3165, 1.0
    %v3373 = vadd.f32 %v3167, 1.0
    %v3374 = vadd.f32 %v3169, 1.0
    %v3375 = vadd.f32 %v3171, 1.0
    %v3376 = vadd.f32 %v3173, 1.0
    %v3377 = vadd.f32 %v3175, 1.0
    %v3378 = vadd.f32 %v3177, 1.0
    %v3379 = vadd.f32 %v3179, 1.0
    %v3380 = vadd.f32 %v3181, 1.0
    %v3381 = vadd.f32 %v3183, 1.0
    %v3382 = vadd.f32 %v3185, 1.0
    %v3383 = vadd.f32 %v3187, 1.0
    %v3384 = vadd.f32 %v3189, 1.0
    %v3385 = vadd.f32 %v3191, 1.0
    %v3386 = vadd.f32 %v3193, 1.0
    %v3387 = vadd.f32 %v3195, 1.0
    %v3388 = vadd.f32 %v3197, 1.0
    %v3389 = vadd.f32 %v3199, 1.0
    %v3390 = vadd.f32 %v3201, 1.0
    %v3391 = vadd.f32 %v3203, 1.0
    %v3392 = vadd.f32 %v3205, 1.0
    %v3393 = vadd.f32 %v3207, 1.0
    %v3394 = vadd.f32 %v3209, 1.0
    %v3395 = vadd.f32 %v3211, 1.0
    %v3396 = vadd.f32 %v3213, 1.0
    %v3397 = vadd.f32 %v3215, 1.0
    %v3398 = vadd.f32 %v3217, 1.0
    %v3399 = vadd.f32 %v3219, 1.0
    %v3400 = vadd.f32 %v3221, 1.0
    %v3401 = vadd.f32 %v3223, 1.0
    %v3402 = vadd.f32 %v3225, 1.0
    %v3403 = vadd.f32 %v3227, 1.0
    %v3404 = vadd.f32 %v3229, 1.0
    %v3405 = vadd.f32 %v3231, 1.0
    %v3406 = vadd.f32 %v3233, 1.0
    %v3407 = vadd.f32 %v3235, 1.0
    %v3408 = vadd.f32 %v3237, 1.0
    %v3409 = vadd.f32 %v3239, 1.0
    %v3410 = vadd.f32 %v3241, 1.0
    %v3411 = vadd.f32 %v3243, 1.0
    %v3412 = vadd.f32 %v3245, 1.0
    %v3413 = vadd.f32 %v3247, 1.0
    %v3414 = vadd.f32 %v3249, 1.0
    %v3415 = vadd.f32 %v3251, 1.0
    %v3416 = vadd.f32 %v3253, 1.0
    %v3417 = vadd.f32 %v3255, 1.0
    %v3418 = vadd.f32 %v3257, 1.0
    %v3419 = vadd.f32 %v3259, 1.0
    %v3420 = vadd.f32 %v3261, 1.0
    %v3421 = vadd.f32 %v3263, 1.0
    %v3422 = vadd.f32 %v3265, 1.0
    %v3423 = vadd.f32 %v3267, 1.0
    %v3424 = vadd.f32 %v3269, 1.0
    %v3425 = vadd.f32 %v3271, 1.0
    %v3426 = vadd.f32 %v3273, 1.0
    %v3427 = vadd.f32 %v3275, 1.0
    %v3428 = vadd.f32 %v3277, 1.0
    %v3429 = vadd.f32 %v3279, 1.0
    %v3430 = vadd.f32 %v3281, 1.0
    %v3431 = vadd.f32 %v3283, 1.0
    %v3432 = vadd.f32 %v3285, 1.0
    %v3433 = vadd.f32 %v3287, 1.0
    %v3434 = vadd.f32 %v3289, 1.0
    %v3435 = vadd.f32 %v3291, 1.0
    %v3436 = vadd.f32 %v3293, 1.0
    %v3437 = vadd.f32 %v3295, 1.0
    %v3438 = vadd.f32 %v3297, 1.0
    %v3439 = vadd.f32 %v3299, 1.0
    %v3440 = vadd.f32 %v3301, 1.0
    %v3441 = vadd.f32 %v3303, 1.0
    %v3442 = vadd.f32 %v3305, 1.0
    %v3443 = vadd.f32 %v3307, 1.0
    %v3444 = vadd.f32 %v3309, 1.0
    %v3445 = vadd.f32 %v3311, 1.0
    %v3446 = vadd.f32 %v3313, 1.0
    %v3447 = vadd.f32 %v3315, 1.0
    %v3448 = vadd.f32 %v3317, 1.0
    %v3449 = vadd.f32 %v3319, 1.0
    %v3450 = vadd.f32 %v3321, 1.0
    %v3451 = vadd.f32 %v3323, 1.0
    %v3452 = vrcp.pop %v3324
    %v3453 = vrcp.pop %v3325
    %v3454 = vrcp.pop %v3326
    %v3455 = vrcp.pop %v3327
    %v3456 = vrcp.pop %v3328
    %v3457 = vrcp.pop %v3329
    %v3458 = vrcp.pop %v3330
    %v3459 = vrcp.pop %v3331
    %v3460 = vrcp.pop %v3332
    %v3461 = vrcp.pop %v3333
    %v3462 = vrcp.pop %v3334
    %v3463 = vrcp.pop %v3335
    %v3464 = vrcp.pop %v3336
    %v3465 = vrcp.pop %v3337
    %v3466 = vrcp.pop %v3338
    %v3467 = vrcp.pop %v3339
    %v3468 = vrcp.pop %v3340
    %v3469 = vrcp.pop %v3341
    %v3470 = vrcp.pop %v3342
    %v3471 = vrcp.pop %v3343
    %v3472 = vrcp.pop %v3344
    %v3473 = vrcp.pop %v3345
    %v3474 = vrcp.pop %v3346
    %v3475 = vrcp.pop %v3347
    %v3476 = vrcp.pop %v3348
    %v3477 = vrcp.pop %v3349
    %v3478 = vrcp.pop %v3350
    %v3479 = vrcp.pop %v3351
    %v3480 = vrcp.pop %v3352
    %v3481 = vrcp.pop %v3353
    %v3482 = vrcp.pop %v3354
    %v3483 = vrcp.pop %v3355
    %v3484 = vrcp.pop %v3356
    %v3485 = vrcp.pop %v3357
    %v3486 = vrcp.pop %v3358
    %v3487 = vrcp.pop %v3359
    %v3488 = vrcp.pop %v3360
    %v3489 = vrcp.pop %v3361
    %v3490 = vrcp.pop %v3362
    %v3491 = vrcp.pop %v3363
    %v3492 = vrcp.pop %v3364
    %v3493 = vrcp.pop %v3365
    %v3494 = vrcp.pop %v3366
    %v3495 = vrcp.pop %v3367
    %v3496 = vrcp.pop %v3368
    %v3497 = vrcp.pop %v3369
    %v3498 = vrcp.pop %v3370
    %v3499 = vrcp.pop %v3371
    %v3500 = vrcp.pop %v3372
    %v3501 = vrcp.pop %v3373
    %v3502 = vrcp.pop %v3374
    %v3503 = vrcp.pop %v3375
    %v3504 = vrcp.pop %v3376
    %v3505 = vrcp.pop %v3377
    %v3506 = vrcp.pop %v3378
    %v3507 = vrcp.pop %v3379
    %v3508 = vrcp.pop %v3380
    %v3509 = vrcp.pop %v3381
    %v3510 = vrcp.pop %v3382
    %v3511 = vrcp.pop %v3383
    %v3512 = vrcp.pop %v3384
    %v3513 = vrcp.pop %v3385
    %v3514 = vrcp.pop %v3386
    %v3515 = vrcp.pop %v3387
    %v3516 = vrcp.pop %v3388
    %v3517 = vrcp.pop %v3389
    %v3518 = vrcp.pop %v3390
    %v3519 = vrcp.pop %v3391
    %v3520 = vrcp.pop %v3392
    %v3521 = vrcp.pop %v3393
    %v3522 = vrcp.pop %v3394
    %v3523 = vrcp.pop %v3395
    %v3524 = vrcp.pop %v3396
    %v3525 = vrcp.pop %v3397
    %v3526 = vrcp.pop %v3398
    %v3527 = vrcp.pop %v3399
    %v3528 = vrcp.pop %v3400
    %v3529 = vrcp.pop %v3401
    %v3530 = vrcp.pop %v3402
    %v3531 = vrcp.pop %v3403
    %v3532 = vrcp.pop %v3404
    %v3533 = vrcp.pop %v3405
    %v3534 = vrcp.pop %v3406
    %v3535 = vrcp.pop %v3407
    %v3536 = vrcp.pop %v3408
    %v3537 = vrcp.pop %v3409
    %v3538 = vrcp.pop %v3410
    %v3539 = vrcp.pop %v3411
    %v3540 = vrcp.pop %v3412
    %v3541 = vrcp.pop %v3413
    %v3542 = vrcp.pop %v3414
    %v3543 = vrcp.pop %v3415
    %v3544 = vrcp.pop %v3416
    %v3545 = vrcp.pop %v3417
    %v3546 = vrcp.pop %v3418
    %v3547 = vrcp.pop %v3419
    %v3548 = vrcp.pop %v3420
    %v3549 = vrcp.pop %v3421
    %v3550 = vrcp.pop %v3422
    %v3551 = vrcp.pop %v3423
    %v3552 = vrcp.pop %v3424
    %v3553 = vrcp.pop %v3425
    %v3554 = vrcp.pop %v3426
    %v3555 = vrcp.pop %v3427
    %v3556 = vrcp.pop %v3428
    %v3557 = vrcp.pop %v3429
    %v3558 = vrcp.pop %v3430
    %v3559 = vrcp.pop %v3431
    %v3560 = vrcp.pop %v3432
    %v3561 = vrcp.pop %v3433
    %v3562 = vrcp.pop %v3434
    %v3563 = vrcp.pop %v3435
    %v3564 = vrcp.pop %v3436
    %v3565 = vrcp.pop %v3437
    %v3566 = vrcp.pop %v3438
    %v3567 = vrcp.pop %v3439
    %v3568 = vrcp.pop %v3440
    %v3569 = vrcp.pop %v3441
    %v3570 = vrcp.pop %v3442
    %v3571 = vrcp.pop %v3443
    %v3572 = vrcp.pop %v3444
    %v3573 = vrcp.pop %v3445
    %v3574 = vrcp.pop %v3446
    %v3575 = vrcp.pop %v3447
    %v3576 = vrcp.pop %v3448
    %v3577 = vrcp.pop %v3449
    %v3578 = vrcp.pop %v3450
    %v3579 = vrcp.pop %v3451
    %v3580 = vmul.f32 %v2396, %v3452
    %v3581 = vmul.f32 %v2398, %v3453
    %v3582 = vmul.f32 %v2782, %v3454
    %v3583 = vmul.f32 %v2784, %v3455
    %v3584 = vmul.f32 %v2400, %v3456
    %v3585 = vmul.f32 %v2402, %v3457
    %v3586 = vmul.f32 %v2786, %v3458
    %v3587 = vmul.f32 %v2788, %v3459
    %v3588 = vmul.f32 %v2406, %v3460
    %v3589 = vmul.f32 %v2408, %v3461
    %v3590 = vmul.f32 %v2792, %v3462
    %v3591 = vmul.f32 %v2794, %v3463
    %v3592 = vmul.f32 %v2410, %v3464
    %v3593 = vmul.f32 %v2412, %v3465
    %v3594 = vmul.f32 %v2796, %v3466
    %v3595 = vmul.f32 %v2798, %v3467
    %v3596 = vmul.f32 %v2416, %v3468
    %v3597 = vmul.f32 %v2418, %v3469
    %v3598 = vmul.f32 %v2802, %v3470
    %v3599 = vmul.f32 %v2804, %v3471
    %v3600 = vmul.f32 %v2420, %v3472
    %v3601 = vmul.f32 %v2422, %v3473
    %v3602 = vmul.f32 %v2806, %v3474
    %v3603 = vmul.f32 %v2808, %v3475
    %v3604 = vmul.f32 %v2426, %v3476
    %v3605 = vmul.f32 %v2428, %v3477
    %v3606 = vmul.f32 %v2812, %v3478
    %v3607 = vmul.f32 %v2814, %v3479
    %v3608 = vmul.f32 %v2430, %v3480
    %v3609 = vmul.f32 %v2432, %v3481
    %v3610 = vmul.f32 %v2816, %v3482
    %v3611 = vmul.f32 %v2818, %v3483
    %v3612 = vmul.f32 %v2436, %v3484
    %v3613 = vmul.f32 %v2438, %v3485
    %v3614 = vmul.f32 %v2822, %v3486
    %v3615 = vmul.f32 %v2824, %v3487
    %v3616 = vmul.f32 %v2440, %v3488
    %v3617 = vmul.f32 %v2442, %v3489
    %v3618 = vmul.f32 %v2826, %v3490
    %v3619 = vmul.f32 %v2828, %v3491
    %v3620 = vmul.f32 %v2446, %v3492
    %v3621 = vmul.f32 %v2448, %v3493
    %v3622 = vmul.f32 %v2832, %v3494
    %v3623 = vmul.f32 %v2834, %v3495
    %v3624 = vmul.f32 %v2450, %v3496
    %v3625 = vmul.f32 %v2452, %v3497
    %v3626 = vmul.f32 %v2836, %v3498
    %v3627 = vmul.f32 %v2838, %v3499
    %v3628 = vmul.f32 %v2456, %v3500
    %v3629 = vmul.f32 %v2458, %v3501
    %v3630 = vmul.f32 %v2842, %v3502
    %v3631 = vmul.f32 %v2844, %v3503
    %v3632 = vmul.f32 %v2460, %v3504
    %v3633 = vmul.f32 %v2462, %v3505
    %v3634 = vmul.f32 %v2846, %v3506
    %v3635 = vmul.f32 %v2848, %v3507
    %v3636 = vmul.f32 %v2466, %v3508
    %v3637 = vmul.f32 %v2468, %v3509
    %v3638 = vmul.f32 %v2852, %v3510
    %v3639 = vmul.f32 %v2854, %v3511
    %v3640 = vmul.f32 %v2470, %v3512
    %v3641 = vmul.f32 %v2472, %v3513
    %v3642 = vmul.f32 %v2856, %v3514
    %v3643 = vmul.f32 %v2858, %v3515
    %v3644 = vmul.f32 %v2476, %v3516
    %v3645 = vmul.f32 %v2478, %v3517
    %v3646 = vmul.f32 %v2862, %v3518
    %v3647 = vmul.f32 %v2864, %v3519
    %v3648 = vmul.f32 %v2480, %v3520
    %v3649 = vmul.f32 %v2482, %v3521
    %v3650 = vmul.f32 %v2866, %v3522
    %v3651 = vmul.f32 %v2868, %v3523
    %v3652 = vmul.f32 %v2486, %v3524
    %v3653 = vmul.f32 %v2488, %v3525
    %v3654 = vmul.f32 %v2872, %v3526
    %v3655 = vmul.f32 %v2874, %v3527
    %v3656 = vmul.f32 %v2490, %v3528
    %v3657 = vmul.f32 %v2492, %v3529
    %v3658 = vmul.f32 %v2876, %v3530
    %v3659 = vmul.f32 %v2878, %v3531
    %v3660 = vmul.f32 %v2496, %v3532
    %v3661 = vmul.f32 %v2498, %v3533
    %v3662 = vmul.f32 %v2882, %v3534
    %v3663 = vmul.f32 %v2884, %v3535
    %v3664 = vmul.f32 %v2500, %v3536
    %v3665 = vmul.f32 %v2502, %v3537
    %v3666 = vmul.f32 %v2886, %v3538
    %v3667 = vmul.f32 %v2888, %v3539
    %v3668 = vmul.f32 %v2506, %v3540
    %v3669 = vmul.f32 %v2508, %v3541
    %v3670 = vmul.f32 %v2892, %v3542
    %v3671 = vmul.f32 %v2894, %v3543
    %v3672 = vmul.f32 %v2510, %v3544
    %v3673 = vmul.f32 %v2512, %v3545
    %v3674 = vmul.f32 %v2896, %v3546
    %v3675 = vmul.f32 %v2898, %v3547
    %v3676 = vmul.f32 %v2516, %v3548
    %v3677 = vmul.f32 %v2518, %v3549
    %v3678 = vmul.f32 %v2902, %v3550
    %v3679 = vmul.f32 %v2904, %v3551
    %v3680 = vmul.f32 %v2520, %v3552
    %v3681 = vmul.f32 %v2522, %v3553
    %v3682 = vmul.f32 %v2906, %v3554
    %v3683 = vmul.f32 %v2908, %v3555
    %v3684 = vmul.f32 %v2526, %v3556
    %v3685 = vmul.f32 %v2528, %v3557
    %v3686 = vmul.f32 %v2912, %v3558
    %v3687 = vmul.f32 %v2914, %v3559
    %v3688 = vmul.f32 %v2530, %v3560
    %v3689 = vmul.f32 %v2532, %v3561
    %v3690 = vmul.f32 %v2916, %v3562
    %v3691 = vmul.f32 %v2918, %v3563
    %v3692 = vmul.f32 %v2536, %v3564
    %v3693 = vmul.f32 %v2538, %v3565
    %v3694 = vmul.f32 %v2922, %v3566
    %v3695 = vmul.f32 %v2924, %v3567
    %v3696 = vmul.f32 %v2540, %v3568
    %v3697 = vmul.f32 %v2542, %v3569
    %v3698 = vmul.f32 %v2926, %v3570
    %v3699 = vmul.f32 %v2928, %v3571
    %v3700 = vmul.f32 %v2546, %v3572
    %v3701 = vmul.f32 %v2548, %v3573
    %v3702 = vmul.f32 %v2932, %v3574
    %v3703 = vmul.f32 %v2934, %v3575
    %v3704 = vmul.f32 %v2550, %v3576
    %v3705 = vmul.f32 %v2552, %v3577
    %v3706 = vmul.f32 %v2936, %v3578
    %v3707 = vmul.f32 %v2938, %v3579
    %v3708 = vpack.c.bf16 %v3584, %v3580
    %v3709 = vpack.c.bf16 %v3585, %v3581
    %v3710 = vpack.c.bf16 %v3586, %v3582
    %v3711 = vpack.c.bf16 %v3587, %v3583
    %v3712 = vpack.c.bf16 %v3592, %v3588
    %v3713 = vpack.c.bf16 %v3593, %v3589
    %v3714 = vpack.c.bf16 %v3594, %v3590
    %v3715 = vpack.c.bf16 %v3595, %v3591
    %v3716 = vpack.c.bf16 %v3600, %v3596
    %v3717 = vpack.c.bf16 %v3601, %v3597
    %v3718 = vpack.c.bf16 %v3602, %v3598
    %v3719 = vpack.c.bf16 %v3603, %v3599
    %v3720 = vpack.c.bf16 %v3608, %v3604
    %v3721 = vpack.c.bf16 %v3609, %v3605
    %v3722 = vpack.c.bf16 %v3610, %v3606
    %v3723 = vpack.c.bf16 %v3611, %v3607
    %v3724 = vpack.c.bf16 %v3616, %v3612
    %v3725 = vpack.c.bf16 %v3617, %v3613
    %v3726 = vpack.c.bf16 %v3618, %v3614
    %v3727 = vpack.c.bf16 %v3619, %v3615
    %v3728 = vpack.c.bf16 %v3624, %v3620
    %v3729 = vpack.c.bf16 %v3625, %v3621
    %v3730 = vpack.c.bf16 %v3626, %v3622
    %v3731 = vpack.c.bf16 %v3627, %v3623
    %v3732 = vpack.c.bf16 %v3632, %v3628
    %v3733 = vpack.c.bf16 %v3633, %v3629
    %v3734 = vpack.c.bf16 %v3634, %v3630
    %v3735 = vpack.c.bf16 %v3635, %v3631
    %v3736 = vpack.c.bf16 %v3640, %v3636
    %v3737 = vpack.c.bf16 %v3641, %v3637
    %v3738 = vpack.c.bf16 %v3642, %v3638
    %v3739 = vpack.c.bf16 %v3643, %v3639
    %v3740 = vpack.c.bf16 %v3648, %v3644
    %v3741 = vpack.c.bf16 %v3649, %v3645
    %v3742 = vpack.c.bf16 %v3650, %v3646
    %v3743 = vpack.c.bf16 %v3651, %v3647
    %v3744 = vpack.c.bf16 %v3656, %v3652
    %v3745 = vpack.c.bf16 %v3657, %v3653
    %v3746 = vpack.c.bf16 %v3658, %v3654
    %v3747 = vpack.c.bf16 %v3659, %v3655
    %v3748 = vpack.c.bf16 %v3664, %v3660
    %v3749 = vpack.c.bf16 %v3665, %v3661
    %v3750 = vpack.c.bf16 %v3666, %v3662
    %v3751 = vpack.c.bf16 %v3667, %v3663
    %v3752 = vpack.c.bf16 %v3672, %v3668
    %v3753 = vpack.c.bf16 %v3673, %v3669
    %v3754 = vpack.c.bf16 %v3674, %v3670
    %v3755 = vpack.c.bf16 %v3675, %v3671
    %v3756 = vpack.c.bf16 %v3680, %v3676
    %v3757 = vpack.c.bf16 %v3681, %v3677
    %v3758 = vpack.c.bf16 %v3682, %v3678
    %v3759 = vpack.c.bf16 %v3683, %v3679
    %v3760 = vpack.c.bf16 %v3688, %v3684
    %v3761 = vpack.c.bf16 %v3689, %v3685
    %v3762 = vpack.c.bf16 %v3690, %v3686
    %v3763 = vpack.c.bf16 %v3691, %v3687
    %v3764 = vpack.c.bf16 %v3696, %v3692
    %v3765 = vpack.c.bf16 %v3697, %v3693
    %v3766 = vpack.c.bf16 %v3698, %v3694
    %v3767 = vpack.c.bf16 %v3699, %v3695
    %v3768 = vpack.c.bf16 %v3704, %v3700
    %v3769 = vpack.c.bf16 %v3705, %v3701
    %v3770 = vpack.c.bf16 %v3706, %v3702
    %v3771 = vpack.c.bf16 %v3707, %v3703
    %v3772 = vld [vmem:[#allocation7] sm:$0xff]
    %v3773 = vld [vmem:[#allocation7 + $0x8] sm:$0xff]
    %v3774 = vld [vmem:[#allocation7 + $0x10] sm:$0xff]
    %v3775 = vld [vmem:[#allocation7 + $0x18] sm:$0xff]
    %v3776 = vld [vmem:[#allocation7 + $0x20] sm:$0xff]
    %v3777 = vld [vmem:[#allocation7 + $0x28] sm:$0xff]
    %v3778 = vld [vmem:[#allocation7 + $0x30] sm:$0xff]
    %v3779 = vld [vmem:[#allocation7 + $0x38] sm:$0xff]
    %v3780 = vld [vmem:[#allocation7 + $0x40] sm:$0xff]
    %v3781 = vld [vmem:[#allocation7 + $0x48] sm:$0xff]
    %v3782 = vld [vmem:[#allocation7 + $0x50] sm:$0xff]
    %v3783 = vld [vmem:[#allocation7 + $0x58] sm:$0xff]
    %v3784 = vld [vmem:[#allocation7 + $0x60] sm:$0xff]
    %v3785 = vld [vmem:[#allocation7 + $0x68] sm:$0xff]
    %v3786 = vld [vmem:[#allocation7 + $0x70] sm:$0xff]
    %v3787 = vld [vmem:[#allocation7 + $0x78] sm:$0xff]
    %v3788 = vld [vmem:[#allocation7 + $0x80] sm:$0xff]
    %v3789 = vld [vmem:[#allocation7 + $0x88] sm:$0xff]
    %v3790 = vld [vmem:[#allocation7 + $0x90] sm:$0xff]
    %v3791 = vld [vmem:[#allocation7 + $0x98] sm:$0xff]
    %v3792 = vld [vmem:[#allocation7 + $0xa0] sm:$0xff]
    %v3793 = vld [vmem:[#allocation7 + $0xa8] sm:$0xff]
    %v3794 = vld [vmem:[#allocation7 + $0xb0] sm:$0xff]
    %v3795 = vld [vmem:[#allocation7 + $0xb8] sm:$0xff]
    %v3796 = vld [vmem:[#allocation7 + $0xc0] sm:$0xff]
    %v3797 = vld [vmem:[#allocation7 + $0xc8] sm:$0xff]
    %v3798 = vld [vmem:[#allocation7 + $0xd0] sm:$0xff]
    %v3799 = vld [vmem:[#allocation7 + $0xd8] sm:$0xff]
    %v3800 = vld [vmem:[#allocation7 + $0xe0] sm:$0xff]
    %v3801 = vld [vmem:[#allocation7 + $0xe8] sm:$0xff]
    %v3802 = vld [vmem:[#allocation7 + $0xf0] sm:$0xff]
    %v3803 = vld [vmem:[#allocation7 + $0xf8] sm:$0xff]
    %v3804 = vld [vmem:[#allocation7 + $0x100] sm:$0xff]
    %v3805 = vld [vmem:[#allocation7 + $0x108] sm:$0xff]
    %v3806 = vld [vmem:[#allocation7 + $0x110] sm:$0xff]
    %v3807 = vld [vmem:[#allocation7 + $0x118] sm:$0xff]
    %v3808 = vld [vmem:[#allocation7 + $0x120] sm:$0xff]
    %v3809 = vld [vmem:[#allocation7 + $0x128] sm:$0xff]
    %v3810 = vld [vmem:[#allocation7 + $0x130] sm:$0xff]
    %v3811 = vld [vmem:[#allocation7 + $0x138] sm:$0xff]
    %v3812 = vld [vmem:[#allocation7 + $0x140] sm:$0xff]
    %v3813 = vld [vmem:[#allocation7 + $0x148] sm:$0xff]
    %v3814 = vld [vmem:[#allocation7 + $0x150] sm:$0xff]
    %v3815 = vld [vmem:[#allocation7 + $0x158] sm:$0xff]
    %v3816 = vld [vmem:[#allocation7 + $0x160] sm:$0xff]
    %v3817 = vld [vmem:[#allocation7 + $0x168] sm:$0xff]
    %v3818 = vld [vmem:[#allocation7 + $0x170] sm:$0xff]
    %v3819 = vld [vmem:[#allocation7 + $0x178] sm:$0xff]
    %v3820 = vld [vmem:[#allocation7 + $0x180] sm:$0xff]
    %v3821 = vld [vmem:[#allocation7 + $0x188] sm:$0xff]
    %v3822 = vld [vmem:[#allocation7 + $0x190] sm:$0xff]
    %v3823 = vld [vmem:[#allocation7 + $0x198] sm:$0xff]
    %v3824 = vld [vmem:[#allocation7 + $0x1a0] sm:$0xff]
    %v3825 = vld [vmem:[#allocation7 + $0x1a8] sm:$0xff]
    %v3826 = vld [vmem:[#allocation7 + $0x1b0] sm:$0xff]
    %v3827 = vld [vmem:[#allocation7 + $0x1b8] sm:$0xff]
    %v3828 = vld [vmem:[#allocation7 + $0x1c0] sm:$0xff]
    %v3829 = vld [vmem:[#allocation7 + $0x1c8] sm:$0xff]
    %v3830 = vld [vmem:[#allocation7 + $0x1d0] sm:$0xff]
    %v3831 = vld [vmem:[#allocation7 + $0x1d8] sm:$0xff]
    %v3832 = vld [vmem:[#allocation7 + $0x1e0] sm:$0xff]
    %v3833 = vld [vmem:[#allocation7 + $0x1e8] sm:$0xff]
    %v3834 = vld [vmem:[#allocation7 + $0x1f0] sm:$0xff]
    %v3835 = vld [vmem:[#allocation7 + $0x1f8] sm:$0xff]
    %v3836 = vld [vmem:[#allocation7 + $0x200] sm:$0xff]
    %v3837 = vld [vmem:[#allocation7 + $0x208] sm:$0xff]
    %v3838 = vld [vmem:[#allocation7 + $0x210] sm:$0xff]
    %v3839 = vld [vmem:[#allocation7 + $0x218] sm:$0xff]
    %v3840 = vld [vmem:[#allocation7 + $0x220] sm:$0xff]
    %v3841 = vld [vmem:[#allocation7 + $0x228] sm:$0xff]
    %v3842 = vld [vmem:[#allocation7 + $0x230] sm:$0xff]
    %v3843 = vld [vmem:[#allocation7 + $0x238] sm:$0xff]
    %v3844 = vld [vmem:[#allocation7 + $0x240] sm:$0xff]
    %v3845 = vld [vmem:[#allocation7 + $0x248] sm:$0xff]
    %v3846 = vld [vmem:[#allocation7 + $0x250] sm:$0xff]
    %v3847 = vld [vmem:[#allocation7 + $0x258] sm:$0xff]
    %v3848 = vld [vmem:[#allocation7 + $0x260] sm:$0xff]
    %v3849 = vld [vmem:[#allocation7 + $0x268] sm:$0xff]
    %v3850 = vld [vmem:[#allocation7 + $0x270] sm:$0xff]
    %v3851 = vld [vmem:[#allocation7 + $0x278] sm:$0xff]
    %v3852 = vld [vmem:[#allocation7 + $0x280] sm:$0xff]
    %v3853 = vld [vmem:[#allocation7 + $0x288] sm:$0xff]
    %v3854 = vld [vmem:[#allocation7 + $0x290] sm:$0xff]
    %v3855 = vld [vmem:[#allocation7 + $0x298] sm:$0xff]
    %v3856 = vld [vmem:[#allocation7 + $0x2a0] sm:$0xff]
    %v3857 = vld [vmem:[#allocation7 + $0x2a8] sm:$0xff]
    %v3858 = vld [vmem:[#allocation7 + $0x2b0] sm:$0xff]
    %v3859 = vld [vmem:[#allocation7 + $0x2b8] sm:$0xff]
    %v3860 = vld [vmem:[#allocation7 + $0x2c0] sm:$0xff]
    %v3861 = vld [vmem:[#allocation7 + $0x2c8] sm:$0xff]
    %v3862 = vld [vmem:[#allocation7 + $0x2d0] sm:$0xff]
    %v3863 = vld [vmem:[#allocation7 + $0x2d8] sm:$0xff]
    %v3864 = vld [vmem:[#allocation7 + $0x2e0] sm:$0xff]
    %v3865 = vld [vmem:[#allocation7 + $0x2e8] sm:$0xff]
    %v3866 = vld [vmem:[#allocation7 + $0x2f0] sm:$0xff]
    %v3867 = vld [vmem:[#allocation7 + $0x2f8] sm:$0xff]
    %v3868 = vld [vmem:[#allocation7 + $0x300] sm:$0xff]
    %v3869 = vld [vmem:[#allocation7 + $0x308] sm:$0xff]
    %v3870 = vld [vmem:[#allocation7 + $0x310] sm:$0xff]
    %v3871 = vld [vmem:[#allocation7 + $0x318] sm:$0xff]
    %v3872 = vld [vmem:[#allocation7 + $0x320] sm:$0xff]
    %v3873 = vld [vmem:[#allocation7 + $0x328] sm:$0xff]
    %v3874 = vld [vmem:[#allocation7 + $0x330] sm:$0xff]
    %v3875 = vld [vmem:[#allocation7 + $0x338] sm:$0xff]
    %v3876 = vld [vmem:[#allocation7 + $0x340] sm:$0xff]
    %v3877 = vld [vmem:[#allocation7 + $0x348] sm:$0xff]
    %v3878 = vld [vmem:[#allocation7 + $0x350] sm:$0xff]
    %v3879 = vld [vmem:[#allocation7 + $0x358] sm:$0xff]
    %v3880 = vld [vmem:[#allocation7 + $0x360] sm:$0xff]
    %v3881 = vld [vmem:[#allocation7 + $0x368] sm:$0xff]
    %v3882 = vld [vmem:[#allocation7 + $0x370] sm:$0xff]
    %v3883 = vld [vmem:[#allocation7 + $0x378] sm:$0xff]
    %v3884 = vld [vmem:[#allocation7 + $0x380] sm:$0xff]
    %v3885 = vld [vmem:[#allocation7 + $0x388] sm:$0xff]
    %v3886 = vld [vmem:[#allocation7 + $0x390] sm:$0xff]
    %v3887 = vld [vmem:[#allocation7 + $0x398] sm:$0xff]
    %v3888 = vld [vmem:[#allocation7 + $0x3a0] sm:$0xff]
    %v3889 = vld [vmem:[#allocation7 + $0x3a8] sm:$0xff]
    %v3890 = vld [vmem:[#allocation7 + $0x3b0] sm:$0xff]
    %v3891 = vld [vmem:[#allocation7 + $0x3b8] sm:$0xff]
    %v3892 = vld [vmem:[#allocation7 + $0x3c0] sm:$0xff]
    %v3893 = vld [vmem:[#allocation7 + $0x3c8] sm:$0xff]
    %v3894 = vld [vmem:[#allocation7 + $0x3d0] sm:$0xff]
    %v3895 = vld [vmem:[#allocation7 + $0x3d8] sm:$0xff]
    %v3896 = vld [vmem:[#allocation7 + $0x3e0] sm:$0xff]
    %v3897 = vld [vmem:[#allocation7 + $0x3e8] sm:$0xff]
    %v3898 = vld [vmem:[#allocation7 + $0x3f0] sm:$0xff]
    %v3899 = vld [vmem:[#allocation7 + $0x3f8] sm:$0xff]
    %v3901 = vlaneseq
    %v3902 = vshrl.u32 %v3901, 7
    %v3903 = vsub.s32 0, %v3902
    %v3904 = vrot.slane %v112, %v3903
    %v3905 = vlaneseq
    %v3906 = vshrl.u32 %v3905, 7
    %v3907 = vsub.s32 1, %v3906
    %v3908 = vrot.slane %v112, %v3907
    %v3909 = vlaneseq
    %v3910 = vshrl.u32 %v3909, 7
    %v3911 = vsub.s32 2, %v3910
    %v3912 = vrot.slane %v112, %v3911
    %v3913 = vlaneseq
    %v3914 = vshrl.u32 %v3913, 7
    %v3915 = vsub.s32 3, %v3914
    %v3916 = vrot.slane %v112, %v3915
    %v4049 = vunpack.c.l.b16 %v3772
    %v4050 = vunpack.c.h.b16 %v3772
    %v4051 = vunpack.c.l.b16 %v3773
    %v4052 = vunpack.c.h.b16 %v3773
    %v4053 = vunpack.c.l.b16 %v3774
    %v4054 = vunpack.c.h.b16 %v3774
    %v4055 = vunpack.c.l.b16 %v3775
    %v4056 = vunpack.c.h.b16 %v3775
    %v4057 = vunpack.c.l.b16 %v3776
    %v4058 = vunpack.c.h.b16 %v3776
    %v4059 = vunpack.c.l.b16 %v3777
    %v4060 = vunpack.c.h.b16 %v3777
    %v4061 = vunpack.c.l.b16 %v3778
    %v4062 = vunpack.c.h.b16 %v3778
    %v4063 = vunpack.c.l.b16 %v3779
    %v4064 = vunpack.c.h.b16 %v3779
    %v4065 = vunpack.c.l.b16 %v3780
    %v4066 = vunpack.c.h.b16 %v3780
    %v4067 = vunpack.c.l.b16 %v3781
    %v4068 = vunpack.c.h.b16 %v3781
    %v4069 = vunpack.c.l.b16 %v3782
    %v4070 = vunpack.c.h.b16 %v3782
    %v4071 = vunpack.c.l.b16 %v3783
    %v4072 = vunpack.c.h.b16 %v3783
    %v4073 = vunpack.c.l.b16 %v3784
    %v4074 = vunpack.c.h.b16 %v3784
    %v4075 = vunpack.c.l.b16 %v3785
    %v4076 = vunpack.c.h.b16 %v3785
    %v4077 = vunpack.c.l.b16 %v3786
    %v4078 = vunpack.c.h.b16 %v3786
    %v4079 = vunpack.c.l.b16 %v3787
    %v4080 = vunpack.c.h.b16 %v3787
    %v4081 = vunpack.c.l.b16 %v3788
    %v4082 = vunpack.c.h.b16 %v3788
    %v4083 = vunpack.c.l.b16 %v3789
    %v4084 = vunpack.c.h.b16 %v3789
    %v4085 = vunpack.c.l.b16 %v3790
    %v4086 = vunpack.c.h.b16 %v3790
    %v4087 = vunpack.c.l.b16 %v3791
    %v4088 = vunpack.c.h.b16 %v3791
    %v4089 = vunpack.c.l.b16 %v3792
    %v4090 = vunpack.c.h.b16 %v3792
    %v4091 = vunpack.c.l.b16 %v3793
    %v4092 = vunpack.c.h.b16 %v3793
    %v4093 = vunpack.c.l.b16 %v3794
    %v4094 = vunpack.c.h.b16 %v3794
    %v4095 = vunpack.c.l.b16 %v3795
    %v4096 = vunpack.c.h.b16 %v3795
    %v4097 = vunpack.c.l.b16 %v3796
    %v4098 = vunpack.c.h.b16 %v3796
    %v4099 = vunpack.c.l.b16 %v3797
    %v4100 = vunpack.c.h.b16 %v3797
    %v4101 = vunpack.c.l.b16 %v3798
    %v4102 = vunpack.c.h.b16 %v3798
    %v4103 = vunpack.c.l.b16 %v3799
    %v4104 = vunpack.c.h.b16 %v3799
    %v4105 = vunpack.c.l.b16 %v3800
    %v4106 = vunpack.c.h.b16 %v3800
    %v4107 = vunpack.c.l.b16 %v3801
    %v4108 = vunpack.c.h.b16 %v3801
    %v4109 = vunpack.c.l.b16 %v3802
    %v4110 = vunpack.c.h.b16 %v3802
    %v4111 = vunpack.c.l.b16 %v3803
    %v4112 = vunpack.c.h.b16 %v3803
    %v4113 = vunpack.c.l.b16 %v3804
    %v4114 = vunpack.c.h.b16 %v3804
    %v4115 = vunpack.c.l.b16 %v3805
    %v4116 = vunpack.c.h.b16 %v3805
    %v4117 = vunpack.c.l.b16 %v3806
    %v4118 = vunpack.c.h.b16 %v3806
    %v4119 = vunpack.c.l.b16 %v3807
    %v4120 = vunpack.c.h.b16 %v3807
    %v4121 = vunpack.c.l.b16 %v3808
    %v4122 = vunpack.c.h.b16 %v3808
    %v4123 = vunpack.c.l.b16 %v3809
    %v4124 = vunpack.c.h.b16 %v3809
    %v4125 = vunpack.c.l.b16 %v3810
    %v4126 = vunpack.c.h.b16 %v3810
    %v4127 = vunpack.c.l.b16 %v3811
    %v4128 = vunpack.c.h.b16 %v3811
    %v4129 = vunpack.c.l.b16 %v3812
    %v4130 = vunpack.c.h.b16 %v3812
    %v4131 = vunpack.c.l.b16 %v3813
    %v4132 = vunpack.c.h.b16 %v3813
    %v4133 = vunpack.c.l.b16 %v3814
    %v4134 = vunpack.c.h.b16 %v3814
    %v4135 = vunpack.c.l.b16 %v3815
    %v4136 = vunpack.c.h.b16 %v3815
    %v4137 = vunpack.c.l.b16 %v3816
    %v4138 = vunpack.c.h.b16 %v3816
    %v4139 = vunpack.c.l.b16 %v3817
    %v4140 = vunpack.c.h.b16 %v3817
    %v4141 = vunpack.c.l.b16 %v3818
    %v4142 = vunpack.c.h.b16 %v3818
    %v4143 = vunpack.c.l.b16 %v3819
    %v4144 = vunpack.c.h.b16 %v3819
    %v4145 = vunpack.c.l.b16 %v3820
    %v4146 = vunpack.c.h.b16 %v3820
    %v4147 = vunpack.c.l.b16 %v3821
    %v4148 = vunpack.c.h.b16 %v3821
    %v4149 = vunpack.c.l.b16 %v3822
    %v4150 = vunpack.c.h.b16 %v3822
    %v4151 = vunpack.c.l.b16 %v3823
    %v4152 = vunpack.c.h.b16 %v3823
    %v4153 = vunpack.c.l.b16 %v3824
    %v4154 = vunpack.c.h.b16 %v3824
    %v4155 = vunpack.c.l.b16 %v3825
    %v4156 = vunpack.c.h.b16 %v3825
    %v4157 = vunpack.c.l.b16 %v3826
    %v4158 = vunpack.c.h.b16 %v3826
    %v4159 = vunpack.c.l.b16 %v3827
    %v4160 = vunpack.c.h.b16 %v3827
    %v4161 = vunpack.c.l.b16 %v3828
    %v4162 = vunpack.c.h.b16 %v3828
    %v4163 = vunpack.c.l.b16 %v3829
    %v4164 = vunpack.c.h.b16 %v3829
    %v4165 = vunpack.c.l.b16 %v3830
    %v4166 = vunpack.c.h.b16 %v3830
    %v4167 = vunpack.c.l.b16 %v3831
    %v4168 = vunpack.c.h.b16 %v3831
    %v4169 = vunpack.c.l.b16 %v3832
    %v4170 = vunpack.c.h.b16 %v3832
    %v4171 = vunpack.c.l.b16 %v3833
    %v4172 = vunpack.c.h.b16 %v3833
    %v4173 = vunpack.c.l.b16 %v3834
    %v4174 = vunpack.c.h.b16 %v3834
    %v4175 = vunpack.c.l.b16 %v3835
    %v4176 = vunpack.c.h.b16 %v3835
    %v4177 = vunpack.c.l.b16 %v3836
    %v4178 = vunpack.c.h.b16 %v3836
    %v4179 = vunpack.c.l.b16 %v3837
    %v4180 = vunpack.c.h.b16 %v3837
    %v4181 = vunpack.c.l.b16 %v3838
    %v4182 = vunpack.c.h.b16 %v3838
    %v4183 = vunpack.c.l.b16 %v3839
    %v4184 = vunpack.c.h.b16 %v3839
    %v4185 = vunpack.c.l.b16 %v3840
    %v4186 = vunpack.c.h.b16 %v3840
    %v4187 = vunpack.c.l.b16 %v3841
    %v4188 = vunpack.c.h.b16 %v3841
    %v4189 = vunpack.c.l.b16 %v3842
    %v4190 = vunpack.c.h.b16 %v3842
    %v4191 = vunpack.c.l.b16 %v3843
    %v4192 = vunpack.c.h.b16 %v3843
    %v4193 = vunpack.c.l.b16 %v3844
    %v4194 = vunpack.c.h.b16 %v3844
    %v4195 = vunpack.c.l.b16 %v3845
    %v4196 = vunpack.c.h.b16 %v3845
    %v4197 = vunpack.c.l.b16 %v3846
    %v4198 = vunpack.c.h.b16 %v3846
    %v4199 = vunpack.c.l.b16 %v3847
    %v4200 = vunpack.c.h.b16 %v3847
    %v4201 = vunpack.c.l.b16 %v3848
    %v4202 = vunpack.c.h.b16 %v3848
    %v4203 = vunpack.c.l.b16 %v3849
    %v4204 = vunpack.c.h.b16 %v3849
    %v4205 = vunpack.c.l.b16 %v3850
    %v4206 = vunpack.c.h.b16 %v3850
    %v4207 = vunpack.c.l.b16 %v3851
    %v4208 = vunpack.c.h.b16 %v3851
    %v4209 = vunpack.c.l.b16 %v3852
    %v4210 = vunpack.c.h.b16 %v3852
    %v4211 = vunpack.c.l.b16 %v3853
    %v4212 = vunpack.c.h.b16 %v3853
    %v4213 = vunpack.c.l.b16 %v3854
    %v4214 = vunpack.c.h.b16 %v3854
    %v4215 = vunpack.c.l.b16 %v3855
    %v4216 = vunpack.c.h.b16 %v3855
    %v4217 = vunpack.c.l.b16 %v3856
    %v4218 = vunpack.c.h.b16 %v3856
    %v4219 = vunpack.c.l.b16 %v3857
    %v4220 = vunpack.c.h.b16 %v3857
    %v4221 = vunpack.c.l.b16 %v3858
    %v4222 = vunpack.c.h.b16 %v3858
    %v4223 = vunpack.c.l.b16 %v3859
    %v4224 = vunpack.c.h.b16 %v3859
    %v4225 = vunpack.c.l.b16 %v3860
    %v4226 = vunpack.c.h.b16 %v3860
    %v4227 = vunpack.c.l.b16 %v3861
    %v4228 = vunpack.c.h.b16 %v3861
    %v4229 = vunpack.c.l.b16 %v3862
    %v4230 = vunpack.c.h.b16 %v3862
    %v4231 = vunpack.c.l.b16 %v3863
    %v4232 = vunpack.c.h.b16 %v3863
    %v4233 = vunpack.c.l.b16 %v3864
    %v4234 = vunpack.c.h.b16 %v3864
    %v4235 = vunpack.c.l.b16 %v3865
    %v4236 = vunpack.c.h.b16 %v3865
    %v4237 = vunpack.c.l.b16 %v3866
    %v4238 = vunpack.c.h.b16 %v3866
    %v4239 = vunpack.c.l.b16 %v3867
    %v4240 = vunpack.c.h.b16 %v3867
    %v4241 = vunpack.c.l.b16 %v3868
    %v4242 = vunpack.c.h.b16 %v3868
    %v4243 = vunpack.c.l.b16 %v3869
    %v4244 = vunpack.c.h.b16 %v3869
    %v4245 = vunpack.c.l.b16 %v3870
    %v4246 = vunpack.c.h.b16 %v3870
    %v4247 = vunpack.c.l.b16 %v3871
    %v4248 = vunpack.c.h.b16 %v3871
    %v4249 = vunpack.c.l.b16 %v3872
    %v4250 = vunpack.c.h.b16 %v3872
    %v4251 = vunpack.c.l.b16 %v3873
    %v4252 = vunpack.c.h.b16 %v3873
    %v4253 = vunpack.c.l.b16 %v3874
    %v4254 = vunpack.c.h.b16 %v3874
    %v4255 = vunpack.c.l.b16 %v3875
    %v4256 = vunpack.c.h.b16 %v3875
    %v4257 = vunpack.c.l.b16 %v3876
    %v4258 = vunpack.c.h.b16 %v3876
    %v4259 = vunpack.c.l.b16 %v3877
    %v4260 = vunpack.c.h.b16 %v3877
    %v4261 = vunpack.c.l.b16 %v3878
    %v4262 = vunpack.c.h.b16 %v3878
    %v4263 = vunpack.c.l.b16 %v3879
    %v4264 = vunpack.c.h.b16 %v3879
    %v4265 = vunpack.c.l.b16 %v3880
    %v4266 = vunpack.c.h.b16 %v3880
    %v4267 = vunpack.c.l.b16 %v3881
    %v4268 = vunpack.c.h.b16 %v3881
    %v4269 = vunpack.c.l.b16 %v3882
    %v4270 = vunpack.c.h.b16 %v3882
    %v4271 = vunpack.c.l.b16 %v3883
    %v4272 = vunpack.c.h.b16 %v3883
    %v4273 = vunpack.c.l.b16 %v3884
    %v4274 = vunpack.c.h.b16 %v3884
    %v4275 = vunpack.c.l.b16 %v3885
    %v4276 = vunpack.c.h.b16 %v3885
    %v4277 = vunpack.c.l.b16 %v3886
    %v4278 = vunpack.c.h.b16 %v3886
    %v4279 = vunpack.c.l.b16 %v3887
    %v4280 = vunpack.c.h.b16 %v3887
    %v4281 = vunpack.c.l.b16 %v3888
    %v4282 = vunpack.c.h.b16 %v3888
    %v4283 = vunpack.c.l.b16 %v3889
    %v4284 = vunpack.c.h.b16 %v3889
    %v4285 = vunpack.c.l.b16 %v3890
    %v4286 = vunpack.c.h.b16 %v3890
    %v4287 = vunpack.c.l.b16 %v3891
    %v4288 = vunpack.c.h.b16 %v3891
    %v4289 = vunpack.c.l.b16 %v3892
    %v4290 = vunpack.c.h.b16 %v3892
    %v4291 = vunpack.c.l.b16 %v3893
    %v4292 = vunpack.c.h.b16 %v3893
    %v4293 = vunpack.c.l.b16 %v3894
    %v4294 = vunpack.c.h.b16 %v3894
    %v4295 = vunpack.c.l.b16 %v3895
    %v4296 = vunpack.c.h.b16 %v3895
    %v4297 = vunpack.c.l.b16 %v3896
    %v4298 = vunpack.c.h.b16 %v3896
    %v4299 = vunpack.c.l.b16 %v3897
    %v4300 = vunpack.c.h.b16 %v3897
    %v4301 = vunpack.c.l.b16 %v3898
    %v4302 = vunpack.c.h.b16 %v3898
    %v4303 = vunpack.c.l.b16 %v3899
    %v4304 = vunpack.c.h.b16 %v3899
    %v4305 = vpack.c.b16 %v4053, %v4049
    %v4306 = vpack.c.b16 %v4054, %v4050
    %v4307 = vpack.c.b16 %v4055, %v4051
    %v4308 = vpack.c.b16 %v4056, %v4052
    %v4309 = vpack.c.b16 %v4061, %v4057
    %v4310 = vpack.c.b16 %v4062, %v4058
    %v4311 = vpack.c.b16 %v4063, %v4059
    %v4312 = vpack.c.b16 %v4064, %v4060
    %v4313 = vpack.c.b16 %v4069, %v4065
    %v4314 = vpack.c.b16 %v4070, %v4066
    %v4315 = vpack.c.b16 %v4071, %v4067
    %v4316 = vpack.c.b16 %v4072, %v4068
    %v4317 = vpack.c.b16 %v4077, %v4073
    %v4318 = vpack.c.b16 %v4078, %v4074
    %v4319 = vpack.c.b16 %v4079, %v4075
    %v4320 = vpack.c.b16 %v4080, %v4076
    %v4321 = vpack.c.b16 %v4085, %v4081
    %v4322 = vpack.c.b16 %v4086, %v4082
    %v4323 = vpack.c.b16 %v4087, %v4083
    %v4324 = vpack.c.b16 %v4088, %v4084
    %v4325 = vpack.c.b16 %v4093, %v4089
    %v4326 = vpack.c.b16 %v4094, %v4090
    %v4327 = vpack.c.b16 %v4095, %v4091
    %v4328 = vpack.c.b16 %v4096, %v4092
    %v4329 = vpack.c.b16 %v4101, %v4097
    %v4330 = vpack.c.b16 %v4102, %v4098
    %v4331 = vpack.c.b16 %v4103, %v4099
    %v4332 = vpack.c.b16 %v4104, %v4100
    %v4333 = vpack.c.b16 %v4109, %v4105
    %v4334 = vpack.c.b16 %v4110, %v4106
    %v4335 = vpack.c.b16 %v4111, %v4107
    %v4336 = vpack.c.b16 %v4112, %v4108
    %v4337 = vpack.c.b16 %v4117, %v4113
    %v4338 = vpack.c.b16 %v4118, %v4114
    %v4339 = vpack.c.b16 %v4119, %v4115
    %v4340 = vpack.c.b16 %v4120, %v4116
    %v4341 = vpack.c.b16 %v4125, %v4121
    %v4342 = vpack.c.b16 %v4126, %v4122
    %v4343 = vpack.c.b16 %v4127, %v4123
    %v4344 = vpack.c.b16 %v4128, %v4124
    %v4345 = vpack.c.b16 %v4133, %v4129
    %v4346 = vpack.c.b16 %v4134, %v4130
    %v4347 = vpack.c.b16 %v4135, %v4131
    %v4348 = vpack.c.b16 %v4136, %v4132
    %v4349 = vpack.c.b16 %v4141, %v4137
    %v4350 = vpack.c.b16 %v4142, %v4138
    %v4351 = vpack.c.b16 %v4143, %v4139
    %v4352 = vpack.c.b16 %v4144, %v4140
    %v4353 = vpack.c.b16 %v4149, %v4145
    %v4354 = vpack.c.b16 %v4150, %v4146
    %v4355 = vpack.c.b16 %v4151, %v4147
    %v4356 = vpack.c.b16 %v4152, %v4148
    %v4357 = vpack.c.b16 %v4157, %v4153
    %v4358 = vpack.c.b16 %v4158, %v4154
    %v4359 = vpack.c.b16 %v4159, %v4155
    %v4360 = vpack.c.b16 %v4160, %v4156
    %v4361 = vpack.c.b16 %v4165, %v4161
    %v4362 = vpack.c.b16 %v4166, %v4162
    %v4363 = vpack.c.b16 %v4167, %v4163
    %v4364 = vpack.c.b16 %v4168, %v4164
    %v4365 = vpack.c.b16 %v4173, %v4169
    %v4366 = vpack.c.b16 %v4174, %v4170
    %v4367 = vpack.c.b16 %v4175, %v4171
    %v4368 = vpack.c.b16 %v4176, %v4172
    %v4369 = vpack.c.b16 %v4181, %v4177
    %v4370 = vpack.c.b16 %v4182, %v4178
    %v4371 = vpack.c.b16 %v4183, %v4179
    %v4372 = vpack.c.b16 %v4184, %v4180
    %v4373 = vpack.c.b16 %v4189, %v4185
    %v4374 = vpack.c.b16 %v4190, %v4186
    %v4375 = vpack.c.b16 %v4191, %v4187
    %v4376 = vpack.c.b16 %v4192, %v4188
    %v4377 = vpack.c.b16 %v4197, %v4193
    %v4378 = vpack.c.b16 %v4198, %v4194
    %v4379 = vpack.c.b16 %v4199, %v4195
    %v4380 = vpack.c.b16 %v4200, %v4196
    %v4381 = vpack.c.b16 %v4205, %v4201
    %v4382 = vpack.c.b16 %v4206, %v4202
    %v4383 = vpack.c.b16 %v4207, %v4203
    %v4384 = vpack.c.b16 %v4208, %v4204
    %v4385 = vpack.c.b16 %v4213, %v4209
    %v4386 = vpack.c.b16 %v4214, %v4210
    %v4387 = vpack.c.b16 %v4215, %v4211
    %v4388 = vpack.c.b16 %v4216, %v4212
    %v4389 = vpack.c.b16 %v4221, %v4217
    %v4390 = vpack.c.b16 %v4222, %v4218
    %v4391 = vpack.c.b16 %v4223, %v4219
    %v4392 = vpack.c.b16 %v4224, %v4220
    %v4393 = vpack.c.b16 %v4229, %v4225
    %v4394 = vpack.c.b16 %v4230, %v4226
    %v4395 = vpack.c.b16 %v4231, %v4227
    %v4396 = vpack.c.b16 %v4232, %v4228
    %v4397 = vpack.c.b16 %v4237, %v4233
    %v4398 = vpack.c.b16 %v4238, %v4234
    %v4399 = vpack.c.b16 %v4239, %v4235
    %v4400 = vpack.c.b16 %v4240, %v4236
    %v4401 = vpack.c.b16 %v4245, %v4241
    %v4402 = vpack.c.b16 %v4246, %v4242
    %v4403 = vpack.c.b16 %v4247, %v4243
    %v4404 = vpack.c.b16 %v4248, %v4244
    %v4405 = vpack.c.b16 %v4253, %v4249
    %v4406 = vpack.c.b16 %v4254, %v4250
    %v4407 = vpack.c.b16 %v4255, %v4251
    %v4408 = vpack.c.b16 %v4256, %v4252
    %v4409 = vpack.c.b16 %v4261, %v4257
    %v4410 = vpack.c.b16 %v4262, %v4258
    %v4411 = vpack.c.b16 %v4263, %v4259
    %v4412 = vpack.c.b16 %v4264, %v4260
    %v4413 = vpack.c.b16 %v4269, %v4265
    %v4414 = vpack.c.b16 %v4270, %v4266
    %v4415 = vpack.c.b16 %v4271, %v4267
    %v4416 = vpack.c.b16 %v4272, %v4268
    %v4417 = vpack.c.b16 %v4277, %v4273
    %v4418 = vpack.c.b16 %v4278, %v4274
    %v4419 = vpack.c.b16 %v4279, %v4275
    %v4420 = vpack.c.b16 %v4280, %v4276
    %v4421 = vpack.c.b16 %v4285, %v4281
    %v4422 = vpack.c.b16 %v4286, %v4282
    %v4423 = vpack.c.b16 %v4287, %v4283
    %v4424 = vpack.c.b16 %v4288, %v4284
    %v4425 = vpack.c.b16 %v4293, %v4289
    %v4426 = vpack.c.b16 %v4294, %v4290
    %v4427 = vpack.c.b16 %v4295, %v4291
    %v4428 = vpack.c.b16 %v4296, %v4292
    %v4429 = vpack.c.b16 %v4301, %v4297
    %v4430 = vpack.c.b16 %v4302, %v4298
    %v4431 = vpack.c.b16 %v4303, %v4299
    %v4432 = vpack.c.b16 %v4304, %v4300
    %4561 = vmatprep.subr.bf16.mxu0 %v4306
    %4562 = vmatpush1.bf16.msra.mxu0 %v4305
    %4563 = vmatprep.subr.bf16.mxu0 %v4310
    %4564 = vmatpush1.bf16.msra.mxu0 %v4309
    %4565 = vmatprep.subr.bf16.mxu0 %v4314
    %4566 = vmatpush1.bf16.msra.mxu0 %v4313
    %4567 = vmatprep.subr.bf16.mxu0 %v4318
    %4568 = vmatpush1.bf16.msra.mxu0 %v4317
    %4569 = vmatprep.subr.bf16.mxu0 %v4322
    %4570 = vmatpush1.bf16.msra.mxu0 %v4321
    %4571 = vmatprep.subr.bf16.mxu0 %v4326
    %4572 = vmatpush1.bf16.msra.mxu0 %v4325
    %4573 = vmatprep.subr.bf16.mxu0 %v4330
    %4574 = vmatpush1.bf16.msra.mxu0 %v4329
    %4575 = vmatprep.subr.bf16.mxu0 %v4334
    %4576 = vmatpush1.bf16.msra.mxu0 %v4333
    %4577 = vmatprep.subr.bf16.mxu0 %v4338
    %4578 = vmatpush1.bf16.msra.mxu0 %v4337
    %4579 = vmatprep.subr.bf16.mxu0 %v4342
    %4580 = vmatpush1.bf16.msra.mxu0 %v4341
    %4581 = vmatprep.subr.bf16.mxu0 %v4346
    %4582 = vmatpush1.bf16.msra.mxu0 %v4345
    %4583 = vmatprep.subr.bf16.mxu0 %v4350
    %4584 = vmatpush1.bf16.msra.mxu0 %v4349
    %4585 = vmatprep.subr.bf16.mxu0 %v4354
    %4586 = vmatpush1.bf16.msra.mxu0 %v4353
    %4587 = vmatprep.subr.bf16.mxu0 %v4358
    %4588 = vmatpush1.bf16.msra.mxu0 %v4357
    %4589 = vmatprep.subr.bf16.mxu0 %v4362
    %4590 = vmatpush1.bf16.msra.mxu0 %v4361
    %4591 = vmatprep.subr.bf16.mxu0 %v4366
    %4592 = vmatpush1.bf16.msra.mxu0 %v4365
    %4593 = vmatprep.mubr.bf16.mxu0 %v3709
    %4594 = vmatmul.mubr.bf16.gmra.mrb[0].mxu0 %v3708
    %v4595 = vpop.f32.mrb[0].mxu0
    %v4596 = vadd.f32 %v3904, %v4595
    %v4597 = vpop.f32.mrb[0].mxu0
    %v4598 = vadd.f32 %v3908, %v4597
    %v4599 = vpop.f32.mrb[0].mxu0
    %v4600 = vadd.f32 %v3904, %v4599
    %v4601 = vpop.f32.mrb[0].mxu0
    %v4602 = vadd.f32 %v3908, %v4601
    %4603 = vmatprep.mubr.bf16.mxu0 %v3713
    %4604 = vmatmul.mubr.bf16.gmra.mrb[0].mxu0 %v3712
    %v4605 = vpop.f32.mrb[0].mxu0
    %v4606 = vadd.f32 %v3904, %v4605
    %v4607 = vpop.f32.mrb[0].mxu0
    %v4608 = vadd.f32 %v3908, %v4607
    %v4609 = vpop.f32.mrb[0].mxu0
    %v4610 = vadd.f32 %v3904, %v4609
    %v4611 = vpop.f32.mrb[0].mxu0
    %v4612 = vadd.f32 %v3908, %v4611
    %4613 = vmatprep.mubr.bf16.mxu0 %v3717
    %4614 = vmatmul.mubr.bf16.gmra.mrb[0].mxu0 %v3716
    %v4615 = vpop.f32.mrb[0].mxu0
    %v4616 = vadd.f32 %v3904, %v4615
    %v4617 = vpop.f32.mrb[0].mxu0
    %v4618 = vadd.f32 %v3908, %v4617
    %v4619 = vpop.f32.mrb[0].mxu0
    %v4620 = vadd.f32 %v3904, %v4619
    %v4621 = vpop.f32.mrb[0].mxu0
    %v4622 = vadd.f32 %v3908, %v4621
    %4623 = vmatprep.mubr.bf16.mxu0 %v3721
    %4624 = vmatmul.mubr.bf16.gmra.mrb[0].mxu0 %v3720
    %v4625 = vpop.f32.mrb[0].mxu0
    %v4626 = vadd.f32 %v3904, %v4625
    %v4627 = vpop.f32.mrb[0].mxu0
    %v4628 = vadd.f32 %v3908, %v4627
    %v4629 = vpop.f32.mrb[0].mxu0
    %v4630 = vadd.f32 %v3904, %v4629
    %v4631 = vpop.f32.mrb[0].mxu0
    %v4632 = vadd.f32 %v3908, %v4631
    %4633 = vmatprep.mubr.bf16.mxu0 %v3725
    %4634 = vmatmul.mubr.bf16.gmra.mrb[0].mxu0 %v3724
    %v4635 = vpop.f32.mrb[0].mxu0
    %v4636 = vadd.f32 %v3904, %v4635
    %v4637 = vpop.f32.mrb[0].mxu0
    %v4638 = vadd.f32 %v3908, %v4637
    %v4639 = vpop.f32.mrb[0].mxu0
    %v4640 = vadd.f32 %v3904, %v4639
    %v4641 = vpop.f32.mrb[0].mxu0
    %v4642 = vadd.f32 %v3908, %v4641
    %4643 = vmatprep.mubr.bf16.mxu0 %v3729
    %4644 = vmatmul.mubr.bf16.gmra.mrb[0].mxu0 %v3728
    %v4645 = vpop.f32.mrb[0].mxu0
    %v4646 = vadd.f32 %v3904, %v4645
    %v4647 = vpop.f32.mrb[0].mxu0
    %v4648 = vadd.f32 %v3908, %v4647
    %v4649 = vpop.f32.mrb[0].mxu0
    %v4650 = vadd.f32 %v3904, %v4649
    %v4651 = vpop.f32.mrb[0].mxu0
    %v4652 = vadd.f32 %v3908, %v4651
    %4653 = vmatprep.mubr.bf16.mxu0 %v3733
    %4654 = vmatmul.mubr.bf16.gmra.mrb[0].mxu0 %v3732
    %v4655 = vpop.f32.mrb[0].mxu0
    %v4656 = vadd.f32 %v3904, %v4655
    %v4657 = vpop.f32.mrb[0].mxu0
    %v4658 = vadd.f32 %v3908, %v4657
    %v4659 = vpop.f32.mrb[0].mxu0
    %v4660 = vadd.f32 %v3904, %v4659
    %v4661 = vpop.f32.mrb[0].mxu0
    %v4662 = vadd.f32 %v3908, %v4661
    %4663 = vmatprep.mubr.bf16.mxu0 %v3737
    %4664 = vmatmul.mubr.bf16.gmra.mrb[0].mxu0 %v3736
    %v4665 = vpop.f32.mrb[0].mxu0
    %v4666 = vadd.f32 %v3904, %v4665
    %v4667 = vpop.f32.mrb[0].mxu0
    %v4668 = vadd.f32 %v3908, %v4667
    %v4669 = vpop.f32.mrb[0].mxu0
    %v4670 = vadd.f32 %v3904, %v4669
    %v4671 = vpop.f32.mrb[0].mxu0
    %v4672 = vadd.f32 %v3908, %v4671
    %4673 = vmatprep.mubr.bf16.mxu0 %v3741
    %4674 = vmatmul.mubr.bf16.gmra.mrb[0].mxu0 %v3740
    %v4675 = vpop.f32.mrb[0].mxu0
    %v4676 = vadd.f32 %v3904, %v4675
    %v4677 = vpop.f32.mrb[0].mxu0
    %v4678 = vadd.f32 %v3908, %v4677
    %v4679 = vpop.f32.mrb[0].mxu0
    %v4680 = vadd.f32 %v3904, %v4679
    %v4681 = vpop.f32.mrb[0].mxu0
    %v4682 = vadd.f32 %v3908, %v4681
    %4683 = vmatprep.mubr.bf16.mxu0 %v3745
    %4684 = vmatmul.mubr.bf16.gmra.mrb[0].mxu0 %v3744
    %v4685 = vpop.f32.mrb[0].mxu0
    %v4686 = vadd.f32 %v3904, %v4685
    %v4687 = vpop.f32.mrb[0].mxu0
    %v4688 = vadd.f32 %v3908, %v4687
    %v4689 = vpop.f32.mrb[0].mxu0
    %v4690 = vadd.f32 %v3904, %v4689
    %v4691 = vpop.f32.mrb[0].mxu0
    %v4692 = vadd.f32 %v3908, %v4691
    %4693 = vmatprep.mubr.bf16.mxu0 %v3749
    %4694 = vmatmul.mubr.bf16.gmra.mrb[0].mxu0 %v3748
    %v4695 = vpop.f32.mrb[0].mxu0
    %v4696 = vadd.f32 %v3904, %v4695
    %v4697 = vpop.f32.mrb[0].mxu0
    %v4698 = vadd.f32 %v3908, %v4697
    %v4699 = vpop.f32.mrb[0].mxu0
    %v4700 = vadd.f32 %v3904, %v4699
    %v4701 = vpop.f32.mrb[0].mxu0
    %v4702 = vadd.f32 %v3908, %v4701
    %4703 = vmatprep.mubr.bf16.mxu0 %v3753
    %4704 = vmatmul.mubr.bf16.gmra.mrb[0].mxu0 %v3752
    %v4705 = vpop.f32.mrb[0].mxu0
    %v4706 = vadd.f32 %v3904, %v4705
    %v4707 = vpop.f32.mrb[0].mxu0
    %v4708 = vadd.f32 %v3908, %v4707
    %v4709 = vpop.f32.mrb[0].mxu0
    %v4710 = vadd.f32 %v3904, %v4709
    %v4711 = vpop.f32.mrb[0].mxu0
    %v4712 = vadd.f32 %v3908, %v4711
    %4713 = vmatprep.mubr.bf16.mxu0 %v3757
    %4714 = vmatmul.mubr.bf16.gmra.mrb[0].mxu0 %v3756
    %v4715 = vpop.f32.mrb[0].mxu0
    %v4716 = vadd.f32 %v3904, %v4715
    %v4717 = vpop.f32.mrb[0].mxu0
    %v4718 = vadd.f32 %v3908, %v4717
    %v4719 = vpop.f32.mrb[0].mxu0
    %v4720 = vadd.f32 %v3904, %v4719
    %v4721 = vpop.f32.mrb[0].mxu0
    %v4722 = vadd.f32 %v3908, %v4721
    %4723 = vmatprep.mubr.bf16.mxu0 %v3761
    %4724 = vmatmul.mubr.bf16.gmra.mrb[0].mxu0 %v3760
    %v4725 = vpop.f32.mrb[0].mxu0
    %v4726 = vadd.f32 %v3904, %v4725
    %v4727 = vpop.f32.mrb[0].mxu0
    %v4728 = vadd.f32 %v3908, %v4727
    %v4729 = vpop.f32.mrb[0].mxu0
    %v4730 = vadd.f32 %v3904, %v4729
    %v4731 = vpop.f32.mrb[0].mxu0
    %v4732 = vadd.f32 %v3908, %v4731
    %4733 = vmatprep.mubr.bf16.mxu0 %v3765
    %4734 = vmatmul.mubr.bf16.gmra.mrb[0].mxu0 %v3764
    %v4735 = vpop.f32.mrb[0].mxu0
    %v4736 = vadd.f32 %v3904, %v4735
    %v4737 = vpop.f32.mrb[0].mxu0
    %v4738 = vadd.f32 %v3908, %v4737
    %v4739 = vpop.f32.mrb[0].mxu0
    %v4740 = vadd.f32 %v3904, %v4739
    %v4741 = vpop.f32.mrb[0].mxu0
    %v4742 = vadd.f32 %v3908, %v4741
    %4743 = vmatprep.mubr.bf16.mxu0 %v3769
    %4744 = vmatmul.mubr.bf16.gmra.mrb[0].mxu0 %v3768
    %v4745 = vpop.f32.mrb[0].mxu0
    %v4746 = vadd.f32 %v3904, %v4745
    %v4747 = vpop.f32.mrb[0].mxu0
    %v4748 = vadd.f32 %v3908, %v4747
    %v4749 = vpop.f32.mrb[0].mxu0
    %v4750 = vadd.f32 %v3904, %v4749
    %v4751 = vpop.f32.mrb[0].mxu0
    %v4752 = vadd.f32 %v3908, %v4751
    %4753 = vdwg.mxu0
    %4754 = vmatprep.subr.bf16.mxu0 %v4370
    %4755 = vmatpush1.bf16.msra.mxu0 %v4369
    %4756 = vmatprep.subr.bf16.mxu0 %v4374
    %4757 = vmatpush1.bf16.msra.mxu0 %v4373
    %4758 = vmatprep.subr.bf16.mxu0 %v4378
    %4759 = vmatpush1.bf16.msra.mxu0 %v4377
    %4760 = vmatprep.subr.bf16.mxu0 %v4382
    %4761 = vmatpush1.bf16.msra.mxu0 %v4381
    %4762 = vmatprep.subr.bf16.mxu0 %v4386
    %4763 = vmatpush1.bf16.msra.mxu0 %v4385
    %4764 = vmatprep.subr.bf16.mxu0 %v4390
    %4765 = vmatpush1.bf16.msra.mxu0 %v4389
    %4766 = vmatprep.subr.bf16.mxu0 %v4394
    %4767 = vmatpush1.bf16.msra.mxu0 %v4393
    %4768 = vmatprep.subr.bf16.mxu0 %v4398
    %4769 = vmatpush1.bf16.msra.mxu0 %v4397
    %4770 = vmatprep.subr.bf16.mxu0 %v4402
    %4771 = vmatpush1.bf16.msra.mxu0 %v4401
    %4772 = vmatprep.subr.bf16.mxu0 %v4406
    %4773 = vmatpush1.bf16.msra.mxu0 %v4405
    %4774 = vmatprep.subr.bf16.mxu0 %v4410
    %4775 = vmatpush1.bf16.msra.mxu0 %v4409
    %4776 = vmatprep.subr.bf16.mxu0 %v4414
    %4777 = vmatpush1.bf16.msra.mxu0 %v4413
    %4778 = vmatprep.subr.bf16.mxu0 %v4418
    %4779 = vmatpush1.bf16.msra.mxu0 %v4417
    %4780 = vmatprep.subr.bf16.mxu0 %v4422
    %4781 = vmatpush1.bf16.msra.mxu0 %v4421
    %4782 = vmatprep.subr.bf16.mxu0 %v4426
    %4783 = vmatpush1.bf16.msra.mxu0 %v4425
    %4784 = vmatprep.subr.bf16.mxu0 %v4430
    %4785 = vmatpush1.bf16.msra.mxu0 %v4429
    %4786 = vmatprep.mubr.bf16.mxu0 %v3711
    %4787 = vmatmul.mubr.bf16.gmra.mrb[0].mxu0 %v3710
    %v4788 = vpop.f32.mrb[0].mxu0
    %v4789 = vadd.f32 %v4596, %v4788
    %v4790 = vpop.f32.mrb[0].mxu0
    %v4791 = vadd.f32 %v4598, %v4790
    %v4792 = vpop.f32.mrb[0].mxu0
    %v4793 = vadd.f32 %v4600, %v4792
    %v4794 = vpop.f32.mrb[0].mxu0
    %v4795 = vadd.f32 %v4602, %v4794
    %4796 = vmatprep.mubr.bf16.mxu0 %v3715
    %4797 = vmatmul.mubr.bf16.gmra.mrb[0].mxu0 %v3714
    %v4798 = vpop.f32.mrb[0].mxu0
    %v4799 = vadd.f32 %v4606, %v4798
    %v4800 = vpop.f32.mrb[0].mxu0
    %v4801 = vadd.f32 %v4608, %v4800
    %v4802 = vpop.f32.mrb[0].mxu0
    %v4803 = vadd.f32 %v4610, %v4802
    %v4804 = vpop.f32.mrb[0].mxu0
    %v4805 = vadd.f32 %v4612, %v4804
    %4806 = vmatprep.mubr.bf16.mxu0 %v3719
    %4807 = vmatmul.mubr.bf16.gmra.mrb[0].mxu0 %v3718
    %v4808 = vpop.f32.mrb[0].mxu0
    %v4809 = vadd.f32 %v4616, %v4808
    %v4810 = vpop.f32.mrb[0].mxu0
    %v4811 = vadd.f32 %v4618, %v4810
    %v4812 = vpop.f32.mrb[0].mxu0
    %v4813 = vadd.f32 %v4620, %v4812
    %v4814 = vpop.f32.mrb[0].mxu0
    %v4815 = vadd.f32 %v4622, %v4814
    %4816 = vmatprep.mubr.bf16.mxu0 %v3723
    %4817 = vmatmul.mubr.bf16.gmra.mrb[0].mxu0 %v3722
    %v4818 = vpop.f32.mrb[0].mxu0
    %v4819 = vadd.f32 %v4626, %v4818
    %v4820 = vpop.f32.mrb[0].mxu0
    %v4821 = vadd.f32 %v4628, %v4820
    %v4822 = vpop.f32.mrb[0].mxu0
    %v4823 = vadd.f32 %v4630, %v4822
    %v4824 = vpop.f32.mrb[0].mxu0
    %v4825 = vadd.f32 %v4632, %v4824
    %4826 = vmatprep.mubr.bf16.mxu0 %v3727
    %4827 = vmatmul.mubr.bf16.gmra.mrb[0].mxu0 %v3726
    %v4828 = vpop.f32.mrb[0].mxu0
    %v4829 = vadd.f32 %v4636, %v4828
    %v4830 = vpop.f32.mrb[0].mxu0
    %v4831 = vadd.f32 %v4638, %v4830
    %v4832 = vpop.f32.mrb[0].mxu0
    %v4833 = vadd.f32 %v4640, %v4832
    %v4834 = vpop.f32.mrb[0].mxu0
    %v4835 = vadd.f32 %v4642, %v4834
    %4836 = vmatprep.mubr.bf16.mxu0 %v3731
    %4837 = vmatmul.mubr.bf16.gmra.mrb[0].mxu0 %v3730
    %v4838 = vpop.f32.mrb[0].mxu0
    %v4839 = vadd.f32 %v4646, %v4838
    %v4840 = vpop.f32.mrb[0].mxu0
    %v4841 = vadd.f32 %v4648, %v4840
    %v4842 = vpop.f32.mrb[0].mxu0
    %v4843 = vadd.f32 %v4650, %v4842
    %v4844 = vpop.f32.mrb[0].mxu0
    %v4845 = vadd.f32 %v4652, %v4844
    %4846 = vmatprep.mubr.bf16.mxu0 %v3735
    %4847 = vmatmul.mubr.bf16.gmra.mrb[0].mxu0 %v3734
    %v4848 = vpop.f32.mrb[0].mxu0
    %v4849 = vadd.f32 %v4656, %v4848
    %v4850 = vpop.f32.mrb[0].mxu0
    %v4851 = vadd.f32 %v4658, %v4850
    %v4852 = vpop.f32.mrb[0].mxu0
    %v4853 = vadd.f32 %v4660, %v4852
    %v4854 = vpop.f32.mrb[0].mxu0
    %v4855 = vadd.f32 %v4662, %v4854
    %4856 = vmatprep.mubr.bf16.mxu0 %v3739
    %4857 = vmatmul.mubr.bf16.gmra.mrb[0].mxu0 %v3738
    %v4858 = vpop.f32.mrb[0].mxu0
    %v4859 = vadd.f32 %v4666, %v4858
    %v4860 = vpop.f32.mrb[0].mxu0
    %v4861 = vadd.f32 %v4668, %v4860
    %v4862 = vpop.f32.mrb[0].mxu0
    %v4863 = vadd.f32 %v4670, %v4862
    %v4864 = vpop.f32.mrb[0].mxu0
    %v4865 = vadd.f32 %v4672, %v4864
    %4866 = vmatprep.mubr.bf16.mxu0 %v3743
    %4867 = vmatmul.mubr.bf16.gmra.mrb[0].mxu0 %v3742
    %v4868 = vpop.f32.mrb[0].mxu0
    %v4869 = vadd.f32 %v4676, %v4868
    %v4870 = vpop.f32.mrb[0].mxu0
    %v4871 = vadd.f32 %v4678, %v4870
    %v4872 = vpop.f32.mrb[0].mxu0
    %v4873 = vadd.f32 %v4680, %v4872
    %v4874 = vpop.f32.mrb[0].mxu0
    %v4875 = vadd.f32 %v4682, %v4874
    %4876 = vmatprep.mubr.bf16.mxu0 %v3747
    %4877 = vmatmul.mubr.bf16.gmra.mrb[0].mxu0 %v3746
    %v4878 = vpop.f32.mrb[0].mxu0
    %v4879 = vadd.f32 %v4686, %v4878
    %v4880 = vpop.f32.mrb[0].mxu0
    %v4881 = vadd.f32 %v4688, %v4880
    %v4882 = vpop.f32.mrb[0].mxu0
    %v4883 = vadd.f32 %v4690, %v4882
    %v4884 = vpop.f32.mrb[0].mxu0
    %v4885 = vadd.f32 %v4692, %v4884
    %4886 = vmatprep.mubr.bf16.mxu0 %v3751
    %4887 = vmatmul.mubr.bf16.gmra.mrb[0].mxu0 %v3750
    %v4888 = vpop.f32.mrb[0].mxu0
    %v4889 = vadd.f32 %v4696, %v4888
    %v4890 = vpop.f32.mrb[0].mxu0
    %v4891 = vadd.f32 %v4698, %v4890
    %v4892 = vpop.f32.mrb[0].mxu0
    %v4893 = vadd.f32 %v4700, %v4892
    %v4894 = vpop.f32.mrb[0].mxu0
    %v4895 = vadd.f32 %v4702, %v4894
    %4896 = vmatprep.mubr.bf16.mxu0 %v3755
    %4897 = vmatmul.mubr.bf16.gmra.mrb[0].mxu0 %v3754
    %v4898 = vpop.f32.mrb[0].mxu0
    %v4899 = vadd.f32 %v4706, %v4898
    %v4900 = vpop.f32.mrb[0].mxu0
    %v4901 = vadd.f32 %v4708, %v4900
    %v4902 = vpop.f32.mrb[0].mxu0
    %v4903 = vadd.f32 %v4710, %v4902
    %v4904 = vpop.f32.mrb[0].mxu0
    %v4905 = vadd.f32 %v4712, %v4904
    %4906 = vmatprep.mubr.bf16.mxu0 %v3759
    %4907 = vmatmul.mubr.bf16.gmra.mrb[0].mxu0 %v3758
    %v4908 = vpop.f32.mrb[0].mxu0
    %v4909 = vadd.f32 %v4716, %v4908
    %v4910 = vpop.f32.mrb[0].mxu0
    %v4911 = vadd.f32 %v4718, %v4910
    %v4912 = vpop.f32.mrb[0].mxu0
    %v4913 = vadd.f32 %v4720, %v4912
    %v4914 = vpop.f32.mrb[0].mxu0
    %v4915 = vadd.f32 %v4722, %v4914
    %4916 = vmatprep.mubr.bf16.mxu0 %v3763
    %4917 = vmatmul.mubr.bf16.gmra.mrb[0].mxu0 %v3762
    %v4918 = vpop.f32.mrb[0].mxu0
    %v4919 = vadd.f32 %v4726, %v4918
    %v4920 = vpop.f32.mrb[0].mxu0
    %v4921 = vadd.f32 %v4728, %v4920
    %v4922 = vpop.f32.mrb[0].mxu0
    %v4923 = vadd.f32 %v4730, %v4922
    %v4924 = vpop.f32.mrb[0].mxu0
    %v4925 = vadd.f32 %v4732, %v4924
    %4926 = vmatprep.mubr.bf16.mxu0 %v3767
    %4927 = vmatmul.mubr.bf16.gmra.mrb[0].mxu0 %v3766
    %v4928 = vpop.f32.mrb[0].mxu0
    %v4929 = vadd.f32 %v4736, %v4928
    %v4930 = vpop.f32.mrb[0].mxu0
    %v4931 = vadd.f32 %v4738, %v4930
    %v4932 = vpop.f32.mrb[0].mxu0
    %v4933 = vadd.f32 %v4740, %v4932
    %v4934 = vpop.f32.mrb[0].mxu0
    %v4935 = vadd.f32 %v4742, %v4934
    %4936 = vmatprep.mubr.bf16.mxu0 %v3771
    %4937 = vmatmul.mubr.bf16.gmra.mrb[0].mxu0 %v3770
    %v4938 = vpop.f32.mrb[0].mxu0
    %v4939 = vadd.f32 %v4746, %v4938
    %v4940 = vpop.f32.mrb[0].mxu0
    %v4941 = vadd.f32 %v4748, %v4940
    %v4942 = vpop.f32.mrb[0].mxu0
    %v4943 = vadd.f32 %v4750, %v4942
    %v4944 = vpop.f32.mrb[0].mxu0
    %v4945 = vadd.f32 %v4752, %v4944
    %4946 = vdwg.mxu0
    %4947 = vmatprep.subr.bf16.mxu0 %v4308
    %4948 = vmatpush1.bf16.msra.mxu0 %v4307
    %4949 = vmatprep.subr.bf16.mxu0 %v4312
    %4950 = vmatpush1.bf16.msra.mxu0 %v4311
    %4951 = vmatprep.subr.bf16.mxu0 %v4316
    %4952 = vmatpush1.bf16.msra.mxu0 %v4315
    %4953 = vmatprep.subr.bf16.mxu0 %v4320
    %4954 = vmatpush1.bf16.msra.mxu0 %v4319
    %4955 = vmatprep.subr.bf16.mxu0 %v4324
    %4956 = vmatpush1.bf16.msra.mxu0 %v4323
    %4957 = vmatprep.subr.bf16.mxu0 %v4328
    %4958 = vmatpush1.bf16.msra.mxu0 %v4327
    %4959 = vmatprep.subr.bf16.mxu0 %v4332
    %4960 = vmatpush1.bf16.msra.mxu0 %v4331
    %4961 = vmatprep.subr.bf16.mxu0 %v4336
    %4962 = vmatpush1.bf16.msra.mxu0 %v4335
    %4963 = vmatprep.subr.bf16.mxu0 %v4340
    %4964 = vmatpush1.bf16.msra.mxu0 %v4339
    %4965 = vmatprep.subr.bf16.mxu0 %v4344
    %4966 = vmatpush1.bf16.msra.mxu0 %v4343
    %4967 = vmatprep.subr.bf16.mxu0 %v4348
    %4968 = vmatpush1.bf16.msra.mxu0 %v4347
    %4969 = vmatprep.subr.bf16.mxu0 %v4352
    %4970 = vmatpush1.bf16.msra.mxu0 %v4351
    %4971 = vmatprep.subr.bf16.mxu0 %v4356
    %4972 = vmatpush1.bf16.msra.mxu0 %v4355
    %4973 = vmatprep.subr.bf16.mxu0 %v4360
    %4974 = vmatpush1.bf16.msra.mxu0 %v4359
    %4975 = vmatprep.subr.bf16.mxu0 %v4364
    %4976 = vmatpush1.bf16.msra.mxu0 %v4363
    %4977 = vmatprep.subr.bf16.mxu0 %v4368
    %4978 = vmatpush1.bf16.msra.mxu0 %v4367
    %4979 = vmatprep.mubr.bf16.mxu0 %v3709
    %4980 = vmatmul.mubr.bf16.gmra.mrb[0].mxu0 %v3708
    %v4981 = vpop.f32.mrb[0].mxu0
    %v4982 = vadd.f32 %v3912, %v4981
    %v4983 = vpop.f32.mrb[0].mxu0
    %v4984 = vadd.f32 %v3916, %v4983
    %v4985 = vpop.f32.mrb[0].mxu0
    %v4986 = vadd.f32 %v3912, %v4985
    %v4987 = vpop.f32.mrb[0].mxu0
    %v4988 = vadd.f32 %v3916, %v4987
    %4989 = vmatprep.mubr.bf16.mxu0 %v3713
    %4990 = vmatmul.mubr.bf16.gmra.mrb[0].mxu0 %v3712
    %v4991 = vpop.f32.mrb[0].mxu0
    %v4992 = vadd.f32 %v3912, %v4991
    %v4993 = vpop.f32.mrb[0].mxu0
    %v4994 = vadd.f32 %v3916, %v4993
    %v4995 = vpop.f32.mrb[0].mxu0
    %v4996 = vadd.f32 %v3912, %v4995
    %v4997 = vpop.f32.mrb[0].mxu0
    %v4998 = vadd.f32 %v3916, %v4997
    %4999 = vmatprep.mubr.bf16.mxu0 %v3717
    %5000 = vmatmul.mubr.bf16.gmra.mrb[0].mxu0 %v3716
    %v5001 = vpop.f32.mrb[0].mxu0
    %v5002 = vadd.f32 %v3912, %v5001
    %v5003 = vpop.f32.mrb[0].mxu0
    %v5004 = vadd.f32 %v3916, %v5003
    %v5005 = vpop.f32.mrb[0].mxu0
    %v5006 = vadd.f32 %v3912, %v5005
    %v5007 = vpop.f32.mrb[0].mxu0
    %v5008 = vadd.f32 %v3916, %v5007
    %5009 = vmatprep.mubr.bf16.mxu0 %v3721
    %5010 = vmatmul.mubr.bf16.gmra.mrb[0].mxu0 %v3720
    %v5011 = vpop.f32.mrb[0].mxu0
    %v5012 = vadd.f32 %v3912, %v5011
    %v5013 = vpop.f32.mrb[0].mxu0
    %v5014 = vadd.f32 %v3916, %v5013
    %v5015 = vpop.f32.mrb[0].mxu0
    %v5016 = vadd.f32 %v3912, %v5015
    %v5017 = vpop.f32.mrb[0].mxu0
    %v5018 = vadd.f32 %v3916, %v5017
    %5019 = vmatprep.mubr.bf16.mxu0 %v3725
    %5020 = vmatmul.mubr.bf16.gmra.mrb[0].mxu0 %v3724
    %v5021 = vpop.f32.mrb[0].mxu0
    %v5022 = vadd.f32 %v3912, %v5021
    %v5023 = vpop.f32.mrb[0].mxu0
    %v5024 = vadd.f32 %v3916, %v5023
    %v5025 = vpop.f32.mrb[0].mxu0
    %v5026 = vadd.f32 %v3912, %v5025
    %v5027 = vpop.f32.mrb[0].mxu0
    %v5028 = vadd.f32 %v3916, %v5027
    %5029 = vmatprep.mubr.bf16.mxu0 %v3729
    %5030 = vmatmul.mubr.bf16.gmra.mrb[0].mxu0 %v3728
    %v5031 = vpop.f32.mrb[0].mxu0
    %v5032 = vadd.f32 %v3912, %v5031
    %v5033 = vpop.f32.mrb[0].mxu0
    %v5034 = vadd.f32 %v3916, %v5033
    %v5035 = vpop.f32.mrb[0].mxu0
    %v5036 = vadd.f32 %v3912, %v5035
    %v5037 = vpop.f32.mrb[0].mxu0
    %v5038 = vadd.f32 %v3916, %v5037
    %5039 = vmatprep.mubr.bf16.mxu0 %v3733
    %5040 = vmatmul.mubr.bf16.gmra.mrb[0].mxu0 %v3732
    %v5041 = vpop.f32.mrb[0].mxu0
    %v5042 = vadd.f32 %v3912, %v5041
    %v5043 = vpop.f32.mrb[0].mxu0
    %v5044 = vadd.f32 %v3916, %v5043
    %v5045 = vpop.f32.mrb[0].mxu0
    %v5046 = vadd.f32 %v3912, %v5045
    %v5047 = vpop.f32.mrb[0].mxu0
    %v5048 = vadd.f32 %v3916, %v5047
    %5049 = vmatprep.mubr.bf16.mxu0 %v3737
    %5050 = vmatmul.mubr.bf16.gmra.mrb[0].mxu0 %v3736
    %v5051 = vpop.f32.mrb[0].mxu0
    %v5052 = vadd.f32 %v3912, %v5051
    %v5053 = vpop.f32.mrb[0].mxu0
    %v5054 = vadd.f32 %v3916, %v5053
    %v5055 = vpop.f32.mrb[0].mxu0
    %v5056 = vadd.f32 %v3912, %v5055
    %v5057 = vpop.f32.mrb[0].mxu0
    %v5058 = vadd.f32 %v3916, %v5057
    %5059 = vmatprep.mubr.bf16.mxu0 %v3741
    %5060 = vmatmul.mubr.bf16.gmra.mrb[0].mxu0 %v3740
    %v5061 = vpop.f32.mrb[0].mxu0
    %v5062 = vadd.f32 %v3912, %v5061
    %v5063 = vpop.f32.mrb[0].mxu0
    %v5064 = vadd.f32 %v3916, %v5063
    %v5065 = vpop.f32.mrb[0].mxu0
    %v5066 = vadd.f32 %v3912, %v5065
    %v5067 = vpop.f32.mrb[0].mxu0
    %v5068 = vadd.f32 %v3916, %v5067
    %5069 = vmatprep.mubr.bf16.mxu0 %v3745
    %5070 = vmatmul.mubr.bf16.gmra.mrb[0].mxu0 %v3744
    %v5071 = vpop.f32.mrb[0].mxu0
    %v5072 = vadd.f32 %v3912, %v5071
    %v5073 = vpop.f32.mrb[0].mxu0
    %v5074 = vadd.f32 %v3916, %v5073
    %v5075 = vpop.f32.mrb[0].mxu0
    %v5076 = vadd.f32 %v3912, %v5075
    %v5077 = vpop.f32.mrb[0].mxu0
    %v5078 = vadd.f32 %v3916, %v5077
    %5079 = vmatprep.mubr.bf16.mxu0 %v3749
    %5080 = vmatmul.mubr.bf16.gmra.mrb[0].mxu0 %v3748
    %v5081 = vpop.f32.mrb[0].mxu0
    %v5082 = vadd.f32 %v3912, %v5081
    %v5083 = vpop.f32.mrb[0].mxu0
    %v5084 = vadd.f32 %v3916, %v5083
    %v5085 = vpop.f32.mrb[0].mxu0
    %v5086 = vadd.f32 %v3912, %v5085
    %v5087 = vpop.f32.mrb[0].mxu0
    %v5088 = vadd.f32 %v3916, %v5087
    %5089 = vmatprep.mubr.bf16.mxu0 %v3753
    %5090 = vmatmul.mubr.bf16.gmra.mrb[0].mxu0 %v3752
    %v5091 = vpop.f32.mrb[0].mxu0
    %v5092 = vadd.f32 %v3912, %v5091
    %v5093 = vpop.f32.mrb[0].mxu0
    %v5094 = vadd.f32 %v3916, %v5093
    %v5095 = vpop.f32.mrb[0].mxu0
    %v5096 = vadd.f32 %v3912, %v5095
    %v5097 = vpop.f32.mrb[0].mxu0
    %v5098 = vadd.f32 %v3916, %v5097
    %5099 = vmatprep.mubr.bf16.mxu0 %v3757
    %5100 = vmatmul.mubr.bf16.gmra.mrb[0].mxu0 %v3756
    %v5101 = vpop.f32.mrb[0].mxu0
    %v5102 = vadd.f32 %v3912, %v5101
    %v5103 = vpop.f32.mrb[0].mxu0
    %v5104 = vadd.f32 %v3916, %v5103
    %v5105 = vpop.f32.mrb[0].mxu0
    %v5106 = vadd.f32 %v3912, %v5105
    %v5107 = vpop.f32.mrb[0].mxu0
    %v5108 = vadd.f32 %v3916, %v5107
    %5109 = vmatprep.mubr.bf16.mxu0 %v3761
    %5110 = vmatmul.mubr.bf16.gmra.mrb[0].mxu0 %v3760
    %v5111 = vpop.f32.mrb[0].mxu0
    %v5112 = vadd.f32 %v3912, %v5111
    %v5113 = vpop.f32.mrb[0].mxu0
    %v5114 = vadd.f32 %v3916, %v5113
    %v5115 = vpop.f32.mrb[0].mxu0
    %v5116 = vadd.f32 %v3912, %v5115
    %v5117 = vpop.f32.mrb[0].mxu0
    %v5118 = vadd.f32 %v3916, %v5117
    %5119 = vmatprep.mubr.bf16.mxu0 %v3765
    %5120 = vmatmul.mubr.bf16.gmra.mrb[0].mxu0 %v3764
    %v5121 = vpop.f32.mrb[0].mxu0
    %v5122 = vadd.f32 %v3912, %v5121
    %v5123 = vpop.f32.mrb[0].mxu0
    %v5124 = vadd.f32 %v3916, %v5123
    %v5125 = vpop.f32.mrb[0].mxu0
    %v5126 = vadd.f32 %v3912, %v5125
    %v5127 = vpop.f32.mrb[0].mxu0
    %v5128 = vadd.f32 %v3916, %v5127
    %5129 = vmatprep.mubr.bf16.mxu0 %v3769
    %5130 = vmatmul.mubr.bf16.gmra.mrb[0].mxu0 %v3768
    %v5131 = vpop.f32.mrb[0].mxu0
    %v5132 = vadd.f32 %v3912, %v5131
    %v5133 = vpop.f32.mrb[0].mxu0
    %v5134 = vadd.f32 %v3916, %v5133
    %v5135 = vpop.f32.mrb[0].mxu0
    %v5136 = vadd.f32 %v3912, %v5135
    %v5137 = vpop.f32.mrb[0].mxu0
    %v5138 = vadd.f32 %v3916, %v5137
    %5139 = vdwg.mxu0
    %5140 = vmatprep.subr.bf16.mxu0 %v4372
    %5141 = vmatpush1.bf16.msra.mxu0 %v4371
    %5142 = vmatprep.subr.bf16.mxu0 %v4376
    %5143 = vmatpush1.bf16.msra.mxu0 %v4375
    %5144 = vmatprep.subr.bf16.mxu0 %v4380
    %5145 = vmatpush1.bf16.msra.mxu0 %v4379
    %5146 = vmatprep.subr.bf16.mxu0 %v4384
    %5147 = vmatpush1.bf16.msra.mxu0 %v4383
    %5148 = vmatprep.subr.bf16.mxu0 %v4388
    %5149 = vmatpush1.bf16.msra.mxu0 %v4387
    %5150 = vmatprep.subr.bf16.mxu0 %v4392
    %5151 = vmatpush1.bf16.msra.mxu0 %v4391
    %5152 = vmatprep.subr.bf16.mxu0 %v4396
    %5153 = vmatpush1.bf16.msra.mxu0 %v4395
    %5154 = vmatprep.subr.bf16.mxu0 %v4400
    %5155 = vmatpush1.bf16.msra.mxu0 %v4399
    %5156 = vmatprep.subr.bf16.mxu0 %v4404
    %5157 = vmatpush1.bf16.msra.mxu0 %v4403
    %5158 = vmatprep.subr.bf16.mxu0 %v4408
    %5159 = vmatpush1.bf16.msra.mxu0 %v4407
    %5160 = vmatprep.subr.bf16.mxu0 %v4412
    %5161 = vmatpush1.bf16.msra.mxu0 %v4411
    %5162 = vmatprep.subr.bf16.mxu0 %v4416
    %5163 = vmatpush1.bf16.msra.mxu0 %v4415
    %5164 = vmatprep.subr.bf16.mxu0 %v4420
    %5165 = vmatpush1.bf16.msra.mxu0 %v4419
    %5166 = vmatprep.subr.bf16.mxu0 %v4424
    %5167 = vmatpush1.bf16.msra.mxu0 %v4423
    %5168 = vmatprep.subr.bf16.mxu0 %v4428
    %5169 = vmatpush1.bf16.msra.mxu0 %v4427
    %5170 = vmatprep.subr.bf16.mxu0 %v4432
    %5171 = vmatpush1.bf16.msra.mxu0 %v4431
    %5172 = vmatprep.mubr.bf16.mxu0 %v3711
    %5173 = vmatmul.mubr.bf16.gmra.mrb[0].mxu0 %v3710
    %v5174 = vpop.f32.mrb[0].mxu0
    %v5175 = vadd.f32 %v4982, %v5174
    %v5176 = vpop.f32.mrb[0].mxu0
    %v5177 = vadd.f32 %v4984, %v5176
    %v5178 = vpop.f32.mrb[0].mxu0
    %v5179 = vadd.f32 %v4986, %v5178
    %v5180 = vpop.f32.mrb[0].mxu0
    %v5181 = vadd.f32 %v4988, %v5180
    %5182 = vmatprep.mubr.bf16.mxu0 %v3715
    %5183 = vmatmul.mubr.bf16.gmra.mrb[0].mxu0 %v3714
    %v5184 = vpop.f32.mrb[0].mxu0
    %v5185 = vadd.f32 %v4992, %v5184
    %v5186 = vpop.f32.mrb[0].mxu0
    %v5187 = vadd.f32 %v4994, %v5186
    %v5188 = vpop.f32.mrb[0].mxu0
    %v5189 = vadd.f32 %v4996, %v5188
    %v5190 = vpop.f32.mrb[0].mxu0
    %v5191 = vadd.f32 %v4998, %v5190
    %5192 = vmatprep.mubr.bf16.mxu0 %v3719
    %5193 = vmatmul.mubr.bf16.gmra.mrb[0].mxu0 %v3718
    %v5194 = vpop.f32.mrb[0].mxu0
    %v5195 = vadd.f32 %v5002, %v5194
    %v5196 = vpop.f32.mrb[0].mxu0
    %v5197 = vadd.f32 %v5004, %v5196
    %v5198 = vpop.f32.mrb[0].mxu0
    %v5199 = vadd.f32 %v5006, %v5198
    %v5200 = vpop.f32.mrb[0].mxu0
    %v5201 = vadd.f32 %v5008, %v5200
    %5202 = vmatprep.mubr.bf16.mxu0 %v3723
    %5203 = vmatmul.mubr.bf16.gmra.mrb[0].mxu0 %v3722
    %v5204 = vpop.f32.mrb[0].mxu0
    %v5205 = vadd.f32 %v5012, %v5204
    %v5206 = vpop.f32.mrb[0].mxu0
    %v5207 = vadd.f32 %v5014, %v5206
    %v5208 = vpop.f32.mrb[0].mxu0
    %v5209 = vadd.f32 %v5016, %v5208
    %v5210 = vpop.f32.mrb[0].mxu0
    %v5211 = vadd.f32 %v5018, %v5210
    %5212 = vmatprep.mubr.bf16.mxu0 %v3727
    %5213 = vmatmul.mubr.bf16.gmra.mrb[0].mxu0 %v3726
    %v5214 = vpop.f32.mrb[0].mxu0
    %v5215 = vadd.f32 %v5022, %v5214
    %v5216 = vpop.f32.mrb[0].mxu0
    %v5217 = vadd.f32 %v5024, %v5216
    %v5218 = vpop.f32.mrb[0].mxu0
    %v5219 = vadd.f32 %v5026, %v5218
    %v5220 = vpop.f32.mrb[0].mxu0
    %v5221 = vadd.f32 %v5028, %v5220
    %5222 = vmatprep.mubr.bf16.mxu0 %v3731
    %5223 = vmatmul.mubr.bf16.gmra.mrb[0].mxu0 %v3730
    %v5224 = vpop.f32.mrb[0].mxu0
    %v5225 = vadd.f32 %v5032, %v5224
    %v5226 = vpop.f32.mrb[0].mxu0
    %v5227 = vadd.f32 %v5034, %v5226
    %v5228 = vpop.f32.mrb[0].mxu0
    %v5229 = vadd.f32 %v5036, %v5228
    %v5230 = vpop.f32.mrb[0].mxu0
    %v5231 = vadd.f32 %v5038, %v5230
    %5232 = vmatprep.mubr.bf16.mxu0 %v3735
    %5233 = vmatmul.mubr.bf16.gmra.mrb[0].mxu0 %v3734
    %v5234 = vpop.f32.mrb[0].mxu0
    %v5235 = vadd.f32 %v5042, %v5234
    %v5236 = vpop.f32.mrb[0].mxu0
    %v5237 = vadd.f32 %v5044, %v5236
    %v5238 = vpop.f32.mrb[0].mxu0
    %v5239 = vadd.f32 %v5046, %v5238
    %v5240 = vpop.f32.mrb[0].mxu0
    %v5241 = vadd.f32 %v5048, %v5240
    %5242 = vmatprep.mubr.bf16.mxu0 %v3739
    %5243 = vmatmul.mubr.bf16.gmra.mrb[0].mxu0 %v3738
    %v5244 = vpop.f32.mrb[0].mxu0
    %v5245 = vadd.f32 %v5052, %v5244
    %v5246 = vpop.f32.mrb[0].mxu0
    %v5247 = vadd.f32 %v5054, %v5246
    %v5248 = vpop.f32.mrb[0].mxu0
    %v5249 = vadd.f32 %v5056, %v5248
    %v5250 = vpop.f32.mrb[0].mxu0
    %v5251 = vadd.f32 %v5058, %v5250
    %5252 = vmatprep.mubr.bf16.mxu0 %v3743
    %5253 = vmatmul.mubr.bf16.gmra.mrb[0].mxu0 %v3742
    %v5254 = vpop.f32.mrb[0].mxu0
    %v5255 = vadd.f32 %v5062, %v5254
    %v5256 = vpop.f32.mrb[0].mxu0
    %v5257 = vadd.f32 %v5064, %v5256
    %v5258 = vpop.f32.mrb[0].mxu0
    %v5259 = vadd.f32 %v5066, %v5258
    %v5260 = vpop.f32.mrb[0].mxu0
    %v5261 = vadd.f32 %v5068, %v5260
    %5262 = vmatprep.mubr.bf16.mxu0 %v3747
    %5263 = vmatmul.mubr.bf16.gmra.mrb[0].mxu0 %v3746
    %v5264 = vpop.f32.mrb[0].mxu0
    %v5265 = vadd.f32 %v5072, %v5264
    %v5266 = vpop.f32.mrb[0].mxu0
    %v5267 = vadd.f32 %v5074, %v5266
    %v5268 = vpop.f32.mrb[0].mxu0
    %v5269 = vadd.f32 %v5076, %v5268
    %v5270 = vpop.f32.mrb[0].mxu0
    %v5271 = vadd.f32 %v5078, %v5270
    %5272 = vmatprep.mubr.bf16.mxu0 %v3751
    %5273 = vmatmul.mubr.bf16.gmra.mrb[0].mxu0 %v3750
    %v5274 = vpop.f32.mrb[0].mxu0
    %v5275 = vadd.f32 %v5082, %v5274
    %v5276 = vpop.f32.mrb[0].mxu0
    %v5277 = vadd.f32 %v5084, %v5276
    %v5278 = vpop.f32.mrb[0].mxu0
    %v5279 = vadd.f32 %v5086, %v5278
    %v5280 = vpop.f32.mrb[0].mxu0
    %v5281 = vadd.f32 %v5088, %v5280
    %5282 = vmatprep.mubr.bf16.mxu0 %v3755
    %5283 = vmatmul.mubr.bf16.gmra.mrb[0].mxu0 %v3754
    %v5284 = vpop.f32.mrb[0].mxu0
    %v5285 = vadd.f32 %v5092, %v5284
    %v5286 = vpop.f32.mrb[0].mxu0
    %v5287 = vadd.f32 %v5094, %v5286
    %v5288 = vpop.f32.mrb[0].mxu0
    %v5289 = vadd.f32 %v5096, %v5288
    %v5290 = vpop.f32.mrb[0].mxu0
    %v5291 = vadd.f32 %v5098, %v5290
    %5292 = vmatprep.mubr.bf16.mxu0 %v3759
    %5293 = vmatmul.mubr.bf16.gmra.mrb[0].mxu0 %v3758
    %v5294 = vpop.f32.mrb[0].mxu0
    %v5295 = vadd.f32 %v5102, %v5294
    %v5296 = vpop.f32.mrb[0].mxu0
    %v5297 = vadd.f32 %v5104, %v5296
    %v5298 = vpop.f32.mrb[0].mxu0
    %v5299 = vadd.f32 %v5106, %v5298
    %v5300 = vpop.f32.mrb[0].mxu0
    %v5301 = vadd.f32 %v5108, %v5300
    %5302 = vmatprep.mubr.bf16.mxu0 %v3763
    %5303 = vmatmul.mubr.bf16.gmra.mrb[0].mxu0 %v3762
    %v5304 = vpop.f32.mrb[0].mxu0
    %v5305 = vadd.f32 %v5112, %v5304
    %v5306 = vpop.f32.mrb[0].mxu0
    %v5307 = vadd.f32 %v5114, %v5306
    %v5308 = vpop.f32.mrb[0].mxu0
    %v5309 = vadd.f32 %v5116, %v5308
    %v5310 = vpop.f32.mrb[0].mxu0
    %v5311 = vadd.f32 %v5118, %v5310
    %5312 = vmatprep.mubr.bf16.mxu0 %v3767
    %5313 = vmatmul.mubr.bf16.gmra.mrb[0].mxu0 %v3766
    %v5314 = vpop.f32.mrb[0].mxu0
    %v5315 = vadd.f32 %v5122, %v5314
    %v5316 = vpop.f32.mrb[0].mxu0
    %v5317 = vadd.f32 %v5124, %v5316
    %v5318 = vpop.f32.mrb[0].mxu0
    %v5319 = vadd.f32 %v5126, %v5318
    %v5320 = vpop.f32.mrb[0].mxu0
    %v5321 = vadd.f32 %v5128, %v5320
    %5322 = vmatprep.mubr.bf16.mxu0 %v3771
    %5323 = vmatmul.mubr.bf16.gmra.mrb[0].mxu0 %v3770
    %v5324 = vpop.f32.mrb[0].mxu0
    %v5325 = vadd.f32 %v5132, %v5324
    %v5326 = vpop.f32.mrb[0].mxu0
    %v5327 = vadd.f32 %v5134, %v5326
    %v5328 = vpop.f32.mrb[0].mxu0
    %v5329 = vadd.f32 %v5136, %v5328
    %v5330 = vpop.f32.mrb[0].mxu0
    %v5331 = vadd.f32 %v5138, %v5330
    %5332 = vdwg.mxu0
    %v5333 = vsub.f32 0.0, %v4789
    %v5334 = vsub.f32 0.0, %v4791
    %v5335 = vsub.f32 0.0, %v5175
    %v5336 = vsub.f32 0.0, %v5177
    %v5337 = vsub.f32 0.0, %v4793
    %v5338 = vsub.f32 0.0, %v4795
    %v5339 = vsub.f32 0.0, %v5179
    %v5340 = vsub.f32 0.0, %v5181
    %v5341 = vsub.f32 0.0, %v4799
    %v5342 = vsub.f32 0.0, %v4801
    %v5343 = vsub.f32 0.0, %v5185
    %v5344 = vsub.f32 0.0, %v5187
    %v5345 = vsub.f32 0.0, %v4803
    %v5346 = vsub.f32 0.0, %v4805
    %v5347 = vsub.f32 0.0, %v5189
    %v5348 = vsub.f32 0.0, %v5191
    %v5349 = vsub.f32 0.0, %v4809
    %v5350 = vsub.f32 0.0, %v4811
    %v5351 = vsub.f32 0.0, %v5195
    %v5352 = vsub.f32 0.0, %v5197
    %v5353 = vsub.f32 0.0, %v4813
    %v5354 = vsub.f32 0.0, %v4815
    %v5355 = vsub.f32 0.0, %v5199
    %v5356 = vsub.f32 0.0, %v5201
    %v5357 = vsub.f32 0.0, %v4819
    %v5358 = vsub.f32 0.0, %v4821
    %v5359 = vsub.f32 0.0, %v5205
    %v5360 = vsub.f32 0.0, %v5207
    %v5361 = vsub.f32 0.0, %v4823
    %v5362 = vsub.f32 0.0, %v4825
    %v5363 = vsub.f32 0.0, %v5209
    %v5364 = vsub.f32 0.0, %v5211
    %v5365 = vsub.f32 0.0, %v4829
    %v5366 = vsub.f32 0.0, %v4831
    %v5367 = vsub.f32 0.0, %v5215
    %v5368 = vsub.f32 0.0, %v5217
    %v5369 = vsub.f32 0.0, %v4833
    %v5370 = vsub.f32 0.0, %v4835
    %v5371 = vsub.f32 0.0, %v5219
    %v5372 = vsub.f32 0.0, %v5221
    %v5373 = vsub.f32 0.0, %v4839
    %v5374 = vsub.f32 0.0, %v4841
    %v5375 = vsub.f32 0.0, %v5225
    %v5376 = vsub.f32 0.0, %v5227
    %v5377 = vsub.f32 0.0, %v4843
    %v5378 = vsub.f32 0.0, %v4845
    %v5379 = vsub.f32 0.0, %v5229
    %v5380 = vsub.f32 0.0, %v5231
    %v5381 = vsub.f32 0.0, %v4849
    %v5382 = vsub.f32 0.0, %v4851
    %v5383 = vsub.f32 0.0, %v5235
    %v5384 = vsub.f32 0.0, %v5237
    %v5385 = vsub.f32 0.0, %v4853
    %v5386 = vsub.f32 0.0, %v4855
    %v5387 = vsub.f32 0.0, %v5239
    %v5388 = vsub.f32 0.0, %v5241
    %v5389 = vsub.f32 0.0, %v4859
    %v5390 = vsub.f32 0.0, %v4861
    %v5391 = vsub.f32 0.0, %v5245
    %v5392 = vsub.f32 0.0, %v5247
    %v5393 = vsub.f32 0.0, %v4863
    %v5394 = vsub.f32 0.0, %v4865
    %v5395 = vsub.f32 0.0, %v5249
    %v5396 = vsub.f32 0.0, %v5251
    %v5397 = vsub.f32 0.0, %v4869
    %v5398 = vsub.f32 0.0, %v4871
    %v5399 = vsub.f32 0.0, %v5255
    %v5400 = vsub.f32 0.0, %v5257
    %v5401 = vsub.f32 0.0, %v4873
    %v5402 = vsub.f32 0.0, %v4875
    %v5403 = vsub.f32 0.0, %v5259
    %v5404 = vsub.f32 0.0, %v5261
    %v5405 = vsub.f32 0.0, %v4879
    %v5406 = vsub.f32 0.0, %v4881
    %v5407 = vsub.f32 0.0, %v5265
    %v5408 = vsub.f32 0.0, %v5267
    %v5409 = vsub.f32 0.0, %v4883
    %v5410 = vsub.f32 0.0, %v4885
    %v5411 = vsub.f32 0.0, %v5269
    %v5412 = vsub.f32 0.0, %v5271
    %v5413 = vsub.f32 0.0, %v4889
    %v5414 = vsub.f32 0.0, %v4891
    %v5415 = vsub.f32 0.0, %v5275
    %v5416 = vsub.f32 0.0, %v5277
    %v5417 = vsub.f32 0.0, %v4893
    %v5418 = vsub.f32 0.0, %v4895
    %v5419 = vsub.f32 0.0, %v5279
    %v5420 = vsub.f32 0.0, %v5281
    %v5421 = vsub.f32 0.0, %v4899
    %v5422 = vsub.f32 0.0, %v4901
    %v5423 = vsub.f32 0.0, %v5285
    %v5424 = vsub.f32 0.0, %v5287
    %v5425 = vsub.f32 0.0, %v4903
    %v5426 = vsub.f32 0.0, %v4905
    %v5427 = vsub.f32 0.0, %v5289
    %v5428 = vsub.f32 0.0, %v5291
    %v5429 = vsub.f32 0.0, %v4909
    %v5430 = vsub.f32 0.0, %v4911
    %v5431 = vsub.f32 0.0, %v5295
    %v5432 = vsub.f32 0.0, %v5297
    %v5433 = vsub.f32 0.0, %v4913
    %v5434 = vsub.f32 0.0, %v4915
    %v5435 = vsub.f32 0.0, %v5299
    %v5436 = vsub.f32 0.0, %v5301
    %v5437 = vsub.f32 0.0, %v4919
    %v5438 = vsub.f32 0.0, %v4921
    %v5439 = vsub.f32 0.0, %v5305
    %v5440 = vsub.f32 0.0, %v5307
    %v5441 = vsub.f32 0.0, %v4923
    %v5442 = vsub.f32 0.0, %v4925
    %v5443 = vsub.f32 0.0, %v5309
    %v5444 = vsub.f32 0.0, %v5311
    %v5445 = vsub.f32 0.0, %v4929
    %v5446 = vsub.f32 0.0, %v4931
    %v5447 = vsub.f32 0.0, %v5315
    %v5448 = vsub.f32 0.0, %v5317
    %v5449 = vsub.f32 0.0, %v4933
    %v5450 = vsub.f32 0.0, %v4935
    %v5451 = vsub.f32 0.0, %v5319
    %v5452 = vsub.f32 0.0, %v5321
    %v5453 = vsub.f32 0.0, %v4939
    %v5454 = vsub.f32 0.0, %v4941
    %v5455 = vsub.f32 0.0, %v5325
    %v5456 = vsub.f32 0.0, %v5327
    %v5457 = vsub.f32 0.0, %v4943
    %v5458 = vsub.f32 0.0, %v4945
    %v5459 = vsub.f32 0.0, %v5329
    %v5460 = vsub.f32 0.0, %v5331
    %v5461 = vmul.f32 %v5333, 1.442695
    %v5462 = vpow.pop %v5461
    %v5463 = vmul.f32 %v5334, 1.442695
    %v5464 = vpow.pop %v5463
    %v5465 = vmul.f32 %v5335, 1.442695
    %v5466 = vpow.pop %v5465
    %v5467 = vmul.f32 %v5336, 1.442695
    %v5468 = vpow.pop %v5467
    %v5469 = vmul.f32 %v5337, 1.442695
    %v5470 = vpow.pop %v5469
    %v5471 = vmul.f32 %v5338, 1.442695
    %v5472 = vpow.pop %v5471
    %v5473 = vmul.f32 %v5339, 1.442695
    %v5474 = vpow.pop %v5473
    %v5475 = vmul.f32 %v5340, 1.442695
    %v5476 = vpow.pop %v5475
    %v5477 = vmul.f32 %v5341, 1.442695
    %v5478 = vpow.pop %v5477
    %v5479 = vmul.f32 %v5342, 1.442695
    %v5480 = vpow.pop %v5479
    %v5481 = vmul.f32 %v5343, 1.442695
    %v5482 = vpow.pop %v5481
    %v5483 = vmul.f32 %v5344, 1.442695
    %v5484 = vpow.pop %v5483
    %v5485 = vmul.f32 %v5345, 1.442695
    %v5486 = vpow.pop %v5485
    %v5487 = vmul.f32 %v5346, 1.442695
    %v5488 = vpow.pop %v5487
    %v5489 = vmul.f32 %v5347, 1.442695
    %v5490 = vpow.pop %v5489
    %v5491 = vmul.f32 %v5348, 1.442695
    %v5492 = vpow.pop %v5491
    %v5493 = vmul.f32 %v5349, 1.442695
    %v5494 = vpow.pop %v5493
    %v5495 = vmul.f32 %v5350, 1.442695
    %v5496 = vpow.pop %v5495
    %v5497 = vmul.f32 %v5351, 1.442695
    %v5498 = vpow.pop %v5497
    %v5499 = vmul.f32 %v5352, 1.442695
    %v5500 = vpow.pop %v5499
    %v5501 = vmul.f32 %v5353, 1.442695
    %v5502 = vpow.pop %v5501
    %v5503 = vmul.f32 %v5354, 1.442695
    %v5504 = vpow.pop %v5503
    %v5505 = vmul.f32 %v5355, 1.442695
    %v5506 = vpow.pop %v5505
    %v5507 = vmul.f32 %v5356, 1.442695
    %v5508 = vpow.pop %v5507
    %v5509 = vmul.f32 %v5357, 1.442695
    %v5510 = vpow.pop %v5509
    %v5511 = vmul.f32 %v5358, 1.442695
    %v5512 = vpow.pop %v5511
    %v5513 = vmul.f32 %v5359, 1.442695
    %v5514 = vpow.pop %v5513
    %v5515 = vmul.f32 %v5360, 1.442695
    %v5516 = vpow.pop %v5515
    %v5517 = vmul.f32 %v5361, 1.442695
    %v5518 = vpow.pop %v5517
    %v5519 = vmul.f32 %v5362, 1.442695
    %v5520 = vpow.pop %v5519
    %v5521 = vmul.f32 %v5363, 1.442695
    %v5522 = vpow.pop %v5521
    %v5523 = vmul.f32 %v5364, 1.442695
    %v5524 = vpow.pop %v5523
    %v5525 = vmul.f32 %v5365, 1.442695
    %v5526 = vpow.pop %v5525
    %v5527 = vmul.f32 %v5366, 1.442695
    %v5528 = vpow.pop %v5527
    %v5529 = vmul.f32 %v5367, 1.442695
    %v5530 = vpow.pop %v5529
    %v5531 = vmul.f32 %v5368, 1.442695
    %v5532 = vpow.pop %v5531
    %v5533 = vmul.f32 %v5369, 1.442695
    %v5534 = vpow.pop %v5533
    %v5535 = vmul.f32 %v5370, 1.442695
    %v5536 = vpow.pop %v5535
    %v5537 = vmul.f32 %v5371, 1.442695
    %v5538 = vpow.pop %v5537
    %v5539 = vmul.f32 %v5372, 1.442695
    %v5540 = vpow.pop %v5539
    %v5541 = vmul.f32 %v5373, 1.442695
    %v5542 = vpow.pop %v5541
    %v5543 = vmul.f32 %v5374, 1.442695
    %v5544 = vpow.pop %v5543
    %v5545 = vmul.f32 %v5375, 1.442695
    %v5546 = vpow.pop %v5545
    %v5547 = vmul.f32 %v5376, 1.442695
    %v5548 = vpow.pop %v5547
    %v5549 = vmul.f32 %v5377, 1.442695
    %v5550 = vpow.pop %v5549
    %v5551 = vmul.f32 %v5378, 1.442695
    %v5552 = vpow.pop %v5551
    %v5553 = vmul.f32 %v5379, 1.442695
    %v5554 = vpow.pop %v5553
    %v5555 = vmul.f32 %v5380, 1.442695
    %v5556 = vpow.pop %v5555
    %v5557 = vmul.f32 %v5381, 1.442695
    %v5558 = vpow.pop %v5557
    %v5559 = vmul.f32 %v5382, 1.442695
    %v5560 = vpow.pop %v5559
    %v5561 = vmul.f32 %v5383, 1.442695
    %v5562 = vpow.pop %v5561
    %v5563 = vmul.f32 %v5384, 1.442695
    %v5564 = vpow.pop %v5563
    %v5565 = vmul.f32 %v5385, 1.442695
    %v5566 = vpow.pop %v5565
    %v5567 = vmul.f32 %v5386, 1.442695
    %v5568 = vpow.pop %v5567
    %v5569 = vmul.f32 %v5387, 1.442695
    %v5570 = vpow.pop %v5569
    %v5571 = vmul.f32 %v5388, 1.442695
    %v5572 = vpow.pop %v5571
    %v5573 = vmul.f32 %v5389, 1.442695
    %v5574 = vpow.pop %v5573
    %v5575 = vmul.f32 %v5390, 1.442695
    %v5576 = vpow.pop %v5575
    %v5577 = vmul.f32 %v5391, 1.442695
    %v5578 = vpow.pop %v5577
    %v5579 = vmul.f32 %v5392, 1.442695
    %v5580 = vpow.pop %v5579
    %v5581 = vmul.f32 %v5393, 1.442695
    %v5582 = vpow.pop %v5581
    %v5583 = vmul.f32 %v5394, 1.442695
    %v5584 = vpow.pop %v5583
    %v5585 = vmul.f32 %v5395, 1.442695
    %v5586 = vpow.pop %v5585
    %v5587 = vmul.f32 %v5396, 1.442695
    %v5588 = vpow.pop %v5587
    %v5589 = vmul.f32 %v5397, 1.442695
    %v5590 = vpow.pop %v5589
    %v5591 = vmul.f32 %v5398, 1.442695
    %v5592 = vpow.pop %v5591
    %v5593 = vmul.f32 %v5399, 1.442695
    %v5594 = vpow.pop %v5593
    %v5595 = vmul.f32 %v5400, 1.442695
    %v5596 = vpow.pop %v5595
    %v5597 = vmul.f32 %v5401, 1.442695
    %v5598 = vpow.pop %v5597
    %v5599 = vmul.f32 %v5402, 1.442695
    %v5600 = vpow.pop %v5599
    %v5601 = vmul.f32 %v5403, 1.442695
    %v5602 = vpow.pop %v5601
    %v5603 = vmul.f32 %v5404, 1.442695
    %v5604 = vpow.pop %v5603
    %v5605 = vmul.f32 %v5405, 1.442695
    %v5606 = vpow.pop %v5605
    %v5607 = vmul.f32 %v5406, 1.442695
    %v5608 = vpow.pop %v5607
    %v5609 = vmul.f32 %v5407, 1.442695
    %v5610 = vpow.pop %v5609
    %v5611 = vmul.f32 %v5408, 1.442695
    %v5612 = vpow.pop %v5611
    %v5613 = vmul.f32 %v5409, 1.442695
    %v5614 = vpow.pop %v5613
    %v5615 = vmul.f32 %v5410, 1.442695
    %v5616 = vpow.pop %v5615
    %v5617 = vmul.f32 %v5411, 1.442695
    %v5618 = vpow.pop %v5617
    %v5619 = vmul.f32 %v5412, 1.442695
    %v5620 = vpow.pop %v5619
    %v5621 = vmul.f32 %v5413, 1.442695
    %v5622 = vpow.pop %v5621
    %v5623 = vmul.f32 %v5414, 1.442695
    %v5624 = vpow.pop %v5623
    %v5625 = vmul.f32 %v5415, 1.442695
    %v5626 = vpow.pop %v5625
    %v5627 = vmul.f32 %v5416, 1.442695
    %v5628 = vpow.pop %v5627
    %v5629 = vmul.f32 %v5417, 1.442695
    %v5630 = vpow.pop %v5629
    %v5631 = vmul.f32 %v5418, 1.442695
    %v5632 = vpow.pop %v5631
    %v5633 = vmul.f32 %v5419, 1.442695
    %v5634 = vpow.pop %v5633
    %v5635 = vmul.f32 %v5420, 1.442695
    %v5636 = vpow.pop %v5635
    %v5637 = vmul.f32 %v5421, 1.442695
    %v5638 = vpow.pop %v5637
    %v5639 = vmul.f32 %v5422, 1.442695
    %v5640 = vpow.pop %v5639
    %v5641 = vmul.f32 %v5423, 1.442695
    %v5642 = vpow.pop %v5641
    %v5643 = vmul.f32 %v5424, 1.442695
    %v5644 = vpow.pop %v5643
    %v5645 = vmul.f32 %v5425, 1.442695
    %v5646 = vpow.pop %v5645
    %v5647 = vmul.f32 %v5426, 1.442695
    %v5648 = vpow.pop %v5647
    %v5649 = vmul.f32 %v5427, 1.442695
    %v5650 = vpow.pop %v5649
    %v5651 = vmul.f32 %v5428, 1.442695
    %v5652 = vpow.pop %v5651
    %v5653 = vmul.f32 %v5429, 1.442695
    %v5654 = vpow.pop %v5653
    %v5655 = vmul.f32 %v5430, 1.442695
    %v5656 = vpow.pop %v5655
    %v5657 = vmul.f32 %v5431, 1.442695
    %v5658 = vpow.pop %v5657
    %v5659 = vmul.f32 %v5432, 1.442695
    %v5660 = vpow.pop %v5659
    %v5661 = vmul.f32 %v5433, 1.442695
    %v5662 = vpow.pop %v5661
    %v5663 = vmul.f32 %v5434, 1.442695
    %v5664 = vpow.pop %v5663
    %v5665 = vmul.f32 %v5435, 1.442695
    %v5666 = vpow.pop %v5665
    %v5667 = vmul.f32 %v5436, 1.442695
    %v5668 = vpow.pop %v5667
    %v5669 = vmul.f32 %v5437, 1.442695
    %v5670 = vpow.pop %v5669
    %v5671 = vmul.f32 %v5438, 1.442695
    %v5672 = vpow.pop %v5671
    %v5673 = vmul.f32 %v5439, 1.442695
    %v5674 = vpow.pop %v5673
    %v5675 = vmul.f32 %v5440, 1.442695
    %v5676 = vpow.pop %v5675
    %v5677 = vmul.f32 %v5441, 1.442695
    %v5678 = vpow.pop %v5677
    %v5679 = vmul.f32 %v5442, 1.442695
    %v5680 = vpow.pop %v5679
    %v5681 = vmul.f32 %v5443, 1.442695
    %v5682 = vpow.pop %v5681
    %v5683 = vmul.f32 %v5444, 1.442695
    %v5684 = vpow.pop %v5683
    %v5685 = vmul.f32 %v5445, 1.442695
    %v5686 = vpow.pop %v5685
    %v5687 = vmul.f32 %v5446, 1.442695
    %v5688 = vpow.pop %v5687
    %v5689 = vmul.f32 %v5447, 1.442695
    %v5690 = vpow.pop %v5689
    %v5691 = vmul.f32 %v5448, 1.442695
    %v5692 = vpow.pop %v5691
    %v5693 = vmul.f32 %v5449, 1.442695
    %v5694 = vpow.pop %v5693
    %v5695 = vmul.f32 %v5450, 1.442695
    %v5696 = vpow.pop %v5695
    %v5697 = vmul.f32 %v5451, 1.442695
    %v5698 = vpow.pop %v5697
    %v5699 = vmul.f32 %v5452, 1.442695
    %v5700 = vpow.pop %v5699
    %v5701 = vmul.f32 %v5453, 1.442695
    %v5702 = vpow.pop %v5701
    %v5703 = vmul.f32 %v5454, 1.442695
    %v5704 = vpow.pop %v5703
    %v5705 = vmul.f32 %v5455, 1.442695
    %v5706 = vpow.pop %v5705
    %v5707 = vmul.f32 %v5456, 1.442695
    %v5708 = vpow.pop %v5707
    %v5709 = vmul.f32 %v5457, 1.442695
    %v5710 = vpow.pop %v5709
    %v5711 = vmul.f32 %v5458, 1.442695
    %v5712 = vpow.pop %v5711
    %v5713 = vmul.f32 %v5459, 1.442695
    %v5714 = vpow.pop %v5713
    %v5715 = vmul.f32 %v5460, 1.442695
    %v5716 = vpow.pop %v5715
    %v5717 = vadd.f32 %v5462, 1.0
    %v5718 = vadd.f32 %v5464, 1.0
    %v5719 = vadd.f32 %v5466, 1.0
    %v5720 = vadd.f32 %v5468, 1.0
    %v5721 = vadd.f32 %v5470, 1.0
    %v5722 = vadd.f32 %v5472, 1.0
    %v5723 = vadd.f32 %v5474, 1.0
    %v5724 = vadd.f32 %v5476, 1.0
    %v5725 = vadd.f32 %v5478, 1.0
    %v5726 = vadd.f32 %v5480, 1.0
    %v5727 = vadd.f32 %v5482, 1.0
    %v5728 = vadd.f32 %v5484, 1.0
    %v5729 = vadd.f32 %v5486, 1.0
    %v5730 = vadd.f32 %v5488, 1.0
    %v5731 = vadd.f32 %v5490, 1.0
    %v5732 = vadd.f32 %v5492, 1.0
    %v5733 = vadd.f32 %v5494, 1.0
    %v5734 = vadd.f32 %v5496, 1.0
    %v5735 = vadd.f32 %v5498, 1.0
    %v5736 = vadd.f32 %v5500, 1.0
    %v5737 = vadd.f32 %v5502, 1.0
    %v5738 = vadd.f32 %v5504, 1.0
    %v5739 = vadd.f32 %v5506, 1.0
    %v5740 = vadd.f32 %v5508, 1.0
    %v5741 = vadd.f32 %v5510, 1.0
    %v5742 = vadd.f32 %v5512, 1.0
    %v5743 = vadd.f32 %v5514, 1.0
    %v5744 = vadd.f32 %v5516, 1.0
    %v5745 = vadd.f32 %v5518, 1.0
    %v5746 = vadd.f32 %v5520, 1.0
    %v5747 = vadd.f32 %v5522, 1.0
    %v5748 = vadd.f32 %v5524, 1.0
    %v5749 = vadd.f32 %v5526, 1.0
    %v5750 = vadd.f32 %v5528, 1.0
    %v5751 = vadd.f32 %v5530, 1.0
    %v5752 = vadd.f32 %v5532, 1.0
    %v5753 = vadd.f32 %v5534, 1.0
    %v5754 = vadd.f32 %v5536, 1.0
    %v5755 = vadd.f32 %v5538, 1.0
    %v5756 = vadd.f32 %v5540, 1.0
    %v5757 = vadd.f32 %v5542, 1.0
    %v5758 = vadd.f32 %v5544, 1.0
    %v5759 = vadd.f32 %v5546, 1.0
    %v5760 = vadd.f32 %v5548, 1.0
    %v5761 = vadd.f32 %v5550, 1.0
    %v5762 = vadd.f32 %v5552, 1.0
    %v5763 = vadd.f32 %v5554, 1.0
    %v5764 = vadd.f32 %v5556, 1.0
    %v5765 = vadd.f32 %v5558, 1.0
    %v5766 = vadd.f32 %v5560, 1.0
    %v5767 = vadd.f32 %v5562, 1.0
    %v5768 = vadd.f32 %v5564, 1.0
    %v5769 = vadd.f32 %v5566, 1.0
    %v5770 = vadd.f32 %v5568, 1.0
    %v5771 = vadd.f32 %v5570, 1.0
    %v5772 = vadd.f32 %v5572, 1.0
    %v5773 = vadd.f32 %v5574, 1.0
    %v5774 = vadd.f32 %v5576, 1.0
    %v5775 = vadd.f32 %v5578, 1.0
    %v5776 = vadd.f32 %v5580, 1.0
    %v5777 = vadd.f32 %v5582, 1.0
    %v5778 = vadd.f32 %v5584, 1.0
    %v5779 = vadd.f32 %v5586, 1.0
    %v5780 = vadd.f32 %v5588, 1.0
    %v5781 = vadd.f32 %v5590, 1.0
    %v5782 = vadd.f32 %v5592, 1.0
    %v5783 = vadd.f32 %v5594, 1.0
    %v5784 = vadd.f32 %v5596, 1.0
    %v5785 = vadd.f32 %v5598, 1.0
    %v5786 = vadd.f32 %v5600, 1.0
    %v5787 = vadd.f32 %v5602, 1.0
    %v5788 = vadd.f32 %v5604, 1.0
    %v5789 = vadd.f32 %v5606, 1.0
    %v5790 = vadd.f32 %v5608, 1.0
    %v5791 = vadd.f32 %v5610, 1.0
    %v5792 = vadd.f32 %v5612, 1.0
    %v5793 = vadd.f32 %v5614, 1.0
    %v5794 = vadd.f32 %v5616, 1.0
    %v5795 = vadd.f32 %v5618, 1.0
    %v5796 = vadd.f32 %v5620, 1.0
    %v5797 = vadd.f32 %v5622, 1.0
    %v5798 = vadd.f32 %v5624, 1.0
    %v5799 = vadd.f32 %v5626, 1.0
    %v5800 = vadd.f32 %v5628, 1.0
    %v5801 = vadd.f32 %v5630, 1.0
    %v5802 = vadd.f32 %v5632, 1.0
    %v5803 = vadd.f32 %v5634, 1.0
    %v5804 = vadd.f32 %v5636, 1.0
    %v5805 = vadd.f32 %v5638, 1.0
    %v5806 = vadd.f32 %v5640, 1.0
    %v5807 = vadd.f32 %v5642, 1.0
    %v5808 = vadd.f32 %v5644, 1.0
    %v5809 = vadd.f32 %v5646, 1.0
    %v5810 = vadd.f32 %v5648, 1.0
    %v5811 = vadd.f32 %v5650, 1.0
    %v5812 = vadd.f32 %v5652, 1.0
    %v5813 = vadd.f32 %v5654, 1.0
    %v5814 = vadd.f32 %v5656, 1.0
    %v5815 = vadd.f32 %v5658, 1.0
    %v5816 = vadd.f32 %v5660, 1.0
    %v5817 = vadd.f32 %v5662, 1.0
    %v5818 = vadd.f32 %v5664, 1.0
    %v5819 = vadd.f32 %v5666, 1.0
    %v5820 = vadd.f32 %v5668, 1.0
    %v5821 = vadd.f32 %v5670, 1.0
    %v5822 = vadd.f32 %v5672, 1.0
    %v5823 = vadd.f32 %v5674, 1.0
    %v5824 = vadd.f32 %v5676, 1.0
    %v5825 = vadd.f32 %v5678, 1.0
    %v5826 = vadd.f32 %v5680, 1.0
    %v5827 = vadd.f32 %v5682, 1.0
    %v5828 = vadd.f32 %v5684, 1.0
    %v5829 = vadd.f32 %v5686, 1.0
    %v5830 = vadd.f32 %v5688, 1.0
    %v5831 = vadd.f32 %v5690, 1.0
    %v5832 = vadd.f32 %v5692, 1.0
    %v5833 = vadd.f32 %v5694, 1.0
    %v5834 = vadd.f32 %v5696, 1.0
    %v5835 = vadd.f32 %v5698, 1.0
    %v5836 = vadd.f32 %v5700, 1.0
    %v5837 = vadd.f32 %v5702, 1.0
    %v5838 = vadd.f32 %v5704, 1.0
    %v5839 = vadd.f32 %v5706, 1.0
    %v5840 = vadd.f32 %v5708, 1.0
    %v5841 = vadd.f32 %v5710, 1.0
    %v5842 = vadd.f32 %v5712, 1.0
    %v5843 = vadd.f32 %v5714, 1.0
    %v5844 = vadd.f32 %v5716, 1.0
    %v5845 = vrcp.pop %v5717
    %v5846 = vrcp.pop %v5718
    %v5847 = vrcp.pop %v5719
    %v5848 = vrcp.pop %v5720
    %v5849 = vrcp.pop %v5721
    %v5850 = vrcp.pop %v5722
    %v5851 = vrcp.pop %v5723
    %v5852 = vrcp.pop %v5724
    %v5853 = vrcp.pop %v5725
    %v5854 = vrcp.pop %v5726
    %v5855 = vrcp.pop %v5727
    %v5856 = vrcp.pop %v5728
    %v5857 = vrcp.pop %v5729
    %v5858 = vrcp.pop %v5730
    %v5859 = vrcp.pop %v5731
    %v5860 = vrcp.pop %v5732
    %v5861 = vrcp.pop %v5733
    %v5862 = vrcp.pop %v5734
    %v5863 = vrcp.pop %v5735
    %v5864 = vrcp.pop %v5736
    %v5865 = vrcp.pop %v5737
    %v5866 = vrcp.pop %v5738
    %v5867 = vrcp.pop %v5739
    %v5868 = vrcp.pop %v5740
    %v5869 = vrcp.pop %v5741
    %v5870 = vrcp.pop %v5742
    %v5871 = vrcp.pop %v5743
    %v5872 = vrcp.pop %v5744
    %v5873 = vrcp.pop %v5745
    %v5874 = vrcp.pop %v5746
    %v5875 = vrcp.pop %v5747
    %v5876 = vrcp.pop %v5748
    %v5877 = vrcp.pop %v5749
    %v5878 = vrcp.pop %v5750
    %v5879 = vrcp.pop %v5751
    %v5880 = vrcp.pop %v5752
    %v5881 = vrcp.pop %v5753
    %v5882 = vrcp.pop %v5754
    %v5883 = vrcp.pop %v5755
    %v5884 = vrcp.pop %v5756
    %v5885 = vrcp.pop %v5757
    %v5886 = vrcp.pop %v5758
    %v5887 = vrcp.pop %v5759
    %v5888 = vrcp.pop %v5760
    %v5889 = vrcp.pop %v5761
    %v5890 = vrcp.pop %v5762
    %v5891 = vrcp.pop %v5763
    %v5892 = vrcp.pop %v5764
    %v5893 = vrcp.pop %v5765
    %v5894 = vrcp.pop %v5766
    %v5895 = vrcp.pop %v5767
    %v5896 = vrcp.pop %v5768
    %v5897 = vrcp.pop %v5769
    %v5898 = vrcp.pop %v5770
    %v5899 = vrcp.pop %v5771
    %v5900 = vrcp.pop %v5772
    %v5901 = vrcp.pop %v5773
    %v5902 = vrcp.pop %v5774
    %v5903 = vrcp.pop %v5775
    %v5904 = vrcp.pop %v5776
    %v5905 = vrcp.pop %v5777
    %v5906 = vrcp.pop %v5778
    %v5907 = vrcp.pop %v5779
    %v5908 = vrcp.pop %v5780
    %v5909 = vrcp.pop %v5781
    %v5910 = vrcp.pop %v5782
    %v5911 = vrcp.pop %v5783
    %v5912 = vrcp.pop %v5784
    %v5913 = vrcp.pop %v5785
    %v5914 = vrcp.pop %v5786
    %v5915 = vrcp.pop %v5787
    %v5916 = vrcp.pop %v5788
    %v5917 = vrcp.pop %v5789
    %v5918 = vrcp.pop %v5790
    %v5919 = vrcp.pop %v5791
    %v5920 = vrcp.pop %v5792
    %v5921 = vrcp.pop %v5793
    %v5922 = vrcp.pop %v5794
    %v5923 = vrcp.pop %v5795
    %v5924 = vrcp.pop %v5796
    %v5925 = vrcp.pop %v5797
    %v5926 = vrcp.pop %v5798
    %v5927 = vrcp.pop %v5799
    %v5928 = vrcp.pop %v5800
    %v5929 = vrcp.pop %v5801
    %v5930 = vrcp.pop %v5802
    %v5931 = vrcp.pop %v5803
    %v5932 = vrcp.pop %v5804
    %v5933 = vrcp.pop %v5805
    %v5934 = vrcp.pop %v5806
    %v5935 = vrcp.pop %v5807
    %v5936 = vrcp.pop %v5808
    %v5937 = vrcp.pop %v5809
    %v5938 = vrcp.pop %v5810
    %v5939 = vrcp.pop %v5811
    %v5940 = vrcp.pop %v5812
    %v5941 = vrcp.pop %v5813
    %v5942 = vrcp.pop %v5814
    %v5943 = vrcp.pop %v5815
    %v5944 = vrcp.pop %v5816
    %v5945 = vrcp.pop %v5817
    %v5946 = vrcp.pop %v5818
    %v5947 = vrcp.pop %v5819
    %v5948 = vrcp.pop %v5820
    %v5949 = vrcp.pop %v5821
    %v5950 = vrcp.pop %v5822
    %v5951 = vrcp.pop %v5823
    %v5952 = vrcp.pop %v5824
    %v5953 = vrcp.pop %v5825
    %v5954 = vrcp.pop %v5826
    %v5955 = vrcp.pop %v5827
    %v5956 = vrcp.pop %v5828
    %v5957 = vrcp.pop %v5829
    %v5958 = vrcp.pop %v5830
    %v5959 = vrcp.pop %v5831
    %v5960 = vrcp.pop %v5832
    %v5961 = vrcp.pop %v5833
    %v5962 = vrcp.pop %v5834
    %v5963 = vrcp.pop %v5835
    %v5964 = vrcp.pop %v5836
    %v5965 = vrcp.pop %v5837
    %v5966 = vrcp.pop %v5838
    %v5967 = vrcp.pop %v5839
    %v5968 = vrcp.pop %v5840
    %v5969 = vrcp.pop %v5841
    %v5970 = vrcp.pop %v5842
    %v5971 = vrcp.pop %v5843
    %v5972 = vrcp.pop %v5844
    %v5973 = vmul.f32 %v4789, %v5845
    %v5974 = vmul.f32 %v4791, %v5846
    %v5975 = vmul.f32 %v5175, %v5847
    %v5976 = vmul.f32 %v5177, %v5848
    %v5977 = vmul.f32 %v4793, %v5849
    %v5978 = vmul.f32 %v4795, %v5850
    %v5979 = vmul.f32 %v5179, %v5851
    %v5980 = vmul.f32 %v5181, %v5852
    %v5981 = vmul.f32 %v4799, %v5853
    %v5982 = vmul.f32 %v4801, %v5854
    %v5983 = vmul.f32 %v5185, %v5855
    %v5984 = vmul.f32 %v5187, %v5856
    %v5985 = vmul.f32 %v4803, %v5857
    %v5986 = vmul.f32 %v4805, %v5858
    %v5987 = vmul.f32 %v5189, %v5859
    %v5988 = vmul.f32 %v5191, %v5860
    %v5989 = vmul.f32 %v4809, %v5861
    %v5990 = vmul.f32 %v4811, %v5862
    %v5991 = vmul.f32 %v5195, %v5863
    %v5992 = vmul.f32 %v5197, %v5864
    %v5993 = vmul.f32 %v4813, %v5865
    %v5994 = vmul.f32 %v4815, %v5866
    %v5995 = vmul.f32 %v5199, %v5867
    %v5996 = vmul.f32 %v5201, %v5868
    %v5997 = vmul.f32 %v4819, %v5869
    %v5998 = vmul.f32 %v4821, %v5870
    %v5999 = vmul.f32 %v5205, %v5871
    %v6000 = vmul.f32 %v5207, %v5872
    %v6001 = vmul.f32 %v4823, %v5873
    %v6002 = vmul.f32 %v4825, %v5874
    %v6003 = vmul.f32 %v5209, %v5875
    %v6004 = vmul.f32 %v5211, %v5876
    %v6005 = vmul.f32 %v4829, %v5877
    %v6006 = vmul.f32 %v4831, %v5878
    %v6007 = vmul.f32 %v5215, %v5879
    %v6008 = vmul.f32 %v5217, %v5880
    %v6009 = vmul.f32 %v4833, %v5881
    %v6010 = vmul.f32 %v4835, %v5882
    %v6011 = vmul.f32 %v5219, %v5883
    %v6012 = vmul.f32 %v5221, %v5884
    %v6013 = vmul.f32 %v4839, %v5885
    %v6014 = vmul.f32 %v4841, %v5886
    %v6015 = vmul.f32 %v5225, %v5887
    %v6016 = vmul.f32 %v5227, %v5888
    %v6017 = vmul.f32 %v4843, %v5889
    %v6018 = vmul.f32 %v4845, %v5890
    %v6019 = vmul.f32 %v5229, %v5891
    %v6020 = vmul.f32 %v5231, %v5892
    %v6021 = vmul.f32 %v4849, %v5893
    %v6022 = vmul.f32 %v4851, %v5894
    %v6023 = vmul.f32 %v5235, %v5895
    %v6024 = vmul.f32 %v5237, %v5896
    %v6025 = vmul.f32 %v4853, %v5897
    %v6026 = vmul.f32 %v4855, %v5898
    %v6027 = vmul.f32 %v5239, %v5899
    %v6028 = vmul.f32 %v5241, %v5900
    %v6029 = vmul.f32 %v4859, %v5901
    %v6030 = vmul.f32 %v4861, %v5902
    %v6031 = vmul.f32 %v5245, %v5903
    %v6032 = vmul.f32 %v5247, %v5904
    %v6033 = vmul.f32 %v4863, %v5905
    %v6034 = vmul.f32 %v4865, %v5906
    %v6035 = vmul.f32 %v5249, %v5907
    %v6036 = vmul.f32 %v5251, %v5908
    %v6037 = vmul.f32 %v4869, %v5909
    %v6038 = vmul.f32 %v4871, %v5910
    %v6039 = vmul.f32 %v5255, %v5911
    %v6040 = vmul.f32 %v5257, %v5912
    %v6041 = vmul.f32 %v4873, %v5913
    %v6042 = vmul.f32 %v4875, %v5914
    %v6043 = vmul.f32 %v5259, %v5915
    %v6044 = vmul.f32 %v5261, %v5916
    %v6045 = vmul.f32 %v4879, %v5917
    %v6046 = vmul.f32 %v4881, %v5918
    %v6047 = vmul.f32 %v5265, %v5919
    %v6048 = vmul.f32 %v5267, %v5920
    %v6049 = vmul.f32 %v4883, %v5921
    %v6050 = vmul.f32 %v4885, %v5922
    %v6051 = vmul.f32 %v5269, %v5923
    %v6052 = vmul.f32 %v5271, %v5924
    %v6053 = vmul.f32 %v4889, %v5925
    %v6054 = vmul.f32 %v4891, %v5926
    %v6055 = vmul.f32 %v5275, %v5927
    %v6056 = vmul.f32 %v5277, %v5928
    %v6057 = vmul.f32 %v4893, %v5929
    %v6058 = vmul.f32 %v4895, %v5930
    %v6059 = vmul.f32 %v5279, %v5931
    %v6060 = vmul.f32 %v5281, %v5932
    %v6061 = vmul.f32 %v4899, %v5933
    %v6062 = vmul.f32 %v4901, %v5934
    %v6063 = vmul.f32 %v5285, %v5935
    %v6064 = vmul.f32 %v5287, %v5936
    %v6065 = vmul.f32 %v4903, %v5937
    %v6066 = vmul.f32 %v4905, %v5938
    %v6067 = vmul.f32 %v5289, %v5939
    %v6068 = vmul.f32 %v5291, %v5940
    %v6069 = vmul.f32 %v4909, %v5941
    %v6070 = vmul.f32 %v4911, %v5942
    %v6071 = vmul.f32 %v5295, %v5943
    %v6072 = vmul.f32 %v5297, %v5944
    %v6073 = vmul.f32 %v4913, %v5945
    %v6074 = vmul.f32 %v4915, %v5946
    %v6075 = vmul.f32 %v5299, %v5947
    %v6076 = vmul.f32 %v5301, %v5948
    %v6077 = vmul.f32 %v4919, %v5949
    %v6078 = vmul.f32 %v4921, %v5950
    %v6079 = vmul.f32 %v5305, %v5951
    %v6080 = vmul.f32 %v5307, %v5952
    %v6081 = vmul.f32 %v4923, %v5953
    %v6082 = vmul.f32 %v4925, %v5954
    %v6083 = vmul.f32 %v5309, %v5955
    %v6084 = vmul.f32 %v5311, %v5956
    %v6085 = vmul.f32 %v4929, %v5957
    %v6086 = vmul.f32 %v4931, %v5958
    %v6087 = vmul.f32 %v5315, %v5959
    %v6088 = vmul.f32 %v5317, %v5960
    %v6089 = vmul.f32 %v4933, %v5961
    %v6090 = vmul.f32 %v4935, %v5962
    %v6091 = vmul.f32 %v5319, %v5963
    %v6092 = vmul.f32 %v5321, %v5964
    %v6093 = vmul.f32 %v4939, %v5965
    %v6094 = vmul.f32 %v4941, %v5966
    %v6095 = vmul.f32 %v5325, %v5967
    %v6096 = vmul.f32 %v5327, %v5968
    %v6097 = vmul.f32 %v4943, %v5969
    %v6098 = vmul.f32 %v4945, %v5970
    %v6099 = vmul.f32 %v5329, %v5971
    %v6100 = vmul.f32 %v5331, %v5972
    %v6101 = vpack.c.bf16 %v5977, %v5973
    %v6102 = vpack.c.bf16 %v5978, %v5974
    %v6103 = vpack.c.bf16 %v5979, %v5975
    %v6104 = vpack.c.bf16 %v5980, %v5976
    %v6105 = vpack.c.bf16 %v5985, %v5981
    %v6106 = vpack.c.bf16 %v5986, %v5982
    %v6107 = vpack.c.bf16 %v5987, %v5983
    %v6108 = vpack.c.bf16 %v5988, %v5984
    %v6109 = vpack.c.bf16 %v5993, %v5989
    %v6110 = vpack.c.bf16 %v5994, %v5990
    %v6111 = vpack.c.bf16 %v5995, %v5991
    %v6112 = vpack.c.bf16 %v5996, %v5992
    %v6113 = vpack.c.bf16 %v6001, %v5997
    %v6114 = vpack.c.bf16 %v6002, %v5998
    %v6115 = vpack.c.bf16 %v6003, %v5999
    %v6116 = vpack.c.bf16 %v6004, %v6000
    %v6117 = vpack.c.bf16 %v6009, %v6005
    %v6118 = vpack.c.bf16 %v6010, %v6006
    %v6119 = vpack.c.bf16 %v6011, %v6007
    %v6120 = vpack.c.bf16 %v6012, %v6008
    %v6121 = vpack.c.bf16 %v6017, %v6013
    %v6122 = vpack.c.bf16 %v6018, %v6014
    %v6123 = vpack.c.bf16 %v6019, %v6015
    %v6124 = vpack.c.bf16 %v6020, %v6016
    %v6125 = vpack.c.bf16 %v6025, %v6021
    %v6126 = vpack.c.bf16 %v6026, %v6022
    %v6127 = vpack.c.bf16 %v6027, %v6023
    %v6128 = vpack.c.bf16 %v6028, %v6024
    %v6129 = vpack.c.bf16 %v6033, %v6029
    %v6130 = vpack.c.bf16 %v6034, %v6030
    %v6131 = vpack.c.bf16 %v6035, %v6031
    %v6132 = vpack.c.bf16 %v6036, %v6032
    %v6133 = vpack.c.bf16 %v6041, %v6037
    %v6134 = vpack.c.bf16 %v6042, %v6038
    %v6135 = vpack.c.bf16 %v6043, %v6039
    %v6136 = vpack.c.bf16 %v6044, %v6040
    %v6137 = vpack.c.bf16 %v6049, %v6045
    %v6138 = vpack.c.bf16 %v6050, %v6046
    %v6139 = vpack.c.bf16 %v6051, %v6047
    %v6140 = vpack.c.bf16 %v6052, %v6048
    %v6141 = vpack.c.bf16 %v6057, %v6053
    %v6142 = vpack.c.bf16 %v6058, %v6054
    %v6143 = vpack.c.bf16 %v6059, %v6055
    %v6144 = vpack.c.bf16 %v6060, %v6056
    %v6145 = vpack.c.bf16 %v6065, %v6061
    %v6146 = vpack.c.bf16 %v6066, %v6062
    %v6147 = vpack.c.bf16 %v6067, %v6063
    %v6148 = vpack.c.bf16 %v6068, %v6064
    %v6149 = vpack.c.bf16 %v6073, %v6069
    %v6150 = vpack.c.bf16 %v6074, %v6070
    %v6151 = vpack.c.bf16 %v6075, %v6071
    %v6152 = vpack.c.bf16 %v6076, %v6072
    %v6153 = vpack.c.bf16 %v6081, %v6077
    %v6154 = vpack.c.bf16 %v6082, %v6078
    %v6155 = vpack.c.bf16 %v6083, %v6079
    %v6156 = vpack.c.bf16 %v6084, %v6080
    %v6157 = vpack.c.bf16 %v6089, %v6085
    %v6158 = vpack.c.bf16 %v6090, %v6086
    %v6159 = vpack.c.bf16 %v6091, %v6087
    %v6160 = vpack.c.bf16 %v6092, %v6088
    %v6161 = vpack.c.bf16 %v6097, %v6093
    %v6162 = vpack.c.bf16 %v6098, %v6094
    %v6163 = vpack.c.bf16 %v6099, %v6095
    %v6164 = vpack.c.bf16 %v6100, %v6096
    %v6165 = vld [vmem:[#allocation9] sm:$0xf]
    %v6166 = vld [vmem:[#allocation9 + $0x4] sm:$0xf]
    %v6167 = vld [vmem:[#allocation9 + $0x8] sm:$0xf]
    %v6168 = vld [vmem:[#allocation9 + $0xc] sm:$0xf]
    %v6169 = vld [vmem:[#allocation9 + $0x10] sm:$0xf]
    %v6170 = vld [vmem:[#allocation9 + $0x14] sm:$0xf]
    %v6171 = vld [vmem:[#allocation9 + $0x18] sm:$0xf]
    %v6172 = vld [vmem:[#allocation9 + $0x1c] sm:$0xf]
    %v6173 = vld [vmem:[#allocation9 + $0x20] sm:$0xf]
    %v6174 = vld [vmem:[#allocation9 + $0x24] sm:$0xf]
    %v6175 = vld [vmem:[#allocation9 + $0x28] sm:$0xf]
    %v6176 = vld [vmem:[#allocation9 + $0x2c] sm:$0xf]
    %v6177 = vld [vmem:[#allocation9 + $0x30] sm:$0xf]
    %v6178 = vld [vmem:[#allocation9 + $0x34] sm:$0xf]
    %v6179 = vld [vmem:[#allocation9 + $0x38] sm:$0xf]
    %v6180 = vld [vmem:[#allocation9 + $0x3c] sm:$0xf]
    %v6181 = vld [vmem:[#allocation9 + $0x40] sm:$0xf]
    %v6182 = vld [vmem:[#allocation9 + $0x44] sm:$0xf]
    %v6183 = vld [vmem:[#allocation9 + $0x48] sm:$0xf]
    %v6184 = vld [vmem:[#allocation9 + $0x4c] sm:$0xf]
    %v6185 = vld [vmem:[#allocation9 + $0x50] sm:$0xf]
    %v6186 = vld [vmem:[#allocation9 + $0x54] sm:$0xf]
    %v6187 = vld [vmem:[#allocation9 + $0x58] sm:$0xf]
    %v6188 = vld [vmem:[#allocation9 + $0x5c] sm:$0xf]
    %v6189 = vld [vmem:[#allocation9 + $0x60] sm:$0xf]
    %v6190 = vld [vmem:[#allocation9 + $0x64] sm:$0xf]
    %v6191 = vld [vmem:[#allocation9 + $0x68] sm:$0xf]
    %v6192 = vld [vmem:[#allocation9 + $0x6c] sm:$0xf]
    %v6193 = vld [vmem:[#allocation9 + $0x70] sm:$0xf]
    %v6194 = vld [vmem:[#allocation9 + $0x74] sm:$0xf]
    %v6195 = vld [vmem:[#allocation9 + $0x78] sm:$0xf]
    %v6196 = vld [vmem:[#allocation9 + $0x7c] sm:$0xf]
    %v6197 = vld [vmem:[#allocation9 + $0x80] sm:$0xf]
    %v6198 = vld [vmem:[#allocation9 + $0x84] sm:$0xf]
    %v6199 = vld [vmem:[#allocation9 + $0x88] sm:$0xf]
    %v6200 = vld [vmem:[#allocation9 + $0x8c] sm:$0xf]
    %v6201 = vld [vmem:[#allocation9 + $0x90] sm:$0xf]
    %v6202 = vld [vmem:[#allocation9 + $0x94] sm:$0xf]
    %v6203 = vld [vmem:[#allocation9 + $0x98] sm:$0xf]
    %v6204 = vld [vmem:[#allocation9 + $0x9c] sm:$0xf]
    %v6205 = vld [vmem:[#allocation9 + $0xa0] sm:$0xf]
    %v6206 = vld [vmem:[#allocation9 + $0xa4] sm:$0xf]
    %v6207 = vld [vmem:[#allocation9 + $0xa8] sm:$0xf]
    %v6208 = vld [vmem:[#allocation9 + $0xac] sm:$0xf]
    %v6209 = vld [vmem:[#allocation9 + $0xb0] sm:$0xf]
    %v6210 = vld [vmem:[#allocation9 + $0xb4] sm:$0xf]
    %v6211 = vld [vmem:[#allocation9 + $0xb8] sm:$0xf]
    %v6212 = vld [vmem:[#allocation9 + $0xbc] sm:$0xf]
    %v6213 = vld [vmem:[#allocation9 + $0xc0] sm:$0xf]
    %v6214 = vld [vmem:[#allocation9 + $0xc4] sm:$0xf]
    %v6215 = vld [vmem:[#allocation9 + $0xc8] sm:$0xf]
    %v6216 = vld [vmem:[#allocation9 + $0xcc] sm:$0xf]
    %v6217 = vld [vmem:[#allocation9 + $0xd0] sm:$0xf]
    %v6218 = vld [vmem:[#allocation9 + $0xd4] sm:$0xf]
    %v6219 = vld [vmem:[#allocation9 + $0xd8] sm:$0xf]
    %v6220 = vld [vmem:[#allocation9 + $0xdc] sm:$0xf]
    %v6221 = vld [vmem:[#allocation9 + $0xe0] sm:$0xf]
    %v6222 = vld [vmem:[#allocation9 + $0xe4] sm:$0xf]
    %v6223 = vld [vmem:[#allocation9 + $0xe8] sm:$0xf]
    %v6224 = vld [vmem:[#allocation9 + $0xec] sm:$0xf]
    %v6225 = vld [vmem:[#allocation9 + $0xf0] sm:$0xf]
    %v6226 = vld [vmem:[#allocation9 + $0xf4] sm:$0xf]
    %v6227 = vld [vmem:[#allocation9 + $0xf8] sm:$0xf]
    %v6228 = vld [vmem:[#allocation9 + $0xfc] sm:$0xf]
    %v6293 = vunpack.c.l.b16 %v6165
    %v6294 = vunpack.c.l.b16 %v6166
    %v6295 = vunpack.c.l.b16 %v6167
    %v6296 = vunpack.c.l.b16 %v6168
    %v6297 = vunpack.c.l.b16 %v6169
    %v6298 = vunpack.c.l.b16 %v6170
    %v6299 = vunpack.c.l.b16 %v6171
    %v6300 = vunpack.c.l.b16 %v6172
    %v6301 = vunpack.c.l.b16 %v6173
    %v6302 = vunpack.c.l.b16 %v6174
    %v6303 = vunpack.c.l.b16 %v6175
    %v6304 = vunpack.c.l.b16 %v6176
    %v6305 = vunpack.c.l.b16 %v6177
    %v6306 = vunpack.c.l.b16 %v6178
    %v6307 = vunpack.c.l.b16 %v6179
    %v6308 = vunpack.c.l.b16 %v6180
    %v6309 = vunpack.c.l.b16 %v6181
    %v6310 = vunpack.c.l.b16 %v6182
    %v6311 = vunpack.c.l.b16 %v6183
    %v6312 = vunpack.c.l.b16 %v6184
    %v6313 = vunpack.c.l.b16 %v6185
    %v6314 = vunpack.c.l.b16 %v6186
    %v6315 = vunpack.c.l.b16 %v6187
    %v6316 = vunpack.c.l.b16 %v6188
    %v6317 = vunpack.c.l.b16 %v6189
    %v6318 = vunpack.c.l.b16 %v6190
    %v6319 = vunpack.c.l.b16 %v6191
    %v6320 = vunpack.c.l.b16 %v6192
    %v6321 = vunpack.c.l.b16 %v6193
    %v6322 = vunpack.c.l.b16 %v6194
    %v6323 = vunpack.c.l.b16 %v6195
    %v6324 = vunpack.c.l.b16 %v6196
    %v6325 = vunpack.c.l.b16 %v6197
    %v6326 = vunpack.c.l.b16 %v6198
    %v6327 = vunpack.c.l.b16 %v6199
    %v6328 = vunpack.c.l.b16 %v6200
    %v6329 = vunpack.c.l.b16 %v6201
    %v6330 = vunpack.c.l.b16 %v6202
    %v6331 = vunpack.c.l.b16 %v6203
    %v6332 = vunpack.c.l.b16 %v6204
    %v6333 = vunpack.c.l.b16 %v6205
    %v6334 = vunpack.c.l.b16 %v6206
    %v6335 = vunpack.c.l.b16 %v6207
    %v6336 = vunpack.c.l.b16 %v6208
    %v6337 = vunpack.c.l.b16 %v6209
    %v6338 = vunpack.c.l.b16 %v6210
    %v6339 = vunpack.c.l.b16 %v6211
    %v6340 = vunpack.c.l.b16 %v6212
    %v6341 = vunpack.c.l.b16 %v6213
    %v6342 = vunpack.c.l.b16 %v6214
    %v6343 = vunpack.c.l.b16 %v6215
    %v6344 = vunpack.c.l.b16 %v6216
    %v6345 = vunpack.c.l.b16 %v6217
    %v6346 = vunpack.c.l.b16 %v6218
    %v6347 = vunpack.c.l.b16 %v6219
    %v6348 = vunpack.c.l.b16 %v6220
    %v6349 = vunpack.c.l.b16 %v6221
    %v6350 = vunpack.c.l.b16 %v6222
    %v6351 = vunpack.c.l.b16 %v6223
    %v6352 = vunpack.c.l.b16 %v6224
    %v6353 = vunpack.c.l.b16 %v6225
    %v6354 = vunpack.c.l.b16 %v6226
    %v6355 = vunpack.c.l.b16 %v6227
    %v6356 = vunpack.c.l.b16 %v6228
    %v6357 = vpack.c.b16 %v6294, %v6293
    %v6358 = vpack.c.b16 %v6296, %v6295
    %v6359 = vpack.c.b16 %v6298, %v6297
    %v6360 = vpack.c.b16 %v6300, %v6299
    %v6361 = vpack.c.b16 %v6302, %v6301
    %v6362 = vpack.c.b16 %v6304, %v6303
    %v6363 = vpack.c.b16 %v6306, %v6305
    %v6364 = vpack.c.b16 %v6308, %v6307
    %v6365 = vpack.c.b16 %v6310, %v6309
    %v6366 = vpack.c.b16 %v6312, %v6311
    %v6367 = vpack.c.b16 %v6314, %v6313
    %v6368 = vpack.c.b16 %v6316, %v6315
    %v6369 = vpack.c.b16 %v6318, %v6317
    %v6370 = vpack.c.b16 %v6320, %v6319
    %v6371 = vpack.c.b16 %v6322, %v6321
    %v6372 = vpack.c.b16 %v6324, %v6323
    %v6373 = vpack.c.b16 %v6326, %v6325
    %v6374 = vpack.c.b16 %v6328, %v6327
    %v6375 = vpack.c.b16 %v6330, %v6329
    %v6376 = vpack.c.b16 %v6332, %v6331
    %v6377 = vpack.c.b16 %v6334, %v6333
    %v6378 = vpack.c.b16 %v6336, %v6335
    %v6379 = vpack.c.b16 %v6338, %v6337
    %v6380 = vpack.c.b16 %v6340, %v6339
    %v6381 = vpack.c.b16 %v6342, %v6341
    %v6382 = vpack.c.b16 %v6344, %v6343
    %v6383 = vpack.c.b16 %v6346, %v6345
    %v6384 = vpack.c.b16 %v6348, %v6347
    %v6385 = vpack.c.b16 %v6350, %v6349
    %v6386 = vpack.c.b16 %v6352, %v6351
    %v6387 = vpack.c.b16 %v6354, %v6353
    %v6388 = vpack.c.b16 %v6356, %v6355
    %6421 = vmatprep.subr.bf16.mxu0 0
    %6422 = vmatpush1.bf16.msra.mxu0 %v6357
    %6423 = vmatprep.subr.bf16.mxu0 0
    %6424 = vmatpush1.bf16.msra.mxu0 %v6358
    %6425 = vmatprep.subr.bf16.mxu0 0
    %6426 = vmatpush1.bf16.msra.mxu0 %v6359
    %6427 = vmatprep.subr.bf16.mxu0 0
    %6428 = vmatpush1.bf16.msra.mxu0 %v6360
    %6429 = vmatprep.subr.bf16.mxu0 0
    %6430 = vmatpush1.bf16.msra.mxu0 %v6361
    %6431 = vmatprep.subr.bf16.mxu0 0
    %6432 = vmatpush1.bf16.msra.mxu0 %v6362
    %6433 = vmatprep.subr.bf16.mxu0 0
    %6434 = vmatpush1.bf16.msra.mxu0 %v6363
    %6435 = vmatprep.subr.bf16.mxu0 0
    %6436 = vmatpush1.bf16.msra.mxu0 %v6364
    %6437 = vmatprep.subr.bf16.mxu0 0
    %6438 = vmatpush1.bf16.msra.mxu0 %v6365
    %6439 = vmatprep.subr.bf16.mxu0 0
    %6440 = vmatpush1.bf16.msra.mxu0 %v6366
    %6441 = vmatprep.subr.bf16.mxu0 0
    %6442 = vmatpush1.bf16.msra.mxu0 %v6367
    %6443 = vmatprep.subr.bf16.mxu0 0
    %6444 = vmatpush1.bf16.msra.mxu0 %v6368
    %6445 = vmatprep.subr.bf16.mxu0 0
    %6446 = vmatpush1.bf16.msra.mxu0 %v6369
    %6447 = vmatprep.subr.bf16.mxu0 0
    %6448 = vmatpush1.bf16.msra.mxu0 %v6370
    %6449 = vmatprep.subr.bf16.mxu0 0
    %6450 = vmatpush1.bf16.msra.mxu0 %v6371
    %6451 = vmatprep.subr.bf16.mxu0 0
    %6452 = vmatpush1.bf16.msra.mxu0 %v6372
    %6453 = vmatprep.mubr.bf16.mxu0 %v6102
    %6454 = vmatmul.mubr.bf16.gmra.mrb[0].mxu0 %v6101
    %v6455 = vpop.f32.mrb[0].mxu0
    %v6456 = vadd.f32 %v113, %v6455
    %v6457 = vpop.f32.mrb[0].mxu0
    %v6458 = vpop.f32.mrb[0].mxu0
    %v6459 = vadd.f32 %v113, %v6458
    %v6460 = vpop.f32.mrb[0].mxu0
    %6461 = vmatprep.mubr.bf16.mxu0 %v6106
    %6462 = vmatmul.mubr.bf16.gmra.mrb[0].mxu0 %v6105
    %v6463 = vpop.f32.mrb[0].mxu0
    %v6464 = vadd.f32 %v113, %v6463
    %v6465 = vpop.f32.mrb[0].mxu0
    %v6466 = vpop.f32.mrb[0].mxu0
    %v6467 = vadd.f32 %v113, %v6466
    %v6468 = vpop.f32.mrb[0].mxu0
    %6469 = vmatprep.mubr.bf16.mxu0 %v6110
    %6470 = vmatmul.mubr.bf16.gmra.mrb[0].mxu0 %v6109
    %v6471 = vpop.f32.mrb[0].mxu0
    %v6472 = vadd.f32 %v113, %v6471
    %v6473 = vpop.f32.mrb[0].mxu0
    %v6474 = vpop.f32.mrb[0].mxu0
    %v6475 = vadd.f32 %v113, %v6474
    %v6476 = vpop.f32.mrb[0].mxu0
    %6477 = vmatprep.mubr.bf16.mxu0 %v6114
    %6478 = vmatmul.mubr.bf16.gmra.mrb[0].mxu0 %v6113
    %v6479 = vpop.f32.mrb[0].mxu0
    %v6480 = vadd.f32 %v113, %v6479
    %v6481 = vpop.f32.mrb[0].mxu0
    %v6482 = vpop.f32.mrb[0].mxu0
    %v6483 = vadd.f32 %v113, %v6482
    %v6484 = vpop.f32.mrb[0].mxu0
    %6485 = vmatprep.mubr.bf16.mxu0 %v6118
    %6486 = vmatmul.mubr.bf16.gmra.mrb[0].mxu0 %v6117
    %v6487 = vpop.f32.mrb[0].mxu0
    %v6488 = vadd.f32 %v113, %v6487
    %v6489 = vpop.f32.mrb[0].mxu0
    %v6490 = vpop.f32.mrb[0].mxu0
    %v6491 = vadd.f32 %v113, %v6490
    %v6492 = vpop.f32.mrb[0].mxu0
    %6493 = vmatprep.mubr.bf16.mxu0 %v6122
    %6494 = vmatmul.mubr.bf16.gmra.mrb[0].mxu0 %v6121
    %v6495 = vpop.f32.mrb[0].mxu0
    %v6496 = vadd.f32 %v113, %v6495
    %v6497 = vpop.f32.mrb[0].mxu0
    %v6498 = vpop.f32.mrb[0].mxu0
    %v6499 = vadd.f32 %v113, %v6498
    %v6500 = vpop.f32.mrb[0].mxu0
    %6501 = vmatprep.mubr.bf16.mxu0 %v6126
    %6502 = vmatmul.mubr.bf16.gmra.mrb[0].mxu0 %v6125
    %v6503 = vpop.f32.mrb[0].mxu0
    %v6504 = vadd.f32 %v113, %v6503
    %v6505 = vpop.f32.mrb[0].mxu0
    %v6506 = vpop.f32.mrb[0].mxu0
    %v6507 = vadd.f32 %v113, %v6506
    %v6508 = vpop.f32.mrb[0].mxu0
    %6509 = vmatprep.mubr.bf16.mxu0 %v6130
    %6510 = vmatmul.mubr.bf16.gmra.mrb[0].mxu0 %v6129
    %v6511 = vpop.f32.mrb[0].mxu0
    %v6512 = vadd.f32 %v113, %v6511
    %v6513 = vpop.f32.mrb[0].mxu0
    %v6514 = vpop.f32.mrb[0].mxu0
    %v6515 = vadd.f32 %v113, %v6514
    %v6516 = vpop.f32.mrb[0].mxu0
    %6517 = vmatprep.mubr.bf16.mxu0 %v6134
    %6518 = vmatmul.mubr.bf16.gmra.mrb[0].mxu0 %v6133
    %v6519 = vpop.f32.mrb[0].mxu0
    %v6520 = vadd.f32 %v113, %v6519
    %v6521 = vpop.f32.mrb[0].mxu0
    %v6522 = vpop.f32.mrb[0].mxu0
    %v6523 = vadd.f32 %v113, %v6522
    %v6524 = vpop.f32.mrb[0].mxu0
    %6525 = vmatprep.mubr.bf16.mxu0 %v6138
    %6526 = vmatmul.mubr.bf16.gmra.mrb[0].mxu0 %v6137
    %v6527 = vpop.f32.mrb[0].mxu0
    %v6528 = vadd.f32 %v113, %v6527
    %v6529 = vpop.f32.mrb[0].mxu0
    %v6530 = vpop.f32.mrb[0].mxu0
    %v6531 = vadd.f32 %v113, %v6530
    %v6532 = vpop.f32.mrb[0].mxu0
    %6533 = vmatprep.mubr.bf16.mxu0 %v6142
    %6534 = vmatmul.mubr.bf16.gmra.mrb[0].mxu0 %v6141
    %v6535 = vpop.f32.mrb[0].mxu0
    %v6536 = vadd.f32 %v113, %v6535
    %v6537 = vpop.f32.mrb[0].mxu0
    %v6538 = vpop.f32.mrb[0].mxu0
    %v6539 = vadd.f32 %v113, %v6538
    %v6540 = vpop.f32.mrb[0].mxu0
    %6541 = vmatprep.mubr.bf16.mxu0 %v6146
    %6542 = vmatmul.mubr.bf16.gmra.mrb[0].mxu0 %v6145
    %v6543 = vpop.f32.mrb[0].mxu0
    %v6544 = vadd.f32 %v113, %v6543
    %v6545 = vpop.f32.mrb[0].mxu0
    %v6546 = vpop.f32.mrb[0].mxu0
    %v6547 = vadd.f32 %v113, %v6546
    %v6548 = vpop.f32.mrb[0].mxu0
    %6549 = vmatprep.mubr.bf16.mxu0 %v6150
    %6550 = vmatmul.mubr.bf16.gmra.mrb[0].mxu0 %v6149
    %v6551 = vpop.f32.mrb[0].mxu0
    %v6552 = vadd.f32 %v113, %v6551
    %v6553 = vpop.f32.mrb[0].mxu0
    %v6554 = vpop.f32.mrb[0].mxu0
    %v6555 = vadd.f32 %v113, %v6554
    %v6556 = vpop.f32.mrb[0].mxu0
    %6557 = vmatprep.mubr.bf16.mxu0 %v6154
    %6558 = vmatmul.mubr.bf16.gmra.mrb[0].mxu0 %v6153
    %v6559 = vpop.f32.mrb[0].mxu0
    %v6560 = vadd.f32 %v113, %v6559
    %v6561 = vpop.f32.mrb[0].mxu0
    %v6562 = vpop.f32.mrb[0].mxu0
    %v6563 = vadd.f32 %v113, %v6562
    %v6564 = vpop.f32.mrb[0].mxu0
    %6565 = vmatprep.mubr.bf16.mxu0 %v6158
    %6566 = vmatmul.mubr.bf16.gmra.mrb[0].mxu0 %v6157
    %v6567 = vpop.f32.mrb[0].mxu0
    %v6568 = vadd.f32 %v113, %v6567
    %v6569 = vpop.f32.mrb[0].mxu0
    %v6570 = vpop.f32.mrb[0].mxu0
    %v6571 = vadd.f32 %v113, %v6570
    %v6572 = vpop.f32.mrb[0].mxu0
    %6573 = vmatprep.mubr.bf16.mxu0 %v6162
    %6574 = vmatmul.mubr.bf16.gmra.mrb[0].mxu0 %v6161
    %v6575 = vpop.f32.mrb[0].mxu0
    %v6576 = vadd.f32 %v113, %v6575
    %v6577 = vpop.f32.mrb[0].mxu0
    %v6578 = vpop.f32.mrb[0].mxu0
    %v6579 = vadd.f32 %v113, %v6578
    %v6580 = vpop.f32.mrb[0].mxu0
    %6581 = vdwg.mxu0
    %6582 = vmatprep.subr.bf16.mxu0 0
    %6583 = vmatpush1.bf16.msra.mxu0 %v6373
    %6584 = vmatprep.subr.bf16.mxu0 0
    %6585 = vmatpush1.bf16.msra.mxu0 %v6374
    %6586 = vmatprep.subr.bf16.mxu0 0
    %6587 = vmatpush1.bf16.msra.mxu0 %v6375
    %6588 = vmatprep.subr.bf16.mxu0 0
    %6589 = vmatpush1.bf16.msra.mxu0 %v6376
    %6590 = vmatprep.subr.bf16.mxu0 0
    %6591 = vmatpush1.bf16.msra.mxu0 %v6377
    %6592 = vmatprep.subr.bf16.mxu0 0
    %6593 = vmatpush1.bf16.msra.mxu0 %v6378
    %6594 = vmatprep.subr.bf16.mxu0 0
    %6595 = vmatpush1.bf16.msra.mxu0 %v6379
    %6596 = vmatprep.subr.bf16.mxu0 0
    %6597 = vmatpush1.bf16.msra.mxu0 %v6380
    %6598 = vmatprep.subr.bf16.mxu0 0
    %6599 = vmatpush1.bf16.msra.mxu0 %v6381
    %6600 = vmatprep.subr.bf16.mxu0 0
    %6601 = vmatpush1.bf16.msra.mxu0 %v6382
    %6602 = vmatprep.subr.bf16.mxu0 0
    %6603 = vmatpush1.bf16.msra.mxu0 %v6383
    %6604 = vmatprep.subr.bf16.mxu0 0
    %6605 = vmatpush1.bf16.msra.mxu0 %v6384
    %6606 = vmatprep.subr.bf16.mxu0 0
    %6607 = vmatpush1.bf16.msra.mxu0 %v6385
    %6608 = vmatprep.subr.bf16.mxu0 0
    %6609 = vmatpush1.bf16.msra.mxu0 %v6386
    %6610 = vmatprep.subr.bf16.mxu0 0
    %6611 = vmatpush1.bf16.msra.mxu0 %v6387
    %6612 = vmatprep.subr.bf16.mxu0 0
    %6613 = vmatpush1.bf16.msra.mxu0 %v6388
    %6614 = vmatprep.mubr.bf16.mxu0 %v6104
    %6615 = vmatmul.mubr.bf16.gmra.mrb[0].mxu0 %v6103
    %v6616 = vpop.f32.mrb[0].mxu0
    %v6617 = vadd.f32 %v6456, %v6616
    %v6618 = vpop.f32.mrb[0].mxu0
    %v6619 = vpop.f32.mrb[0].mxu0
    %v6620 = vadd.f32 %v6459, %v6619
    %v6621 = vpop.f32.mrb[0].mxu0
    %6622 = vmatprep.mubr.bf16.mxu0 %v6108
    %6623 = vmatmul.mubr.bf16.gmra.mrb[0].mxu0 %v6107
    %v6624 = vpop.f32.mrb[0].mxu0
    %v6625 = vadd.f32 %v6464, %v6624
    %v6626 = vpop.f32.mrb[0].mxu0
    %v6627 = vpop.f32.mrb[0].mxu0
    %v6628 = vadd.f32 %v6467, %v6627
    %v6629 = vpop.f32.mrb[0].mxu0
    %6630 = vmatprep.mubr.bf16.mxu0 %v6112
    %6631 = vmatmul.mubr.bf16.gmra.mrb[0].mxu0 %v6111
    %v6632 = vpop.f32.mrb[0].mxu0
    %v6633 = vadd.f32 %v6472, %v6632
    %v6634 = vpop.f32.mrb[0].mxu0
    %v6635 = vpop.f32.mrb[0].mxu0
    %v6636 = vadd.f32 %v6475, %v6635
    %v6637 = vpop.f32.mrb[0].mxu0
    %6638 = vmatprep.mubr.bf16.mxu0 %v6116
    %6639 = vmatmul.mubr.bf16.gmra.mrb[0].mxu0 %v6115
    %v6640 = vpop.f32.mrb[0].mxu0
    %v6641 = vadd.f32 %v6480, %v6640
    %v6642 = vpop.f32.mrb[0].mxu0
    %v6643 = vpop.f32.mrb[0].mxu0
    %v6644 = vadd.f32 %v6483, %v6643
    %v6645 = vpop.f32.mrb[0].mxu0
    %6646 = vmatprep.mubr.bf16.mxu0 %v6120
    %6647 = vmatmul.mubr.bf16.gmra.mrb[0].mxu0 %v6119
    %v6648 = vpop.f32.mrb[0].mxu0
    %v6649 = vadd.f32 %v6488, %v6648
    %v6650 = vpop.f32.mrb[0].mxu0
    %v6651 = vpop.f32.mrb[0].mxu0
    %v6652 = vadd.f32 %v6491, %v6651
    %v6653 = vpop.f32.mrb[0].mxu0
    %6654 = vmatprep.mubr.bf16.mxu0 %v6124
    %6655 = vmatmul.mubr.bf16.gmra.mrb[0].mxu0 %v6123
    %v6656 = vpop.f32.mrb[0].mxu0
    %v6657 = vadd.f32 %v6496, %v6656
    %v6658 = vpop.f32.mrb[0].mxu0
    %v6659 = vpop.f32.mrb[0].mxu0
    %v6660 = vadd.f32 %v6499, %v6659
    %v6661 = vpop.f32.mrb[0].mxu0
    %6662 = vmatprep.mubr.bf16.mxu0 %v6128
    %6663 = vmatmul.mubr.bf16.gmra.mrb[0].mxu0 %v6127
    %v6664 = vpop.f32.mrb[0].mxu0
    %v6665 = vadd.f32 %v6504, %v6664
    %v6666 = vpop.f32.mrb[0].mxu0
    %v6667 = vpop.f32.mrb[0].mxu0
    %v6668 = vadd.f32 %v6507, %v6667
    %v6669 = vpop.f32.mrb[0].mxu0
    %6670 = vmatprep.mubr.bf16.mxu0 %v6132
    %6671 = vmatmul.mubr.bf16.gmra.mrb[0].mxu0 %v6131
    %v6672 = vpop.f32.mrb[0].mxu0
    %v6673 = vadd.f32 %v6512, %v6672
    %v6674 = vpop.f32.mrb[0].mxu0
    %v6675 = vpop.f32.mrb[0].mxu0
    %v6676 = vadd.f32 %v6515, %v6675
    %v6677 = vpop.f32.mrb[0].mxu0
    %6678 = vmatprep.mubr.bf16.mxu0 %v6136
    %6679 = vmatmul.mubr.bf16.gmra.mrb[0].mxu0 %v6135
    %v6680 = vpop.f32.mrb[0].mxu0
    %v6681 = vadd.f32 %v6520, %v6680
    %v6682 = vpop.f32.mrb[0].mxu0
    %v6683 = vpop.f32.mrb[0].mxu0
    %v6684 = vadd.f32 %v6523, %v6683
    %v6685 = vpop.f32.mrb[0].mxu0
    %6686 = vmatprep.mubr.bf16.mxu0 %v6140
    %6687 = vmatmul.mubr.bf16.gmra.mrb[0].mxu0 %v6139
    %v6688 = vpop.f32.mrb[0].mxu0
    %v6689 = vadd.f32 %v6528, %v6688
    %v6690 = vpop.f32.mrb[0].mxu0
    %v6691 = vpop.f32.mrb[0].mxu0
    %v6692 = vadd.f32 %v6531, %v6691
    %v6693 = vpop.f32.mrb[0].mxu0
    %6694 = vmatprep.mubr.bf16.mxu0 %v6144
    %6695 = vmatmul.mubr.bf16.gmra.mrb[0].mxu0 %v6143
    %v6696 = vpop.f32.mrb[0].mxu0
    %v6697 = vadd.f32 %v6536, %v6696
    %v6698 = vpop.f32.mrb[0].mxu0
    %v6699 = vpop.f32.mrb[0].mxu0
    %v6700 = vadd.f32 %v6539, %v6699
    %v6701 = vpop.f32.mrb[0].mxu0
    %6702 = vmatprep.mubr.bf16.mxu0 %v6148
    %6703 = vmatmul.mubr.bf16.gmra.mrb[0].mxu0 %v6147
    %v6704 = vpop.f32.mrb[0].mxu0
    %v6705 = vadd.f32 %v6544, %v6704
    %v6706 = vpop.f32.mrb[0].mxu0
    %v6707 = vpop.f32.mrb[0].mxu0
    %v6708 = vadd.f32 %v6547, %v6707
    %v6709 = vpop.f32.mrb[0].mxu0
    %6710 = vmatprep.mubr.bf16.mxu0 %v6152
    %6711 = vmatmul.mubr.bf16.gmra.mrb[0].mxu0 %v6151
    %v6712 = vpop.f32.mrb[0].mxu0
    %v6713 = vadd.f32 %v6552, %v6712
    %v6714 = vpop.f32.mrb[0].mxu0
    %v6715 = vpop.f32.mrb[0].mxu0
    %v6716 = vadd.f32 %v6555, %v6715
    %v6717 = vpop.f32.mrb[0].mxu0
    %6718 = vmatprep.mubr.bf16.mxu0 %v6156
    %6719 = vmatmul.mubr.bf16.gmra.mrb[0].mxu0 %v6155
    %v6720 = vpop.f32.mrb[0].mxu0
    %v6721 = vadd.f32 %v6560, %v6720
    %v6722 = vpop.f32.mrb[0].mxu0
    %v6723 = vpop.f32.mrb[0].mxu0
    %v6724 = vadd.f32 %v6563, %v6723
    %v6725 = vpop.f32.mrb[0].mxu0
    %6726 = vmatprep.mubr.bf16.mxu0 %v6160
    %6727 = vmatmul.mubr.bf16.gmra.mrb[0].mxu0 %v6159
    %v6728 = vpop.f32.mrb[0].mxu0
    %v6729 = vadd.f32 %v6568, %v6728
    %v6730 = vpop.f32.mrb[0].mxu0
    %v6731 = vpop.f32.mrb[0].mxu0
    %v6732 = vadd.f32 %v6571, %v6731
    %v6733 = vpop.f32.mrb[0].mxu0
    %6734 = vmatprep.mubr.bf16.mxu0 %v6164
    %6735 = vmatmul.mubr.bf16.gmra.mrb[0].mxu0 %v6163
    %v6736 = vpop.f32.mrb[0].mxu0
    %v6737 = vadd.f32 %v6576, %v6736
    %v6738 = vpop.f32.mrb[0].mxu0
    %v6739 = vpop.f32.mrb[0].mxu0
    %v6740 = vadd.f32 %v6579, %v6739
    %v6741 = vpop.f32.mrb[0].mxu0
    %6742 = vdwg.mxu0
    %v6743 = vsub.f32 0.0, %v6617
    %v6744 = vsub.f32 0.0, %v6620
    %v6745 = vsub.f32 0.0, %v6625
    %v6746 = vsub.f32 0.0, %v6628
    %v6747 = vsub.f32 0.0, %v6633
    %v6748 = vsub.f32 0.0, %v6636
    %v6749 = vsub.f32 0.0, %v6641
    %v6750 = vsub.f32 0.0, %v6644
    %v6751 = vsub.f32 0.0, %v6649
    %v6752 = vsub.f32 0.0, %v6652
    %v6753 = vsub.f32 0.0, %v6657
    %v6754 = vsub.f32 0.0, %v6660
    %v6755 = vsub.f32 0.0, %v6665
    %v6756 = vsub.f32 0.0, %v6668
    %v6757 = vsub.f32 0.0, %v6673
    %v6758 = vsub.f32 0.0, %v6676
    %v6759 = vsub.f32 0.0, %v6681
    %v6760 = vsub.f32 0.0, %v6684
    %v6761 = vsub.f32 0.0, %v6689
    %v6762 = vsub.f32 0.0, %v6692
    %v6763 = vsub.f32 0.0, %v6697
    %v6764 = vsub.f32 0.0, %v6700
    %v6765 = vsub.f32 0.0, %v6705
    %v6766 = vsub.f32 0.0, %v6708
    %v6767 = vsub.f32 0.0, %v6713
    %v6768 = vsub.f32 0.0, %v6716
    %v6769 = vsub.f32 0.0, %v6721
    %v6770 = vsub.f32 0.0, %v6724
    %v6771 = vsub.f32 0.0, %v6729
    %v6772 = vsub.f32 0.0, %v6732
    %v6773 = vsub.f32 0.0, %v6737
    %v6774 = vsub.f32 0.0, %v6740
    %v6775 = vmul.f32 %v6743, 1.442695
    %v6776 = vpow.pop %v6775
    %v6777 = vmul.f32 %v6744, 1.442695
    %v6778 = vpow.pop %v6777
    %v6779 = vmul.f32 %v6745, 1.442695
    %v6780 = vpow.pop %v6779
    %v6781 = vmul.f32 %v6746, 1.442695
    %v6782 = vpow.pop %v6781
    %v6783 = vmul.f32 %v6747, 1.442695
    %v6784 = vpow.pop %v6783
    %v6785 = vmul.f32 %v6748, 1.442695
    %v6786 = vpow.pop %v6785
    %v6787 = vmul.f32 %v6749, 1.442695
    %v6788 = vpow.pop %v6787
    %v6789 = vmul.f32 %v6750, 1.442695
    %v6790 = vpow.pop %v6789
    %v6791 = vmul.f32 %v6751, 1.442695
    %v6792 = vpow.pop %v6791
    %v6793 = vmul.f32 %v6752, 1.442695
    %v6794 = vpow.pop %v6793
    %v6795 = vmul.f32 %v6753, 1.442695
    %v6796 = vpow.pop %v6795
    %v6797 = vmul.f32 %v6754, 1.442695
    %v6798 = vpow.pop %v6797
    %v6799 = vmul.f32 %v6755, 1.442695
    %v6800 = vpow.pop %v6799
    %v6801 = vmul.f32 %v6756, 1.442695
    %v6802 = vpow.pop %v6801
    %v6803 = vmul.f32 %v6757, 1.442695
    %v6804 = vpow.pop %v6803
    %v6805 = vmul.f32 %v6758, 1.442695
    %v6806 = vpow.pop %v6805
    %v6807 = vmul.f32 %v6759, 1.442695
    %v6808 = vpow.pop %v6807
    %v6809 = vmul.f32 %v6760, 1.442695
    %v6810 = vpow.pop %v6809
    %v6811 = vmul.f32 %v6761, 1.442695
    %v6812 = vpow.pop %v6811
    %v6813 = vmul.f32 %v6762, 1.442695
    %v6814 = vpow.pop %v6813
    %v6815 = vmul.f32 %v6763, 1.442695
    %v6816 = vpow.pop %v6815
    %v6817 = vmul.f32 %v6764, 1.442695
    %v6818 = vpow.pop %v6817
    %v6819 = vmul.f32 %v6765, 1.442695
    %v6820 = vpow.pop %v6819
    %v6821 = vmul.f32 %v6766, 1.442695
    %v6822 = vpow.pop %v6821
    %v6823 = vmul.f32 %v6767, 1.442695
    %v6824 = vpow.pop %v6823
    %v6825 = vmul.f32 %v6768, 1.442695
    %v6826 = vpow.pop %v6825
    %v6827 = vmul.f32 %v6769, 1.442695
    %v6828 = vpow.pop %v6827
    %v6829 = vmul.f32 %v6770, 1.442695
    %v6830 = vpow.pop %v6829
    %v6831 = vmul.f32 %v6771, 1.442695
    %v6832 = vpow.pop %v6831
    %v6833 = vmul.f32 %v6772, 1.442695
    %v6834 = vpow.pop %v6833
    %v6835 = vmul.f32 %v6773, 1.442695
    %v6836 = vpow.pop %v6835
    %v6837 = vmul.f32 %v6774, 1.442695
    %v6838 = vpow.pop %v6837
    %v6839 = vadd.f32 %v6776, 1.0
    %v6840 = vadd.f32 %v6778, 1.0
    %v6841 = vadd.f32 %v6780, 1.0
    %v6842 = vadd.f32 %v6782, 1.0
    %v6843 = vadd.f32 %v6784, 1.0
    %v6844 = vadd.f32 %v6786, 1.0
    %v6845 = vadd.f32 %v6788, 1.0
    %v6846 = vadd.f32 %v6790, 1.0
    %v6847 = vadd.f32 %v6792, 1.0
    %v6848 = vadd.f32 %v6794, 1.0
    %v6849 = vadd.f32 %v6796, 1.0
    %v6850 = vadd.f32 %v6798, 1.0
    %v6851 = vadd.f32 %v6800, 1.0
    %v6852 = vadd.f32 %v6802, 1.0
    %v6853 = vadd.f32 %v6804, 1.0
    %v6854 = vadd.f32 %v6806, 1.0
    %v6855 = vadd.f32 %v6808, 1.0
    %v6856 = vadd.f32 %v6810, 1.0
    %v6857 = vadd.f32 %v6812, 1.0
    %v6858 = vadd.f32 %v6814, 1.0
    %v6859 = vadd.f32 %v6816, 1.0
    %v6860 = vadd.f32 %v6818, 1.0
    %v6861 = vadd.f32 %v6820, 1.0
    %v6862 = vadd.f32 %v6822, 1.0
    %v6863 = vadd.f32 %v6824, 1.0
    %v6864 = vadd.f32 %v6826, 1.0
    %v6865 = vadd.f32 %v6828, 1.0
    %v6866 = vadd.f32 %v6830, 1.0
    %v6867 = vadd.f32 %v6832, 1.0
    %v6868 = vadd.f32 %v6834, 1.0
    %v6869 = vadd.f32 %v6836, 1.0
    %v6870 = vadd.f32 %v6838, 1.0
    %v6871 = vrcp.pop %v6839
    %v6872 = vrcp.pop %v6840
    %v6873 = vrcp.pop %v6841
    %v6874 = vrcp.pop %v6842
    %v6875 = vrcp.pop %v6843
    %v6876 = vrcp.pop %v6844
    %v6877 = vrcp.pop %v6845
    %v6878 = vrcp.pop %v6846
    %v6879 = vrcp.pop %v6847
    %v6880 = vrcp.pop %v6848
    %v6881 = vrcp.pop %v6849
    %v6882 = vrcp.pop %v6850
    %v6883 = vrcp.pop %v6851
    %v6884 = vrcp.pop %v6852
    %v6885 = vrcp.pop %v6853
    %v6886 = vrcp.pop %v6854
    %v6887 = vrcp.pop %v6855
    %v6888 = vrcp.pop %v6856
    %v6889 = vrcp.pop %v6857
    %v6890 = vrcp.pop %v6858
    %v6891 = vrcp.pop %v6859
    %v6892 = vrcp.pop %v6860
    %v6893 = vrcp.pop %v6861
    %v6894 = vrcp.pop %v6862
    %v6895 = vrcp.pop %v6863
    %v6896 = vrcp.pop %v6864
    %v6897 = vrcp.pop %v6865
    %v6898 = vrcp.pop %v6866
    %v6899 = vrcp.pop %v6867
    %v6900 = vrcp.pop %v6868
    %v6901 = vrcp.pop %v6869
    %v6902 = vrcp.pop %v6870
    %6903 = vst [vmem:[%s6] sm:$0xff] %v6871
    %6904 = vst [vmem:[%s6 + $0x8] sm:$0xff] %v6872
    %6905 = vst [vmem:[%s6 + $0x10] sm:$0xff] %v6873
    %6906 = vst [vmem:[%s6 + $0x18] sm:$0xff] %v6874
    %6907 = vst [vmem:[%s6 + $0x20] sm:$0xff] %v6875
    %6908 = vst [vmem:[%s6 + $0x28] sm:$0xff] %v6876
    %6909 = vst [vmem:[%s6 + $0x30] sm:$0xff] %v6877
    %6910 = vst [vmem:[%s6 + $0x38] sm:$0xff] %v6878
    %6911 = vst [vmem:[%s6 + $0x40] sm:$0xff] %v6879
    %6912 = vst [vmem:[%s6 + $0x48] sm:$0xff] %v6880
    %6913 = vst [vmem:[%s6 + $0x50] sm:$0xff] %v6881
    %6914 = vst [vmem:[%s6 + $0x58] sm:$0xff] %v6882
    %6915 = vst [vmem:[%s6 + $0x60] sm:$0xff] %v6883
    %6916 = vst [vmem:[%s6 + $0x68] sm:$0xff] %v6884
    %6917 = vst [vmem:[%s6 + $0x70] sm:$0xff] %v6885
    %6918 = vst [vmem:[%s6 + $0x78] sm:$0xff] %v6886
    %6919 = vst [vmem:[%s6 + $0x80] sm:$0xff] %v6887
    %6920 = vst [vmem:[%s6 + $0x88] sm:$0xff] %v6888
    %6921 = vst [vmem:[%s6 + $0x90] sm:$0xff] %v6889
    %6922 = vst [vmem:[%s6 + $0x98] sm:$0xff] %v6890
    %6923 = vst [vmem:[%s6 + $0xa0] sm:$0xff] %v6891
    %6924 = vst [vmem:[%s6 + $0xa8] sm:$0xff] %v6892
    %6925 = vst [vmem:[%s6 + $0xb0] sm:$0xff] %v6893
    %6926 = vst [vmem:[%s6 + $0xb8] sm:$0xff] %v6894
    %6927 = vst [vmem:[%s6 + $0xc0] sm:$0xff] %v6895
    %6928 = vst [vmem:[%s6 + $0xc8] sm:$0xff] %v6896
    %6929 = vst [vmem:[%s6 + $0xd0] sm:$0xff] %v6897
    %6930 = vst [vmem:[%s6 + $0xd8] sm:$0xff] %v6898
    %6931 = vst [vmem:[%s6 + $0xe0] sm:$0xff] %v6899
    %6932 = vst [vmem:[%s6 + $0xe8] sm:$0xff] %v6900
    %6933 = vst [vmem:[%s6 + $0xf0] sm:$0xff] %v6901
    %6934 = vst [vmem:[%s6 + $0xf8] sm:$0xff] %v6902
    // Predicated region
    $region50: #{_mlpnet_forward_impl.1} parent=1 // pred_check
      _
    $region51: #{_mlpnet_forward_impl.1} parent=1 // pred_check_branch
      %6936 = sbr.rel (0) target = $region53
    $region52: #{_mlpnet_forward_impl.1} parent=1 // pred_region
      _
    $region53: #{_mlpnet_forward_impl.1} parent=1 // pred_fallthru
      _
    // Predicated region
    $region54: #{_mlpnet_forward_impl.1} parent=1 // pred_check
      _
    $region55: #{_mlpnet_forward_impl.1} parent=1 // pred_check_branch
      %6938 = sbr.rel (0) target = $region57
    $region56: #{_mlpnet_forward_impl.1} parent=1 // pred_region
      _
    $region57: #{_mlpnet_forward_impl.1} parent=1 // pred_fallthru
      _
    %6939 = vsyncpa [#allocation3], 1
    %6940 = vsyncpa [#allocation5], 1
    %6941 = vsyncpa [#allocation8], 1
    %6942 = vsyncpa [#allocation11], 1

</llo_original>
